<compile_context>
chip_gen: v6e
topology: v6e:2x2x1
jax: 0.10.0
libtpu: 0.0.40
codegen_flags: <defaults>
</compile_context>

<pallas_src>
import functools
import math

import numpy as np
import jax
import jax.numpy as jnp
from jax.experimental import pallas as pl
from jax.experimental.pallas import tpu as pltpu

F32 = jnp.float32
BF16 = jnp.bfloat16


def _scoped_vmem_limit():
    # Generation-aware scoped-VMEM budget: ~85% of physical per-core VMEM
    # (=> ~108 MiB on v5e/v6e with 128 MiB, ~54 MiB on v7x with 64 MiB).
    try:
        cap = int(getattr(pltpu.get_tpu_info(), "vmem_capacity_bytes"))
    except Exception:
        cap = 64 * 1024 * 1024
    return max(32 * 1024 * 1024, min(int(cap * 0.85), 110 * 1024 * 1024))


_VMEM_LIMIT = _scoped_vmem_limit()


def _cparams(n_grid):
    return pltpu.CompilerParams(
        dimension_semantics=("parallel",) * n_grid,
        vmem_limit_bytes=_VMEM_LIMIT)


def _row_tile(n_rows, bytes_per_row, max_tile=2048):
    """Row tile sized so double-buffered (in+out) activation tiles stay under ~1/3 of
    the scoped VMEM limit (review: v6e wants 1024-2048, v7x must stay smaller; the
    budget formula handles both). Rows are zero-padded to a tile multiple instead of
    the old whole-array fallback."""
    budget = _VMEM_LIMIT // 3
    cap = (budget // (2 * max(bytes_per_row, 1))) // 8 * 8
    cap = max(8, min(max_tile, cap))
    if n_rows <= cap:
        tile = ((n_rows + 7) // 8) * 8
    else:
        tile = cap
    n_pad = pl.cdiv(n_rows, tile) * tile
    return tile, n_pad


# ----------------------------- in-kernel math helpers -----------------------------

def _erf_approx(x):
    # TODO(synk): jax.lax.erf has no guaranteed Mosaic lowering on all jax versions;
    # Abramowitz & Stegun 7.1.26 rational approximation (~1.5e-7 abs error) from
    # exp/abs/select keeps torch nn.GELU() semantics to f32 precision.
    a1, a2, a3, a4, a5 = (0.254829592, -0.284496736, 1.421413741,
                          -1.453152027, 1.061405429)
    p = 0.3275911
    z = jnp.abs(x)
    t = 1.0 / (1.0 + p * z)
    poly = ((((a5 * t + a4) * t + a3) * t + a2) * t + a1) * t
    y = 1.0 - poly * jnp.exp(-z * z)
    return jnp.where(x >= 0, y, -y)


def _gelu_exact(x):
    # nn.GELU() default (exact erf form).
    return 0.5 * x * (1.0 + _erf_approx(x * 0.7071067811865476))


def _instance_norm_cols(x):
    # InstanceNorm3d(affine=False, eps=1e-5): per-channel stats over the full spatial
    # extent of one batch item (the block is one batch item -> rows == D*H*W).
    # Single-pass E[x^2]-E[x]^2 stats + EUP rsqrt (review micro-opts).
    mean = jnp.mean(x, axis=0, keepdims=True)
    meansq = jnp.mean(x * x, axis=0, keepdims=True)
    var = jnp.maximum(meansq - mean * mean, 0.0)
    return (x - mean) * jax.lax.rsqrt(var + 1e-5)


def _dwconv3x3x3_flat(x, w27, bias, masks, D, H, W):
    """Depthwise 3x3x3 conv (padding=1, cross-correlation) on a channels-last volume
    flattened to (D*H*W, C).  A zero halo is concatenated in-kernel along the row
    (sublane) axis (8-aligned), each tap is a static shifted slice, and rows whose 3d
    neighbor falls outside the volume are zeroed via one combined mask per tap.
    TODO(synk): the 26 shifted slices start at non-8-aligned sublane offsets (Mosaic
    realigns each); a fully padded (D+2)(H+2)(W+2) VMEM scratch or pltpu.roll shifts
    would remove those copies but needs per-shape validation."""
    N, C = x.shape
    HW = H * W
    halo = ((HW + W + 1 + 7) // 8) * 8
    zeros = jnp.zeros((halo, C), x.dtype)
    xp = jnp.concatenate([zeros, x, zeros], axis=0)  # (N + 2*halo, C)

    acc = jnp.zeros((N, C), jnp.float32) + bias      # bias broadcast (1, C) -> (N, C)
    for kd in range(3):
        for kh in range(3):
            for kw in range(3):
                tap = kd * 9 + kh * 3 + kw
                od, oh, ow = kd - 1, kh - 1, kw - 1
                s = od * HW + oh * W + ow
                shifted = xp[halo + s:halo + s + N, :]
                term = shifted * w27[tap, :]
                if (od, oh, ow) != (0, 0, 0):
                    term = term * masks[:, tap:tap + 1]   # one combined mask per tap
                acc = acc + term
    return acc


def _conv_tap_masks(D, H, W):
    # Host-side (static) combined validity mask per tap: masks[n, tap] == 1 iff the
    # 3d neighbor of flattened position n at offset (kd-1, kh-1, kw-1) is in-bounds.
    n = np.arange(D * H * W)
    d = n // (H * W)
    h = (n // W) % H
    w = n % W
    cols = []
    for kd in range(3):
        for kh in range(3):
            for kw in range(3):
                od, oh, ow = kd - 1, kh - 1, kw - 1
                ok = ((d + od >= 0) & (d + od < D) &
                      (h + oh >= 0) & (h + oh < H) &
                      (w + ow >= 0) & (w + ow < W))
                cols.append(ok.astype(np.float32))
    return jnp.asarray(np.stack(cols, axis=1))  # (N, 27)


# ----------------------------- kernel 1: ChanLayerNorm + to_qkv -----------------------------

def _ln_qkv_kernel(x_ref, g_ref, b_ref, w_ref, o_ref):
    x = x_ref[...]
    mean = jnp.mean(x, axis=-1, keepdims=True)
    meansq = jnp.mean(x * x, axis=-1, keepdims=True)
    var = jnp.maximum(meansq - mean * mean, 0.0)
    xn = (x - mean) * jax.lax.rsqrt(var + 1e-5) * g_ref[...] + b_ref[...]
    # bf16 MXU operands, f32 accumulation (w_ref is already bf16).
    o_ref[...] = jnp.dot(xn.astype(BF16), w_ref[...],
                         preferred_element_type=jnp.float32)


def ln_qkv(x2d, g, b, w_bf16):
    n_rows, c_in = x2d.shape
    c_out = w_bf16.shape[1]
    tile, n_pad = _row_tile(n_rows, 4 * (c_in + c_out))
    if n_pad != n_rows:
        x2d = jnp.pad(x2d, ((0, n_pad - n_rows), (0, 0)))
    grid = (n_pad // tile,)
    flops = 2 * n_pad * c_in * c_out + 8 * n_pad * c_in
    bytes_accessed = 4 * n_pad * (c_in + c_out) + 2 * c_in * c_out + 8 * c_in
    out = pl.pallas_call(
        _ln_qkv_kernel,
        out_shape=jax.ShapeDtypeStruct((n_pad, c_out), F32),
        grid=grid,
        in_specs=[
            pl.BlockSpec((tile, c_in), lambda i: (i, 0)),
            pl.BlockSpec((1, c_in), lambda i: (0, 0)),
            pl.BlockSpec((1, c_in), lambda i: (0, 0)),
            pl.BlockSpec((c_in, c_out), lambda i: (0, 0)),
        ],
        out_specs=pl.BlockSpec((tile, c_out), lambda i: (i, 0)),
        compiler_params=_cparams(1),
        cost_estimate=pl.CostEstimate(flops=flops, transcendentals=n_pad,
                                      bytes_accessed=bytes_accessed),
    )(x2d, g.reshape(1, c_in), b.reshape(1, c_in), w_bf16)
    return out[:n_rows] if n_pad != n_rows else out


# ----------------------------- kernel 2: cosine-sim attention -----------------------------

def _attn_kernel(q_ref, k_ref, v_ref, o_ref):
    q = q_ref[...].astype(BF16)
    k = k_ref[...].astype(BF16)
    sim = jax.lax.dot_general(q, k, (((1,), (1,)), ((), ())),
                              preferred_element_type=jnp.float32)   # q @ k^T, f32 acc
    m = jnp.max(sim, axis=-1, keepdims=True)
    p = jnp.exp(sim - m)
    attn = p * pl.reciprocal(jnp.sum(p, axis=-1, keepdims=True), approx=True)
    o_ref[...] = jnp.dot(attn.astype(BF16), v_ref[...].astype(BF16),
                         preferred_element_type=jnp.float32)


def attention(q, k, v):
    """Grid over (batch*head, query-tile): many small steps -> pipelining + bounded
    per-step VMEM, instead of 2 fat grouped steps."""
    bh, nq, c = q.shape
    nk = k.shape[1]
    tq = min(512, ((nq + 7) // 8) * 8)
    nq_pad = pl.cdiv(nq, tq) * tq
    if nq_pad != nq:
        q = jnp.pad(q, ((0, 0), (0, nq_pad - nq), (0, 0)))
    grid = (bh, nq_pad // tq)
    flops = 4 * bh * nq_pad * nk * c
    bytes_accessed = 4 * bh * (2 * nq_pad * c + 2 * nk * c)
    out = pl.pallas_call(
        _attn_kernel,
        out_shape=jax.ShapeDtypeStruct((bh, nq_pad, c), F32),
        grid=grid,
        in_specs=[
            pl.BlockSpec((None, tq, c), lambda b, i: (b, i, 0)),
            pl.BlockSpec((None, nk, c), lambda b, i: (b, 0, 0)),
            pl.BlockSpec((None, nk, c), lambda b, i: (b, 0, 0)),
        ],
        out_specs=pl.BlockSpec((None, tq, c), lambda b, i: (b, i, 0)),
        compiler_params=_cparams(2),
        cost_estimate=pl.CostEstimate(flops=flops, transcendentals=bh * nq_pad * nk,
                                      bytes_accessed=bytes_accessed),
    )(q, k, v)
    return out[:, :nq] if nq_pad != nq else out


# ----------------------------- kernel 3a: to_out + dwconv branch + combine + residual ---------

def _make_combine_kernel(D, H, W):
    def kernel(attn_ref, x_ref, mask_ref,
               ow_ref, ob_ref, dww_ref, dwb_ref,
               wa_ref, wc_ref, cb_ref, o_ref):
        x = x_ref[...]              # (N, C)      original input, channels-last flattened
        masks = mask_ref[...]       # (N, 27)     per-tap dwconv edge validity masks

        # DPSA3d.to_out (1x1x1 conv, bias) — bf16 MXU, f32 acc
        attn_out = (jnp.dot(attn_ref[...].astype(BF16), ow_ref[...],
                            preferred_element_type=jnp.float32) + ob_ref[...])

        # depthwise 3x3x3 conv branch on the original input (f32 elementwise)
        conv = _dwconv3x3x3_flat(x, dww_ref[...], dwb_ref[...], masks, D, H, W)

        # concat + combine 1x1x1 conv + residual (concat folded into two matmuls)
        comb = (jnp.dot(attn_out.astype(BF16), wa_ref[...],
                        preferred_element_type=jnp.float32)
                + jnp.dot(conv.astype(BF16), wc_ref[...],
                          preferred_element_type=jnp.float32)
                + cb_ref[...] + x)
        o_ref[...] = comb

    return kernel


def hpb_combine(attn_feat, x_flat, p, D, H, W):
    B, N, inner = attn_feat.shape
    C = x_flat.shape[-1]
    masks = _conv_tap_masks(D, H, W)
    wa = p["comb_w"][:C].astype(BF16)
    wc = p["comb_w"][C:].astype(BF16)

    def rep(shape):
        return pl.BlockSpec(shape, lambda b: (0,) * len(shape))

    flops = 2 * B * N * (inner * C + 2 * C * C) + 110 * B * N * C
    bytes_accessed = 4 * B * N * (inner + 2 * C) + 2 * (inner * C + 2 * C * C)
    return pl.pallas_call(
        _make_combine_kernel(D, H, W),
        out_shape=jax.ShapeDtypeStruct((B, N, C), F32),
        grid=(B,),
        in_specs=[
            pl.BlockSpec((None, N, inner), lambda b: (b, 0, 0)),
            pl.BlockSpec((None, N, C), lambda b: (b, 0, 0)),
            rep((N, 27)),
            rep((inner, C)), rep((1, C)),            # to_out (bf16 weight)
            rep((27, C)), rep((1, C)),               # dwconv branch (f32, VPU)
            rep((C, C)), rep((C, C)), rep((1, C)),   # combine conv (split on concat)
        ],
        out_specs=pl.BlockSpec((None, N, C), lambda b: (b, 0, 0)),
        compiler_params=_cparams(1),
        cost_estimate=pl.CostEstimate(flops=flops, transcendentals=0,
                                      bytes_accessed=bytes_accessed),
    )(attn_feat, x_flat, masks,
      p["out_w"].astype(BF16), p["out_b"].reshape(1, C),
      p["dw_w"], p["dw_b"].reshape(1, C),
      wa, wc, p["comb_b"].reshape(1, C))


# ----------------------------- kernel 3b: FFN (split out for v7x VMEM headroom) ---------------

def _make_ffn_kernel(D, H, W):
    def kernel(y_ref, mask_ref,
               f1w_ref, f1b_ref, fdw_ref, fdb_ref, f2w_ref, f2b_ref, o_ref):
        y = y_ref[...]
        masks = mask_ref[...]
        # ff1 -> IN -> GELU -> Residual(dwconv3 -> IN -> GELU) -> ff2 -> IN
        h1 = (jnp.dot(y.astype(BF16), f1w_ref[...],
                      preferred_element_type=jnp.float32) + f1b_ref[...])
        h1 = _gelu_exact(_instance_norm_cols(h1))
        h2 = _dwconv3x3x3_flat(h1, fdw_ref[...], fdb_ref[...], masks, D, H, W)
        h2 = _gelu_exact(_instance_norm_cols(h2))
        h3 = h2 + h1
        h4 = (jnp.dot(h3.astype(BF16), f2w_ref[...],
                      preferred_element_type=jnp.float32) + f2b_ref[...])
        o_ref[...] = _instance_norm_cols(h4)

    return kernel


def hpb_ffn(y_flat, p, D, H, W):
    B, N, C = y_flat.shape
    ffC = p["ff1_w"].shape[1]
    masks = _conv_tap_masks(D, H, W)

    def rep(shape):
        return pl.BlockSpec(shape, lambda b: (0,) * len(shape))

    flops = 2 * B * N * (2 * C * ffC) + 110 * B * N * ffC
    bytes_accessed = 4 * B * N * (2 * C) + 2 * (2 * C * ffC) + 4 * 27 * ffC
    return pl.pallas_call(
        _make_ffn_kernel(D, H, W),
        out_shape=jax.ShapeDtypeStruct((B, N, C), F32),
        grid=(B,),
        in_specs=[
            pl.BlockSpec((None, N, C), lambda b: (b, 0, 0)),
            rep((N, 27)),
            rep((C, ffC)), rep((1, ffC)),            # ff1 (bf16 weight)
            rep((27, ffC)), rep((1, ffC)),           # ff depthwise conv (f32, VPU)
            rep((ffC, C)), rep((1, C)),              # ff2 (bf16 weight)
        ],
        out_specs=pl.BlockSpec((None, N, C), lambda b: (b, 0, 0)),
        compiler_params=_cparams(1),
        cost_estimate=pl.CostEstimate(flops=flops, transcendentals=4 * B * N * ffC,
                                      bytes_accessed=bytes_accessed),
    )(y_flat, masks,
      p["ff1_w"].astype(BF16), p["ff1_b"].reshape(1, ffC),
      p["ffdw_w"], p["ffdw_b"].reshape(1, ffC),
      p["ff2_w"].astype(BF16), p["ff2_b"].reshape(1, C))


# ----------------------------- DPSA3d attention features -----------------------------

def dpsa3d_attention_features(x_flat, p, heads, dim_head, B, D, H, W):
    """ChanLayerNorm + to_qkv (fused kernel), head fold, L2 norm, dual top-k pruning
    (JAX glue), cosine-sim attention (kernel).  Returns the attention output laid out
    channels-last as (B, D*H*W, heads*dim_head), i.e. right before DPSA3d.to_out
    (which is fused into the combine kernel)."""
    N = D * H * W
    C = x_flat.shape[-1]
    inner = heads * dim_head
    dk = int(math.ceil(D ** 0.5))
    hk = int(math.ceil(H ** 0.5))
    wk = int(math.ceil(W ** 0.5))

    qkv = ln_qkv(x_flat.reshape(B * N, C), p["norm_g"], p["norm_b"],
                 p["qkv_w"].astype(BF16))
    qkv = qkv.reshape(B, D, H, W, 3, heads, dim_head)

    def fold(t):  # 'b (i c) d h w -> (b i) c d h w', kept channels-last
        t = jnp.transpose(t, (0, 4, 1, 2, 3, 5))
        return t.reshape(B * heads, D, H, W, dim_head)

    q = fold(qkv[..., 0, :, :])
    k = fold(qkv[..., 1, :, :])
    v = fold(qkv[..., 2, :, :])

    def l2norm(t):  # F.normalize over the channel dim, eps=1e-12 (x / max(||x||, eps))
        ss = jnp.sum(t * t, axis=-1, keepdims=True)
        return t * jax.lax.rsqrt(jnp.maximum(ss, 1e-24))

    q = l2norm(q)
    k = l2norm(k)
    q_abs = jnp.abs(q)

    # TODO(synk): dual top-k pruning + gather are data-dependent; kept as plain JAX
    # glue (no clean static-BlockSpec Pallas equivalent at this size).
    if dk < D:
        qp = q_abs.sum(axis=(2, 3))
        kp = jnp.abs(k).sum(axis=(2, 3))
        idx = jax.lax.top_k((qp * kp).sum(axis=-1), dk)[1]
        k = jnp.take_along_axis(k, idx[:, :, None, None, None], axis=1)
        v = jnp.take_along_axis(v, idx[:, :, None, None, None], axis=1)
    if hk < H:
        qp = q_abs.sum(axis=(1, 3))
        kp = jnp.abs(k).sum(axis=(1, 3))
        idx = jax.lax.top_k((qp * kp).sum(axis=-1), hk)[1]
        k = jnp.take_along_axis(k, idx[:, None, :, None, None], axis=2)
        v = jnp.take_along_axis(v, idx[:, None, :, None, None], axis=2)
    if wk < W:
        qp = q_abs.sum(axis=(1, 2))
        kp = jnp.abs(k).sum(axis=(1, 2))
        idx = jax.lax.top_k((qp * kp).sum(axis=-1), wk)[1]
        k = jnp.take_along_axis(k, idx[:, None, None, :, None], axis=3)
        v = jnp.take_along_axis(v, idx[:, None, None, :, None], axis=3)

    BH = B * heads
    Nk = k.shape[1] * k.shape[2] * k.shape[3]
    of = attention(q.reshape(BH, N, dim_head),
                   k.reshape(BH, Nk, dim_head),
                   v.reshape(BH, Nk, dim_head))        # (BH, N, dim_head)

    # Reproduce PyTorch's raw `.view` reinterpretation (bH, n, c) -> (bH, c, D, H, W),
    # then lay the result out channels-last per batch for the fused to_out matmul.
    out = of.reshape(B, heads, dim_head, D, H, W)
    out = jnp.transpose(out, (0, 3, 4, 5, 1, 2)).reshape(B, N, inner)
    return out


# ----------------------------- HPB3d forward -----------------------------

def hpb3d_forward(x_ncdhw, p, heads, dim_head, ff_mult):
    del ff_mult  # implied by the parameter shapes
    B, C, D, H, W = x_ncdhw.shape
    N = D * H * W
    # NOTE(perf): production channel dims (C, heads*dim_head, ff inner) should be
    # lane-dense (>=128) for full MXU/VPU lane utilisation and unmasked stores.
    x_flat = jnp.transpose(x_ncdhw, (0, 2, 3, 4, 1)).astype(F32).reshape(B, N, C)

    attn_feat = dpsa3d_attention_features(x_flat, p, heads, dim_head, B, D, H, W)
    comb = hpb_combine(attn_feat, x_flat, p, D, H, W)   # (B, N, C)
    out_flat = hpb_ffn(comb, p, D, H, W)                # (B, N, C)

    out = out_flat.reshape(B, D, H, W, C)
    return jnp.transpose(out, (0, 4, 1, 2, 3))          # back to (B, C, D, H, W)


# ----------------------------- parameters & main -----------------------------

def make_params(dim, heads, dim_head, ff_mult, key):
    inner = heads * dim_head
    ffC = dim * ff_mult
    ks = jax.random.split(key, 13)

    def nrm(k, shape, scale=0.1):
        return scale * jax.random.normal(k, shape, F32)

    return {
        # DPSA3d
        "norm_g": jnp.ones((dim,), F32),
        "norm_b": jnp.zeros((dim,), F32),
        "qkv_w": nrm(ks[0], (dim, 3 * inner)),        # to_qkv (no bias)
        "out_w": nrm(ks[1], (inner, dim)),            # to_out
        "out_b": nrm(ks[2], (dim,)),
        # depthwise conv branch (weight flattened to (27, C), tap = kd*9 + kh*3 + kw)
        "dw_w": nrm(ks[3], (27, dim)),
        "dw_b": nrm(ks[4], (dim,)),
        # combine 1x1x1 conv (rows 0..dim-1 -> attn channels, dim..2dim-1 -> conv channels)
        "comb_w": nrm(ks[5], (2 * dim, dim)),
        "comb_b": nrm(ks[6], (dim,)),
        # FFN
        "ff1_w": nrm(ks[7], (dim, ffC)),
        "ff1_b": nrm(ks[8], (ffC,)),
        "ffdw_w": nrm(ks[9], (27, ffC)),
        "ffdw_b": nrm(ks[10], (ffC,)),
        "ff2_w": nrm(ks[11], (ffC, dim)),
        "ff2_b": nrm(ks[12], (dim,)),
    }


if __name__ == "__main__":
    B, dim, D, H, W = 2, 8, 4, 4, 4
    heads, dim_head, ff_mult = 2, 8, 2

    key = jax.random.PRNGKey(0)
    kp, kx = jax.random.split(key)
    params = make_params(dim, heads, dim_head, ff_mult, kp)
    x = jax.random.normal(kx, (B, dim, D, H, W), F32)

    fwd = jax.jit(functools.partial(hpb3d_forward, heads=heads,
                                    dim_head=dim_head, ff_mult=ff_mult))
    out = fwd(x, params)
    out = jax.block_until_ready(out)

    assert out.shape == (B, dim, D, H, W), out.shape
    assert bool(jnp.all(jnp.isfinite(out)))
    print("KERNEL_OK")
</pallas_src>

<mosaic_0001>
module attributes {stable_mosaic.version = 11 : i64} {
  func.func @_ln_qkv_kernel(%arg0: i32, %arg1: memref<128x8xf32, #tpu.memory_space<vmem>>, %arg2: memref<1x8xf32, #tpu.memory_space<vmem>>, %arg3: memref<1x8xf32, #tpu.memory_space<vmem>>, %arg4: memref<8x48xbf16, #tpu.memory_space<vmem>>, %arg5: memref<128x48xf32, #tpu.memory_space<vmem>>) attributes {dimension_semantics = [#tpu.dimension_semantics<parallel>], iteration_bounds = array<i64: 1>, scalar_prefetch = 0 : i64, scratch_operands = 0 : i64, tpu.core_type = #tpu.core_type<tc>, window_params = [{transform_indices = @transform_0, window_bounds = array<i64: 128, 8>}, {pipeline_mode = #tpu.pipeline_mode<synchronous>, transform_indices = @transform_1, window_bounds = array<i64: 1, 8>}, {pipeline_mode = #tpu.pipeline_mode<synchronous>, transform_indices = @transform_2, window_bounds = array<i64: 1, 8>}, {pipeline_mode = #tpu.pipeline_mode<synchronous>, transform_indices = @transform_3, window_bounds = array<i64: 8, 48>}, {transform_indices = @transform_4, window_bounds = array<i64: 128, 48>}]} {
    %c0 = arith.constant 0 : index
    %c0_0 = arith.constant 0 : index
    %0 = vector.load %arg1[%c0, %c0_0] : memref<128x8xf32, #tpu.memory_space<vmem>>, vector<128x8xf32>
    %cst = arith.constant dense<0.000000e+00> : vector<128xf32>
    %1 = vector.multi_reduction <add>, %0, %cst [1] : vector<128x8xf32> to vector<128xf32>
    %2 = vector.shape_cast %1 : vector<128xf32> to vector<128x1xf32>
    %cst_1 = arith.constant 8.000000e+00 : f32
    %3 = vector.broadcast %cst_1 : f32 to vector<128x1xf32>
    %4 = arith.divf %2, %3 : vector<128x1xf32>
    %5 = arith.mulf %0, %0 : vector<128x8xf32>
    %cst_2 = arith.constant dense<0.000000e+00> : vector<128xf32>
    %6 = vector.multi_reduction <add>, %5, %cst_2 [1] : vector<128x8xf32> to vector<128xf32>
    %7 = vector.shape_cast %6 : vector<128xf32> to vector<128x1xf32>
    %cst_3 = arith.constant 8.000000e+00 : f32
    %8 = vector.broadcast %cst_3 : f32 to vector<128x1xf32>
    %9 = arith.divf %7, %8 : vector<128x1xf32>
    %10 = arith.mulf %4, %4 : vector<128x1xf32>
    %11 = arith.subf %9, %10 : vector<128x1xf32>
    %cst_4 = arith.constant 0.000000e+00 : f32
    %12 = vector.broadcast %cst_4 : f32 to vector<128x1xf32>
    %13 = arith.maximumf %11, %12 : vector<128x1xf32>
    %14 = vector.broadcast %4 : vector<128x1xf32> to vector<128x8xf32>
    %15 = arith.subf %0, %14 : vector<128x8xf32>
    %cst_5 = arith.constant 9.99999974E-6 : f32
    %16 = vector.broadcast %cst_5 : f32 to vector<128x1xf32>
    %17 = arith.addf %13, %16 : vector<128x1xf32>
    %18 = math.rsqrt %17 : vector<128x1xf32>
    %19 = vector.broadcast %18 : vector<128x1xf32> to vector<128x8xf32>
    %20 = arith.mulf %15, %19 : vector<128x8xf32>
    %c0_6 = arith.constant 0 : index
    %c0_7 = arith.constant 0 : index
    %21 = vector.load %arg2[%c0_6, %c0_7] : memref<1x8xf32, #tpu.memory_space<vmem>>, vector<1x8xf32>
    %22 = vector.broadcast %21 : vector<1x8xf32> to vector<128x8xf32>
    %23 = arith.mulf %20, %22 : vector<128x8xf32>
    %c0_8 = arith.constant 0 : index
    %c0_9 = arith.constant 0 : index
    %24 = vector.load %arg3[%c0_8, %c0_9] : memref<1x8xf32, #tpu.memory_space<vmem>>, vector<1x8xf32>
    %25 = vector.broadcast %24 : vector<1x8xf32> to vector<128x8xf32>
    %26 = arith.addf %23, %25 : vector<128x8xf32>
    %27 = arith.truncf %26 : vector<128x8xf32> to vector<128x8xbf16>
    %c0_10 = arith.constant 0 : index
    %c0_11 = arith.constant 0 : index
    %28 = vector.load %arg4[%c0_10, %c0_11] : memref<8x48xbf16, #tpu.memory_space<vmem>>, vector<8x48xbf16>
    %cst_12 = arith.constant dense<0.000000e+00> : vector<128x48xf32>
    %29 = tpu.matmul %27, %28, %cst_12 {dimension_numbers = #tpu.dot_dimension_numbers<[1], [0], [0], [1], [0, 0, 1, 1], [], []>} : vector<128x8xbf16>, vector<8x48xbf16>, vector<128x48xf32> -> vector<128x48xf32>
    %c0_13 = arith.constant 0 : index
    %c0_14 = arith.constant 0 : index
    %30 = vector.load %arg5[%c0_13, %c0_14] : memref<128x48xf32, #tpu.memory_space<vmem>>, vector<128x48xf32>
    tpu.vector_store %arg5[%c0_13, %c0_14], %29 {strides = array<i32>} : memref<128x48xf32, #tpu.memory_space<vmem>>, vector<128x48xf32>,
    return
  }
  func.func @transform_0(%arg0: i32) -> (i32, i32) {
    %c0_i32 = arith.constant 0 : i32
    %c0_i32_0 = arith.constant 0 : i32
    return %arg0, %c0_i32 : i32, i32
  }
  func.func @transform_1(%arg0: i32) -> (i32, i32) {
    %c0_i32 = arith.constant 0 : i32
    %c0_i32_0 = arith.constant 0 : i32
    %c0_i32_1 = arith.constant 0 : i32
    return %c0_i32, %c0_i32_0 : i32, i32
  }
  func.func @transform_2(%arg0: i32) -> (i32, i32) {
    %c0_i32 = arith.constant 0 : i32
    %c0_i32_0 = arith.constant 0 : i32
    %c0_i32_1 = arith.constant 0 : i32
    return %c0_i32, %c0_i32_0 : i32, i32
  }
  func.func @transform_3(%arg0: i32) -> (i32, i32) {
    %c0_i32 = arith.constant 0 : i32
    %c0_i32_0 = arith.constant 0 : i32
    %c0_i32_1 = arith.constant 0 : i32
    return %c0_i32, %c0_i32_0 : i32, i32
  }
  func.func @transform_4(%arg0: i32) -> (i32, i32) {
    %c0_i32 = arith.constant 0 : i32
    %c0_i32_0 = arith.constant 0 : i32
    return %arg0, %c0_i32 : i32, i32
  }
}

module attributes {stable_mosaic.version = 11 : i64} {
  func.func @_attn_kernel(%arg0: i32, %arg1: i32, %arg2: memref<1x64x8xf32, #tpu.memory_space<vmem>>, %arg3: memref<1x8x8xf32, #tpu.memory_space<vmem>>, %arg4: memref<1x8x8xf32, #tpu.memory_space<vmem>>, %arg5: memref<1x64x8xf32, #tpu.memory_space<vmem>>) attributes {dimension_semantics = [#tpu.dimension_semantics<parallel>, #tpu.dimension_semantics<parallel>], iteration_bounds = array<i64: 4, 1>, scalar_prefetch = 0 : i64, scratch_operands = 0 : i64, tpu.core_type = #tpu.core_type<tc>, window_params = [{transform_indices = @transform_0, window_bounds = array<i64: 1, 64, 8>}, {transform_indices = @transform_1, window_bounds = array<i64: 1, 8, 8>}, {transform_indices = @transform_2, window_bounds = array<i64: 1, 8, 8>}, {transform_indices = @transform_3, window_bounds = array<i64: 1, 64, 8>}]} {
    %c0 = arith.constant 0 : index
    %c0_0 = arith.constant 0 : index
    %c0_1 = arith.constant 0 : index
    %0 = vector.load %arg2[%c0, %c0_0, %c0_1] : memref<1x64x8xf32, #tpu.memory_space<vmem>>, vector<1x64x8xf32>
    %1 = vector.shape_cast %0 : vector<1x64x8xf32> to vector<64x8xf32>
    %2 = arith.truncf %1 : vector<64x8xf32> to vector<64x8xbf16>
    %c0_2 = arith.constant 0 : index
    %c0_3 = arith.constant 0 : index
    %c0_4 = arith.constant 0 : index
    %3 = vector.load %arg3[%c0_2, %c0_3, %c0_4] : memref<1x8x8xf32, #tpu.memory_space<vmem>>, vector<1x8x8xf32>
    %4 = vector.shape_cast %3 : vector<1x8x8xf32> to vector<8x8xf32>
    %5 = arith.truncf %4 : vector<8x8xf32> to vector<8x8xbf16>
    %cst = arith.constant dense<0.000000e+00> : vector<64x8xf32>
    %6 = tpu.matmul %2, %5, %cst {dimension_numbers = #tpu.dot_dimension_numbers<[1], [1], [0], [0], [0, 0, 1, 0], [], []>} : vector<64x8xbf16>, vector<8x8xbf16>, vector<64x8xf32> -> vector<64x8xf32>
    %cst_5 = arith.constant dense<0xFF800000> : vector<64xf32>
    %7 = vector.multi_reduction <maximumf>, %6, %cst_5 [1] : vector<64x8xf32> to vector<64xf32>
    %8 = vector.shape_cast %7 : vector<64xf32> to vector<64x1xf32>
    %9 = vector.broadcast %8 : vector<64x1xf32> to vector<64x8xf32>
    %10 = arith.subf %6, %9 : vector<64x8xf32>
    %11 = math.exp %10 : vector<64x8xf32>
    %cst_6 = arith.constant dense<0.000000e+00> : vector<64xf32>
    %12 = vector.multi_reduction <add>, %11, %cst_6 [1] : vector<64x8xf32> to vector<64xf32>
    %13 = vector.shape_cast %12 : vector<64xf32> to vector<64x1xf32>
    %14 = tpu.reciprocal %13 {approx = true} : vector<64x1xf32> -> vector<64x1xf32>
    %15 = vector.broadcast %14 : vector<64x1xf32> to vector<64x8xf32>
    %16 = arith.mulf %11, %15 : vector<64x8xf32>
    %17 = arith.truncf %16 : vector<64x8xf32> to vector<64x8xbf16>
    %c0_7 = arith.constant 0 : index
    %c0_8 = arith.constant 0 : index
    %c0_9 = arith.constant 0 : index
    %18 = vector.load %arg4[%c0_7, %c0_8, %c0_9] : memref<1x8x8xf32, #tpu.memory_space<vmem>>, vector<1x8x8xf32>
    %19 = vector.shape_cast %18 : vector<1x8x8xf32> to vector<8x8xf32>
    %20 = arith.truncf %19 : vector<8x8xf32> to vector<8x8xbf16>
    %cst_10 = arith.constant dense<0.000000e+00> : vector<64x8xf32>
    %21 = tpu.matmul %17, %20, %cst_10 {dimension_numbers = #tpu.dot_dimension_numbers<[1], [0], [0], [1], [0, 0, 1, 1], [], []>} : vector<64x8xbf16>, vector<8x8xbf16>, vector<64x8xf32> -> vector<64x8xf32>
    %c0_11 = arith.constant 0 : index
    %c0_12 = arith.constant 0 : index
    %c0_13 = arith.constant 0 : index
    %22 = vector.load %arg5[%c0_11, %c0_12, %c0_13] : memref<1x64x8xf32, #tpu.memory_space<vmem>>, vector<1x64x8xf32>
    %23 = vector.shape_cast %22 : vector<1x64x8xf32> to vector<64x8xf32>
    %24 = vector.shape_cast %21 : vector<64x8xf32> to vector<1x64x8xf32>
    tpu.vector_store %arg5[%c0_11, %c0_12, %c0_13], %24 {strides = array<i32>} : memref<1x64x8xf32, #tpu.memory_space<vmem>>, vector<1x64x8xf32>,
    return
  }
  func.func @transform_0(%arg0: i32, %arg1: i32) -> (i32, i32, i32) {
    %c0_i32 = arith.constant 0 : i32
    %c0_i32_0 = arith.constant 0 : i32
    return %arg0, %arg1, %c0_i32 : i32, i32, i32
  }
  func.func @transform_1(%arg0: i32, %arg1: i32) -> (i32, i32, i32) {
    %c0_i32 = arith.constant 0 : i32
    %c0_i32_0 = arith.constant 0 : i32
    %c0_i32_1 = arith.constant 0 : i32
    return %arg0, %c0_i32, %c0_i32_0 : i32, i32, i32
  }
  func.func @transform_2(%arg0: i32, %arg1: i32) -> (i32, i32, i32) {
    %c0_i32 = arith.constant 0 : i32
    %c0_i32_0 = arith.constant 0 : i32
    %c0_i32_1 = arith.constant 0 : i32
    return %arg0, %c0_i32, %c0_i32_0 : i32, i32, i32
  }
  func.func @transform_3(%arg0: i32, %arg1: i32) -> (i32, i32, i32) {
    %c0_i32 = arith.constant 0 : i32
    %c0_i32_0 = arith.constant 0 : i32
    return %arg0, %arg1, %c0_i32 : i32, i32, i32
  }
}

module attributes {stable_mosaic.version = 11 : i64} {
  func.func @kernel(%arg0: i32, %arg1: memref<1x64x8xf32, #tpu.memory_space<vmem>>, %arg2: memref<64x27xf32, #tpu.memory_space<vmem>>, %arg3: memref<8x16xbf16, #tpu.memory_space<vmem>>, %arg4: memref<1x16xf32, #tpu.memory_space<vmem>>, %arg5: memref<27x16xf32, #tpu.memory_space<vmem>>, %arg6: memref<1x16xf32, #tpu.memory_space<vmem>>, %arg7: memref<16x8xbf16, #tpu.memory_space<vmem>>, %arg8: memref<1x8xf32, #tpu.memory_space<vmem>>, %arg9: memref<1x64x8xf32, #tpu.memory_space<vmem>>) attributes {dimension_semantics = [#tpu.dimension_semantics<parallel>], iteration_bounds = array<i64: 2>, scalar_prefetch = 0 : i64, scratch_operands = 0 : i64, tpu.core_type = #tpu.core_type<tc>, window_params = [{transform_indices = @transform_0, window_bounds = array<i64: 1, 64, 8>}, {pipeline_mode = #tpu.pipeline_mode<synchronous>, transform_indices = @transform_1, window_bounds = array<i64: 64, 27>}, {pipeline_mode = #tpu.pipeline_mode<synchronous>, transform_indices = @transform_2, window_bounds = array<i64: 8, 16>}, {pipeline_mode = #tpu.pipeline_mode<synchronous>, transform_indices = @transform_3, window_bounds = array<i64: 1, 16>}, {pipeline_mode = #tpu.pipeline_mode<synchronous>, transform_indices = @transform_4, window_bounds = array<i64: 27, 16>}, {pipeline_mode = #tpu.pipeline_mode<synchronous>, transform_indices = @transform_5, window_bounds = array<i64: 1, 16>}, {pipeline_mode = #tpu.pipeline_mode<synchronous>, transform_indices = @transform_6, window_bounds = array<i64: 16, 8>}, {pipeline_mode = #tpu.pipeline_mode<synchronous>, transform_indices = @transform_7, window_bounds = array<i64: 1, 8>}, {transform_indices = @transform_8, window_bounds = array<i64: 1, 64, 8>}]} {
    %c0 = arith.constant 0 : index
    %c0_0 = arith.constant 0 : index
    %c0_1 = arith.constant 0 : index
    %0 = vector.load %arg1[%c0, %c0_0, %c0_1] : memref<1x64x8xf32, #tpu.memory_space<vmem>>, vector<1x64x8xf32>
    %1 = vector.shape_cast %0 : vector<1x64x8xf32> to vector<64x8xf32>
    %c0_2 = arith.constant 0 : index
    %c0_3 = arith.constant 0 : index
    %2 = vector.load %arg2[%c0_2, %c0_3] : memref<64x27xf32, #tpu.memory_space<vmem>>, vector<64x27xf32>
    %3 = arith.truncf %1 : vector<64x8xf32> to vector<64x8xbf16>
    %c0_4 = arith.constant 0 : index
    %c0_5 = arith.constant 0 : index
    %4 = vector.load %arg3[%c0_4, %c0_5] : memref<8x16xbf16, #tpu.memory_space<vmem>>, vector<8x16xbf16>
    %cst = arith.constant dense<0.000000e+00> : vector<64x16xf32>
    %5 = tpu.matmul %3, %4, %cst {dimension_numbers = #tpu.dot_dimension_numbers<[1], [0], [0], [1], [0, 0, 1, 1], [], []>} : vector<64x8xbf16>, vector<8x16xbf16>, vector<64x16xf32> -> vector<64x16xf32>
    %c0_6 = arith.constant 0 : index
    %c0_7 = arith.constant 0 : index
    %6 = vector.load %arg4[%c0_6, %c0_7] : memref<1x16xf32, #tpu.memory_space<vmem>>, vector<1x16xf32>
    %7 = vector.broadcast %6 : vector<1x16xf32> to vector<64x16xf32>
    %8 = arith.addf %5, %7 : vector<64x16xf32>
    %cst_8 = arith.constant dense<0.000000e+00> : vector<16xf32>
    %9 = vector.multi_reduction <add>, %8, %cst_8 [0] : vector<64x16xf32> to vector<16xf32>
    %10 = vector.shape_cast %9 : vector<16xf32> to vector<1x16xf32>
    %cst_9 = arith.constant 6.400000e+01 : f32
    %11 = vector.broadcast %cst_9 : f32 to vector<1x16xf32>
    %12 = arith.divf %10, %11 : vector<1x16xf32>
    %13 = arith.mulf %8, %8 : vector<64x16xf32>
    %cst_10 = arith.constant dense<0.000000e+00> : vector<16xf32>
    %14 = vector.multi_reduction <add>, %13, %cst_10 [0] : vector<64x16xf32> to vector<16xf32>
    %15 = vector.shape_cast %14 : vector<16xf32> to vector<1x16xf32>
    %cst_11 = arith.constant 6.400000e+01 : f32
    %16 = vector.broadcast %cst_11 : f32 to vector<1x16xf32>
    %17 = arith.divf %15, %16 : vector<1x16xf32>
    %18 = arith.mulf %12, %12 : vector<1x16xf32>
    %19 = arith.subf %17, %18 : vector<1x16xf32>
    %cst_12 = arith.constant 0.000000e+00 : f32
    %20 = vector.broadcast %cst_12 : f32 to vector<1x16xf32>
    %21 = arith.maximumf %19, %20 : vector<1x16xf32>
    %22 = vector.broadcast %12 : vector<1x16xf32> to vector<64x16xf32>
    %23 = arith.subf %8, %22 : vector<64x16xf32>
    %cst_13 = arith.constant 9.99999974E-6 : f32
    %24 = vector.broadcast %cst_13 : f32 to vector<1x16xf32>
    %25 = arith.addf %21, %24 : vector<1x16xf32>
    %26 = math.rsqrt %25 : vector<1x16xf32>
    %27 = vector.broadcast %26 : vector<1x16xf32> to vector<64x16xf32>
    %28 = arith.mulf %23, %27 : vector<64x16xf32>
    %cst_14 = arith.constant 5.000000e-01 : f32
    %29 = vector.broadcast %cst_14 : f32 to vector<64x16xf32>
    %30 = arith.mulf %29, %28 : vector<64x16xf32>
    %cst_15 = arith.constant 0.707106769 : f32
    %31 = vector.broadcast %cst_15 : f32 to vector<64x16xf32>
    %32 = arith.mulf %28, %31 : vector<64x16xf32>
    %33 = math.absf %32 : vector<64x16xf32>
    %cst_16 = arith.constant 0.327591091 : f32
    %34 = vector.broadcast %cst_16 : f32 to vector<64x16xf32>
    %35 = arith.mulf %34, %33 : vector<64x16xf32>
    %cst_17 = arith.constant 1.000000e+00 : f32
    %36 = vector.broadcast %cst_17 : f32 to vector<64x16xf32>
    %37 = arith.addf %36, %35 : vector<64x16xf32>
    %cst_18 = arith.constant 1.000000e+00 : f32
    %38 = vector.broadcast %cst_18 : f32 to vector<64x16xf32>
    %39 = arith.divf %38, %37 : vector<64x16xf32>
    %cst_19 = arith.constant 1.06140542 : f32
    %40 = vector.broadcast %cst_19 : f32 to vector<64x16xf32>
    %41 = arith.mulf %40, %39 : vector<64x16xf32>
    %cst_20 = arith.constant -1.45315206 : f32
    %42 = vector.broadcast %cst_20 : f32 to vector<64x16xf32>
    %43 = arith.addf %41, %42 : vector<64x16xf32>
    %44 = arith.mulf %43, %39 : vector<64x16xf32>
    %cst_21 = arith.constant 1.42141378 : f32
    %45 = vector.broadcast %cst_21 : f32 to vector<64x16xf32>
    %46 = arith.addf %44, %45 : vector<64x16xf32>
    %47 = arith.mulf %46, %39 : vector<64x16xf32>
    %cst_22 = arith.constant -0.284496725 : f32
    %48 = vector.broadcast %cst_22 : f32 to vector<64x16xf32>
    %49 = arith.addf %47, %48 : vector<64x16xf32>
    %50 = arith.mulf %49, %39 : vector<64x16xf32>
    %cst_23 = arith.constant 0.254829586 : f32
    %51 = vector.broadcast %cst_23 : f32 to vector<64x16xf32>
    %52 = arith.addf %50, %51 : vector<64x16xf32>
    %53 = arith.mulf %52, %39 : vector<64x16xf32>
    %cst_24 = arith.constant 0.000000e+00 : f32
    %54 = vector.broadcast %cst_24 : f32 to vector<64x16xf32>
    %55 = arith.subf %54, %33 : vector<64x16xf32>
    %56 = arith.mulf %55, %33 : vector<64x16xf32>
    %57 = math.exp %56 : vector<64x16xf32>
    %58 = arith.mulf %53, %57 : vector<64x16xf32>
    %cst_25 = arith.constant 1.000000e+00 : f32
    %59 = vector.broadcast %cst_25 : f32 to vector<64x16xf32>
    %60 = arith.subf %59, %58 : vector<64x16xf32>
    %cst_26 = arith.constant 0.000000e+00 : f32
    %61 = vector.broadcast %cst_26 : f32 to vector<64x16xf32>
    %62 = arith.cmpf oge, %32, %61 : vector<64x16xf32>
    %cst_27 = arith.constant 0.000000e+00 : f32
    %63 = vector.broadcast %cst_27 : f32 to vector<64x16xf32>
    %64 = arith.subf %63, %60 : vector<64x16xf32>
    %65 = arith.select %62, %60, %64 : vector<64x16xi1>, vector<64x16xf32>
    %cst_28 = arith.constant 1.000000e+00 : f32
    %66 = vector.broadcast %cst_28 : f32 to vector<64x16xf32>
    %67 = arith.addf %66, %65 : vector<64x16xf32>
    %68 = arith.mulf %30, %67 : vector<64x16xf32>
    %c0_29 = arith.constant 0 : index
    %c0_30 = arith.constant 0 : index
    %69 = vector.load %arg5[%c0_29, %c0_30] : memref<27x16xf32, #tpu.memory_space<vmem>>, vector<27x16xf32>
    %c0_31 = arith.constant 0 : index
    %c0_32 = arith.constant 0 : index
    %70 = vector.load %arg6[%c0_31, %c0_32] : memref<1x16xf32, #tpu.memory_space<vmem>>, vector<1x16xf32>
    %cst_33 = arith.constant 0.000000e+00 : f32
    %71 = vector.broadcast %cst_33 : f32 to vector<24x16xf32>
    %72 = tpu.concatenate %71, %68, %71 in 0 : vector<24x16xf32>, vector<64x16xf32>, vector<24x16xf32> -> vector<112x16xf32>
    %cst_34 = arith.constant 0.000000e+00 : f32
    %73 = vector.broadcast %cst_34 : f32 to vector<64x16xf32>
    %74 = vector.broadcast %70 : vector<1x16xf32> to vector<64x16xf32>
    %75 = arith.addf %73, %74 : vector<64x16xf32>
    %76 = vector.extract_strided_slice %72 {offsets = [3, 0], sizes = [64, 16], strides = [1, 1]} : vector<112x16xf32> to vector<64x16xf32>
    %77 = vector.extract_strided_slice %69 {offsets = [0, 0], sizes = [1, 16], strides = [1, 1]} : vector<27x16xf32> to vector<1x16xf32>
    %78 = vector.shape_cast %77 : vector<1x16xf32> to vector<16xf32>
    %79 = vector.shape_cast %78 : vector<16xf32> to vector<1x16xf32>
    %80 = vector.broadcast %79 : vector<1x16xf32> to vector<64x16xf32>
    %81 = arith.mulf %76, %80 : vector<64x16xf32>
    %82 = vector.extract_strided_slice %2 {offsets = [0, 0], sizes = [64, 1], strides = [1, 1]} : vector<64x27xf32> to vector<64x1xf32>
    %83 = vector.broadcast %82 : vector<64x1xf32> to vector<64x16xf32>
    %84 = arith.mulf %81, %83 : vector<64x16xf32>
    %85 = arith.addf %75, %84 : vector<64x16xf32>
    %86 = vector.extract_strided_slice %72 {offsets = [4, 0], sizes = [64, 16], strides = [1, 1]} : vector<112x16xf32> to vector<64x16xf32>
    %87 = vector.extract_strided_slice %69 {offsets = [1, 0], sizes = [1, 16], strides = [1, 1]} : vector<27x16xf32> to vector<1x16xf32>
    %88 = vector.shape_cast %87 : vector<1x16xf32> to vector<16xf32>
    %89 = vector.shape_cast %88 : vector<16xf32> to vector<1x16xf32>
    %90 = vector.broadcast %89 : vector<1x16xf32> to vector<64x16xf32>
    %91 = arith.mulf %86, %90 : vector<64x16xf32>
    %92 = vector.extract_strided_slice %2 {offsets = [0, 1], sizes = [64, 1], strides = [1, 1]} : vector<64x27xf32> to vector<64x1xf32>
    %93 = vector.broadcast %92 : vector<64x1xf32> to vector<64x16xf32>
    %94 = arith.mulf %91, %93 : vector<64x16xf32>
    %95 = arith.addf %85, %94 : vector<64x16xf32>
    %96 = vector.extract_strided_slice %72 {offsets = [5, 0], sizes = [64, 16], strides = [1, 1]} : vector<112x16xf32> to vector<64x16xf32>
    %97 = vector.extract_strided_slice %69 {offsets = [2, 0], sizes = [1, 16], strides = [1, 1]} : vector<27x16xf32> to vector<1x16xf32>
    %98 = vector.shape_cast %97 : vector<1x16xf32> to vector<16xf32>
    %99 = vector.shape_cast %98 : vector<16xf32> to vector<1x16xf32>
    %100 = vector.broadcast %99 : vector<1x16xf32> to vector<64x16xf32>
    %101 = arith.mulf %96, %100 : vector<64x16xf32>
    %102 = vector.extract_strided_slice %2 {offsets = [0, 2], sizes = [64, 1], strides = [1, 1]} : vector<64x27xf32> to vector<64x1xf32>
    %103 = vector.broadcast %102 : vector<64x1xf32> to vector<64x16xf32>
    %104 = arith.mulf %101, %103 : vector<64x16xf32>
    %105 = arith.addf %95, %104 : vector<64x16xf32>
    %106 = vector.extract_strided_slice %72 {offsets = [7, 0], sizes = [64, 16], strides = [1, 1]} : vector<112x16xf32> to vector<64x16xf32>
    %107 = vector.extract_strided_slice %69 {offsets = [3, 0], sizes = [1, 16], strides = [1, 1]} : vector<27x16xf32> to vector<1x16xf32>
    %108 = vector.shape_cast %107 : vector<1x16xf32> to vector<16xf32>
    %109 = vector.shape_cast %108 : vector<16xf32> to vector<1x16xf32>
    %110 = vector.broadcast %109 : vector<1x16xf32> to vector<64x16xf32>
    %111 = arith.mulf %106, %110 : vector<64x16xf32>
    %112 = vector.extract_strided_slice %2 {offsets = [0, 3], sizes = [64, 1], strides = [1, 1]} : vector<64x27xf32> to vector<64x1xf32>
    %113 = vector.broadcast %112 : vector<64x1xf32> to vector<64x16xf32>
    %114 = arith.mulf %111, %113 : vector<64x16xf32>
    %115 = arith.addf %105, %114 : vector<64x16xf32>
    %116 = vector.extract_strided_slice %72 {offsets = [8, 0], sizes = [64, 16], strides = [1, 1]} : vector<112x16xf32> to vector<64x16xf32>
    %117 = vector.extract_strided_slice %69 {offsets = [4, 0], sizes = [1, 16], strides = [1, 1]} : vector<27x16xf32> to vector<1x16xf32>
    %118 = vector.shape_cast %117 : vector<1x16xf32> to vector<16xf32>
    %119 = vector.shape_cast %118 : vector<16xf32> to vector<1x16xf32>
    %120 = vector.broadcast %119 : vector<1x16xf32> to vector<64x16xf32>
    %121 = arith.mulf %116, %120 : vector<64x16xf32>
    %122 = vector.extract_strided_slice %2 {offsets = [0, 4], sizes = [64, 1], strides = [1, 1]} : vector<64x27xf32> to vector<64x1xf32>
    %123 = vector.broadcast %122 : vector<64x1xf32> to vector<64x16xf32>
    %124 = arith.mulf %121, %123 : vector<64x16xf32>
    %125 = arith.addf %115, %124 : vector<64x16xf32>
    %126 = vector.extract_strided_slice %72 {offsets = [9, 0], sizes = [64, 16], strides = [1, 1]} : vector<112x16xf32> to vector<64x16xf32>
    %127 = vector.extract_strided_slice %69 {offsets = [5, 0], sizes = [1, 16], strides = [1, 1]} : vector<27x16xf32> to vector<1x16xf32>
    %128 = vector.shape_cast %127 : vector<1x16xf32> to vector<16xf32>
    %129 = vector.shape_cast %128 : vector<16xf32> to vector<1x16xf32>
    %130 = vector.broadcast %129 : vector<1x16xf32> to vector<64x16xf32>
    %131 = arith.mulf %126, %130 : vector<64x16xf32>
    %132 = vector.extract_strided_slice %2 {offsets = [0, 5], sizes = [64, 1], strides = [1, 1]} : vector<64x27xf32> to vector<64x1xf32>
    %133 = vector.broadcast %132 : vector<64x1xf32> to vector<64x16xf32>
    %134 = arith.mulf %131, %133 : vector<64x16xf32>
    %135 = arith.addf %125, %134 : vector<64x16xf32>
    %136 = vector.extract_strided_slice %72 {offsets = [11, 0], sizes = [64, 16], strides = [1, 1]} : vector<112x16xf32> to vector<64x16xf32>
    %137 = vector.extract_strided_slice %69 {offsets = [6, 0], sizes = [1, 16], strides = [1, 1]} : vector<27x16xf32> to vector<1x16xf32>
    %138 = vector.shape_cast %137 : vector<1x16xf32> to vector<16xf32>
    %139 = vector.shape_cast %138 : vector<16xf32> to vector<1x16xf32>
    %140 = vector.broadcast %139 : vector<1x16xf32> to vector<64x16xf32>
    %141 = arith.mulf %136, %140 : vector<64x16xf32>
    %142 = vector.extract_strided_slice %2 {offsets = [0, 6], sizes = [64, 1], strides = [1, 1]} : vector<64x27xf32> to vector<64x1xf32>
    %143 = vector.broadcast %142 : vector<64x1xf32> to vector<64x16xf32>
    %144 = arith.mulf %141, %143 : vector<64x16xf32>
    %145 = arith.addf %135, %144 : vector<64x16xf32>
    %146 = vector.extract_strided_slice %72 {offsets = [12, 0], sizes = [64, 16], strides = [1, 1]} : vector<112x16xf32> to vector<64x16xf32>
    %147 = vector.extract_strided_slice %69 {offsets = [7, 0], sizes = [1, 16], strides = [1, 1]} : vector<27x16xf32> to vector<1x16xf32>
    %148 = vector.shape_cast %147 : vector<1x16xf32> to vector<16xf32>
    %149 = vector.shape_cast %148 : vector<16xf32> to vector<1x16xf32>
    %150 = vector.broadcast %149 : vector<1x16xf32> to vector<64x16xf32>
    %151 = arith.mulf %146, %150 : vector<64x16xf32>
    %152 = vector.extract_strided_slice %2 {offsets = [0, 7], sizes = [64, 1], strides = [1, 1]} : vector<64x27xf32> to vector<64x1xf32>
    %153 = vector.broadcast %152 : vector<64x1xf32> to vector<64x16xf32>
    %154 = arith.mulf %151, %153 : vector<64x16xf32>
    %155 = arith.addf %145, %154 : vector<64x16xf32>
    %156 = vector.extract_strided_slice %72 {offsets = [13, 0], sizes = [64, 16], strides = [1, 1]} : vector<112x16xf32> to vector<64x16xf32>
    %157 = vector.extract_strided_slice %69 {offsets = [8, 0], sizes = [1, 16], strides = [1, 1]} : vector<27x16xf32> to vector<1x16xf32>
    %158 = vector.shape_cast %157 : vector<1x16xf32> to vector<16xf32>
    %159 = vector.shape_cast %158 : vector<16xf32> to vector<1x16xf32>
    %160 = vector.broadcast %159 : vector<1x16xf32> to vector<64x16xf32>
    %161 = arith.mulf %156, %160 : vector<64x16xf32>
    %162 = vector.extract_strided_slice %2 {offsets = [0, 8], sizes = [64, 1], strides = [1, 1]} : vector<64x27xf32> to vector<64x1xf32>
    %163 = vector.broadcast %162 : vector<64x1xf32> to vector<64x16xf32>
    %164 = arith.mulf %161, %163 : vector<64x16xf32>
    %165 = arith.addf %155, %164 : vector<64x16xf32>
    %166 = vector.extract_strided_slice %72 {offsets = [19, 0], sizes = [64, 16], strides = [1, 1]} : vector<112x16xf32> to vector<64x16xf32>
    %167 = vector.extract_strided_slice %69 {offsets = [9, 0], sizes = [1, 16], strides = [1, 1]} : vector<27x16xf32> to vector<1x16xf32>
    %168 = vector.shape_cast %167 : vector<1x16xf32> to vector<16xf32>
    %169 = vector.shape_cast %168 : vector<16xf32> to vector<1x16xf32>
    %170 = vector.broadcast %169 : vector<1x16xf32> to vector<64x16xf32>
    %171 = arith.mulf %166, %170 : vector<64x16xf32>
    %172 = vector.extract_strided_slice %2 {offsets = [0, 9], sizes = [64, 1], strides = [1, 1]} : vector<64x27xf32> to vector<64x1xf32>
    %173 = vector.broadcast %172 : vector<64x1xf32> to vector<64x16xf32>
    %174 = arith.mulf %171, %173 : vector<64x16xf32>
    %175 = arith.addf %165, %174 : vector<64x16xf32>
    %176 = vector.extract_strided_slice %72 {offsets = [20, 0], sizes = [64, 16], strides = [1, 1]} : vector<112x16xf32> to vector<64x16xf32>
    %177 = vector.extract_strided_slice %69 {offsets = [10, 0], sizes = [1, 16], strides = [1, 1]} : vector<27x16xf32> to vector<1x16xf32>
    %178 = vector.shape_cast %177 : vector<1x16xf32> to vector<16xf32>
    %179 = vector.shape_cast %178 : vector<16xf32> to vector<1x16xf32>
    %180 = vector.broadcast %179 : vector<1x16xf32> to vector<64x16xf32>
    %181 = arith.mulf %176, %180 : vector<64x16xf32>
    %182 = vector.extract_strided_slice %2 {offsets = [0, 10], sizes = [64, 1], strides = [1, 1]} : vector<64x27xf32> to vector<64x1xf32>
    %183 = vector.broadcast %182 : vector<64x1xf32> to vector<64x16xf32>
    %184 = arith.mulf %181, %183 : vector<64x16xf32>
    %185 = arith.addf %175, %184 : vector<64x16xf32>
    %186 = vector.extract_strided_slice %72 {offsets = [21, 0], sizes = [64, 16], strides = [1, 1]} : vector<112x16xf32> to vector<64x16xf32>
    %187 = vector.extract_strided_slice %69 {offsets = [11, 0], sizes = [1, 16], strides = [1, 1]} : vector<27x16xf32> to vector<1x16xf32>
    %188 = vector.shape_cast %187 : vector<1x16xf32> to vector<16xf32>
    %189 = vector.shape_cast %188 : vector<16xf32> to vector<1x16xf32>
    %190 = vector.broadcast %189 : vector<1x16xf32> to vector<64x16xf32>
    %191 = arith.mulf %186, %190 : vector<64x16xf32>
    %192 = vector.extract_strided_slice %2 {offsets = [0, 11], sizes = [64, 1], strides = [1, 1]} : vector<64x27xf32> to vector<64x1xf32>
    %193 = vector.broadcast %192 : vector<64x1xf32> to vector<64x16xf32>
    %194 = arith.mulf %191, %193 : vector<64x16xf32>
    %195 = arith.addf %185, %194 : vector<64x16xf32>
    %196 = vector.extract_strided_slice %72 {offsets = [23, 0], sizes = [64, 16], strides = [1, 1]} : vector<112x16xf32> to vector<64x16xf32>
    %197 = vector.extract_strided_slice %69 {offsets = [12, 0], sizes = [1, 16], strides = [1, 1]} : vector<27x16xf32> to vector<1x16xf32>
    %198 = vector.shape_cast %197 : vector<1x16xf32> to vector<16xf32>
    %199 = vector.shape_cast %198 : vector<16xf32> to vector<1x16xf32>
    %200 = vector.broadcast %199 : vector<1x16xf32> to vector<64x16xf32>
    %201 = arith.mulf %196, %200 : vector<64x16xf32>
    %202 = vector.extract_strided_slice %2 {offsets = [0, 12], sizes = [64, 1], strides = [1, 1]} : vector<64x27xf32> to vector<64x1xf32>
    %203 = vector.broadcast %202 : vector<64x1xf32> to vector<64x16xf32>
    %204 = arith.mulf %201, %203 : vector<64x16xf32>
    %205 = arith.addf %195, %204 : vector<64x16xf32>
    %206 = vector.extract_strided_slice %72 {offsets = [24, 0], sizes = [64, 16], strides = [1, 1]} : vector<112x16xf32> to vector<64x16xf32>
    %207 = vector.extract_strided_slice %69 {offsets = [13, 0], sizes = [1, 16], strides = [1, 1]} : vector<27x16xf32> to vector<1x16xf32>
    %208 = vector.shape_cast %207 : vector<1x16xf32> to vector<16xf32>
    %209 = vector.shape_cast %208 : vector<16xf32> to vector<1x16xf32>
    %210 = vector.broadcast %209 : vector<1x16xf32> to vector<64x16xf32>
    %211 = arith.mulf %206, %210 : vector<64x16xf32>
    %212 = arith.addf %205, %211 : vector<64x16xf32>
    %213 = vector.extract_strided_slice %72 {offsets = [25, 0], sizes = [64, 16], strides = [1, 1]} : vector<112x16xf32> to vector<64x16xf32>
    %214 = vector.extract_strided_slice %69 {offsets = [14, 0], sizes = [1, 16], strides = [1, 1]} : vector<27x16xf32> to vector<1x16xf32>
    %215 = vector.shape_cast %214 : vector<1x16xf32> to vector<16xf32>
    %216 = vector.shape_cast %215 : vector<16xf32> to vector<1x16xf32>
    %217 = vector.broadcast %216 : vector<1x16xf32> to vector<64x16xf32>
    %218 = arith.mulf %213, %217 : vector<64x16xf32>
    %219 = vector.extract_strided_slice %2 {offsets = [0, 14], sizes = [64, 1], strides = [1, 1]} : vector<64x27xf32> to vector<64x1xf32>
    %220 = vector.broadcast %219 : vector<64x1xf32> to vector<64x16xf32>
    %221 = arith.mulf %218, %220 : vector<64x16xf32>
    %222 = arith.addf %212, %221 : vector<64x16xf32>
    %223 = vector.extract_strided_slice %72 {offsets = [27, 0], sizes = [64, 16], strides = [1, 1]} : vector<112x16xf32> to vector<64x16xf32>
    %224 = vector.extract_strided_slice %69 {offsets = [15, 0], sizes = [1, 16], strides = [1, 1]} : vector<27x16xf32> to vector<1x16xf32>
    %225 = vector.shape_cast %224 : vector<1x16xf32> to vector<16xf32>
    %226 = vector.shape_cast %225 : vector<16xf32> to vector<1x16xf32>
    %227 = vector.broadcast %226 : vector<1x16xf32> to vector<64x16xf32>
    %228 = arith.mulf %223, %227 : vector<64x16xf32>
    %229 = vector.extract_strided_slice %2 {offsets = [0, 15], sizes = [64, 1], strides = [1, 1]} : vector<64x27xf32> to vector<64x1xf32>
    %230 = vector.broadcast %229 : vector<64x1xf32> to vector<64x16xf32>
    %231 = arith.mulf %228, %230 : vector<64x16xf32>
    %232 = arith.addf %222, %231 : vector<64x16xf32>
    %233 = vector.extract_strided_slice %72 {offsets = [28, 0], sizes = [64, 16], strides = [1, 1]} : vector<112x16xf32> to vector<64x16xf32>
    %234 = vector.extract_strided_slice %69 {offsets = [16, 0], sizes = [1, 16], strides = [1, 1]} : vector<27x16xf32> to vector<1x16xf32>
    %235 = vector.shape_cast %234 : vector<1x16xf32> to vector<16xf32>
    %236 = vector.shape_cast %235 : vector<16xf32> to vector<1x16xf32>
    %237 = vector.broadcast %236 : vector<1x16xf32> to vector<64x16xf32>
    %238 = arith.mulf %233, %237 : vector<64x16xf32>
    %239 = vector.extract_strided_slice %2 {offsets = [0, 16], sizes = [64, 1], strides = [1, 1]} : vector<64x27xf32> to vector<64x1xf32>
    %240 = vector.broadcast %239 : vector<64x1xf32> to vector<64x16xf32>
    %241 = arith.mulf %238, %240 : vector<64x16xf32>
    %242 = arith.addf %232, %241 : vector<64x16xf32>
    %243 = vector.extract_strided_slice %72 {offsets = [29, 0], sizes = [64, 16], strides = [1, 1]} : vector<112x16xf32> to vector<64x16xf32>
    %244 = vector.extract_strided_slice %69 {offsets = [17, 0], sizes = [1, 16], strides = [1, 1]} : vector<27x16xf32> to vector<1x16xf32>
    %245 = vector.shape_cast %244 : vector<1x16xf32> to vector<16xf32>
    %246 = vector.shape_cast %245 : vector<16xf32> to vector<1x16xf32>
    %247 = vector.broadcast %246 : vector<1x16xf32> to vector<64x16xf32>
    %248 = arith.mulf %243, %247 : vector<64x16xf32>
    %249 = vector.extract_strided_slice %2 {offsets = [0, 17], sizes = [64, 1], strides = [1, 1]} : vector<64x27xf32> to vector<64x1xf32>
    %250 = vector.broadcast %249 : vector<64x1xf32> to vector<64x16xf32>
    %251 = arith.mulf %248, %250 : vector<64x16xf32>
    %252 = arith.addf %242, %251 : vector<64x16xf32>
    %253 = vector.extract_strided_slice %72 {offsets = [35, 0], sizes = [64, 16], strides = [1, 1]} : vector<112x16xf32> to vector<64x16xf32>
    %254 = vector.extract_strided_slice %69 {offsets = [18, 0], sizes = [1, 16], strides = [1, 1]} : vector<27x16xf32> to vector<1x16xf32>
    %255 = vector.shape_cast %254 : vector<1x16xf32> to vector<16xf32>
    %256 = vector.shape_cast %255 : vector<16xf32> to vector<1x16xf32>
    %257 = vector.broadcast %256 : vector<1x16xf32> to vector<64x16xf32>
    %258 = arith.mulf %253, %257 : vector<64x16xf32>
    %259 = vector.extract_strided_slice %2 {offsets = [0, 18], sizes = [64, 1], strides = [1, 1]} : vector<64x27xf32> to vector<64x1xf32>
    %260 = vector.broadcast %259 : vector<64x1xf32> to vector<64x16xf32>
    %261 = arith.mulf %258, %260 : vector<64x16xf32>
    %262 = arith.addf %252, %261 : vector<64x16xf32>
    %263 = vector.extract_strided_slice %72 {offsets = [36, 0], sizes = [64, 16], strides = [1, 1]} : vector<112x16xf32> to vector<64x16xf32>
    %264 = vector.extract_strided_slice %69 {offsets = [19, 0], sizes = [1, 16], strides = [1, 1]} : vector<27x16xf32> to vector<1x16xf32>
    %265 = vector.shape_cast %264 : vector<1x16xf32> to vector<16xf32>
    %266 = vector.shape_cast %265 : vector<16xf32> to vector<1x16xf32>
    %267 = vector.broadcast %266 : vector<1x16xf32> to vector<64x16xf32>
    %268 = arith.mulf %263, %267 : vector<64x16xf32>
    %269 = vector.extract_strided_slice %2 {offsets = [0, 19], sizes = [64, 1], strides = [1, 1]} : vector<64x27xf32> to vector<64x1xf32>
    %270 = vector.broadcast %269 : vector<64x1xf32> to vector<64x16xf32>
    %271 = arith.mulf %268, %270 : vector<64x16xf32>
    %272 = arith.addf %262, %271 : vector<64x16xf32>
    %273 = vector.extract_strided_slice %72 {offsets = [37, 0], sizes = [64, 16], strides = [1, 1]} : vector<112x16xf32> to vector<64x16xf32>
    %274 = vector.extract_strided_slice %69 {offsets = [20, 0], sizes = [1, 16], strides = [1, 1]} : vector<27x16xf32> to vector<1x16xf32>
    %275 = vector.shape_cast %274 : vector<1x16xf32> to vector<16xf32>
    %276 = vector.shape_cast %275 : vector<16xf32> to vector<1x16xf32>
    %277 = vector.broadcast %276 : vector<1x16xf32> to vector<64x16xf32>
    %278 = arith.mulf %273, %277 : vector<64x16xf32>
    %279 = vector.extract_strided_slice %2 {offsets = [0, 20], sizes = [64, 1], strides = [1, 1]} : vector<64x27xf32> to vector<64x1xf32>
    %280 = vector.broadcast %279 : vector<64x1xf32> to vector<64x16xf32>
    %281 = arith.mulf %278, %280 : vector<64x16xf32>
    %282 = arith.addf %272, %281 : vector<64x16xf32>
    %283 = vector.extract_strided_slice %72 {offsets = [39, 0], sizes = [64, 16], strides = [1, 1]} : vector<112x16xf32> to vector<64x16xf32>
    %284 = vector.extract_strided_slice %69 {offsets = [21, 0], sizes = [1, 16], strides = [1, 1]} : vector<27x16xf32> to vector<1x16xf32>
    %285 = vector.shape_cast %284 : vector<1x16xf32> to vector<16xf32>
    %286 = vector.shape_cast %285 : vector<16xf32> to vector<1x16xf32>
    %287 = vector.broadcast %286 : vector<1x16xf32> to vector<64x16xf32>
    %288 = arith.mulf %283, %287 : vector<64x16xf32>
    %289 = vector.extract_strided_slice %2 {offsets = [0, 21], sizes = [64, 1], strides = [1, 1]} : vector<64x27xf32> to vector<64x1xf32>
    %290 = vector.broadcast %289 : vector<64x1xf32> to vector<64x16xf32>
    %291 = arith.mulf %288, %290 : vector<64x16xf32>
    %292 = arith.addf %282, %291 : vector<64x16xf32>
    %293 = vector.extract_strided_slice %72 {offsets = [40, 0], sizes = [64, 16], strides = [1, 1]} : vector<112x16xf32> to vector<64x16xf32>
    %294 = vector.extract_strided_slice %69 {offsets = [22, 0], sizes = [1, 16], strides = [1, 1]} : vector<27x16xf32> to vector<1x16xf32>
    %295 = vector.shape_cast %294 : vector<1x16xf32> to vector<16xf32>
    %296 = vector.shape_cast %295 : vector<16xf32> to vector<1x16xf32>
    %297 = vector.broadcast %296 : vector<1x16xf32> to vector<64x16xf32>
    %298 = arith.mulf %293, %297 : vector<64x16xf32>
    %299 = vector.extract_strided_slice %2 {offsets = [0, 22], sizes = [64, 1], strides = [1, 1]} : vector<64x27xf32> to vector<64x1xf32>
    %300 = vector.broadcast %299 : vector<64x1xf32> to vector<64x16xf32>
    %301 = arith.mulf %298, %300 : vector<64x16xf32>
    %302 = arith.addf %292, %301 : vector<64x16xf32>
    %303 = vector.extract_strided_slice %72 {offsets = [41, 0], sizes = [64, 16], strides = [1, 1]} : vector<112x16xf32> to vector<64x16xf32>
    %304 = vector.extract_strided_slice %69 {offsets = [23, 0], sizes = [1, 16], strides = [1, 1]} : vector<27x16xf32> to vector<1x16xf32>
    %305 = vector.shape_cast %304 : vector<1x16xf32> to vector<16xf32>
    %306 = vector.shape_cast %305 : vector<16xf32> to vector<1x16xf32>
    %307 = vector.broadcast %306 : vector<1x16xf32> to vector<64x16xf32>
    %308 = arith.mulf %303, %307 : vector<64x16xf32>
    %309 = vector.extract_strided_slice %2 {offsets = [0, 23], sizes = [64, 1], strides = [1, 1]} : vector<64x27xf32> to vector<64x1xf32>
    %310 = vector.broadcast %309 : vector<64x1xf32> to vector<64x16xf32>
    %311 = arith.mulf %308, %310 : vector<64x16xf32>
    %312 = arith.addf %302, %311 : vector<64x16xf32>
    %313 = vector.extract_strided_slice %72 {offsets = [43, 0], sizes = [64, 16], strides = [1, 1]} : vector<112x16xf32> to vector<64x16xf32>
    %314 = vector.extract_strided_slice %69 {offsets = [24, 0], sizes = [1, 16], strides = [1, 1]} : vector<27x16xf32> to vector<1x16xf32>
    %315 = vector.shape_cast %314 : vector<1x16xf32> to vector<16xf32>
    %316 = vector.shape_cast %315 : vector<16xf32> to vector<1x16xf32>
    %317 = vector.broadcast %316 : vector<1x16xf32> to vector<64x16xf32>
    %318 = arith.mulf %313, %317 : vector<64x16xf32>
    %319 = vector.extract_strided_slice %2 {offsets = [0, 24], sizes = [64, 1], strides = [1, 1]} : vector<64x27xf32> to vector<64x1xf32>
    %320 = vector.broadcast %319 : vector<64x1xf32> to vector<64x16xf32>
    %321 = arith.mulf %318, %320 : vector<64x16xf32>
    %322 = arith.addf %312, %321 : vector<64x16xf32>
    %323 = vector.extract_strided_slice %72 {offsets = [44, 0], sizes = [64, 16], strides = [1, 1]} : vector<112x16xf32> to vector<64x16xf32>
    %324 = vector.extract_strided_slice %69 {offsets = [25, 0], sizes = [1, 16], strides = [1, 1]} : vector<27x16xf32> to vector<1x16xf32>
    %325 = vector.shape_cast %324 : vector<1x16xf32> to vector<16xf32>
    %326 = vector.shape_cast %325 : vector<16xf32> to vector<1x16xf32>
    %327 = vector.broadcast %326 : vector<1x16xf32> to vector<64x16xf32>
    %328 = arith.mulf %323, %327 : vector<64x16xf32>
    %329 = vector.extract_strided_slice %2 {offsets = [0, 25], sizes = [64, 1], strides = [1, 1]} : vector<64x27xf32> to vector<64x1xf32>
    %330 = vector.broadcast %329 : vector<64x1xf32> to vector<64x16xf32>
    %331 = arith.mulf %328, %330 : vector<64x16xf32>
    %332 = arith.addf %322, %331 : vector<64x16xf32>
    %333 = vector.extract_strided_slice %72 {offsets = [45, 0], sizes = [64, 16], strides = [1, 1]} : vector<112x16xf32> to vector<64x16xf32>
    %334 = vector.extract_strided_slice %69 {offsets = [26, 0], sizes = [1, 16], strides = [1, 1]} : vector<27x16xf32> to vector<1x16xf32>
    %335 = vector.shape_cast %334 : vector<1x16xf32> to vector<16xf32>
    %336 = vector.shape_cast %335 : vector<16xf32> to vector<1x16xf32>
    %337 = vector.broadcast %336 : vector<1x16xf32> to vector<64x16xf32>
    %338 = arith.mulf %333, %337 : vector<64x16xf32>
    %339 = vector.extract_strided_slice %2 {offsets = [0, 26], sizes = [64, 1], strides = [1, 1]} : vector<64x27xf32> to vector<64x1xf32>
    %340 = vector.broadcast %339 : vector<64x1xf32> to vector<64x16xf32>
    %341 = arith.mulf %338, %340 : vector<64x16xf32>
    %342 = arith.addf %332, %341 : vector<64x16xf32>
    %cst_35 = arith.constant dense<0.000000e+00> : vector<16xf32>
    %343 = vector.multi_reduction <add>, %342, %cst_35 [0] : vector<64x16xf32> to vector<16xf32>
    %344 = vector.shape_cast %343 : vector<16xf32> to vector<1x16xf32>
    %cst_36 = arith.constant 6.400000e+01 : f32
    %345 = vector.broadcast %cst_36 : f32 to vector<1x16xf32>
    %346 = arith.divf %344, %345 : vector<1x16xf32>
    %347 = arith.mulf %342, %342 : vector<64x16xf32>
    %cst_37 = arith.constant dense<0.000000e+00> : vector<16xf32>
    %348 = vector.multi_reduction <add>, %347, %cst_37 [0] : vector<64x16xf32> to vector<16xf32>
    %349 = vector.shape_cast %348 : vector<16xf32> to vector<1x16xf32>
    %cst_38 = arith.constant 6.400000e+01 : f32
    %350 = vector.broadcast %cst_38 : f32 to vector<1x16xf32>
    %351 = arith.divf %349, %350 : vector<1x16xf32>
    %352 = arith.mulf %346, %346 : vector<1x16xf32>
    %353 = arith.subf %351, %352 : vector<1x16xf32>
    %cst_39 = arith.constant 0.000000e+00 : f32
    %354 = vector.broadcast %cst_39 : f32 to vector<1x16xf32>
    %355 = arith.maximumf %353, %354 : vector<1x16xf32>
    %356 = vector.broadcast %346 : vector<1x16xf32> to vector<64x16xf32>
    %357 = arith.subf %342, %356 : vector<64x16xf32>
    %cst_40 = arith.constant 9.99999974E-6 : f32
    %358 = vector.broadcast %cst_40 : f32 to vector<1x16xf32>
    %359 = arith.addf %355, %358 : vector<1x16xf32>
    %360 = math.rsqrt %359 : vector<1x16xf32>
    %361 = vector.broadcast %360 : vector<1x16xf32> to vector<64x16xf32>
    %362 = arith.mulf %357, %361 : vector<64x16xf32>
    %cst_41 = arith.constant 5.000000e-01 : f32
    %363 = vector.broadcast %cst_41 : f32 to vector<64x16xf32>
    %364 = arith.mulf %363, %362 : vector<64x16xf32>
    %cst_42 = arith.constant 0.707106769 : f32
    %365 = vector.broadcast %cst_42 : f32 to vector<64x16xf32>
    %366 = arith.mulf %362, %365 : vector<64x16xf32>
    %367 = math.absf %366 : vector<64x16xf32>
    %cst_43 = arith.constant 0.327591091 : f32
    %368 = vector.broadcast %cst_43 : f32 to vector<64x16xf32>
    %369 = arith.mulf %368, %367 : vector<64x16xf32>
    %cst_44 = arith.constant 1.000000e+00 : f32
    %370 = vector.broadcast %cst_44 : f32 to vector<64x16xf32>
    %371 = arith.addf %370, %369 : vector<64x16xf32>
    %cst_45 = arith.constant 1.000000e+00 : f32
    %372 = vector.broadcast %cst_45 : f32 to vector<64x16xf32>
    %373 = arith.divf %372, %371 : vector<64x16xf32>
    %cst_46 = arith.constant 1.06140542 : f32
    %374 = vector.broadcast %cst_46 : f32 to vector<64x16xf32>
    %375 = arith.mulf %374, %373 : vector<64x16xf32>
    %cst_47 = arith.constant -1.45315206 : f32
    %376 = vector.broadcast %cst_47 : f32 to vector<64x16xf32>
    %377 = arith.addf %375, %376 : vector<64x16xf32>
    %378 = arith.mulf %377, %373 : vector<64x16xf32>
    %cst_48 = arith.constant 1.42141378 : f32
    %379 = vector.broadcast %cst_48 : f32 to vector<64x16xf32>
    %380 = arith.addf %378, %379 : vector<64x16xf32>
    %381 = arith.mulf %380, %373 : vector<64x16xf32>
    %cst_49 = arith.constant -0.284496725 : f32
    %382 = vector.broadcast %cst_49 : f32 to vector<64x16xf32>
    %383 = arith.addf %381, %382 : vector<64x16xf32>
    %384 = arith.mulf %383, %373 : vector<64x16xf32>
    %cst_50 = arith.constant 0.254829586 : f32
    %385 = vector.broadcast %cst_50 : f32 to vector<64x16xf32>
    %386 = arith.addf %384, %385 : vector<64x16xf32>
    %387 = arith.mulf %386, %373 : vector<64x16xf32>
    %cst_51 = arith.constant 0.000000e+00 : f32
    %388 = vector.broadcast %cst_51 : f32 to vector<64x16xf32>
    %389 = arith.subf %388, %367 : vector<64x16xf32>
    %390 = arith.mulf %389, %367 : vector<64x16xf32>
    %391 = math.exp %390 : vector<64x16xf32>
    %392 = arith.mulf %387, %391 : vector<64x16xf32>
    %cst_52 = arith.constant 1.000000e+00 : f32
    %393 = vector.broadcast %cst_52 : f32 to vector<64x16xf32>
    %394 = arith.subf %393, %392 : vector<64x16xf32>
    %cst_53 = arith.constant 0.000000e+00 : f32
    %395 = vector.broadcast %cst_53 : f32 to vector<64x16xf32>
    %396 = arith.cmpf oge, %366, %395 : vector<64x16xf32>
    %cst_54 = arith.constant 0.000000e+00 : f32
    %397 = vector.broadcast %cst_54 : f32 to vector<64x16xf32>
    %398 = arith.subf %397, %394 : vector<64x16xf32>
    %399 = arith.select %396, %394, %398 : vector<64x16xi1>, vector<64x16xf32>
    %cst_55 = arith.constant 1.000000e+00 : f32
    %400 = vector.broadcast %cst_55 : f32 to vector<64x16xf32>
    %401 = arith.addf %400, %399 : vector<64x16xf32>
    %402 = arith.mulf %364, %401 : vector<64x16xf32>
    %403 = arith.addf %402, %68 : vector<64x16xf32>
    %404 = arith.truncf %403 : vector<64x16xf32> to vector<64x16xbf16>
    %c0_56 = arith.constant 0 : index
    %c0_57 = arith.constant 0 : index
    %405 = vector.load %arg7[%c0_56, %c0_57] : memref<16x8xbf16, #tpu.memory_space<vmem>>, vector<16x8xbf16>
    %cst_58 = arith.constant dense<0.000000e+00> : vector<64x8xf32>
    %406 = tpu.matmul %404, %405, %cst_58 {dimension_numbers = #tpu.dot_dimension_numbers<[1], [0], [0], [1], [0, 0, 1, 1], [], []>} : vector<64x16xbf16>, vector<16x8xbf16>, vector<64x8xf32> -> vector<64x8xf32>
    %c0_59 = arith.constant 0 : index
    %c0_60 = arith.constant 0 : index
    %407 = vector.load %arg8[%c0_59, %c0_60] : memref<1x8xf32, #tpu.memory_space<vmem>>, vector<1x8xf32>
    %408 = vector.broadcast %407 : vector<1x8xf32> to vector<64x8xf32>
    %409 = arith.addf %406, %408 : vector<64x8xf32>
    %cst_61 = arith.constant dense<0.000000e+00> : vector<8xf32>
    %410 = vector.multi_reduction <add>, %409, %cst_61 [0] : vector<64x8xf32> to vector<8xf32>
    %411 = vector.shape_cast %410 : vector<8xf32> to vector<1x8xf32>
    %cst_62 = arith.constant 6.400000e+01 : f32
    %412 = vector.broadcast %cst_62 : f32 to vector<1x8xf32>
    %413 = arith.divf %411, %412 : vector<1x8xf32>
    %414 = arith.mulf %409, %409 : vector<64x8xf32>
    %cst_63 = arith.constant dense<0.000000e+00> : vector<8xf32>
    %415 = vector.multi_reduction <add>, %414, %cst_63 [0] : vector<64x8xf32> to vector<8xf32>
    %416 = vector.shape_cast %415 : vector<8xf32> to vector<1x8xf32>
    %cst_64 = arith.constant 6.400000e+01 : f32
    %417 = vector.broadcast %cst_64 : f32 to vector<1x8xf32>
    %418 = arith.divf %416, %417 : vector<1x8xf32>
    %419 = arith.mulf %413, %413 : vector<1x8xf32>
    %420 = arith.subf %418, %419 : vector<1x8xf32>
    %cst_65 = arith.constant 0.000000e+00 : f32
    %421 = vector.broadcast %cst_65 : f32 to vector<1x8xf32>
    %422 = arith.maximumf %420, %421 : vector<1x8xf32>
    %423 = vector.broadcast %413 : vector<1x8xf32> to vector<64x8xf32>
    %424 = arith.subf %409, %423 : vector<64x8xf32>
    %cst_66 = arith.constant 9.99999974E-6 : f32
    %425 = vector.broadcast %cst_66 : f32 to vector<1x8xf32>
    %426 = arith.addf %422, %425 : vector<1x8xf32>
    %427 = math.rsqrt %426 : vector<1x8xf32>
    %428 = vector.broadcast %427 : vector<1x8xf32> to vector<64x8xf32>
    %429 = arith.mulf %424, %428 : vector<64x8xf32>
    %c0_67 = arith.constant 0 : index
    %c0_68 = arith.constant 0 : index
    %c0_69 = arith.constant 0 : index
    %430 = vector.load %arg9[%c0_67, %c0_68, %c0_69] : memref<1x64x8xf32, #tpu.memory_space<vmem>>, vector<1x64x8xf32>
    %431 = vector.shape_cast %430 : vector<1x64x8xf32> to vector<64x8xf32>
    %432 = vector.shape_cast %429 : vector<64x8xf32> to vector<1x64x8xf32>
    tpu.vector_store %arg9[%c0_67, %c0_68, %c0_69], %432 {strides = array<i32>} : memref<1x64x8xf32, #tpu.memory_space<vmem>>, vector<1x64x8xf32>,
    return
  }
  func.func @transform_0(%arg0: i32) -> (i32, i32, i32) {
    %c0_i32 = arith.constant 0 : i32
    %c0_i32_0 = arith.constant 0 : i32
    %c0_i32_1 = arith.constant 0 : i32
    return %arg0, %c0_i32, %c0_i32_0 : i32, i32, i32
  }
  func.func @transform_1(%arg0: i32) -> (i32, i32) {
    %c0_i32 = arith.constant 0 : i32
    %c0_i32_0 = arith.constant 0 : i32
    %c0_i32_1 = arith.constant 0 : i32
    return %c0_i32, %c0_i32_0 : i32, i32
  }
  func.func @transform_2(%arg0: i32) -> (i32, i32) {
    %c0_i32 = arith.constant 0 : i32
    %c0_i32_0 = arith.constant 0 : i32
    %c0_i32_1 = arith.constant 0 : i32
    return %c0_i32, %c0_i32_0 : i32, i32
  }
  func.func @transform_3(%arg0: i32) -> (i32, i32) {
    %c0_i32 = arith.constant 0 : i32
    %c0_i32_0 = arith.constant 0 : i32
    %c0_i32_1 = arith.constant 0 : i32
    return %c0_i32, %c0_i32_0 : i32, i32
  }
  func.func @transform_4(%arg0: i32) -> (i32, i32) {
    %c0_i32 = arith.constant 0 : i32
    %c0_i32_0 = arith.constant 0 : i32
    %c0_i32_1 = arith.constant 0 : i32
    return %c0_i32, %c0_i32_0 : i32, i32
  }
  func.func @transform_5(%arg0: i32) -> (i32, i32) {
    %c0_i32 = arith.constant 0 : i32
    %c0_i32_0 = arith.constant 0 : i32
    %c0_i32_1 = arith.constant 0 : i32
    return %c0_i32, %c0_i32_0 : i32, i32
  }
  func.func @transform_6(%arg0: i32) -> (i32, i32) {
    %c0_i32 = arith.constant 0 : i32
    %c0_i32_0 = arith.constant 0 : i32
    %c0_i32_1 = arith.constant 0 : i32
    return %c0_i32, %c0_i32_0 : i32, i32
  }
  func.func @transform_7(%arg0: i32) -> (i32, i32) {
    %c0_i32 = arith.constant 0 : i32
    %c0_i32_0 = arith.constant 0 : i32
    %c0_i32_1 = arith.constant 0 : i32
    return %c0_i32, %c0_i32_0 : i32, i32
  }
  func.func @transform_8(%arg0: i32) -> (i32, i32, i32) {
    %c0_i32 = arith.constant 0 : i32
    %c0_i32_0 = arith.constant 0 : i32
    %c0_i32_1 = arith.constant 0 : i32
    return %arg0, %c0_i32, %c0_i32_0 : i32, i32, i32
  }
}

module attributes {stable_mosaic.version = 11 : i64} {
  func.func @kernel(%arg0: i32, %arg1: memref<1x64x16xf32, #tpu.memory_space<vmem>>, %arg2: memref<1x64x8xf32, #tpu.memory_space<vmem>>, %arg3: memref<64x27xf32, #tpu.memory_space<vmem>>, %arg4: memref<16x8xbf16, #tpu.memory_space<vmem>>, %arg5: memref<1x8xf32, #tpu.memory_space<vmem>>, %arg6: memref<27x8xf32, #tpu.memory_space<vmem>>, %arg7: memref<1x8xf32, #tpu.memory_space<vmem>>, %arg8: memref<8x8xbf16, #tpu.memory_space<vmem>>, %arg9: memref<8x8xbf16, #tpu.memory_space<vmem>>, %arg10: memref<1x8xf32, #tpu.memory_space<vmem>>, %arg11: memref<1x64x8xf32, #tpu.memory_space<vmem>>) attributes {dimension_semantics = [#tpu.dimension_semantics<parallel>], iteration_bounds = array<i64: 2>, scalar_prefetch = 0 : i64, scratch_operands = 0 : i64, tpu.core_type = #tpu.core_type<tc>, window_params = [{transform_indices = @transform_0, window_bounds = array<i64: 1, 64, 16>}, {transform_indices = @transform_1, window_bounds = array<i64: 1, 64, 8>}, {pipeline_mode = #tpu.pipeline_mode<synchronous>, transform_indices = @transform_2, window_bounds = array<i64: 64, 27>}, {pipeline_mode = #tpu.pipeline_mode<synchronous>, transform_indices = @transform_3, window_bounds = array<i64: 16, 8>}, {pipeline_mode = #tpu.pipeline_mode<synchronous>, transform_indices = @transform_4, window_bounds = array<i64: 1, 8>}, {pipeline_mode = #tpu.pipeline_mode<synchronous>, transform_indices = @transform_5, window_bounds = array<i64: 27, 8>}, {pipeline_mode = #tpu.pipeline_mode<synchronous>, transform_indices = @transform_6, window_bounds = array<i64: 1, 8>}, {pipeline_mode = #tpu.pipeline_mode<synchronous>, transform_indices = @transform_7, window_bounds = array<i64: 8, 8>}, {pipeline_mode = #tpu.pipeline_mode<synchronous>, transform_indices = @transform_8, window_bounds = array<i64: 8, 8>}, {pipeline_mode = #tpu.pipeline_mode<synchronous>, transform_indices = @transform_9, window_bounds = array<i64: 1, 8>}, {transform_indices = @transform_10, window_bounds = array<i64: 1, 64, 8>}]} {
    %c0 = arith.constant 0 : index
    %c0_0 = arith.constant 0 : index
    %c0_1 = arith.constant 0 : index
    %0 = vector.load %arg2[%c0, %c0_0, %c0_1] : memref<1x64x8xf32, #tpu.memory_space<vmem>>, vector<1x64x8xf32>
    %1 = vector.shape_cast %0 : vector<1x64x8xf32> to vector<64x8xf32>
    %c0_2 = arith.constant 0 : index
    %c0_3 = arith.constant 0 : index
    %2 = vector.load %arg3[%c0_2, %c0_3] : memref<64x27xf32, #tpu.memory_space<vmem>>, vector<64x27xf32>
    %c0_4 = arith.constant 0 : index
    %c0_5 = arith.constant 0 : index
    %c0_6 = arith.constant 0 : index
    %3 = vector.load %arg1[%c0_4, %c0_5, %c0_6] : memref<1x64x16xf32, #tpu.memory_space<vmem>>, vector<1x64x16xf32>
    %4 = vector.shape_cast %3 : vector<1x64x16xf32> to vector<64x16xf32>
    %5 = arith.truncf %4 : vector<64x16xf32> to vector<64x16xbf16>
    %c0_7 = arith.constant 0 : index
    %c0_8 = arith.constant 0 : index
    %6 = vector.load %arg4[%c0_7, %c0_8] : memref<16x8xbf16, #tpu.memory_space<vmem>>, vector<16x8xbf16>
    %cst = arith.constant dense<0.000000e+00> : vector<64x8xf32>
    %7 = tpu.matmul %5, %6, %cst {dimension_numbers = #tpu.dot_dimension_numbers<[1], [0], [0], [1], [0, 0, 1, 1], [], []>} : vector<64x16xbf16>, vector<16x8xbf16>, vector<64x8xf32> -> vector<64x8xf32>
    %c0_9 = arith.constant 0 : index
    %c0_10 = arith.constant 0 : index
    %8 = vector.load %arg5[%c0_9, %c0_10] : memref<1x8xf32, #tpu.memory_space<vmem>>, vector<1x8xf32>
    %9 = vector.broadcast %8 : vector<1x8xf32> to vector<64x8xf32>
    %10 = arith.addf %7, %9 : vector<64x8xf32>
    %c0_11 = arith.constant 0 : index
    %c0_12 = arith.constant 0 : index
    %11 = vector.load %arg6[%c0_11, %c0_12] : memref<27x8xf32, #tpu.memory_space<vmem>>, vector<27x8xf32>
    %c0_13 = arith.constant 0 : index
    %c0_14 = arith.constant 0 : index
    %12 = vector.load %arg7[%c0_13, %c0_14] : memref<1x8xf32, #tpu.memory_space<vmem>>, vector<1x8xf32>
    %cst_15 = arith.constant 0.000000e+00 : f32
    %13 = vector.broadcast %cst_15 : f32 to vector<24x8xf32>
    %14 = tpu.concatenate %13, %1, %13 in 0 : vector<24x8xf32>, vector<64x8xf32>, vector<24x8xf32> -> vector<112x8xf32>
    %cst_16 = arith.constant 0.000000e+00 : f32
    %15 = vector.broadcast %cst_16 : f32 to vector<64x8xf32>
    %16 = vector.broadcast %12 : vector<1x8xf32> to vector<64x8xf32>
    %17 = arith.addf %15, %16 : vector<64x8xf32>
    %18 = vector.extract_strided_slice %14 {offsets = [3, 0], sizes = [64, 8], strides = [1, 1]} : vector<112x8xf32> to vector<64x8xf32>
    %19 = vector.extract_strided_slice %11 {offsets = [0, 0], sizes = [1, 8], strides = [1, 1]} : vector<27x8xf32> to vector<1x8xf32>
    %20 = vector.shape_cast %19 : vector<1x8xf32> to vector<8xf32>
    %21 = vector.shape_cast %20 : vector<8xf32> to vector<1x8xf32>
    %22 = vector.broadcast %21 : vector<1x8xf32> to vector<64x8xf32>
    %23 = arith.mulf %18, %22 : vector<64x8xf32>
    %24 = vector.extract_strided_slice %2 {offsets = [0, 0], sizes = [64, 1], strides = [1, 1]} : vector<64x27xf32> to vector<64x1xf32>
    %25 = vector.broadcast %24 : vector<64x1xf32> to vector<64x8xf32>
    %26 = arith.mulf %23, %25 : vector<64x8xf32>
    %27 = arith.addf %17, %26 : vector<64x8xf32>
    %28 = vector.extract_strided_slice %14 {offsets = [4, 0], sizes = [64, 8], strides = [1, 1]} : vector<112x8xf32> to vector<64x8xf32>
    %29 = vector.extract_strided_slice %11 {offsets = [1, 0], sizes = [1, 8], strides = [1, 1]} : vector<27x8xf32> to vector<1x8xf32>
    %30 = vector.shape_cast %29 : vector<1x8xf32> to vector<8xf32>
    %31 = vector.shape_cast %30 : vector<8xf32> to vector<1x8xf32>
    %32 = vector.broadcast %31 : vector<1x8xf32> to vector<64x8xf32>
    %33 = arith.mulf %28, %32 : vector<64x8xf32>
    %34 = vector.extract_strided_slice %2 {offsets = [0, 1], sizes = [64, 1], strides = [1, 1]} : vector<64x27xf32> to vector<64x1xf32>
    %35 = vector.broadcast %34 : vector<64x1xf32> to vector<64x8xf32>
    %36 = arith.mulf %33, %35 : vector<64x8xf32>
    %37 = arith.addf %27, %36 : vector<64x8xf32>
    %38 = vector.extract_strided_slice %14 {offsets = [5, 0], sizes = [64, 8], strides = [1, 1]} : vector<112x8xf32> to vector<64x8xf32>
    %39 = vector.extract_strided_slice %11 {offsets = [2, 0], sizes = [1, 8], strides = [1, 1]} : vector<27x8xf32> to vector<1x8xf32>
    %40 = vector.shape_cast %39 : vector<1x8xf32> to vector<8xf32>
    %41 = vector.shape_cast %40 : vector<8xf32> to vector<1x8xf32>
    %42 = vector.broadcast %41 : vector<1x8xf32> to vector<64x8xf32>
    %43 = arith.mulf %38, %42 : vector<64x8xf32>
    %44 = vector.extract_strided_slice %2 {offsets = [0, 2], sizes = [64, 1], strides = [1, 1]} : vector<64x27xf32> to vector<64x1xf32>
    %45 = vector.broadcast %44 : vector<64x1xf32> to vector<64x8xf32>
    %46 = arith.mulf %43, %45 : vector<64x8xf32>
    %47 = arith.addf %37, %46 : vector<64x8xf32>
    %48 = vector.extract_strided_slice %14 {offsets = [7, 0], sizes = [64, 8], strides = [1, 1]} : vector<112x8xf32> to vector<64x8xf32>
    %49 = vector.extract_strided_slice %11 {offsets = [3, 0], sizes = [1, 8], strides = [1, 1]} : vector<27x8xf32> to vector<1x8xf32>
    %50 = vector.shape_cast %49 : vector<1x8xf32> to vector<8xf32>
    %51 = vector.shape_cast %50 : vector<8xf32> to vector<1x8xf32>
    %52 = vector.broadcast %51 : vector<1x8xf32> to vector<64x8xf32>
    %53 = arith.mulf %48, %52 : vector<64x8xf32>
    %54 = vector.extract_strided_slice %2 {offsets = [0, 3], sizes = [64, 1], strides = [1, 1]} : vector<64x27xf32> to vector<64x1xf32>
    %55 = vector.broadcast %54 : vector<64x1xf32> to vector<64x8xf32>
    %56 = arith.mulf %53, %55 : vector<64x8xf32>
    %57 = arith.addf %47, %56 : vector<64x8xf32>
    %58 = vector.extract_strided_slice %14 {offsets = [8, 0], sizes = [64, 8], strides = [1, 1]} : vector<112x8xf32> to vector<64x8xf32>
    %59 = vector.extract_strided_slice %11 {offsets = [4, 0], sizes = [1, 8], strides = [1, 1]} : vector<27x8xf32> to vector<1x8xf32>
    %60 = vector.shape_cast %59 : vector<1x8xf32> to vector<8xf32>
    %61 = vector.shape_cast %60 : vector<8xf32> to vector<1x8xf32>
    %62 = vector.broadcast %61 : vector<1x8xf32> to vector<64x8xf32>
    %63 = arith.mulf %58, %62 : vector<64x8xf32>
    %64 = vector.extract_strided_slice %2 {offsets = [0, 4], sizes = [64, 1], strides = [1, 1]} : vector<64x27xf32> to vector<64x1xf32>
    %65 = vector.broadcast %64 : vector<64x1xf32> to vector<64x8xf32>
    %66 = arith.mulf %63, %65 : vector<64x8xf32>
    %67 = arith.addf %57, %66 : vector<64x8xf32>
    %68 = vector.extract_strided_slice %14 {offsets = [9, 0], sizes = [64, 8], strides = [1, 1]} : vector<112x8xf32> to vector<64x8xf32>
    %69 = vector.extract_strided_slice %11 {offsets = [5, 0], sizes = [1, 8], strides = [1, 1]} : vector<27x8xf32> to vector<1x8xf32>
    %70 = vector.shape_cast %69 : vector<1x8xf32> to vector<8xf32>
    %71 = vector.shape_cast %70 : vector<8xf32> to vector<1x8xf32>
    %72 = vector.broadcast %71 : vector<1x8xf32> to vector<64x8xf32>
    %73 = arith.mulf %68, %72 : vector<64x8xf32>
    %74 = vector.extract_strided_slice %2 {offsets = [0, 5], sizes = [64, 1], strides = [1, 1]} : vector<64x27xf32> to vector<64x1xf32>
    %75 = vector.broadcast %74 : vector<64x1xf32> to vector<64x8xf32>
    %76 = arith.mulf %73, %75 : vector<64x8xf32>
    %77 = arith.addf %67, %76 : vector<64x8xf32>
    %78 = vector.extract_strided_slice %14 {offsets = [11, 0], sizes = [64, 8], strides = [1, 1]} : vector<112x8xf32> to vector<64x8xf32>
    %79 = vector.extract_strided_slice %11 {offsets = [6, 0], sizes = [1, 8], strides = [1, 1]} : vector<27x8xf32> to vector<1x8xf32>
    %80 = vector.shape_cast %79 : vector<1x8xf32> to vector<8xf32>
    %81 = vector.shape_cast %80 : vector<8xf32> to vector<1x8xf32>
    %82 = vector.broadcast %81 : vector<1x8xf32> to vector<64x8xf32>
    %83 = arith.mulf %78, %82 : vector<64x8xf32>
    %84 = vector.extract_strided_slice %2 {offsets = [0, 6], sizes = [64, 1], strides = [1, 1]} : vector<64x27xf32> to vector<64x1xf32>
    %85 = vector.broadcast %84 : vector<64x1xf32> to vector<64x8xf32>
    %86 = arith.mulf %83, %85 : vector<64x8xf32>
    %87 = arith.addf %77, %86 : vector<64x8xf32>
    %88 = vector.extract_strided_slice %14 {offsets = [12, 0], sizes = [64, 8], strides = [1, 1]} : vector<112x8xf32> to vector<64x8xf32>
    %89 = vector.extract_strided_slice %11 {offsets = [7, 0], sizes = [1, 8], strides = [1, 1]} : vector<27x8xf32> to vector<1x8xf32>
    %90 = vector.shape_cast %89 : vector<1x8xf32> to vector<8xf32>
    %91 = vector.shape_cast %90 : vector<8xf32> to vector<1x8xf32>
    %92 = vector.broadcast %91 : vector<1x8xf32> to vector<64x8xf32>
    %93 = arith.mulf %88, %92 : vector<64x8xf32>
    %94 = vector.extract_strided_slice %2 {offsets = [0, 7], sizes = [64, 1], strides = [1, 1]} : vector<64x27xf32> to vector<64x1xf32>
    %95 = vector.broadcast %94 : vector<64x1xf32> to vector<64x8xf32>
    %96 = arith.mulf %93, %95 : vector<64x8xf32>
    %97 = arith.addf %87, %96 : vector<64x8xf32>
    %98 = vector.extract_strided_slice %14 {offsets = [13, 0], sizes = [64, 8], strides = [1, 1]} : vector<112x8xf32> to vector<64x8xf32>
    %99 = vector.extract_strided_slice %11 {offsets = [8, 0], sizes = [1, 8], strides = [1, 1]} : vector<27x8xf32> to vector<1x8xf32>
    %100 = vector.shape_cast %99 : vector<1x8xf32> to vector<8xf32>
    %101 = vector.shape_cast %100 : vector<8xf32> to vector<1x8xf32>
    %102 = vector.broadcast %101 : vector<1x8xf32> to vector<64x8xf32>
    %103 = arith.mulf %98, %102 : vector<64x8xf32>
    %104 = vector.extract_strided_slice %2 {offsets = [0, 8], sizes = [64, 1], strides = [1, 1]} : vector<64x27xf32> to vector<64x1xf32>
    %105 = vector.broadcast %104 : vector<64x1xf32> to vector<64x8xf32>
    %106 = arith.mulf %103, %105 : vector<64x8xf32>
    %107 = arith.addf %97, %106 : vector<64x8xf32>
    %108 = vector.extract_strided_slice %14 {offsets = [19, 0], sizes = [64, 8], strides = [1, 1]} : vector<112x8xf32> to vector<64x8xf32>
    %109 = vector.extract_strided_slice %11 {offsets = [9, 0], sizes = [1, 8], strides = [1, 1]} : vector<27x8xf32> to vector<1x8xf32>
    %110 = vector.shape_cast %109 : vector<1x8xf32> to vector<8xf32>
    %111 = vector.shape_cast %110 : vector<8xf32> to vector<1x8xf32>
    %112 = vector.broadcast %111 : vector<1x8xf32> to vector<64x8xf32>
    %113 = arith.mulf %108, %112 : vector<64x8xf32>
    %114 = vector.extract_strided_slice %2 {offsets = [0, 9], sizes = [64, 1], strides = [1, 1]} : vector<64x27xf32> to vector<64x1xf32>
    %115 = vector.broadcast %114 : vector<64x1xf32> to vector<64x8xf32>
    %116 = arith.mulf %113, %115 : vector<64x8xf32>
    %117 = arith.addf %107, %116 : vector<64x8xf32>
    %118 = vector.extract_strided_slice %14 {offsets = [20, 0], sizes = [64, 8], strides = [1, 1]} : vector<112x8xf32> to vector<64x8xf32>
    %119 = vector.extract_strided_slice %11 {offsets = [10, 0], sizes = [1, 8], strides = [1, 1]} : vector<27x8xf32> to vector<1x8xf32>
    %120 = vector.shape_cast %119 : vector<1x8xf32> to vector<8xf32>
    %121 = vector.shape_cast %120 : vector<8xf32> to vector<1x8xf32>
    %122 = vector.broadcast %121 : vector<1x8xf32> to vector<64x8xf32>
    %123 = arith.mulf %118, %122 : vector<64x8xf32>
    %124 = vector.extract_strided_slice %2 {offsets = [0, 10], sizes = [64, 1], strides = [1, 1]} : vector<64x27xf32> to vector<64x1xf32>
    %125 = vector.broadcast %124 : vector<64x1xf32> to vector<64x8xf32>
    %126 = arith.mulf %123, %125 : vector<64x8xf32>
    %127 = arith.addf %117, %126 : vector<64x8xf32>
    %128 = vector.extract_strided_slice %14 {offsets = [21, 0], sizes = [64, 8], strides = [1, 1]} : vector<112x8xf32> to vector<64x8xf32>
    %129 = vector.extract_strided_slice %11 {offsets = [11, 0], sizes = [1, 8], strides = [1, 1]} : vector<27x8xf32> to vector<1x8xf32>
    %130 = vector.shape_cast %129 : vector<1x8xf32> to vector<8xf32>
    %131 = vector.shape_cast %130 : vector<8xf32> to vector<1x8xf32>
    %132 = vector.broadcast %131 : vector<1x8xf32> to vector<64x8xf32>
    %133 = arith.mulf %128, %132 : vector<64x8xf32>
    %134 = vector.extract_strided_slice %2 {offsets = [0, 11], sizes = [64, 1], strides = [1, 1]} : vector<64x27xf32> to vector<64x1xf32>
    %135 = vector.broadcast %134 : vector<64x1xf32> to vector<64x8xf32>
    %136 = arith.mulf %133, %135 : vector<64x8xf32>
    %137 = arith.addf %127, %136 : vector<64x8xf32>
    %138 = vector.extract_strided_slice %14 {offsets = [23, 0], sizes = [64, 8], strides = [1, 1]} : vector<112x8xf32> to vector<64x8xf32>
    %139 = vector.extract_strided_slice %11 {offsets = [12, 0], sizes = [1, 8], strides = [1, 1]} : vector<27x8xf32> to vector<1x8xf32>
    %140 = vector.shape_cast %139 : vector<1x8xf32> to vector<8xf32>
    %141 = vector.shape_cast %140 : vector<8xf32> to vector<1x8xf32>
    %142 = vector.broadcast %141 : vector<1x8xf32> to vector<64x8xf32>
    %143 = arith.mulf %138, %142 : vector<64x8xf32>
    %144 = vector.extract_strided_slice %2 {offsets = [0, 12], sizes = [64, 1], strides = [1, 1]} : vector<64x27xf32> to vector<64x1xf32>
    %145 = vector.broadcast %144 : vector<64x1xf32> to vector<64x8xf32>
    %146 = arith.mulf %143, %145 : vector<64x8xf32>
    %147 = arith.addf %137, %146 : vector<64x8xf32>
    %148 = vector.extract_strided_slice %14 {offsets = [24, 0], sizes = [64, 8], strides = [1, 1]} : vector<112x8xf32> to vector<64x8xf32>
    %149 = vector.extract_strided_slice %11 {offsets = [13, 0], sizes = [1, 8], strides = [1, 1]} : vector<27x8xf32> to vector<1x8xf32>
    %150 = vector.shape_cast %149 : vector<1x8xf32> to vector<8xf32>
    %151 = vector.shape_cast %150 : vector<8xf32> to vector<1x8xf32>
    %152 = vector.broadcast %151 : vector<1x8xf32> to vector<64x8xf32>
    %153 = arith.mulf %148, %152 : vector<64x8xf32>
    %154 = arith.addf %147, %153 : vector<64x8xf32>
    %155 = vector.extract_strided_slice %14 {offsets = [25, 0], sizes = [64, 8], strides = [1, 1]} : vector<112x8xf32> to vector<64x8xf32>
    %156 = vector.extract_strided_slice %11 {offsets = [14, 0], sizes = [1, 8], strides = [1, 1]} : vector<27x8xf32> to vector<1x8xf32>
    %157 = vector.shape_cast %156 : vector<1x8xf32> to vector<8xf32>
    %158 = vector.shape_cast %157 : vector<8xf32> to vector<1x8xf32>
    %159 = vector.broadcast %158 : vector<1x8xf32> to vector<64x8xf32>
    %160 = arith.mulf %155, %159 : vector<64x8xf32>
    %161 = vector.extract_strided_slice %2 {offsets = [0, 14], sizes = [64, 1], strides = [1, 1]} : vector<64x27xf32> to vector<64x1xf32>
    %162 = vector.broadcast %161 : vector<64x1xf32> to vector<64x8xf32>
    %163 = arith.mulf %160, %162 : vector<64x8xf32>
    %164 = arith.addf %154, %163 : vector<64x8xf32>
    %165 = vector.extract_strided_slice %14 {offsets = [27, 0], sizes = [64, 8], strides = [1, 1]} : vector<112x8xf32> to vector<64x8xf32>
    %166 = vector.extract_strided_slice %11 {offsets = [15, 0], sizes = [1, 8], strides = [1, 1]} : vector<27x8xf32> to vector<1x8xf32>
    %167 = vector.shape_cast %166 : vector<1x8xf32> to vector<8xf32>
    %168 = vector.shape_cast %167 : vector<8xf32> to vector<1x8xf32>
    %169 = vector.broadcast %168 : vector<1x8xf32> to vector<64x8xf32>
    %170 = arith.mulf %165, %169 : vector<64x8xf32>
    %171 = vector.extract_strided_slice %2 {offsets = [0, 15], sizes = [64, 1], strides = [1, 1]} : vector<64x27xf32> to vector<64x1xf32>
    %172 = vector.broadcast %171 : vector<64x1xf32> to vector<64x8xf32>
    %173 = arith.mulf %170, %172 : vector<64x8xf32>
    %174 = arith.addf %164, %173 : vector<64x8xf32>
    %175 = vector.extract_strided_slice %14 {offsets = [28, 0], sizes = [64, 8], strides = [1, 1]} : vector<112x8xf32> to vector<64x8xf32>
    %176 = vector.extract_strided_slice %11 {offsets = [16, 0], sizes = [1, 8], strides = [1, 1]} : vector<27x8xf32> to vector<1x8xf32>
    %177 = vector.shape_cast %176 : vector<1x8xf32> to vector<8xf32>
    %178 = vector.shape_cast %177 : vector<8xf32> to vector<1x8xf32>
    %179 = vector.broadcast %178 : vector<1x8xf32> to vector<64x8xf32>
    %180 = arith.mulf %175, %179 : vector<64x8xf32>
    %181 = vector.extract_strided_slice %2 {offsets = [0, 16], sizes = [64, 1], strides = [1, 1]} : vector<64x27xf32> to vector<64x1xf32>
    %182 = vector.broadcast %181 : vector<64x1xf32> to vector<64x8xf32>
    %183 = arith.mulf %180, %182 : vector<64x8xf32>
    %184 = arith.addf %174, %183 : vector<64x8xf32>
    %185 = vector.extract_strided_slice %14 {offsets = [29, 0], sizes = [64, 8], strides = [1, 1]} : vector<112x8xf32> to vector<64x8xf32>
    %186 = vector.extract_strided_slice %11 {offsets = [17, 0], sizes = [1, 8], strides = [1, 1]} : vector<27x8xf32> to vector<1x8xf32>
    %187 = vector.shape_cast %186 : vector<1x8xf32> to vector<8xf32>
    %188 = vector.shape_cast %187 : vector<8xf32> to vector<1x8xf32>
    %189 = vector.broadcast %188 : vector<1x8xf32> to vector<64x8xf32>
    %190 = arith.mulf %185, %189 : vector<64x8xf32>
    %191 = vector.extract_strided_slice %2 {offsets = [0, 17], sizes = [64, 1], strides = [1, 1]} : vector<64x27xf32> to vector<64x1xf32>
    %192 = vector.broadcast %191 : vector<64x1xf32> to vector<64x8xf32>
    %193 = arith.mulf %190, %192 : vector<64x8xf32>
    %194 = arith.addf %184, %193 : vector<64x8xf32>
    %195 = vector.extract_strided_slice %14 {offsets = [35, 0], sizes = [64, 8], strides = [1, 1]} : vector<112x8xf32> to vector<64x8xf32>
    %196 = vector.extract_strided_slice %11 {offsets = [18, 0], sizes = [1, 8], strides = [1, 1]} : vector<27x8xf32> to vector<1x8xf32>
    %197 = vector.shape_cast %196 : vector<1x8xf32> to vector<8xf32>
    %198 = vector.shape_cast %197 : vector<8xf32> to vector<1x8xf32>
    %199 = vector.broadcast %198 : vector<1x8xf32> to vector<64x8xf32>
    %200 = arith.mulf %195, %199 : vector<64x8xf32>
    %201 = vector.extract_strided_slice %2 {offsets = [0, 18], sizes = [64, 1], strides = [1, 1]} : vector<64x27xf32> to vector<64x1xf32>
    %202 = vector.broadcast %201 : vector<64x1xf32> to vector<64x8xf32>
    %203 = arith.mulf %200, %202 : vector<64x8xf32>
    %204 = arith.addf %194, %203 : vector<64x8xf32>
    %205 = vector.extract_strided_slice %14 {offsets = [36, 0], sizes = [64, 8], strides = [1, 1]} : vector<112x8xf32> to vector<64x8xf32>
    %206 = vector.extract_strided_slice %11 {offsets = [19, 0], sizes = [1, 8], strides = [1, 1]} : vector<27x8xf32> to vector<1x8xf32>
    %207 = vector.shape_cast %206 : vector<1x8xf32> to vector<8xf32>
    %208 = vector.shape_cast %207 : vector<8xf32> to vector<1x8xf32>
    %209 = vector.broadcast %208 : vector<1x8xf32> to vector<64x8xf32>
    %210 = arith.mulf %205, %209 : vector<64x8xf32>
    %211 = vector.extract_strided_slice %2 {offsets = [0, 19], sizes = [64, 1], strides = [1, 1]} : vector<64x27xf32> to vector<64x1xf32>
    %212 = vector.broadcast %211 : vector<64x1xf32> to vector<64x8xf32>
    %213 = arith.mulf %210, %212 : vector<64x8xf32>
    %214 = arith.addf %204, %213 : vector<64x8xf32>
    %215 = vector.extract_strided_slice %14 {offsets = [37, 0], sizes = [64, 8], strides = [1, 1]} : vector<112x8xf32> to vector<64x8xf32>
    %216 = vector.extract_strided_slice %11 {offsets = [20, 0], sizes = [1, 8], strides = [1, 1]} : vector<27x8xf32> to vector<1x8xf32>
    %217 = vector.shape_cast %216 : vector<1x8xf32> to vector<8xf32>
    %218 = vector.shape_cast %217 : vector<8xf32> to vector<1x8xf32>
    %219 = vector.broadcast %218 : vector<1x8xf32> to vector<64x8xf32>
    %220 = arith.mulf %215, %219 : vector<64x8xf32>
    %221 = vector.extract_strided_slice %2 {offsets = [0, 20], sizes = [64, 1], strides = [1, 1]} : vector<64x27xf32> to vector<64x1xf32>
    %222 = vector.broadcast %221 : vector<64x1xf32> to vector<64x8xf32>
    %223 = arith.mulf %220, %222 : vector<64x8xf32>
    %224 = arith.addf %214, %223 : vector<64x8xf32>
    %225 = vector.extract_strided_slice %14 {offsets = [39, 0], sizes = [64, 8], strides = [1, 1]} : vector<112x8xf32> to vector<64x8xf32>
    %226 = vector.extract_strided_slice %11 {offsets = [21, 0], sizes = [1, 8], strides = [1, 1]} : vector<27x8xf32> to vector<1x8xf32>
    %227 = vector.shape_cast %226 : vector<1x8xf32> to vector<8xf32>
    %228 = vector.shape_cast %227 : vector<8xf32> to vector<1x8xf32>
    %229 = vector.broadcast %228 : vector<1x8xf32> to vector<64x8xf32>
    %230 = arith.mulf %225, %229 : vector<64x8xf32>
    %231 = vector.extract_strided_slice %2 {offsets = [0, 21], sizes = [64, 1], strides = [1, 1]} : vector<64x27xf32> to vector<64x1xf32>
    %232 = vector.broadcast %231 : vector<64x1xf32> to vector<64x8xf32>
    %233 = arith.mulf %230, %232 : vector<64x8xf32>
    %234 = arith.addf %224, %233 : vector<64x8xf32>
    %235 = vector.extract_strided_slice %14 {offsets = [40, 0], sizes = [64, 8], strides = [1, 1]} : vector<112x8xf32> to vector<64x8xf32>
    %236 = vector.extract_strided_slice %11 {offsets = [22, 0], sizes = [1, 8], strides = [1, 1]} : vector<27x8xf32> to vector<1x8xf32>
    %237 = vector.shape_cast %236 : vector<1x8xf32> to vector<8xf32>
    %238 = vector.shape_cast %237 : vector<8xf32> to vector<1x8xf32>
    %239 = vector.broadcast %238 : vector<1x8xf32> to vector<64x8xf32>
    %240 = arith.mulf %235, %239 : vector<64x8xf32>
    %241 = vector.extract_strided_slice %2 {offsets = [0, 22], sizes = [64, 1], strides = [1, 1]} : vector<64x27xf32> to vector<64x1xf32>
    %242 = vector.broadcast %241 : vector<64x1xf32> to vector<64x8xf32>
    %243 = arith.mulf %240, %242 : vector<64x8xf32>
    %244 = arith.addf %234, %243 : vector<64x8xf32>
    %245 = vector.extract_strided_slice %14 {offsets = [41, 0], sizes = [64, 8], strides = [1, 1]} : vector<112x8xf32> to vector<64x8xf32>
    %246 = vector.extract_strided_slice %11 {offsets = [23, 0], sizes = [1, 8], strides = [1, 1]} : vector<27x8xf32> to vector<1x8xf32>
    %247 = vector.shape_cast %246 : vector<1x8xf32> to vector<8xf32>
    %248 = vector.shape_cast %247 : vector<8xf32> to vector<1x8xf32>
    %249 = vector.broadcast %248 : vector<1x8xf32> to vector<64x8xf32>
    %250 = arith.mulf %245, %249 : vector<64x8xf32>
    %251 = vector.extract_strided_slice %2 {offsets = [0, 23], sizes = [64, 1], strides = [1, 1]} : vector<64x27xf32> to vector<64x1xf32>
    %252 = vector.broadcast %251 : vector<64x1xf32> to vector<64x8xf32>
    %253 = arith.mulf %250, %252 : vector<64x8xf32>
    %254 = arith.addf %244, %253 : vector<64x8xf32>
    %255 = vector.extract_strided_slice %14 {offsets = [43, 0], sizes = [64, 8], strides = [1, 1]} : vector<112x8xf32> to vector<64x8xf32>
    %256 = vector.extract_strided_slice %11 {offsets = [24, 0], sizes = [1, 8], strides = [1, 1]} : vector<27x8xf32> to vector<1x8xf32>
    %257 = vector.shape_cast %256 : vector<1x8xf32> to vector<8xf32>
    %258 = vector.shape_cast %257 : vector<8xf32> to vector<1x8xf32>
    %259 = vector.broadcast %258 : vector<1x8xf32> to vector<64x8xf32>
    %260 = arith.mulf %255, %259 : vector<64x8xf32>
    %261 = vector.extract_strided_slice %2 {offsets = [0, 24], sizes = [64, 1], strides = [1, 1]} : vector<64x27xf32> to vector<64x1xf32>
    %262 = vector.broadcast %261 : vector<64x1xf32> to vector<64x8xf32>
    %263 = arith.mulf %260, %262 : vector<64x8xf32>
    %264 = arith.addf %254, %263 : vector<64x8xf32>
    %265 = vector.extract_strided_slice %14 {offsets = [44, 0], sizes = [64, 8], strides = [1, 1]} : vector<112x8xf32> to vector<64x8xf32>
    %266 = vector.extract_strided_slice %11 {offsets = [25, 0], sizes = [1, 8], strides = [1, 1]} : vector<27x8xf32> to vector<1x8xf32>
    %267 = vector.shape_cast %266 : vector<1x8xf32> to vector<8xf32>
    %268 = vector.shape_cast %267 : vector<8xf32> to vector<1x8xf32>
    %269 = vector.broadcast %268 : vector<1x8xf32> to vector<64x8xf32>
    %270 = arith.mulf %265, %269 : vector<64x8xf32>
    %271 = vector.extract_strided_slice %2 {offsets = [0, 25], sizes = [64, 1], strides = [1, 1]} : vector<64x27xf32> to vector<64x1xf32>
    %272 = vector.broadcast %271 : vector<64x1xf32> to vector<64x8xf32>
    %273 = arith.mulf %270, %272 : vector<64x8xf32>
    %274 = arith.addf %264, %273 : vector<64x8xf32>
    %275 = vector.extract_strided_slice %14 {offsets = [45, 0], sizes = [64, 8], strides = [1, 1]} : vector<112x8xf32> to vector<64x8xf32>
    %276 = vector.extract_strided_slice %11 {offsets = [26, 0], sizes = [1, 8], strides = [1, 1]} : vector<27x8xf32> to vector<1x8xf32>
    %277 = vector.shape_cast %276 : vector<1x8xf32> to vector<8xf32>
    %278 = vector.shape_cast %277 : vector<8xf32> to vector<1x8xf32>
    %279 = vector.broadcast %278 : vector<1x8xf32> to vector<64x8xf32>
    %280 = arith.mulf %275, %279 : vector<64x8xf32>
    %281 = vector.extract_strided_slice %2 {offsets = [0, 26], sizes = [64, 1], strides = [1, 1]} : vector<64x27xf32> to vector<64x1xf32>
    %282 = vector.broadcast %281 : vector<64x1xf32> to vector<64x8xf32>
    %283 = arith.mulf %280, %282 : vector<64x8xf32>
    %284 = arith.addf %274, %283 : vector<64x8xf32>
    %285 = arith.truncf %10 : vector<64x8xf32> to vector<64x8xbf16>
    %c0_17 = arith.constant 0 : index
    %c0_18 = arith.constant 0 : index
    %286 = vector.load %arg8[%c0_17, %c0_18] : memref<8x8xbf16, #tpu.memory_space<vmem>>, vector<8x8xbf16>
    %cst_19 = arith.constant dense<0.000000e+00> : vector<64x8xf32>
    %287 = tpu.matmul %285, %286, %cst_19 {dimension_numbers = #tpu.dot_dimension_numbers<[1], [0], [0], [1], [0, 0, 1, 1], [], []>} : vector<64x8xbf16>, vector<8x8xbf16>, vector<64x8xf32> -> vector<64x8xf32>
    %288 = arith.truncf %284 : vector<64x8xf32> to vector<64x8xbf16>
    %c0_20 = arith.constant 0 : index
    %c0_21 = arith.constant 0 : index
    %289 = vector.load %arg9[%c0_20, %c0_21] : memref<8x8xbf16, #tpu.memory_space<vmem>>, vector<8x8xbf16>
    %cst_22 = arith.constant dense<0.000000e+00> : vector<64x8xf32>
    %290 = tpu.matmul %288, %289, %cst_22 {dimension_numbers = #tpu.dot_dimension_numbers<[1], [0], [0], [1], [0, 0, 1, 1], [], []>} : vector<64x8xbf16>, vector<8x8xbf16>, vector<64x8xf32> -> vector<64x8xf32>
    %291 = arith.addf %287, %290 : vector<64x8xf32>
    %c0_23 = arith.constant 0 : index
    %c0_24 = arith.constant 0 : index
    %292 = vector.load %arg10[%c0_23, %c0_24] : memref<1x8xf32, #tpu.memory_space<vmem>>, vector<1x8xf32>
    %293 = vector.broadcast %292 : vector<1x8xf32> to vector<64x8xf32>
    %294 = arith.addf %291, %293 : vector<64x8xf32>
    %295 = arith.addf %294, %1 : vector<64x8xf32>
    %c0_25 = arith.constant 0 : index
    %c0_26 = arith.constant 0 : index
    %c0_27 = arith.constant 0 : index
    %296 = vector.load %arg11[%c0_25, %c0_26, %c0_27] : memref<1x64x8xf32, #tpu.memory_space<vmem>>, vector<1x64x8xf32>
    %297 = vector.shape_cast %296 : vector<1x64x8xf32> to vector<64x8xf32>
    %298 = vector.shape_cast %295 : vector<64x8xf32> to vector<1x64x8xf32>
    tpu.vector_store %arg11[%c0_25, %c0_26, %c0_27], %298 {strides = array<i32>} : memref<1x64x8xf32, #tpu.memory_space<vmem>>, vector<1x64x8xf32>,
    return
  }
  func.func @transform_0(%arg0: i32) -> (i32, i32, i32) {
    %c0_i32 = arith.constant 0 : i32
    %c0_i32_0 = arith.constant 0 : i32
    %c0_i32_1 = arith.constant 0 : i32
    return %arg0, %c0_i32, %c0_i32_0 : i32, i32, i32
  }
  func.func @transform_1(%arg0: i32) -> (i32, i32, i32) {
    %c0_i32 = arith.constant 0 : i32
    %c0_i32_0 = arith.constant 0 : i32
    %c0_i32_1 = arith.constant 0 : i32
    return %arg0, %c0_i32, %c0_i32_0 : i32, i32, i32
  }
  func.func @transform_2(%arg0: i32) -> (i32, i32) {
    %c0_i32 = arith.constant 0 : i32
    %c0_i32_0 = arith.constant 0 : i32
    %c0_i32_1 = arith.constant 0 : i32
    return %c0_i32, %c0_i32_0 : i32, i32
  }
  func.func @transform_3(%arg0: i32) -> (i32, i32) {
    %c0_i32 = arith.constant 0 : i32
    %c0_i32_0 = arith.constant 0 : i32
    %c0_i32_1 = arith.constant 0 : i32
    return %c0_i32, %c0_i32_0 : i32, i32
  }
  func.func @transform_4(%arg0: i32) -> (i32, i32) {
    %c0_i32 = arith.constant 0 : i32
    %c0_i32_0 = arith.constant 0 : i32
    %c0_i32_1 = arith.constant 0 : i32
    return %c0_i32, %c0_i32_0 : i32, i32
  }
  func.func @transform_5(%arg0: i32) -> (i32, i32) {
    %c0_i32 = arith.constant 0 : i32
    %c0_i32_0 = arith.constant 0 : i32
    %c0_i32_1 = arith.constant 0 : i32
    return %c0_i32, %c0_i32_0 : i32, i32
  }
  func.func @transform_6(%arg0: i32) -> (i32, i32) {
    %c0_i32 = arith.constant 0 : i32
    %c0_i32_0 = arith.constant 0 : i32
    %c0_i32_1 = arith.constant 0 : i32
    return %c0_i32, %c0_i32_0 : i32, i32
  }
  func.func @transform_7(%arg0: i32) -> (i32, i32) {
    %c0_i32 = arith.constant 0 : i32
    %c0_i32_0 = arith.constant 0 : i32
    %c0_i32_1 = arith.constant 0 : i32
    return %c0_i32, %c0_i32_0 : i32, i32
  }
  func.func @transform_8(%arg0: i32) -> (i32, i32) {
    %c0_i32 = arith.constant 0 : i32
    %c0_i32_0 = arith.constant 0 : i32
    %c0_i32_1 = arith.constant 0 : i32
    return %c0_i32, %c0_i32_0 : i32, i32
  }
  func.func @transform_9(%arg0: i32) -> (i32, i32) {
    %c0_i32 = arith.constant 0 : i32
    %c0_i32_0 = arith.constant 0 : i32
    %c0_i32_1 = arith.constant 0 : i32
    return %c0_i32, %c0_i32_0 : i32, i32
  }
  func.func @transform_10(%arg0: i32) -> (i32, i32, i32) {
    %c0_i32 = arith.constant 0 : i32
    %c0_i32_0 = arith.constant 0 : i32
    %c0_i32_1 = arith.constant 0 : i32
    return %arg0, %c0_i32, %c0_i32_0 : i32, i32, i32
  }
}

</mosaic_0001>

<llo_original>
// kernel: hpb3d_forward.4
$region0: #{hpb3d_forward.4}
  #allocation0 [shape = 'u32[]', space=smem, size = 0x4, offset = 0x4, fixed_abs, tag = 'smem constant byte address 0x4 - core index']
  #allocation1 [shape = 'u32[144,128]{1,0:T(1,128)}', space=vmem, size = 0x12000, scoped, tag = 'internal scratch']
  %s0 = inlined_call_operand.vmem [shape: f32[128,8], index: 0, kind: input, shape index: {}]
  %s1 = inlined_call_operand.vmem [shape: f32[1,8], index: 1, kind: input, shape index: {}]
  %s2 = inlined_call_operand.vmem [shape: f32[1,8], index: 2, kind: input, shape index: {}]
  %s3 = inlined_call_operand.vmem [shape: bf16[8,48], index: 3, kind: input, shape index: {}]
  %s4 = inlined_call_operand.vmem [shape: f32[128,48], index: 4, kind: output, shape index: {}]
  %s5 = sld [smem:[#allocation0]]
  $region26: #{hpb3d_forward.4} parent=0
    _
  %s7 = ssub.s32 1, %s5
  %s8 = scalar_select 0, %s7, %s5
  // Predicated region
  $region2: #{hpb3d_forward.4} parent=0 // pred_check
    _
  $region3: #{hpb3d_forward.4} parent=0 // pred_check_branch
    %10 = sbr.rel (0) target = $region5
  $region4: #{hpb3d_forward.4} parent=0 // pred_region
    _
  $region5: #{hpb3d_forward.4} parent=0 // pred_fallthru
    _
  // Predicated region
  $region6: #{hpb3d_forward.4} parent=0 // pred_check
    _
  $region7: #{hpb3d_forward.4} parent=0 // pred_check_branch
    %12 = sbr.rel (0) target = $region9
  $region8: #{hpb3d_forward.4} parent=0 // pred_region
    _
  $region9: #{hpb3d_forward.4} parent=0 // pred_fallthru
    _
  // Predicated region
  $region10: #{hpb3d_forward.4} parent=0 // pred_check
    _
  $region11: #{hpb3d_forward.4} parent=0 // pred_check_branch
    %14 = sbr.rel (0) target = $region13
  $region12: #{hpb3d_forward.4} parent=0 // pred_region
    _
  $region13: #{hpb3d_forward.4} parent=0 // pred_fallthru
    _
  // Predicated region
  $region14: #{hpb3d_forward.4} parent=0 // pred_check
    _
  $region15: #{hpb3d_forward.4} parent=0 // pred_check_branch
    %16 = sbr.rel (0) target = $region17
  $region16: #{hpb3d_forward.4} parent=0 // pred_region
    _
  $region17: #{hpb3d_forward.4} parent=0 // pred_fallthru
    _
  %v18 = vld [vmem:[%s0] sm:$0xff]
  %v19 = vld [vmem:[%s0 + $0x8] sm:$0xff]
  %v20 = vld [vmem:[%s0 + $0x10] sm:$0xff]
  %v21 = vld [vmem:[%s0 + $0x18] sm:$0xff]
  %v22 = vld [vmem:[%s0 + $0x20] sm:$0xff]
  %v23 = vld [vmem:[%s0 + $0x28] sm:$0xff]
  %v24 = vld [vmem:[%s0 + $0x30] sm:$0xff]
  %v25 = vld [vmem:[%s0 + $0x38] sm:$0xff]
  %v26 = vld [vmem:[%s0 + $0x40] sm:$0xff]
  %v27 = vld [vmem:[%s0 + $0x48] sm:$0xff]
  %v28 = vld [vmem:[%s0 + $0x50] sm:$0xff]
  %v29 = vld [vmem:[%s0 + $0x58] sm:$0xff]
  %v30 = vld [vmem:[%s0 + $0x60] sm:$0xff]
  %v31 = vld [vmem:[%s0 + $0x68] sm:$0xff]
  %v32 = vld [vmem:[%s0 + $0x70] sm:$0xff]
  %v33 = vld [vmem:[%s0 + $0x78] sm:$0xff]
  %vm34 = vcmask 64512
  %v35 = vsel %vm34, %v18, 0.0
  %36 = vadd.xlane.f32.xlu0 %v35
  %v37 = vpop.xlane.xlu0 %36
  %v38 = vsel %vm34, %v19, 0.0
  %39 = vadd.xlane.f32.xlu0 %v38
  %v40 = vpop.xlane.xlu0 %39
  %v41 = vsel %vm34, %v20, 0.0
  %42 = vadd.xlane.f32.xlu0 %v41
  %v43 = vpop.xlane.xlu0 %42
  %v44 = vsel %vm34, %v21, 0.0
  %45 = vadd.xlane.f32.xlu0 %v44
  %v46 = vpop.xlane.xlu0 %45
  %v47 = vsel %vm34, %v22, 0.0
  %48 = vadd.xlane.f32.xlu0 %v47
  %v49 = vpop.xlane.xlu0 %48
  %v50 = vsel %vm34, %v23, 0.0
  %51 = vadd.xlane.f32.xlu0 %v50
  %v52 = vpop.xlane.xlu0 %51
  %v53 = vsel %vm34, %v24, 0.0
  %54 = vadd.xlane.f32.xlu0 %v53
  %v55 = vpop.xlane.xlu0 %54
  %v56 = vsel %vm34, %v25, 0.0
  %57 = vadd.xlane.f32.xlu0 %v56
  %v58 = vpop.xlane.xlu0 %57
  %v59 = vsel %vm34, %v26, 0.0
  %60 = vadd.xlane.f32.xlu0 %v59
  %v61 = vpop.xlane.xlu0 %60
  %v62 = vsel %vm34, %v27, 0.0
  %63 = vadd.xlane.f32.xlu0 %v62
  %v64 = vpop.xlane.xlu0 %63
  %v65 = vsel %vm34, %v28, 0.0
  %66 = vadd.xlane.f32.xlu0 %v65
  %v67 = vpop.xlane.xlu0 %66
  %v68 = vsel %vm34, %v29, 0.0
  %69 = vadd.xlane.f32.xlu0 %v68
  %v70 = vpop.xlane.xlu0 %69
  %v71 = vsel %vm34, %v30, 0.0
  %72 = vadd.xlane.f32.xlu0 %v71
  %v73 = vpop.xlane.xlu0 %72
  %v74 = vsel %vm34, %v31, 0.0
  %75 = vadd.xlane.f32.xlu0 %v74
  %v76 = vpop.xlane.xlu0 %75
  %v77 = vsel %vm34, %v32, 0.0
  %78 = vadd.xlane.f32.xlu0 %v77
  %v79 = vpop.xlane.xlu0 %78
  %v80 = vsel %vm34, %v33, 0.0
  %81 = vadd.xlane.f32.xlu0 %v80
  %v82 = vpop.xlane.xlu0 %81
  %v83 = vrcp.pop 8.0
  %v84 = vmul.f32 %v37, %v83
  %v85 = vmul.f32 %v40, %v83
  %v86 = vmul.f32 %v43, %v83
  %v87 = vmul.f32 %v46, %v83
  %v88 = vmul.f32 %v49, %v83
  %v89 = vmul.f32 %v52, %v83
  %v90 = vmul.f32 %v55, %v83
  %v91 = vmul.f32 %v58, %v83
  %v92 = vmul.f32 %v61, %v83
  %v93 = vmul.f32 %v64, %v83
  %v94 = vmul.f32 %v67, %v83
  %v95 = vmul.f32 %v70, %v83
  %v96 = vmul.f32 %v73, %v83
  %v97 = vmul.f32 %v76, %v83
  %v98 = vmul.f32 %v79, %v83
  %v99 = vmul.f32 %v82, %v83
  %v100 = vmul.f32 %v18, %v18
  %v101 = vmul.f32 %v19, %v19
  %v102 = vmul.f32 %v20, %v20
  %v103 = vmul.f32 %v21, %v21
  %v104 = vmul.f32 %v22, %v22
  %v105 = vmul.f32 %v23, %v23
  %v106 = vmul.f32 %v24, %v24
  %v107 = vmul.f32 %v25, %v25
  %v108 = vmul.f32 %v26, %v26
  %v109 = vmul.f32 %v27, %v27
  %v110 = vmul.f32 %v28, %v28
  %v111 = vmul.f32 %v29, %v29
  %v112 = vmul.f32 %v30, %v30
  %v113 = vmul.f32 %v31, %v31
  %v114 = vmul.f32 %v32, %v32
  %v115 = vmul.f32 %v33, %v33
  %v116 = vsel %vm34, %v100, 0.0
  %117 = vadd.xlane.f32.xlu0 %v116
  %v118 = vpop.xlane.xlu0 %117
  %v119 = vsel %vm34, %v101, 0.0
  %120 = vadd.xlane.f32.xlu0 %v119
  %v121 = vpop.xlane.xlu0 %120
  %v122 = vsel %vm34, %v102, 0.0
  %123 = vadd.xlane.f32.xlu0 %v122
  %v124 = vpop.xlane.xlu0 %123
  %v125 = vsel %vm34, %v103, 0.0
  %126 = vadd.xlane.f32.xlu0 %v125
  %v127 = vpop.xlane.xlu0 %126
  %v128 = vsel %vm34, %v104, 0.0
  %129 = vadd.xlane.f32.xlu0 %v128
  %v130 = vpop.xlane.xlu0 %129
  %v131 = vsel %vm34, %v105, 0.0
  %132 = vadd.xlane.f32.xlu0 %v131
  %v133 = vpop.xlane.xlu0 %132
  %v134 = vsel %vm34, %v106, 0.0
  %135 = vadd.xlane.f32.xlu0 %v134
  %v136 = vpop.xlane.xlu0 %135
  %v137 = vsel %vm34, %v107, 0.0
  %138 = vadd.xlane.f32.xlu0 %v137
  %v139 = vpop.xlane.xlu0 %138
  %v140 = vsel %vm34, %v108, 0.0
  %141 = vadd.xlane.f32.xlu0 %v140
  %v142 = vpop.xlane.xlu0 %141
  %v143 = vsel %vm34, %v109, 0.0
  %144 = vadd.xlane.f32.xlu0 %v143
  %v145 = vpop.xlane.xlu0 %144
  %v146 = vsel %vm34, %v110, 0.0
  %147 = vadd.xlane.f32.xlu0 %v146
  %v148 = vpop.xlane.xlu0 %147
  %v149 = vsel %vm34, %v111, 0.0
  %150 = vadd.xlane.f32.xlu0 %v149
  %v151 = vpop.xlane.xlu0 %150
  %v152 = vsel %vm34, %v112, 0.0
  %153 = vadd.xlane.f32.xlu0 %v152
  %v154 = vpop.xlane.xlu0 %153
  %v155 = vsel %vm34, %v113, 0.0
  %156 = vadd.xlane.f32.xlu0 %v155
  %v157 = vpop.xlane.xlu0 %156
  %v158 = vsel %vm34, %v114, 0.0
  %159 = vadd.xlane.f32.xlu0 %v158
  %v160 = vpop.xlane.xlu0 %159
  %v161 = vsel %vm34, %v115, 0.0
  %162 = vadd.xlane.f32.xlu0 %v161
  %v163 = vpop.xlane.xlu0 %162
  %v164 = vmul.f32 %v118, %v83
  %v165 = vmul.f32 %v121, %v83
  %v166 = vmul.f32 %v124, %v83
  %v167 = vmul.f32 %v127, %v83
  %v168 = vmul.f32 %v130, %v83
  %v169 = vmul.f32 %v133, %v83
  %v170 = vmul.f32 %v136, %v83
  %v171 = vmul.f32 %v139, %v83
  %v172 = vmul.f32 %v142, %v83
  %v173 = vmul.f32 %v145, %v83
  %v174 = vmul.f32 %v148, %v83
  %v175 = vmul.f32 %v151, %v83
  %v176 = vmul.f32 %v154, %v83
  %v177 = vmul.f32 %v157, %v83
  %v178 = vmul.f32 %v160, %v83
  %v179 = vmul.f32 %v163, %v83
  %v180 = vmul.f32 %v84, %v84
  %v181 = vmul.f32 %v85, %v85
  %v182 = vmul.f32 %v86, %v86
  %v183 = vmul.f32 %v87, %v87
  %v184 = vmul.f32 %v88, %v88
  %v185 = vmul.f32 %v89, %v89
  %v186 = vmul.f32 %v90, %v90
  %v187 = vmul.f32 %v91, %v91
  %v188 = vmul.f32 %v92, %v92
  %v189 = vmul.f32 %v93, %v93
  %v190 = vmul.f32 %v94, %v94
  %v191 = vmul.f32 %v95, %v95
  %v192 = vmul.f32 %v96, %v96
  %v193 = vmul.f32 %v97, %v97
  %v194 = vmul.f32 %v98, %v98
  %v195 = vmul.f32 %v99, %v99
  %v196 = vsub.f32 %v164, %v180
  %v197 = vsub.f32 %v165, %v181
  %v198 = vsub.f32 %v166, %v182
  %v199 = vsub.f32 %v167, %v183
  %v200 = vsub.f32 %v168, %v184
  %v201 = vsub.f32 %v169, %v185
  %v202 = vsub.f32 %v170, %v186
  %v203 = vsub.f32 %v171, %v187
  %v204 = vsub.f32 %v172, %v188
  %v205 = vsub.f32 %v173, %v189
  %v206 = vsub.f32 %v174, %v190
  %v207 = vsub.f32 %v175, %v191
  %v208 = vsub.f32 %v176, %v192
  %v209 = vsub.f32 %v177, %v193
  %v210 = vsub.f32 %v178, %v194
  %v211 = vsub.f32 %v179, %v195
  %v212 = vmax.f32 %v196, 0.0
  %v213 = vmax.f32 %v197, 0.0
  %v214 = vmax.f32 %v198, 0.0
  %v215 = vmax.f32 %v199, 0.0
  %v216 = vmax.f32 %v200, 0.0
  %v217 = vmax.f32 %v201, 0.0
  %v218 = vmax.f32 %v202, 0.0
  %v219 = vmax.f32 %v203, 0.0
  %v220 = vmax.f32 %v204, 0.0
  %v221 = vmax.f32 %v205, 0.0
  %v222 = vmax.f32 %v206, 0.0
  %v223 = vmax.f32 %v207, 0.0
  %v224 = vmax.f32 %v208, 0.0
  %v225 = vmax.f32 %v209, 0.0
  %v226 = vmax.f32 %v210, 0.0
  %v227 = vmax.f32 %v211, 0.0
  %v228 = vsub.f32 %v18, %v84
  %v229 = vsub.f32 %v19, %v85
  %v230 = vsub.f32 %v20, %v86
  %v231 = vsub.f32 %v21, %v87
  %v232 = vsub.f32 %v22, %v88
  %v233 = vsub.f32 %v23, %v89
  %v234 = vsub.f32 %v24, %v90
  %v235 = vsub.f32 %v25, %v91
  %v236 = vsub.f32 %v26, %v92
  %v237 = vsub.f32 %v27, %v93
  %v238 = vsub.f32 %v28, %v94
  %v239 = vsub.f32 %v29, %v95
  %v240 = vsub.f32 %v30, %v96
  %v241 = vsub.f32 %v31, %v97
  %v242 = vsub.f32 %v32, %v98
  %v243 = vsub.f32 %v33, %v99
  %v244 = vadd.f32 %v212, 1e-05
  %v245 = vadd.f32 %v213, 1e-05
  %v246 = vadd.f32 %v214, 1e-05
  %v247 = vadd.f32 %v215, 1e-05
  %v248 = vadd.f32 %v216, 1e-05
  %v249 = vadd.f32 %v217, 1e-05
  %v250 = vadd.f32 %v218, 1e-05
  %v251 = vadd.f32 %v219, 1e-05
  %v252 = vadd.f32 %v220, 1e-05
  %v253 = vadd.f32 %v221, 1e-05
  %v254 = vadd.f32 %v222, 1e-05
  %v255 = vadd.f32 %v223, 1e-05
  %v256 = vadd.f32 %v224, 1e-05
  %v257 = vadd.f32 %v225, 1e-05
  %v258 = vadd.f32 %v226, 1e-05
  %v259 = vadd.f32 %v227, 1e-05
  %v260 = vrsqrt.pop %v244
  %v261 = vrsqrt.pop %v245
  %v262 = vrsqrt.pop %v246
  %v263 = vrsqrt.pop %v247
  %v264 = vrsqrt.pop %v248
  %v265 = vrsqrt.pop %v249
  %v266 = vrsqrt.pop %v250
  %v267 = vrsqrt.pop %v251
  %v268 = vrsqrt.pop %v252
  %v269 = vrsqrt.pop %v253
  %v270 = vrsqrt.pop %v254
  %v271 = vrsqrt.pop %v255
  %v272 = vrsqrt.pop %v256
  %v273 = vrsqrt.pop %v257
  %v274 = vrsqrt.pop %v258
  %v275 = vrsqrt.pop %v259
  %v276 = vmul.f32 %v228, %v260
  %v277 = vmul.f32 %v229, %v261
  %v278 = vmul.f32 %v230, %v262
  %v279 = vmul.f32 %v231, %v263
  %v280 = vmul.f32 %v232, %v264
  %v281 = vmul.f32 %v233, %v265
  %v282 = vmul.f32 %v234, %v266
  %v283 = vmul.f32 %v235, %v267
  %v284 = vmul.f32 %v236, %v268
  %v285 = vmul.f32 %v237, %v269
  %v286 = vmul.f32 %v238, %v270
  %v287 = vmul.f32 %v239, %v271
  %v288 = vmul.f32 %v240, %v272
  %v289 = vmul.f32 %v241, %v273
  %v290 = vmul.f32 %v242, %v274
  %v291 = vmul.f32 %v243, %v275
  %v292 = vld [vmem:[%s1] sm:$0x1]
  %v294 = vlaneseq
  %v295 = vshrl.u32 %v294, 7
  %v296 = vsub.s32 0, %v295
  %v297 = vrot.slane %v292, %v296
  %v299 = vmul.f32 %v276, %v297
  %v300 = vmul.f32 %v277, %v297
  %v301 = vmul.f32 %v278, %v297
  %v302 = vmul.f32 %v279, %v297
  %v303 = vmul.f32 %v280, %v297
  %v304 = vmul.f32 %v281, %v297
  %v305 = vmul.f32 %v282, %v297
  %v306 = vmul.f32 %v283, %v297
  %v307 = vmul.f32 %v284, %v297
  %v308 = vmul.f32 %v285, %v297
  %v309 = vmul.f32 %v286, %v297
  %v310 = vmul.f32 %v287, %v297
  %v311 = vmul.f32 %v288, %v297
  %v312 = vmul.f32 %v289, %v297
  %v313 = vmul.f32 %v290, %v297
  %v314 = vmul.f32 %v291, %v297
  %v315 = vld [vmem:[%s2] sm:$0x1]
  %v317 = vlaneseq
  %v318 = vshrl.u32 %v317, 7
  %v319 = vsub.s32 0, %v318
  %v320 = vrot.slane %v315, %v319
  %v322 = vadd.f32 %v299, %v320
  %v323 = vadd.f32 %v300, %v320
  %v324 = vadd.f32 %v301, %v320
  %v325 = vadd.f32 %v302, %v320
  %v326 = vadd.f32 %v303, %v320
  %v327 = vadd.f32 %v304, %v320
  %v328 = vadd.f32 %v305, %v320
  %v329 = vadd.f32 %v306, %v320
  %v330 = vadd.f32 %v307, %v320
  %v331 = vadd.f32 %v308, %v320
  %v332 = vadd.f32 %v309, %v320
  %v333 = vadd.f32 %v310, %v320
  %v334 = vadd.f32 %v311, %v320
  %v335 = vadd.f32 %v312, %v320
  %v336 = vadd.f32 %v313, %v320
  %v337 = vadd.f32 %v314, %v320
  %v338 = vpack.c.bf16 %v323, %v322
  %v339 = vpack.c.bf16 %v325, %v324
  %v340 = vpack.c.bf16 %v327, %v326
  %v341 = vpack.c.bf16 %v329, %v328
  %v342 = vpack.c.bf16 %v331, %v330
  %v343 = vpack.c.bf16 %v333, %v332
  %v344 = vpack.c.bf16 %v335, %v334
  %v345 = vpack.c.bf16 %v337, %v336
  %v346 = vld [vmem:[%s3] sm:$0xf]
  %v348 = vsel %vm34, %v338, 0
  %v351 = vsel %vm34, %v339, 0
  %v354 = vsel %vm34, %v340, 0
  %v357 = vsel %vm34, %v341, 0
  %v360 = vsel %vm34, %v342, 0
  %v363 = vsel %vm34, %v343, 0
  %v366 = vsel %vm34, %v344, 0
  %v369 = vsel %vm34, %v345, 0
  %vm371 = vcmask 1043456
  %v373 = vsel %vm371, %v346, 0
  %375 = vmatprep.subr.bf16.mxu0 0
  %376 = vmatpush1.bf16.msra.mxu0 0
  %377 = vmatprep.subr.bf16.mxu0 0
  %378 = vmatpush1.bf16.msra.mxu0 0
  %379 = vmatprep.subr.bf16.mxu0 0
  %380 = vmatpush1.bf16.msra.mxu0 0
  %381 = vmatprep.subr.bf16.mxu0 0
  %382 = vmatpush1.bf16.msra.mxu0 0
  %383 = vmatprep.subr.bf16.mxu0 0
  %384 = vmatpush1.bf16.msra.mxu0 0
  %385 = vmatprep.subr.bf16.mxu0 0
  %386 = vmatpush1.bf16.msra.mxu0 0
  %387 = vmatprep.subr.bf16.mxu0 0
  %388 = vmatpush1.bf16.msra.mxu0 0
  %389 = vmatprep.subr.bf16.mxu0 0
  %390 = vmatpush1.bf16.msra.mxu0 %v373
  %391 = vmatprep.subr.bf16.mxu0 0
  %392 = vmatpush2.bf16.msra.mxu0 0
  %393 = vmatprep.subr.bf16.mxu0 0
  %394 = vmatpush2.bf16.msra.mxu0 0
  %395 = vmatprep.subr.bf16.mxu0 0
  %396 = vmatpush2.bf16.msra.mxu0 0
  %397 = vmatprep.subr.bf16.mxu0 0
  %398 = vmatpush2.bf16.msra.mxu0 0
  %399 = vmatprep.subr.bf16.mxu0 0
  %400 = vmatpush2.bf16.msra.mxu0 0
  %401 = vmatprep.subr.bf16.mxu0 0
  %402 = vmatpush2.bf16.msra.mxu0 0
  %403 = vmatprep.subr.bf16.mxu0 0
  %404 = vmatpush2.bf16.msra.mxu0 0
  %405 = vmatprep.subr.bf16.mxu0 0
  %406 = vmatpush2.bf16.msra.mxu0 0
  %407 = vmatprep.mubr.bf16.mxu0 0
  %408 = vmatmul.mubr.bf16.gmra.mxu0 %v348
  %v409 = vpop.f32.mrf.mxu0
  %v410 = vadd.f32 0.0, %v409
  %v411 = vpop.f32.mrf.mxu0
  %v412 = vpop.f32.mrf.mxu0
  %v413 = vadd.f32 0.0, %v412
  %v414 = vpop.f32.mrf.mxu0
  %415 = vmatprep.mubr.bf16.mxu0 0
  %416 = vmatmul.mubr.bf16.gmra.mxu0 %v351
  %v417 = vpop.f32.mrf.mxu0
  %v418 = vadd.f32 0.0, %v417
  %v419 = vpop.f32.mrf.mxu0
  %v420 = vpop.f32.mrf.mxu0
  %v421 = vadd.f32 0.0, %v420
  %v422 = vpop.f32.mrf.mxu0
  %423 = vmatprep.mubr.bf16.mxu0 0
  %424 = vmatmul.mubr.bf16.gmra.mxu0 %v354
  %v425 = vpop.f32.mrf.mxu0
  %v426 = vadd.f32 0.0, %v425
  %v427 = vpop.f32.mrf.mxu0
  %v428 = vpop.f32.mrf.mxu0
  %v429 = vadd.f32 0.0, %v428
  %v430 = vpop.f32.mrf.mxu0
  %431 = vmatprep.mubr.bf16.mxu0 0
  %432 = vmatmul.mubr.bf16.gmra.mxu0 %v357
  %v433 = vpop.f32.mrf.mxu0
  %v434 = vadd.f32 0.0, %v433
  %v435 = vpop.f32.mrf.mxu0
  %v436 = vpop.f32.mrf.mxu0
  %v437 = vadd.f32 0.0, %v436
  %v438 = vpop.f32.mrf.mxu0
  %439 = vmatprep.mubr.bf16.mxu0 0
  %440 = vmatmul.mubr.bf16.gmra.mxu0 %v360
  %v441 = vpop.f32.mrf.mxu0
  %v442 = vadd.f32 0.0, %v441
  %v443 = vpop.f32.mrf.mxu0
  %v444 = vpop.f32.mrf.mxu0
  %v445 = vadd.f32 0.0, %v444
  %v446 = vpop.f32.mrf.mxu0
  %447 = vmatprep.mubr.bf16.mxu0 0
  %448 = vmatmul.mubr.bf16.gmra.mxu0 %v363
  %v449 = vpop.f32.mrf.mxu0
  %v450 = vadd.f32 0.0, %v449
  %v451 = vpop.f32.mrf.mxu0
  %v452 = vpop.f32.mrf.mxu0
  %v453 = vadd.f32 0.0, %v452
  %v454 = vpop.f32.mrf.mxu0
  %455 = vmatprep.mubr.bf16.mxu0 0
  %456 = vmatmul.mubr.bf16.gmra.mxu0 %v366
  %v457 = vpop.f32.mrf.mxu0
  %v458 = vadd.f32 0.0, %v457
  %v459 = vpop.f32.mrf.mxu0
  %v460 = vpop.f32.mrf.mxu0
  %v461 = vadd.f32 0.0, %v460
  %v462 = vpop.f32.mrf.mxu0
  %463 = vmatprep.mubr.bf16.mxu0 0
  %464 = vmatmul.mubr.bf16.gmra.mxu0 %v369
  %v465 = vpop.f32.mrf.mxu0
  %v466 = vadd.f32 0.0, %v465
  %v467 = vpop.f32.mrf.mxu0
  %v468 = vpop.f32.mrf.mxu0
  %v469 = vadd.f32 0.0, %v468
  %v470 = vpop.f32.mrf.mxu0
  %471 = vdwg.mxu0
  %vm472 = vcmask 392192
  %473 = vst.msk [vmem:[%s4] sm:$0xff] %vm472, %v410
  %474 = vst.msk [vmem:[%s4 + $0x8] sm:$0xff] %vm472, %v413
  %475 = vst.msk [vmem:[%s4 + $0x10] sm:$0xff] %vm472, %v418
  %476 = vst.msk [vmem:[%s4 + $0x18] sm:$0xff] %vm472, %v421
  %477 = vst.msk [vmem:[%s4 + $0x20] sm:$0xff] %vm472, %v426
  %478 = vst.msk [vmem:[%s4 + $0x28] sm:$0xff] %vm472, %v429
  %479 = vst.msk [vmem:[%s4 + $0x30] sm:$0xff] %vm472, %v434
  %480 = vst.msk [vmem:[%s4 + $0x38] sm:$0xff] %vm472, %v437
  %481 = vst.msk [vmem:[%s4 + $0x40] sm:$0xff] %vm472, %v442
  %482 = vst.msk [vmem:[%s4 + $0x48] sm:$0xff] %vm472, %v445
  %483 = vst.msk [vmem:[%s4 + $0x50] sm:$0xff] %vm472, %v450
  %484 = vst.msk [vmem:[%s4 + $0x58] sm:$0xff] %vm472, %v453
  %485 = vst.msk [vmem:[%s4 + $0x60] sm:$0xff] %vm472, %v458
  %486 = vst.msk [vmem:[%s4 + $0x68] sm:$0xff] %vm472, %v461
  %487 = vst.msk [vmem:[%s4 + $0x70] sm:$0xff] %vm472, %v466
  %488 = vst.msk [vmem:[%s4 + $0x78] sm:$0xff] %vm472, %v469
  // Predicated region
  $region18: #{hpb3d_forward.4} parent=0 // pred_check
    _
  $region19: #{hpb3d_forward.4} parent=0 // pred_check_branch
    %490 = sbr.rel (0) target = $region21
  $region20: #{hpb3d_forward.4} parent=0 // pred_region
    _
  $region21: #{hpb3d_forward.4} parent=0 // pred_fallthru
    _
  // Predicated region
  $region22: #{hpb3d_forward.4} parent=0 // pred_check
    _
  $region23: #{hpb3d_forward.4} parent=0 // pred_check_branch
    %492 = sbr.rel (0) target = $region25
  $region24: #{hpb3d_forward.4} parent=0 // pred_region
    _
  $region25: #{hpb3d_forward.4} parent=0 // pred_fallthru
    _

// kernel: hpb3d_forward.5
$region0: #{hpb3d_forward.5}
  #allocation0 [shape = 'u32[]', space=smem, size = 0x4, offset = 0x4, fixed_abs, tag = 'smem constant byte address 0x4 - core index']
  #allocation1 [shape = 'u32[144,128]{1,0:T(1,128)}', space=vmem, size = 0x12000, scoped, tag = 'internal scratch']
  %s0 = inlined_call_operand.vmem [shape: f32[4,64,8], index: 0, kind: input, shape index: {}]
  %s1 = inlined_call_operand.vmem [shape: f32[4,8,8], index: 1, kind: input, shape index: {}]
  %s2 = inlined_call_operand.vmem [shape: f32[4,8,8], index: 2, kind: input, shape index: {}]
  %s3 = inlined_call_operand.vmem [shape: f32[4,64,8], index: 3, kind: output, shape index: {}]
  %s4 = sld [smem:[#allocation0]]
  $region45: #{hpb3d_forward.5} parent=0
    _
  %s6 = ssub.s32 1, %s4
  %s7 = scalar_select 0, %s6, %s4
  loop: start=0, step=1, limit=6
  $region2: #{hpb3d_forward.5} parent=0 // loop_pre_header
    _
  $region3: #{hpb3d_forward.5} parent=0 // loop_header
    %s9 = sphi 0, %s13
    %p10 = scmp.ge.s32.totalorder %s9, 6
    %s16 = sphi 0, %s28
    %s17 = sphi 0, %s24
    %s18 = sphi 0, %s16
    %s19 = sphi 0, %s17
    %s20 = sphi 0, %s18
    %s21 = sphi 0, %s19
    %s33 = sphi 0, %s35
    %s36 = sphi 0, %s33
    %s37 = sphi 0, %s36
    %s53 = sphi 0, %s37
    %s59 = sphi 0, %s61
    %s62 = sphi 0, %s59
    %s63 = sphi 0, %s62
    %s79 = sphi 0, %s63
    %s85 = sphi 0, %s87
    %s88 = sphi 0, %s85
    %s89 = sphi 0, %s88
    %s105 = sphi 0, %s89
    %s113 = sphi 0, %s115
    %s116 = sphi 0, %s113
    %s117 = sphi 0, %s116
    %s133 = sphi 0, %s117
  $region4: #{hpb3d_forward.5} parent=0 // loop_header_branch
    %12 = sbr.rel (%p10) target = $region8
  $region5: #{hpb3d_forward.5} parent=0 // loop_body
    %s14 = ssub.s32 %s9, 1
    %s15 = ssub.s32 %s9, 2
    %s22 = sadd.s32 1, %s17
    %p23 = scmp.ge.s32.totalorder %s22, 1
    %s24 = scalar_select %p23, 0, %s22
    %s25 = sadd.s32 1, %s16
    %s26 = scalar_select %p23, %s25, %s16
    %p27 = scmp.ge.s32.totalorder %s26, 4
    %s28 = scalar_select %p27, 0, %s26
    %s29 = ssub.s32 %s16, %s28
    %s30 = ssub.s32 %s17, %s24
    %s31 = sor.u32 %s29, %s30
    %p32 = scmp.eq.s32.totalorder %s31, 0
    %s34 = sadd.s32 %s33, 1
    %s35 = scalar_select %p32, %s33, %s34
    %p38 = pneg %p32
    %p39 = scmp.eq.s32.totalorder %s9, 3
    %p40 = por %p38, %p39
    %p41 = scmp.ne.s32.totalorder %s33, %s36
    %p42 = scmp.eq.s32.totalorder %s9, 0
    %p43 = por %p41, %p42
    %p44 = scmp.ne.s32.totalorder %s33, %s36
    %p45 = scmp.eq.s32.totalorder %s14, 3
    %p46 = por %p44, %p45
    %p47 = scmp.ne.s32.totalorder %s36, %s37
    %p48 = scmp.eq.s32.totalorder %s14, 0
    %p49 = por %p47, %p48
    %p50 = scmp.ne.s32.totalorder %s36, %s37
    %p51 = scmp.eq.s32.totalorder %s15, 3
    %p52 = por %p50, %p51
    %p54 = scmp.ne.s32.totalorder %s37, %s53
    %p55 = scmp.eq.s32.totalorder %s15, 0
    %p56 = por %p54, %p55
    %s57 = ssub.s32 %s16, %s28
    %p58 = scmp.eq.s32.totalorder %s57, 0
    %s60 = sadd.s32 %s59, 1
    %s61 = scalar_select %p58, %s59, %s60
    %p64 = pneg %p58
    %p65 = scmp.eq.s32.totalorder %s9, 3
    %p66 = por %p64, %p65
    %p67 = scmp.ne.s32.totalorder %s59, %s62
    %p68 = scmp.eq.s32.totalorder %s9, 0
    %p69 = por %p67, %p68
    %p70 = scmp.ne.s32.totalorder %s59, %s62
    %p71 = scmp.eq.s32.totalorder %s14, 3
    %p72 = por %p70, %p71
    %p73 = scmp.ne.s32.totalorder %s62, %s63
    %p74 = scmp.eq.s32.totalorder %s14, 0
    %p75 = por %p73, %p74
    %p76 = scmp.ne.s32.totalorder %s62, %s63
    %p77 = scmp.eq.s32.totalorder %s15, 3
    %p78 = por %p76, %p77
    %p80 = scmp.ne.s32.totalorder %s63, %s79
    %p81 = scmp.eq.s32.totalorder %s15, 0
    %p82 = por %p80, %p81
    %s83 = ssub.s32 %s16, %s28
    %p84 = scmp.eq.s32.totalorder %s83, 0
    %s86 = sadd.s32 %s85, 1
    %s87 = scalar_select %p84, %s85, %s86
    %p90 = pneg %p84
    %p91 = scmp.eq.s32.totalorder %s9, 3
    %p92 = por %p90, %p91
    %p93 = scmp.ne.s32.totalorder %s85, %s88
    %p94 = scmp.eq.s32.totalorder %s9, 0
    %p95 = por %p93, %p94
    %p96 = scmp.ne.s32.totalorder %s85, %s88
    %p97 = scmp.eq.s32.totalorder %s14, 3
    %p98 = por %p96, %p97
    %p99 = scmp.ne.s32.totalorder %s88, %s89
    %p100 = scmp.eq.s32.totalorder %s14, 0
    %p101 = por %p99, %p100
    %p102 = scmp.ne.s32.totalorder %s88, %s89
    %p103 = scmp.eq.s32.totalorder %s15, 3
    %p104 = por %p102, %p103
    %p106 = scmp.ne.s32.totalorder %s89, %s105
    %p107 = scmp.eq.s32.totalorder %s15, 0
    %p108 = por %p106, %p107
    %s109 = ssub.s32 %s16, %s28
    %s110 = ssub.s32 %s17, %s24
    %s111 = sor.u32 %s109, %s110
    %p112 = scmp.eq.s32.totalorder %s111, 0
    %s114 = sadd.s32 %s113, 1
    %s115 = scalar_select %p112, %s113, %s114
    %p118 = pneg %p112
    %p119 = scmp.eq.s32.totalorder %s9, 3
    %p120 = por %p118, %p119
    %p121 = scmp.ne.s32.totalorder %s113, %s116
    %p122 = scmp.eq.s32.totalorder %s9, 0
    %p123 = por %p121, %p122
    %p124 = scmp.ne.s32.totalorder %s113, %s116
    %p125 = scmp.eq.s32.totalorder %s14, 3
    %p126 = por %p124, %p125
    %p127 = scmp.ne.s32.totalorder %s116, %s117
    %p128 = scmp.eq.s32.totalorder %s14, 0
    %p129 = por %p127, %p128
    %p130 = scmp.ne.s32.totalorder %s116, %s117
    %p131 = scmp.eq.s32.totalorder %s15, 3
    %p132 = por %p130, %p131
    %p134 = scmp.ne.s32.totalorder %s117, %s133
    %p135 = scmp.eq.s32.totalorder %s15, 0
    %p136 = por %p134, %p135
    %p137 = scmp.le.s32.totalorder 1, %s9
    %p138 = scmp.lt.s32.totalorder %s9, 5
    %p139 = pnand %p137, %p138
    %p140 = pneg %p139
    // Predicated region
    $region9: #{hpb3d_forward.5} parent=5 // pred_check
      _
    $region10: #{hpb3d_forward.5} parent=5 // pred_check_branch
      %142 = sbr.rel (%p139) target = $region12
    $region11: #{hpb3d_forward.5} parent=5 // pred_region
      %s143 = ssub.s32 %s9, 1
    $region12: #{hpb3d_forward.5} parent=5 // pred_fallthru
      _
    %p144 = scmp.lt.s32.totalorder %s9, 4
    // Predicated region
    $region13: #{hpb3d_forward.5} parent=5 // pred_check
      %p145 = pneg %p144
    $region14: #{hpb3d_forward.5} parent=5 // pred_check_branch
      %147 = sbr.rel (%p145) target = $region16
    $region15: #{hpb3d_forward.5} parent=5 // pred_region
      // Predicated region
      $region17: #{hpb3d_forward.5} parent=15 // pred_check
        %p148 = pneg %p43
      $region18: #{hpb3d_forward.5} parent=15 // pred_check_branch
        %150 = sbr.rel (%p148) target = $region20
      $region19: #{hpb3d_forward.5} parent=15 // pred_region
        %s151 = smul.u32 8, %s17
        %p152 = scmp.lt.s32.totalorder %s16, 3
        %s153 = scalar_select %p152, %s16, 3
        %p154 = scmp.lt.s32.totalorder %s151, 7
        %s155 = scalar_select %p154, %s151, 7
        %s156 = smul.addr %s153, 8
        %s157 = sadd.s32 %s155, %s156
        %s158 = smul.addr %s157, 8
        %s159 = scalar_lea.vmem %s0, %s158
        %s160 = smul.u32 8, %s17
      $region20: #{hpb3d_forward.5} parent=15 // pred_fallthru
        _
      // Predicated region
      $region21: #{hpb3d_forward.5} parent=15 // pred_check
        %p161 = pneg %p69
      $region22: #{hpb3d_forward.5} parent=15 // pred_check_branch
        %163 = sbr.rel (%p161) target = $region24
      $region23: #{hpb3d_forward.5} parent=15 // pred_region
        %p164 = scmp.lt.s32.totalorder %s16, 3
        %s165 = scalar_select %p164, %s16, 3
        %s166 = smul.addr %s165, 8
        %s167 = scalar_lea.vmem %s1, %s166
      $region24: #{hpb3d_forward.5} parent=15 // pred_fallthru
        _
      // Predicated region
      $region25: #{hpb3d_forward.5} parent=15 // pred_check
        %p168 = pneg %p95
      $region26: #{hpb3d_forward.5} parent=15 // pred_check_branch
        %170 = sbr.rel (%p168) target = $region28
      $region27: #{hpb3d_forward.5} parent=15 // pred_region
        %p171 = scmp.lt.s32.totalorder %s16, 3
        %s172 = scalar_select %p171, %s16, 3
        %s173 = smul.addr %s172, 8
        %s174 = scalar_lea.vmem %s2, %s173
      $region28: #{hpb3d_forward.5} parent=15 // pred_fallthru
        _
    $region16: #{hpb3d_forward.5} parent=5 // pred_fallthru
      _
    %p175 = scmp.le.s32.totalorder 1, %s9
    %p176 = scmp.lt.s32.totalorder %s9, 5
    %p177 = pnand %p175, %p176
    %p178 = pneg %p177
    // Predicated region
    $region29: #{hpb3d_forward.5} parent=5 // pred_check
      _
    $region30: #{hpb3d_forward.5} parent=5 // pred_check_branch
      %180 = sbr.rel (%p177) target = $region32
    $region31: #{hpb3d_forward.5} parent=5 // pred_region
      %s181 = ssub.s32 %s9, 1
      %s182 = smul.u32 8, %s19
      %p183 = scmp.lt.s32.totalorder %s18, 3
      %s184 = scalar_select %p183, %s18, 3
      %p185 = scmp.lt.s32.totalorder %s182, 7
      %s186 = scalar_select %p185, %s182, 7
      %s187 = smul.addr %s184, 8
      %s188 = sadd.s32 %s186, %s187
      %s189 = smul.addr %s188, 8
      %s190 = scalar_lea.vmem %s0, %s189
      %p191 = pneg %p49
      %p192 = pneg %p46
      %p193 = scmp.lt.s32.totalorder %s18, 3
      %s194 = scalar_select %p193, %s18, 3
      %s195 = smul.addr %s194, 8
      %s196 = scalar_lea.vmem %s1, %s195
      %p197 = pneg %p75
      %p198 = pneg %p72
      %p199 = scmp.lt.s32.totalorder %s18, 3
      %s200 = scalar_select %p199, %s18, 3
      %s201 = smul.addr %s200, 8
      %s202 = scalar_lea.vmem %s2, %s201
      %p203 = pneg %p101
      %p204 = pneg %p98
      %p205 = pneg %p129
      %p206 = pneg %p126
      %s207 = smul.u32 8, %s19
      %p208 = scmp.lt.s32.totalorder %s18, 3
      %s209 = scalar_select %p208, %s18, 3
      %p210 = scmp.lt.s32.totalorder %s207, 7
      %s211 = scalar_select %p210, %s207, 7
      %s212 = smul.addr %s209, 8
      %s213 = sadd.s32 %s211, %s212
      %s214 = smul.addr %s213, 8
      %s215 = scalar_lea.vmem %s3, %s214
      %s216 = smul.u32 8, %s19
      %p217 = scmp.lt.s32.totalorder %s18, 3
      %s218 = scalar_select %p217, %s18, 3
      %p219 = scmp.lt.s32.totalorder %s216, 7
      %s220 = scalar_select %p219, %s216, 7
      %s221 = smul.addr %s218, 8
      %s222 = sadd.s32 %s220, %s221
      %s223 = smul.addr %s222, 8
      %s224 = scalar_lea.vmem %s0, %s223
      %s225 = smul.u32 8, %s19
      %p226 = scmp.lt.s32.totalorder %s18, 3
      %s227 = scalar_select %p226, %s18, 3
      %s228 = smul.addr %s227, 8
      %s229 = scalar_lea.vmem %s1, %s228
      %p230 = scmp.lt.s32.totalorder %s18, 3
      %s231 = scalar_select %p230, %s18, 3
      %s232 = smul.addr %s231, 8
      %s233 = scalar_lea.vmem %s2, %s232
      %s234 = smul.u32 8, %s19
      %p235 = scmp.lt.s32.totalorder %s18, 3
      %s236 = scalar_select %p235, %s18, 3
      %p237 = scmp.lt.s32.totalorder %s234, 7
      %s238 = scalar_select %p237, %s234, 7
      %s239 = smul.addr %s236, 8
      %s240 = sadd.s32 %s238, %s239
      %s241 = smul.addr %s240, 8
      %s242 = scalar_lea.vmem %s3, %s241
      %s243 = smul.u32 8, %s19
      %v245 = vld [vmem:[%s224] sm:$0xff]
      %v246 = vld [vmem:[%s224 + $0x8] sm:$0xff]
      %v247 = vld [vmem:[%s224 + $0x10] sm:$0xff]
      %v248 = vld [vmem:[%s224 + $0x18] sm:$0xff]
      %v249 = vld [vmem:[%s224 + $0x20] sm:$0xff]
      %v250 = vld [vmem:[%s224 + $0x28] sm:$0xff]
      %v251 = vld [vmem:[%s224 + $0x30] sm:$0xff]
      %v252 = vld [vmem:[%s224 + $0x38] sm:$0xff]
      %v253 = vpack.c.bf16 %v246, %v245
      %v254 = vpack.c.bf16 %v248, %v247
      %v255 = vpack.c.bf16 %v250, %v249
      %v256 = vpack.c.bf16 %v252, %v251
      %v257 = vld [vmem:[%s229] sm:$0xff]
      %v258 = vpack.c.bf16 %v257, %v257
      %vm259 = vcmask 64512
      %v261 = vsel %vm259, %v253, 0
      %v264 = vsel %vm259, %v254, 0
      %v267 = vsel %vm259, %v255, 0
      %v270 = vsel %vm259, %v256, 0
      %v273 = vsel %vm259, %v258, 0
      %275 = vmatprep.subr.bf16.mxu0 0
      %276 = vmatpush1.bf16.xpose.msra.mxu0 0
      %277 = vmatprep.subr.bf16.mxu0 0
      %278 = vmatpush1.bf16.xpose.msra.mxu0 0
      %279 = vmatprep.subr.bf16.mxu0 0
      %280 = vmatpush1.bf16.xpose.msra.mxu0 0
      %281 = vmatprep.subr.bf16.mxu0 0
      %282 = vmatpush1.bf16.xpose.msra.mxu0 0
      %283 = vmatprep.subr.bf16.mxu0 0
      %284 = vmatpush1.bf16.xpose.msra.mxu0 0
      %285 = vmatprep.subr.bf16.mxu0 0
      %286 = vmatpush1.bf16.xpose.msra.mxu0 0
      %287 = vmatprep.subr.bf16.mxu0 0
      %288 = vmatpush1.bf16.xpose.msra.mxu0 0
      %289 = vmatprep.subr.bf16.mxu0 0
      %290 = vmatpush1.bf16.xpose.msra.mxu0 %v273
      %291 = vmatprep.subr.bf16.mxu0 0
      %292 = vmatpush2.bf16.xpose.msra.mxu0 0
      %293 = vmatprep.subr.bf16.mxu0 0
      %294 = vmatpush2.bf16.xpose.msra.mxu0 0
      %295 = vmatprep.subr.bf16.mxu0 0
      %296 = vmatpush2.bf16.xpose.msra.mxu0 0
      %297 = vmatprep.subr.bf16.mxu0 0
      %298 = vmatpush2.bf16.xpose.msra.mxu0 0
      %299 = vmatprep.subr.bf16.mxu0 0
      %300 = vmatpush2.bf16.xpose.msra.mxu0 0
      %301 = vmatprep.subr.bf16.mxu0 0
      %302 = vmatpush2.bf16.xpose.msra.mxu0 0
      %303 = vmatprep.subr.bf16.mxu0 0
      %304 = vmatpush2.bf16.xpose.msra.mxu0 0
      %305 = vmatprep.subr.bf16.mxu0 0
      %306 = vmatpush2.bf16.xpose.msra.mxu0 0
      %307 = vmatprep.mubr.bf16.mxu0 0
      %308 = vmatmul.mubr.bf16.gmra.mxu0 %v261
      %v309 = vpop.f32.mrf.mxu0
      %v310 = vadd.f32 0.0, %v309
      %v311 = vpop.f32.mrf.mxu0
      %v312 = vpop.f32.mrf.mxu0
      %v313 = vadd.f32 0.0, %v312
      %v314 = vpop.f32.mrf.mxu0
      %315 = vmatprep.mubr.bf16.mxu0 0
      %316 = vmatmul.mubr.bf16.gmra.mxu0 %v264
      %v317 = vpop.f32.mrf.mxu0
      %v318 = vadd.f32 0.0, %v317
      %v319 = vpop.f32.mrf.mxu0
      %v320 = vpop.f32.mrf.mxu0
      %v321 = vadd.f32 0.0, %v320
      %v322 = vpop.f32.mrf.mxu0
      %323 = vmatprep.mubr.bf16.mxu0 0
      %324 = vmatmul.mubr.bf16.gmra.mxu0 %v267
      %v325 = vpop.f32.mrf.mxu0
      %v326 = vadd.f32 0.0, %v325
      %v327 = vpop.f32.mrf.mxu0
      %v328 = vpop.f32.mrf.mxu0
      %v329 = vadd.f32 0.0, %v328
      %v330 = vpop.f32.mrf.mxu0
      %331 = vmatprep.mubr.bf16.mxu0 0
      %332 = vmatmul.mubr.bf16.gmra.mxu0 %v270
      %v333 = vpop.f32.mrf.mxu0
      %v334 = vadd.f32 0.0, %v333
      %v335 = vpop.f32.mrf.mxu0
      %v336 = vpop.f32.mrf.mxu0
      %v337 = vadd.f32 0.0, %v336
      %v338 = vpop.f32.mrf.mxu0
      %339 = vdwg.mxu0
      %v340 = vsel %vm259, %v310, -inf
      %341 = vmax.xlane.f32.xlu0 %v340
      %v342 = vpop.xlane.xlu0 %341
      %v343 = vsel %vm259, %v313, -inf
      %344 = vmax.xlane.f32.xlu0 %v343
      %v345 = vpop.xlane.xlu0 %344
      %v346 = vsel %vm259, %v318, -inf
      %347 = vmax.xlane.f32.xlu0 %v346
      %v348 = vpop.xlane.xlu0 %347
      %v349 = vsel %vm259, %v321, -inf
      %350 = vmax.xlane.f32.xlu0 %v349
      %v351 = vpop.xlane.xlu0 %350
      %v352 = vsel %vm259, %v326, -inf
      %353 = vmax.xlane.f32.xlu0 %v352
      %v354 = vpop.xlane.xlu0 %353
      %v355 = vsel %vm259, %v329, -inf
      %356 = vmax.xlane.f32.xlu0 %v355
      %v357 = vpop.xlane.xlu0 %356
      %v358 = vsel %vm259, %v334, -inf
      %359 = vmax.xlane.f32.xlu0 %v358
      %v360 = vpop.xlane.xlu0 %359
      %v361 = vsel %vm259, %v337, -inf
      %362 = vmax.xlane.f32.xlu0 %v361
      %v363 = vpop.xlane.xlu0 %362
      %v364 = vsub.f32 %v310, %v342
      %v365 = vsub.f32 %v313, %v345
      %v366 = vsub.f32 %v318, %v348
      %v367 = vsub.f32 %v321, %v351
      %v368 = vsub.f32 %v326, %v354
      %v369 = vsub.f32 %v329, %v357
      %v370 = vsub.f32 %v334, %v360
      %v371 = vsub.f32 %v337, %v363
      %v372 = vmul.f32 %v364, 1.442695
      %v373 = vpow.pop %v372
      %v374 = vmul.f32 %v365, 1.442695
      %v375 = vpow.pop %v374
      %v376 = vmul.f32 %v366, 1.442695
      %v377 = vpow.pop %v376
      %v378 = vmul.f32 %v367, 1.442695
      %v379 = vpow.pop %v378
      %v380 = vmul.f32 %v368, 1.442695
      %v381 = vpow.pop %v380
      %v382 = vmul.f32 %v369, 1.442695
      %v383 = vpow.pop %v382
      %v384 = vmul.f32 %v370, 1.442695
      %v385 = vpow.pop %v384
      %v386 = vmul.f32 %v371, 1.442695
      %v387 = vpow.pop %v386
      %v388 = vsel %vm259, %v373, 0.0
      %389 = vadd.xlane.f32.xlu0 %v388
      %v390 = vpop.xlane.xlu0 %389
      %v391 = vsel %vm259, %v375, 0.0
      %392 = vadd.xlane.f32.xlu0 %v391
      %v393 = vpop.xlane.xlu0 %392
      %v394 = vsel %vm259, %v377, 0.0
      %395 = vadd.xlane.f32.xlu0 %v394
      %v396 = vpop.xlane.xlu0 %395
      %v397 = vsel %vm259, %v379, 0.0
      %398 = vadd.xlane.f32.xlu0 %v397
      %v399 = vpop.xlane.xlu0 %398
      %v400 = vsel %vm259, %v381, 0.0
      %401 = vadd.xlane.f32.xlu0 %v400
      %v402 = vpop.xlane.xlu0 %401
      %v403 = vsel %vm259, %v383, 0.0
      %404 = vadd.xlane.f32.xlu0 %v403
      %v405 = vpop.xlane.xlu0 %404
      %v406 = vsel %vm259, %v385, 0.0
      %407 = vadd.xlane.f32.xlu0 %v406
      %v408 = vpop.xlane.xlu0 %407
      %v409 = vsel %vm259, %v387, 0.0
      %410 = vadd.xlane.f32.xlu0 %v409
      %v411 = vpop.xlane.xlu0 %410
      %v412 = vrcp.pop %v390
      %v413 = vrcp.pop %v393
      %v414 = vrcp.pop %v396
      %v415 = vrcp.pop %v399
      %v416 = vrcp.pop %v402
      %v417 = vrcp.pop %v405
      %v418 = vrcp.pop %v408
      %v419 = vrcp.pop %v411
      %v420 = vmul.f32 %v373, %v412
      %v421 = vmul.f32 %v375, %v413
      %v422 = vmul.f32 %v377, %v414
      %v423 = vmul.f32 %v379, %v415
      %v424 = vmul.f32 %v381, %v416
      %v425 = vmul.f32 %v383, %v417
      %v426 = vmul.f32 %v385, %v418
      %v427 = vmul.f32 %v387, %v419
      %v428 = vpack.c.bf16 %v421, %v420
      %v429 = vpack.c.bf16 %v423, %v422
      %v430 = vpack.c.bf16 %v425, %v424
      %v431 = vpack.c.bf16 %v427, %v426
      %v432 = vld [vmem:[%s233] sm:$0xff]
      %v433 = vpack.c.bf16 %v432, %v432
      %v435 = vsel %vm259, %v428, 0
      %v438 = vsel %vm259, %v429, 0
      %v441 = vsel %vm259, %v430, 0
      %v444 = vsel %vm259, %v431, 0
      %vm446 = vcmask 1043456
      %v448 = vsel %vm446, %v433, 0
      %450 = vmatprep.subr.bf16.mxu0 0
      %451 = vmatpush1.bf16.msra.mxu0 0
      %452 = vmatprep.subr.bf16.mxu0 0
      %453 = vmatpush1.bf16.msra.mxu0 0
      %454 = vmatprep.subr.bf16.mxu0 0
      %455 = vmatpush1.bf16.msra.mxu0 0
      %456 = vmatprep.subr.bf16.mxu0 0
      %457 = vmatpush1.bf16.msra.mxu0 0
      %458 = vmatprep.subr.bf16.mxu0 0
      %459 = vmatpush1.bf16.msra.mxu0 0
      %460 = vmatprep.subr.bf16.mxu0 0
      %461 = vmatpush1.bf16.msra.mxu0 0
      %462 = vmatprep.subr.bf16.mxu0 0
      %463 = vmatpush1.bf16.msra.mxu0 0
      %464 = vmatprep.subr.bf16.mxu0 0
      %465 = vmatpush1.bf16.msra.mxu0 %v448
      %466 = vmatprep.subr.bf16.mxu0 0
      %467 = vmatpush2.bf16.msra.mxu0 0
      %468 = vmatprep.subr.bf16.mxu0 0
      %469 = vmatpush2.bf16.msra.mxu0 0
      %470 = vmatprep.subr.bf16.mxu0 0
      %471 = vmatpush2.bf16.msra.mxu0 0
      %472 = vmatprep.subr.bf16.mxu0 0
      %473 = vmatpush2.bf16.msra.mxu0 0
      %474 = vmatprep.subr.bf16.mxu0 0
      %475 = vmatpush2.bf16.msra.mxu0 0
      %476 = vmatprep.subr.bf16.mxu0 0
      %477 = vmatpush2.bf16.msra.mxu0 0
      %478 = vmatprep.subr.bf16.mxu0 0
      %479 = vmatpush2.bf16.msra.mxu0 0
      %480 = vmatprep.subr.bf16.mxu0 0
      %481 = vmatpush2.bf16.msra.mxu0 0
      %482 = vmatprep.mubr.bf16.mxu0 0
      %483 = vmatmul.mubr.bf16.gmra.mxu0 %v435
      %v484 = vpop.f32.mrf.mxu0
      %v485 = vadd.f32 0.0, %v484
      %v486 = vpop.f32.mrf.mxu0
      %v487 = vpop.f32.mrf.mxu0
      %v488 = vadd.f32 0.0, %v487
      %v489 = vpop.f32.mrf.mxu0
      %490 = vmatprep.mubr.bf16.mxu0 0
      %491 = vmatmul.mubr.bf16.gmra.mxu0 %v438
      %v492 = vpop.f32.mrf.mxu0
      %v493 = vadd.f32 0.0, %v492
      %v494 = vpop.f32.mrf.mxu0
      %v495 = vpop.f32.mrf.mxu0
      %v496 = vadd.f32 0.0, %v495
      %v497 = vpop.f32.mrf.mxu0
      %498 = vmatprep.mubr.bf16.mxu0 0
      %499 = vmatmul.mubr.bf16.gmra.mxu0 %v441
      %v500 = vpop.f32.mrf.mxu0
      %v501 = vadd.f32 0.0, %v500
      %v502 = vpop.f32.mrf.mxu0
      %v503 = vpop.f32.mrf.mxu0
      %v504 = vadd.f32 0.0, %v503
      %v505 = vpop.f32.mrf.mxu0
      %506 = vmatprep.mubr.bf16.mxu0 0
      %507 = vmatmul.mubr.bf16.gmra.mxu0 %v444
      %v508 = vpop.f32.mrf.mxu0
      %v509 = vadd.f32 0.0, %v508
      %v510 = vpop.f32.mrf.mxu0
      %v511 = vpop.f32.mrf.mxu0
      %v512 = vadd.f32 0.0, %v511
      %v513 = vpop.f32.mrf.mxu0
      %514 = vdwg.mxu0
      %515 = vst.msk [vmem:[%s242] sm:$0xff] %vm259, %v485
      %516 = vst.msk [vmem:[%s242 + $0x8] sm:$0xff] %vm259, %v488
      %517 = vst.msk [vmem:[%s242 + $0x10] sm:$0xff] %vm259, %v493
      %518 = vst.msk [vmem:[%s242 + $0x18] sm:$0xff] %vm259, %v496
      %519 = vst.msk [vmem:[%s242 + $0x20] sm:$0xff] %vm259, %v501
      %520 = vst.msk [vmem:[%s242 + $0x28] sm:$0xff] %vm259, %v504
      %521 = vst.msk [vmem:[%s242 + $0x30] sm:$0xff] %vm259, %v509
      %522 = vst.msk [vmem:[%s242 + $0x38] sm:$0xff] %vm259, %v512
      %s523 = smul.u32 8, %s19
      %p524 = scmp.lt.s32.totalorder %s18, 3
      %s525 = scalar_select %p524, %s18, 3
      %p526 = scmp.lt.s32.totalorder %s523, 7
      %s527 = scalar_select %p526, %s523, 7
      %s528 = smul.addr %s525, 8
      %s529 = sadd.s32 %s527, %s528
      %s530 = smul.addr %s529, 8
      %s531 = scalar_lea.vmem %s3, %s530
      // Predicated region
      $region33: #{hpb3d_forward.5} parent=31 // pred_check
        %p532 = pneg %p126
      $region34: #{hpb3d_forward.5} parent=31 // pred_check_branch
        %534 = sbr.rel (%p532) target = $region36
      $region35: #{hpb3d_forward.5} parent=31 // pred_region
        %s535 = smul.u32 8, %s19
      $region36: #{hpb3d_forward.5} parent=31 // pred_fallthru
        _
    $region32: #{hpb3d_forward.5} parent=5 // pred_fallthru
      _
    %p536 = scmp.le.s32.totalorder 2, %s9
    // Predicated region
    $region37: #{hpb3d_forward.5} parent=5 // pred_check
      %p537 = pneg %p536
    $region38: #{hpb3d_forward.5} parent=5 // pred_check_branch
      %539 = sbr.rel (%p537) target = $region40
    $region39: #{hpb3d_forward.5} parent=5 // pred_region
      %s540 = ssub.s32 %s9, 2
      // Predicated region
      $region41: #{hpb3d_forward.5} parent=39 // pred_check
        %p541 = pneg %p132
      $region42: #{hpb3d_forward.5} parent=39 // pred_check_branch
        %543 = sbr.rel (%p541) target = $region44
      $region43: #{hpb3d_forward.5} parent=39 // pred_region
        %s544 = smul.u32 8, %s21
        %p545 = scmp.lt.s32.totalorder %s20, 3
        %s546 = scalar_select %p545, %s20, 3
        %p547 = scmp.lt.s32.totalorder %s544, 7
        %s548 = scalar_select %p547, %s544, 7
        %s549 = smul.addr %s546, 8
        %s550 = sadd.s32 %s548, %s549
        %s551 = smul.addr %s550, 8
        %s552 = scalar_lea.vmem %s3, %s551
      $region44: #{hpb3d_forward.5} parent=39 // pred_fallthru
        _
    $region40: #{hpb3d_forward.5} parent=5 // pred_fallthru
      _
  $region6: #{hpb3d_forward.5} parent=0 // loop_footer
    %s13 = sadd.s32 1, %s9
  $region7: #{hpb3d_forward.5} parent=0 // loop_footer_branch
    %8 = sbr.rel target = $region3
  $region8: #{hpb3d_forward.5} parent=0 // loop_exit
    _

// kernel: hpb3d_forward.7
$region0: #{hpb3d_forward.7}
  #allocation0 [shape = 'u32[]', space=smem, size = 0x4, offset = 0x4, fixed_abs, tag = 'smem constant byte address 0x4 - core index']
  #allocation1 [shape = 'u32[144,128]{1,0:T(1,128)}', space=vmem, size = 0x12000, scoped, tag = 'internal scratch']
  %s0 = inlined_call_operand.vmem [shape: f32[2,64,8], index: 0, kind: input, shape index: {}]
  %s1 = inlined_call_operand.vmem [shape: f32[64,27], index: 1, kind: input, shape index: {}]
  %s2 = inlined_call_operand.vmem [shape: bf16[8,16], index: 2, kind: input, shape index: {}]
  %s3 = inlined_call_operand.vmem [shape: f32[1,16], index: 3, kind: input, shape index: {}]
  %s4 = inlined_call_operand.vmem [shape: f32[27,16], index: 4, kind: input, shape index: {}]
  %s5 = inlined_call_operand.vmem [shape: f32[1,16], index: 5, kind: input, shape index: {}]
  %s6 = inlined_call_operand.vmem [shape: bf16[16,8], index: 6, kind: input, shape index: {}]
  %s7 = inlined_call_operand.vmem [shape: f32[1,8], index: 7, kind: input, shape index: {}]
  %s8 = inlined_call_operand.hbm [shape: f32[2,64,8], index: 8, kind: output, shape index: {}]
  %s9 = sld [smem:[#allocation0]]
  $region65: #{hpb3d_forward.7} parent=0
    _
  %s11 = ssub.s32 1, %s9
  %s12 = scalar_select 0, %s11, %s9
  $region1: #{hpb3d_forward.7} parent=0
    #allocation2 [shape = 'u8[65536]{0}', space=vmem, size = 0x10000, scoped, tag = 'output window, operand 0']
    #allocation3 [shape = 's32[2]{0}', space=sflag, size = 0x8, scoped, tag = 'scoped memory for hpb3d_forward.7']
    %13 = vsyncpa [#allocation3], 0
    %s14 = scalar_lea.sflag [#allocation3], 1
    %15 = vsyncpa %s14, 0
    loop: start=0, step=1, limit=4
    $region2: #{hpb3d_forward.7} parent=1 // loop_pre_header
      _
    $region3: #{hpb3d_forward.7} parent=1 // loop_header
      %s17 = sphi 0, %s21
      %p18 = scmp.ge.s32.totalorder %s17, 4
      %s27 = sphi 0, %s29
      %s30 = sphi 0, %s27
      %s31 = sphi 0, %s30
      %s47 = sphi 0, %s31
      %s51 = sphi 0, %s51
      %s53 = sphi 0, %s51
      %s54 = sphi 0, %s53
      %s68 = sphi 0, %s54
      %s72 = sphi 0, %s72
      %s74 = sphi 0, %s72
      %s75 = sphi 0, %s74
      %s89 = sphi 0, %s75
      %s93 = sphi 0, %s93
      %s95 = sphi 0, %s93
      %s96 = sphi 0, %s95
      %s110 = sphi 0, %s96
      %s114 = sphi 0, %s114
      %s116 = sphi 0, %s114
      %s117 = sphi 0, %s116
      %s131 = sphi 0, %s117
      %s135 = sphi 0, %s135
      %s137 = sphi 0, %s135
      %s138 = sphi 0, %s137
      %s152 = sphi 0, %s138
      %s156 = sphi 0, %s156
      %s158 = sphi 0, %s156
      %s159 = sphi 0, %s158
      %s173 = sphi 0, %s159
      %s177 = sphi 0, %s177
      %s179 = sphi 0, %s177
      %s180 = sphi 0, %s179
      %s194 = sphi 0, %s180
      %s200 = sphi 0, %s202
      %s203 = sphi 0, %s200
      %s204 = sphi 0, %s203
      %s220 = sphi 0, %s204
    $region4: #{hpb3d_forward.7} parent=1 // loop_header_branch
      %20 = sbr.rel (%p18) target = $region8
    $region5: #{hpb3d_forward.7} parent=1 // loop_body
      %s22 = ssub.s32 %s17, 1
      %s23 = ssub.s32 %s17, 2
      %s24 = sadd.s32 %s17, 1
      %s25 = ssub.s32 %s17, %s24
      %p26 = scmp.eq.s32.totalorder %s25, 0
      %s28 = sadd.s32 %s27, 1
      %s29 = scalar_select %p26, %s27, %s28
      %p32 = pneg %p26
      %p33 = scmp.eq.s32.totalorder %s17, 1
      %p34 = por %p32, %p33
      %p35 = scmp.ne.s32.totalorder %s27, %s30
      %p36 = scmp.eq.s32.totalorder %s17, 0
      %p37 = por %p35, %p36
      %p38 = scmp.ne.s32.totalorder %s27, %s30
      %p39 = scmp.eq.s32.totalorder %s22, 1
      %p40 = por %p38, %p39
      %p41 = scmp.ne.s32.totalorder %s30, %s31
      %p42 = scmp.eq.s32.totalorder %s22, 0
      %p43 = por %p41, %p42
      %p44 = scmp.ne.s32.totalorder %s30, %s31
      %p45 = scmp.eq.s32.totalorder %s23, 1
      %p46 = por %p44, %p45
      %p48 = scmp.ne.s32.totalorder %s31, %s47
      %p49 = scmp.eq.s32.totalorder %s23, 0
      %p50 = por %p48, %p49
      %s52 = sadd.s32 %s51, 1
      %p55 = scmp.eq.s32.totalorder %s17, 1
      %p56 = scmp.ne.s32.totalorder %s51, %s53
      %p57 = scmp.eq.s32.totalorder %s17, 0
      %p58 = por %p56, %p57
      %p59 = scmp.ne.s32.totalorder %s51, %s53
      %p60 = scmp.eq.s32.totalorder %s22, 1
      %p61 = por %p59, %p60
      %p62 = scmp.ne.s32.totalorder %s53, %s54
      %p63 = scmp.eq.s32.totalorder %s22, 0
      %p64 = por %p62, %p63
      %p65 = scmp.ne.s32.totalorder %s53, %s54
      %p66 = scmp.eq.s32.totalorder %s23, 1
      %p67 = por %p65, %p66
      %p69 = scmp.ne.s32.totalorder %s54, %s68
      %p70 = scmp.eq.s32.totalorder %s23, 0
      %p71 = por %p69, %p70
      %s73 = sadd.s32 %s72, 1
      %p76 = scmp.eq.s32.totalorder %s17, 1
      %p77 = scmp.ne.s32.totalorder %s72, %s74
      %p78 = scmp.eq.s32.totalorder %s17, 0
      %p79 = por %p77, %p78
      %p80 = scmp.ne.s32.totalorder %s72, %s74
      %p81 = scmp.eq.s32.totalorder %s22, 1
      %p82 = por %p80, %p81
      %p83 = scmp.ne.s32.totalorder %s74, %s75
      %p84 = scmp.eq.s32.totalorder %s22, 0
      %p85 = por %p83, %p84
      %p86 = scmp.ne.s32.totalorder %s74, %s75
      %p87 = scmp.eq.s32.totalorder %s23, 1
      %p88 = por %p86, %p87
      %p90 = scmp.ne.s32.totalorder %s75, %s89
      %p91 = scmp.eq.s32.totalorder %s23, 0
      %p92 = por %p90, %p91
      %s94 = sadd.s32 %s93, 1
      %p97 = scmp.eq.s32.totalorder %s17, 1
      %p98 = scmp.ne.s32.totalorder %s93, %s95
      %p99 = scmp.eq.s32.totalorder %s17, 0
      %p100 = por %p98, %p99
      %p101 = scmp.ne.s32.totalorder %s93, %s95
      %p102 = scmp.eq.s32.totalorder %s22, 1
      %p103 = por %p101, %p102
      %p104 = scmp.ne.s32.totalorder %s95, %s96
      %p105 = scmp.eq.s32.totalorder %s22, 0
      %p106 = por %p104, %p105
      %p107 = scmp.ne.s32.totalorder %s95, %s96
      %p108 = scmp.eq.s32.totalorder %s23, 1
      %p109 = por %p107, %p108
      %p111 = scmp.ne.s32.totalorder %s96, %s110
      %p112 = scmp.eq.s32.totalorder %s23, 0
      %p113 = por %p111, %p112
      %s115 = sadd.s32 %s114, 1
      %p118 = scmp.eq.s32.totalorder %s17, 1
      %p119 = scmp.ne.s32.totalorder %s114, %s116
      %p120 = scmp.eq.s32.totalorder %s17, 0
      %p121 = por %p119, %p120
      %p122 = scmp.ne.s32.totalorder %s114, %s116
      %p123 = scmp.eq.s32.totalorder %s22, 1
      %p124 = por %p122, %p123
      %p125 = scmp.ne.s32.totalorder %s116, %s117
      %p126 = scmp.eq.s32.totalorder %s22, 0
      %p127 = por %p125, %p126
      %p128 = scmp.ne.s32.totalorder %s116, %s117
      %p129 = scmp.eq.s32.totalorder %s23, 1
      %p130 = por %p128, %p129
      %p132 = scmp.ne.s32.totalorder %s117, %s131
      %p133 = scmp.eq.s32.totalorder %s23, 0
      %p134 = por %p132, %p133
      %s136 = sadd.s32 %s135, 1
      %p139 = scmp.eq.s32.totalorder %s17, 1
      %p140 = scmp.ne.s32.totalorder %s135, %s137
      %p141 = scmp.eq.s32.totalorder %s17, 0
      %p142 = por %p140, %p141
      %p143 = scmp.ne.s32.totalorder %s135, %s137
      %p144 = scmp.eq.s32.totalorder %s22, 1
      %p145 = por %p143, %p144
      %p146 = scmp.ne.s32.totalorder %s137, %s138
      %p147 = scmp.eq.s32.totalorder %s22, 0
      %p148 = por %p146, %p147
      %p149 = scmp.ne.s32.totalorder %s137, %s138
      %p150 = scmp.eq.s32.totalorder %s23, 1
      %p151 = por %p149, %p150
      %p153 = scmp.ne.s32.totalorder %s138, %s152
      %p154 = scmp.eq.s32.totalorder %s23, 0
      %p155 = por %p153, %p154
      %s157 = sadd.s32 %s156, 1
      %p160 = scmp.eq.s32.totalorder %s17, 1
      %p161 = scmp.ne.s32.totalorder %s156, %s158
      %p162 = scmp.eq.s32.totalorder %s17, 0
      %p163 = por %p161, %p162
      %p164 = scmp.ne.s32.totalorder %s156, %s158
      %p165 = scmp.eq.s32.totalorder %s22, 1
      %p166 = por %p164, %p165
      %p167 = scmp.ne.s32.totalorder %s158, %s159
      %p168 = scmp.eq.s32.totalorder %s22, 0
      %p169 = por %p167, %p168
      %p170 = scmp.ne.s32.totalorder %s158, %s159
      %p171 = scmp.eq.s32.totalorder %s23, 1
      %p172 = por %p170, %p171
      %p174 = scmp.ne.s32.totalorder %s159, %s173
      %p175 = scmp.eq.s32.totalorder %s23, 0
      %p176 = por %p174, %p175
      %s178 = sadd.s32 %s177, 1
      %p181 = scmp.eq.s32.totalorder %s17, 1
      %p182 = scmp.ne.s32.totalorder %s177, %s179
      %p183 = scmp.eq.s32.totalorder %s17, 0
      %p184 = por %p182, %p183
      %p185 = scmp.ne.s32.totalorder %s177, %s179
      %p186 = scmp.eq.s32.totalorder %s22, 1
      %p187 = por %p185, %p186
      %p188 = scmp.ne.s32.totalorder %s179, %s180
      %p189 = scmp.eq.s32.totalorder %s22, 0
      %p190 = por %p188, %p189
      %p191 = scmp.ne.s32.totalorder %s179, %s180
      %p192 = scmp.eq.s32.totalorder %s23, 1
      %p193 = por %p191, %p192
      %p195 = scmp.ne.s32.totalorder %s180, %s194
      %p196 = scmp.eq.s32.totalorder %s23, 0
      %p197 = por %p195, %p196
      %s198 = ssub.s32 %s17, %s24
      %p199 = scmp.eq.s32.totalorder %s198, 0
      %s201 = sadd.s32 %s200, 1
      %s202 = scalar_select %p199, %s200, %s201
      %p205 = pneg %p199
      %p206 = scmp.eq.s32.totalorder %s17, 1
      %p207 = por %p205, %p206
      %p208 = scmp.ne.s32.totalorder %s200, %s203
      %p209 = scmp.eq.s32.totalorder %s17, 0
      %p210 = por %p208, %p209
      %p211 = scmp.ne.s32.totalorder %s200, %s203
      %p212 = scmp.eq.s32.totalorder %s22, 1
      %p213 = por %p211, %p212
      %p214 = scmp.ne.s32.totalorder %s203, %s204
      %p215 = scmp.eq.s32.totalorder %s22, 0
      %p216 = por %p214, %p215
      %p217 = scmp.ne.s32.totalorder %s203, %s204
      %p218 = scmp.eq.s32.totalorder %s23, 1
      %p219 = por %p217, %p218
      %p221 = scmp.ne.s32.totalorder %s204, %s220
      %p222 = scmp.eq.s32.totalorder %s23, 0
      %p223 = por %p221, %p222
      %p224 = scmp.le.s32.totalorder 1, %s17
      %p225 = scmp.lt.s32.totalorder %s17, 3
      %p226 = pnand %p224, %p225
      %p227 = pneg %p226
      // Predicated region
      $region9: #{hpb3d_forward.7} parent=5 // pred_check
        _
      $region10: #{hpb3d_forward.7} parent=5 // pred_check_branch
        %229 = sbr.rel (%p226) target = $region12
      $region11: #{hpb3d_forward.7} parent=5 // pred_region
        %s230 = ssub.s32 %s17, 1
        // Predicated region
        $region13: #{hpb3d_forward.7} parent=11 // pred_check
          %p231 = pneg %p64
        $region14: #{hpb3d_forward.7} parent=11 // pred_check_branch
          %233 = sbr.rel (%p231) target = $region16
        $region15: #{hpb3d_forward.7} parent=11 // pred_region
          _
        $region16: #{hpb3d_forward.7} parent=11 // pred_fallthru
          _
        // Predicated region
        $region17: #{hpb3d_forward.7} parent=11 // pred_check
          %p234 = pneg %p85
        $region18: #{hpb3d_forward.7} parent=11 // pred_check_branch
          %236 = sbr.rel (%p234) target = $region20
        $region19: #{hpb3d_forward.7} parent=11 // pred_region
          _
        $region20: #{hpb3d_forward.7} parent=11 // pred_fallthru
          _
        // Predicated region
        $region21: #{hpb3d_forward.7} parent=11 // pred_check
          %p237 = pneg %p106
        $region22: #{hpb3d_forward.7} parent=11 // pred_check_branch
          %239 = sbr.rel (%p237) target = $region24
        $region23: #{hpb3d_forward.7} parent=11 // pred_region
          _
        $region24: #{hpb3d_forward.7} parent=11 // pred_fallthru
          _
        // Predicated region
        $region25: #{hpb3d_forward.7} parent=11 // pred_check
          %p240 = pneg %p127
        $region26: #{hpb3d_forward.7} parent=11 // pred_check_branch
          %242 = sbr.rel (%p240) target = $region28
        $region27: #{hpb3d_forward.7} parent=11 // pred_region
          _
        $region28: #{hpb3d_forward.7} parent=11 // pred_fallthru
          _
        // Predicated region
        $region29: #{hpb3d_forward.7} parent=11 // pred_check
          %p243 = pneg %p148
        $region30: #{hpb3d_forward.7} parent=11 // pred_check_branch
          %245 = sbr.rel (%p243) target = $region32
        $region31: #{hpb3d_forward.7} parent=11 // pred_region
          _
        $region32: #{hpb3d_forward.7} parent=11 // pred_fallthru
          _
        // Predicated region
        $region33: #{hpb3d_forward.7} parent=11 // pred_check
          %p246 = pneg %p169
        $region34: #{hpb3d_forward.7} parent=11 // pred_check_branch
          %248 = sbr.rel (%p246) target = $region36
        $region35: #{hpb3d_forward.7} parent=11 // pred_region
          _
        $region36: #{hpb3d_forward.7} parent=11 // pred_fallthru
          _
        // Predicated region
        $region37: #{hpb3d_forward.7} parent=11 // pred_check
          %p249 = pneg %p190
        $region38: #{hpb3d_forward.7} parent=11 // pred_check_branch
          %251 = sbr.rel (%p249) target = $region40
        $region39: #{hpb3d_forward.7} parent=11 // pred_region
          _
        $region40: #{hpb3d_forward.7} parent=11 // pred_fallthru
          _
      $region12: #{hpb3d_forward.7} parent=5 // pred_fallthru
        _
      %p252 = scmp.lt.s32.totalorder %s17, 2
      // Predicated region
      $region41: #{hpb3d_forward.7} parent=5 // pred_check
        %p253 = pneg %p252
      $region42: #{hpb3d_forward.7} parent=5 // pred_check_branch
        %255 = sbr.rel (%p253) target = $region44
      $region43: #{hpb3d_forward.7} parent=5 // pred_region
        // Predicated region
        $region45: #{hpb3d_forward.7} parent=43 // pred_check
          %p256 = pneg %p37
        $region46: #{hpb3d_forward.7} parent=43 // pred_check_branch
          %258 = sbr.rel (%p256) target = $region48
        $region47: #{hpb3d_forward.7} parent=43 // pred_region
          %p259 = scmp.lt.s32.totalorder %s17, 1
          %s260 = scalar_select %p259, %s17, 1
          %s261 = smul.addr %s260, 8
          %s262 = smul.addr %s261, 8
          %s263 = scalar_lea.vmem %s0, %s262
        $region48: #{hpb3d_forward.7} parent=43 // pred_fallthru
          _
      $region44: #{hpb3d_forward.7} parent=5 // pred_fallthru
        _
      %p264 = scmp.le.s32.totalorder 1, %s17
      %p265 = scmp.lt.s32.totalorder %s17, 3
      %p266 = pnand %p264, %p265
      %p267 = pneg %p266
      // Predicated region
      $region49: #{hpb3d_forward.7} parent=5 // pred_check
        _
      $region50: #{hpb3d_forward.7} parent=5 // pred_check_branch
        %269 = sbr.rel (%p266) target = $region52
      $region51: #{hpb3d_forward.7} parent=5 // pred_region
        %s270 = ssub.s32 %s17, 1
        %p271 = scmp.lt.s32.totalorder %s22, 1
        %s272 = scalar_select %p271, %s22, 1
        %s273 = smul.addr %s272, 8
        %s274 = smul.addr %s273, 8
        %s275 = scalar_lea.vmem %s0, %s274
        %p276 = pneg %p43
        %p277 = pneg %p40
        %p278 = pneg %p64
        %p279 = pneg %p61
        %p280 = pneg %p85
        %p281 = pneg %p82
        %p282 = pneg %p106
        %p283 = pneg %p103
        %p284 = pneg %p127
        %p285 = pneg %p124
        %p286 = pneg %p148
        %p287 = pneg %p145
        %p288 = pneg %p169
        %p289 = pneg %p166
        %p290 = pneg %p190
        %p291 = pneg %p187
        %p292 = pneg %p216
        %p293 = pneg %p213
        %s294 = sand.u32 %s203, 1
        %s295 = scalar_lea.sflag [#allocation3], %s294
        %s296 = sand.u32 %s203, 1
        %s297 = smul.addr %s296, 64
        %s298 = scalar_lea.vmem [#allocation2], %s297
        %p299 = scmp.lt.s32.totalorder %s22, 1
        %s300 = scalar_select %p299, %s22, 1
        %s301 = smul.addr %s300, 8
        %s302 = smul.addr %s301, 8
        %s303 = scalar_lea.vmem %s0, %s302
        %v305 = vld [vmem:[%s303] sm:$0xff]
        %v306 = vld [vmem:[%s303 + $0x8] sm:$0xff]
        %v307 = vld [vmem:[%s303 + $0x10] sm:$0xff]
        %v308 = vld [vmem:[%s303 + $0x18] sm:$0xff]
        %v309 = vld [vmem:[%s303 + $0x20] sm:$0xff]
        %v310 = vld [vmem:[%s303 + $0x28] sm:$0xff]
        %v311 = vld [vmem:[%s303 + $0x30] sm:$0xff]
        %v312 = vld [vmem:[%s303 + $0x38] sm:$0xff]
        %v313 = vld [vmem:[%s1] sm:$0xff]
        %v314 = vld [vmem:[%s1 + $0x8] sm:$0xff]
        %v315 = vld [vmem:[%s1 + $0x10] sm:$0xff]
        %v316 = vld [vmem:[%s1 + $0x18] sm:$0xff]
        %v317 = vld [vmem:[%s1 + $0x20] sm:$0xff]
        %v318 = vld [vmem:[%s1 + $0x28] sm:$0xff]
        %v319 = vld [vmem:[%s1 + $0x30] sm:$0xff]
        %v320 = vld [vmem:[%s1 + $0x38] sm:$0xff]
        %v321 = vpack.c.bf16 %v306, %v305
        %v322 = vpack.c.bf16 %v308, %v307
        %v323 = vpack.c.bf16 %v310, %v309
        %v324 = vpack.c.bf16 %v312, %v311
        %v325 = vld [vmem:[%s2] sm:$0xf]
        %v326 = vld [vmem:[%s3] sm:$0x1]
        %v328 = vlaneseq
        %v329 = vshrl.u32 %v328, 7
        %v330 = vsub.s32 0, %v329
        %v331 = vrot.slane %v326, %v330
        %vm333 = vcmask 64512
        %v335 = vsel %vm333, %v321, 0
        %v338 = vsel %vm333, %v322, 0
        %v341 = vsel %vm333, %v323, 0
        %v344 = vsel %vm333, %v324, 0
        %vm346 = vcmask 1043456
        %v348 = vsel %vm346, %v325, 0
        %350 = vmatprep.subr.bf16.mxu0 0
        %351 = vmatpush1.bf16.msra.mxu0 0
        %352 = vmatprep.subr.bf16.mxu0 0
        %353 = vmatpush1.bf16.msra.mxu0 0
        %354 = vmatprep.subr.bf16.mxu0 0
        %355 = vmatpush1.bf16.msra.mxu0 0
        %356 = vmatprep.subr.bf16.mxu0 0
        %357 = vmatpush1.bf16.msra.mxu0 0
        %358 = vmatprep.subr.bf16.mxu0 0
        %359 = vmatpush1.bf16.msra.mxu0 0
        %360 = vmatprep.subr.bf16.mxu0 0
        %361 = vmatpush1.bf16.msra.mxu0 0
        %362 = vmatprep.subr.bf16.mxu0 0
        %363 = vmatpush1.bf16.msra.mxu0 0
        %364 = vmatprep.subr.bf16.mxu0 0
        %365 = vmatpush1.bf16.msra.mxu0 %v348
        %366 = vmatprep.subr.bf16.mxu0 0
        %367 = vmatpush2.bf16.msra.mxu0 0
        %368 = vmatprep.subr.bf16.mxu0 0
        %369 = vmatpush2.bf16.msra.mxu0 0
        %370 = vmatprep.subr.bf16.mxu0 0
        %371 = vmatpush2.bf16.msra.mxu0 0
        %372 = vmatprep.subr.bf16.mxu0 0
        %373 = vmatpush2.bf16.msra.mxu0 0
        %374 = vmatprep.subr.bf16.mxu0 0
        %375 = vmatpush2.bf16.msra.mxu0 0
        %376 = vmatprep.subr.bf16.mxu0 0
        %377 = vmatpush2.bf16.msra.mxu0 0
        %378 = vmatprep.subr.bf16.mxu0 0
        %379 = vmatpush2.bf16.msra.mxu0 0
        %380 = vmatprep.subr.bf16.mxu0 0
        %381 = vmatpush2.bf16.msra.mxu0 0
        %382 = vmatprep.mubr.bf16.mxu0 0
        %383 = vmatmul.mubr.bf16.gmra.mxu0 %v335
        %v384 = vpop.f32.mrf.mxu0
        %v385 = vadd.f32 %v331, %v384
        %v386 = vpop.f32.mrf.mxu0
        %v387 = vpop.f32.mrf.mxu0
        %v388 = vadd.f32 %v331, %v387
        %v389 = vpop.f32.mrf.mxu0
        %390 = vmatprep.mubr.bf16.mxu0 0
        %391 = vmatmul.mubr.bf16.gmra.mxu0 %v338
        %v392 = vpop.f32.mrf.mxu0
        %v393 = vadd.f32 %v331, %v392
        %v394 = vpop.f32.mrf.mxu0
        %v395 = vpop.f32.mrf.mxu0
        %v396 = vadd.f32 %v331, %v395
        %v397 = vpop.f32.mrf.mxu0
        %398 = vmatprep.mubr.bf16.mxu0 0
        %399 = vmatmul.mubr.bf16.gmra.mxu0 %v341
        %v400 = vpop.f32.mrf.mxu0
        %v401 = vadd.f32 %v331, %v400
        %v402 = vpop.f32.mrf.mxu0
        %v403 = vpop.f32.mrf.mxu0
        %v404 = vadd.f32 %v331, %v403
        %v405 = vpop.f32.mrf.mxu0
        %406 = vmatprep.mubr.bf16.mxu0 0
        %407 = vmatmul.mubr.bf16.gmra.mxu0 %v344
        %v408 = vpop.f32.mrf.mxu0
        %v409 = vadd.f32 %v331, %v408
        %v410 = vpop.f32.mrf.mxu0
        %v411 = vpop.f32.mrf.mxu0
        %v412 = vadd.f32 %v331, %v411
        %v413 = vpop.f32.mrf.mxu0
        %414 = vdwg.mxu0
        %vm415 = vcmask 130048
        %v416 = vsel %vm415, %v385, 0.0
        %v417 = vsel %vm415, %v388, 0.0
        %v418 = vadd.f32 %v416, %v417
        %v419 = vsel %vm415, %v393, 0.0
        %v420 = vadd.f32 %v418, %v419
        %v421 = vsel %vm415, %v396, 0.0
        %v422 = vadd.f32 %v420, %v421
        %v423 = vsel %vm415, %v401, 0.0
        %v424 = vadd.f32 %v422, %v423
        %v425 = vsel %vm415, %v404, 0.0
        %v426 = vadd.f32 %v424, %v425
        %v427 = vsel %vm415, %v409, 0.0
        %v428 = vadd.f32 %v426, %v427
        %v429 = vsel %vm415, %v412, 0.0
        %v430 = vadd.f32 %v428, %v429
        %v431 = vrot.slane %v430, 4
        %v432 = vadd.f32 %v430, %v431
        %v433 = vrot.slane %v432, 2
        %v434 = vadd.f32 %v432, %v433
        %v435 = vrot.slane %v434, 1
        %v436 = vadd.f32 %v434, %v435
        %v437 = vrcp.pop 64.0
        %v438 = vmul.f32 %v436, %v437
        %v439 = vmul.f32 %v385, %v385
        %v440 = vmul.f32 %v388, %v388
        %v441 = vmul.f32 %v393, %v393
        %v442 = vmul.f32 %v396, %v396
        %v443 = vmul.f32 %v401, %v401
        %v444 = vmul.f32 %v404, %v404
        %v445 = vmul.f32 %v409, %v409
        %v446 = vmul.f32 %v412, %v412
        %v447 = vsel %vm415, %v439, 0.0
        %v448 = vsel %vm415, %v440, 0.0
        %v449 = vadd.f32 %v447, %v448
        %v450 = vsel %vm415, %v441, 0.0
        %v451 = vadd.f32 %v449, %v450
        %v452 = vsel %vm415, %v442, 0.0
        %v453 = vadd.f32 %v451, %v452
        %v454 = vsel %vm415, %v443, 0.0
        %v455 = vadd.f32 %v453, %v454
        %v456 = vsel %vm415, %v444, 0.0
        %v457 = vadd.f32 %v455, %v456
        %v458 = vsel %vm415, %v445, 0.0
        %v459 = vadd.f32 %v457, %v458
        %v460 = vsel %vm415, %v446, 0.0
        %v461 = vadd.f32 %v459, %v460
        %v462 = vrot.slane %v461, 4
        %v463 = vadd.f32 %v461, %v462
        %v464 = vrot.slane %v463, 2
        %v465 = vadd.f32 %v463, %v464
        %v466 = vrot.slane %v465, 1
        %v467 = vadd.f32 %v465, %v466
        %v468 = vmul.f32 %v467, %v437
        %v469 = vmul.f32 %v438, %v438
        %v470 = vsub.f32 %v468, %v469
        %v471 = vmax.f32 %v470, 0.0
        %v472 = vsub.f32 %v385, %v438
        %v473 = vsub.f32 %v388, %v438
        %v474 = vsub.f32 %v393, %v438
        %v475 = vsub.f32 %v396, %v438
        %v476 = vsub.f32 %v401, %v438
        %v477 = vsub.f32 %v404, %v438
        %v478 = vsub.f32 %v409, %v438
        %v479 = vsub.f32 %v412, %v438
        %v480 = vadd.f32 %v471, 1e-05
        %v481 = vrsqrt.pop %v480
        %v482 = vmul.f32 %v472, %v481
        %v483 = vmul.f32 %v473, %v481
        %v484 = vmul.f32 %v474, %v481
        %v485 = vmul.f32 %v475, %v481
        %v486 = vmul.f32 %v476, %v481
        %v487 = vmul.f32 %v477, %v481
        %v488 = vmul.f32 %v478, %v481
        %v489 = vmul.f32 %v479, %v481
        %v490 = vmul.f32 %v482, 0.5
        %v491 = vmul.f32 %v483, 0.5
        %v492 = vmul.f32 %v484, 0.5
        %v493 = vmul.f32 %v485, 0.5
        %v494 = vmul.f32 %v486, 0.5
        %v495 = vmul.f32 %v487, 0.5
        %v496 = vmul.f32 %v488, 0.5
        %v497 = vmul.f32 %v489, 0.5
        %v498 = vmul.f32 %v482, 0.70710677
        %v499 = vmul.f32 %v483, 0.70710677
        %v500 = vmul.f32 %v484, 0.70710677
        %v501 = vmul.f32 %v485, 0.70710677
        %v502 = vmul.f32 %v486, 0.70710677
        %v503 = vmul.f32 %v487, 0.70710677
        %v504 = vmul.f32 %v488, 0.70710677
        %v505 = vmul.f32 %v489, 0.70710677
        %v506 = vand.u32 2147483647, %v498
        %v507 = vand.u32 2147483647, %v499
        %v508 = vand.u32 2147483647, %v500
        %v509 = vand.u32 2147483647, %v501
        %v510 = vand.u32 2147483647, %v502
        %v511 = vand.u32 2147483647, %v503
        %v512 = vand.u32 2147483647, %v504
        %v513 = vand.u32 2147483647, %v505
        %v514 = vmul.f32 %v506, 0.3275911
        %v515 = vmul.f32 %v507, 0.3275911
        %v516 = vmul.f32 %v508, 0.3275911
        %v517 = vmul.f32 %v509, 0.3275911
        %v518 = vmul.f32 %v510, 0.3275911
        %v519 = vmul.f32 %v511, 0.3275911
        %v520 = vmul.f32 %v512, 0.3275911
        %v521 = vmul.f32 %v513, 0.3275911
        %v522 = vadd.f32 %v514, 1.0
        %v523 = vadd.f32 %v515, 1.0
        %v524 = vadd.f32 %v516, 1.0
        %v525 = vadd.f32 %v517, 1.0
        %v526 = vadd.f32 %v518, 1.0
        %v527 = vadd.f32 %v519, 1.0
        %v528 = vadd.f32 %v520, 1.0
        %v529 = vadd.f32 %v521, 1.0
        %v530 = vrcp.pop %v522
        %v531 = vmul.f32 1.0, %v530
        %v532 = vrcp.pop %v523
        %v533 = vmul.f32 1.0, %v532
        %v534 = vrcp.pop %v524
        %v535 = vmul.f32 1.0, %v534
        %v536 = vrcp.pop %v525
        %v537 = vmul.f32 1.0, %v536
        %v538 = vrcp.pop %v526
        %v539 = vmul.f32 1.0, %v538
        %v540 = vrcp.pop %v527
        %v541 = vmul.f32 1.0, %v540
        %v542 = vrcp.pop %v528
        %v543 = vmul.f32 1.0, %v542
        %v544 = vrcp.pop %v529
        %v545 = vmul.f32 1.0, %v544
        %v546 = vmul.f32 %v531, 1.0614054
        %v547 = vmul.f32 %v533, 1.0614054
        %v548 = vmul.f32 %v535, 1.0614054
        %v549 = vmul.f32 %v537, 1.0614054
        %v550 = vmul.f32 %v539, 1.0614054
        %v551 = vmul.f32 %v541, 1.0614054
        %v552 = vmul.f32 %v543, 1.0614054
        %v553 = vmul.f32 %v545, 1.0614054
        %v554 = vadd.f32 %v546, -1.4531521
        %v555 = vadd.f32 %v547, -1.4531521
        %v556 = vadd.f32 %v548, -1.4531521
        %v557 = vadd.f32 %v549, -1.4531521
        %v558 = vadd.f32 %v550, -1.4531521
        %v559 = vadd.f32 %v551, -1.4531521
        %v560 = vadd.f32 %v552, -1.4531521
        %v561 = vadd.f32 %v553, -1.4531521
        %v562 = vmul.f32 %v554, %v531
        %v563 = vmul.f32 %v555, %v533
        %v564 = vmul.f32 %v556, %v535
        %v565 = vmul.f32 %v557, %v537
        %v566 = vmul.f32 %v558, %v539
        %v567 = vmul.f32 %v559, %v541
        %v568 = vmul.f32 %v560, %v543
        %v569 = vmul.f32 %v561, %v545
        %v570 = vadd.f32 %v562, 1.4214138
        %v571 = vadd.f32 %v563, 1.4214138
        %v572 = vadd.f32 %v564, 1.4214138
        %v573 = vadd.f32 %v565, 1.4214138
        %v574 = vadd.f32 %v566, 1.4214138
        %v575 = vadd.f32 %v567, 1.4214138
        %v576 = vadd.f32 %v568, 1.4214138
        %v577 = vadd.f32 %v569, 1.4214138
        %v578 = vmul.f32 %v570, %v531
        %v579 = vmul.f32 %v571, %v533
        %v580 = vmul.f32 %v572, %v535
        %v581 = vmul.f32 %v573, %v537
        %v582 = vmul.f32 %v574, %v539
        %v583 = vmul.f32 %v575, %v541
        %v584 = vmul.f32 %v576, %v543
        %v585 = vmul.f32 %v577, %v545
        %v586 = vadd.f32 %v578, -0.28449672
        %v587 = vadd.f32 %v579, -0.28449672
        %v588 = vadd.f32 %v580, -0.28449672
        %v589 = vadd.f32 %v581, -0.28449672
        %v590 = vadd.f32 %v582, -0.28449672
        %v591 = vadd.f32 %v583, -0.28449672
        %v592 = vadd.f32 %v584, -0.28449672
        %v593 = vadd.f32 %v585, -0.28449672
        %v594 = vmul.f32 %v586, %v531
        %v595 = vmul.f32 %v587, %v533
        %v596 = vmul.f32 %v588, %v535
        %v597 = vmul.f32 %v589, %v537
        %v598 = vmul.f32 %v590, %v539
        %v599 = vmul.f32 %v591, %v541
        %v600 = vmul.f32 %v592, %v543
        %v601 = vmul.f32 %v593, %v545
        %v602 = vadd.f32 %v594, 0.2548296
        %v603 = vadd.f32 %v595, 0.2548296
        %v604 = vadd.f32 %v596, 0.2548296
        %v605 = vadd.f32 %v597, 0.2548296
        %v606 = vadd.f32 %v598, 0.2548296
        %v607 = vadd.f32 %v599, 0.2548296
        %v608 = vadd.f32 %v600, 0.2548296
        %v609 = vadd.f32 %v601, 0.2548296
        %v610 = vmul.f32 %v602, %v531
        %v611 = vmul.f32 %v603, %v533
        %v612 = vmul.f32 %v604, %v535
        %v613 = vmul.f32 %v605, %v537
        %v614 = vmul.f32 %v606, %v539
        %v615 = vmul.f32 %v607, %v541
        %v616 = vmul.f32 %v608, %v543
        %v617 = vmul.f32 %v609, %v545
        %v618 = vsub.f32 0.0, %v506
        %v619 = vsub.f32 0.0, %v507
        %v620 = vsub.f32 0.0, %v508
        %v621 = vsub.f32 0.0, %v509
        %v622 = vsub.f32 0.0, %v510
        %v623 = vsub.f32 0.0, %v511
        %v624 = vsub.f32 0.0, %v512
        %v625 = vsub.f32 0.0, %v513
        %v626 = vmul.f32 %v618, %v506
        %v627 = vmul.f32 %v619, %v507
        %v628 = vmul.f32 %v620, %v508
        %v629 = vmul.f32 %v621, %v509
        %v630 = vmul.f32 %v622, %v510
        %v631 = vmul.f32 %v623, %v511
        %v632 = vmul.f32 %v624, %v512
        %v633 = vmul.f32 %v625, %v513
        %v634 = vmul.f32 %v626, 1.442695
        %v635 = vpow.pop %v634
        %v636 = vmul.f32 %v627, 1.442695
        %v637 = vpow.pop %v636
        %v638 = vmul.f32 %v628, 1.442695
        %v639 = vpow.pop %v638
        %v640 = vmul.f32 %v629, 1.442695
        %v641 = vpow.pop %v640
        %v642 = vmul.f32 %v630, 1.442695
        %v643 = vpow.pop %v642
        %v644 = vmul.f32 %v631, 1.442695
        %v645 = vpow.pop %v644
        %v646 = vmul.f32 %v632, 1.442695
        %v647 = vpow.pop %v646
        %v648 = vmul.f32 %v633, 1.442695
        %v649 = vpow.pop %v648
        %v650 = vmul.f32 %v610, %v635
        %v651 = vmul.f32 %v611, %v637
        %v652 = vmul.f32 %v612, %v639
        %v653 = vmul.f32 %v613, %v641
        %v654 = vmul.f32 %v614, %v643
        %v655 = vmul.f32 %v615, %v645
        %v656 = vmul.f32 %v616, %v647
        %v657 = vmul.f32 %v617, %v649
        %v658 = vsub.f32 1.0, %v650
        %v659 = vsub.f32 1.0, %v651
        %v660 = vsub.f32 1.0, %v652
        %v661 = vsub.f32 1.0, %v653
        %v662 = vsub.f32 1.0, %v654
        %v663 = vsub.f32 1.0, %v655
        %v664 = vsub.f32 1.0, %v656
        %v665 = vsub.f32 1.0, %v657
        %vm666 = vcmp.ge.f32.partialorder %v498, 0.0
        %vm667 = vcmp.ge.f32.partialorder %v499, 0.0
        %vm668 = vcmp.ge.f32.partialorder %v500, 0.0
        %vm669 = vcmp.ge.f32.partialorder %v501, 0.0
        %vm670 = vcmp.ge.f32.partialorder %v502, 0.0
        %vm671 = vcmp.ge.f32.partialorder %v503, 0.0
        %vm672 = vcmp.ge.f32.partialorder %v504, 0.0
        %vm673 = vcmp.ge.f32.partialorder %v505, 0.0
        %v674 = vsub.f32 0.0, %v658
        %v675 = vsub.f32 0.0, %v659
        %v676 = vsub.f32 0.0, %v660
        %v677 = vsub.f32 0.0, %v661
        %v678 = vsub.f32 0.0, %v662
        %v679 = vsub.f32 0.0, %v663
        %v680 = vsub.f32 0.0, %v664
        %v681 = vsub.f32 0.0, %v665
        %v682 = vsel %vm666, %v658, %v674
        %v683 = vsel %vm667, %v659, %v675
        %v684 = vsel %vm668, %v660, %v676
        %v685 = vsel %vm669, %v661, %v677
        %v686 = vsel %vm670, %v662, %v678
        %v687 = vsel %vm671, %v663, %v679
        %v688 = vsel %vm672, %v664, %v680
        %v689 = vsel %vm673, %v665, %v681
        %v690 = vadd.f32 %v682, 1.0
        %v691 = vadd.f32 %v683, 1.0
        %v692 = vadd.f32 %v684, 1.0
        %v693 = vadd.f32 %v685, 1.0
        %v694 = vadd.f32 %v686, 1.0
        %v695 = vadd.f32 %v687, 1.0
        %v696 = vadd.f32 %v688, 1.0
        %v697 = vadd.f32 %v689, 1.0
        %v698 = vmul.f32 %v490, %v690
        %v699 = vmul.f32 %v491, %v691
        %v700 = vmul.f32 %v492, %v692
        %v701 = vmul.f32 %v493, %v693
        %v702 = vmul.f32 %v494, %v694
        %v703 = vmul.f32 %v495, %v695
        %v704 = vmul.f32 %v496, %v696
        %v705 = vmul.f32 %v497, %v697
        %v706 = vld [vmem:[%s4] sm:$0xff]
        %v707 = vld [vmem:[%s4 + $0x8] sm:$0xff]
        %v708 = vld [vmem:[%s4 + $0x10] sm:$0xff]
        %v709 = vld [vmem:[%s4 + $0x18] sm:$0x7]
        %v710 = vld [vmem:[%s5] sm:$0x1]
        %v712 = vlaneseq
        %v713 = vshrl.u32 %v712, 7
        %v714 = vsub.s32 0, %v713
        %v715 = vrot.slane %v710, %v714
        %v717 = vadd.f32 %v715, 0.0
        %v718 = vlaneseq
        %v719 = vshrl.u32 %v718, 7
        %v720 = vsub.s32 0, %v719
        %v721 = vrot.slane %v706, %v720
        %v722 = vmul.f32 %v721, 0.0
        %v723 = vmul.f32 %v698, %v721
        %v724 = vmul.f32 %v699, %v721
        %v725 = vmul.f32 %v700, %v721
        %v726 = vmul.f32 %v701, %v721
        %v727 = vmul.f32 %v702, %v721
        %v728 = vmul.f32 %v703, %v721
        %730 = vset.pattern.permute.xlu0 0
        %731 = vperm.xlu0 %730, %v313
        %v732 = vpop.permute.xlu0 %731
        %734 = vset.pattern.permute.xlu0 0
        %735 = vperm.xlu0 %734, %v314
        %v736 = vpop.permute.xlu0 %735
        %738 = vset.pattern.permute.xlu0 0
        %739 = vperm.xlu0 %738, %v315
        %v740 = vpop.permute.xlu0 %739
        %742 = vset.pattern.permute.xlu0 0
        %743 = vperm.xlu0 %742, %v316
        %v744 = vpop.permute.xlu0 %743
        %746 = vset.pattern.permute.xlu0 0
        %747 = vperm.xlu0 %746, %v317
        %v748 = vpop.permute.xlu0 %747
        %750 = vset.pattern.permute.xlu0 0
        %751 = vperm.xlu0 %750, %v318
        %v752 = vpop.permute.xlu0 %751
        %754 = vset.pattern.permute.xlu0 0
        %755 = vperm.xlu0 %754, %v319
        %v756 = vpop.permute.xlu0 %755
        %758 = vset.pattern.permute.xlu0 0
        %759 = vperm.xlu0 %758, %v320
        %v760 = vpop.permute.xlu0 %759
        %vm761 = vcmask 1042432
        %v762 = vrot.slane %v732, 5
        %v763 = vrot.slane %v736, 5
        %v764 = vsel %vm761, %v762, %v763
        %v765 = vrot.slane %v740, 5
        %v766 = vsel %vm761, %v763, %v765
        %v767 = vrot.slane %v744, 5
        %v768 = vsel %vm761, %v765, %v767
        %v769 = vrot.slane %v748, 5
        %v770 = vsel %vm761, %v767, %v769
        %v771 = vrot.slane %v752, 5
        %v772 = vsel %vm761, %v769, %v771
        %v773 = vrot.slane %v756, 5
        %v774 = vsel %vm761, %v771, %v773
        %v775 = vrot.slane %v760, 5
        %v776 = vsel %vm761, %v773, %v775
        %v786 = vmul.f32 %v722, %v762
        %v787 = vmul.f32 %v722, %v764
        %v788 = vmul.f32 %v722, %v766
        %v789 = vmul.f32 %v723, %v768
        %v790 = vmul.f32 %v724, %v770
        %v791 = vmul.f32 %v725, %v772
        %v792 = vmul.f32 %v726, %v774
        %v793 = vmul.f32 %v727, %v776
        %v794 = vmul.f32 %v728, %v775
        %v795 = vadd.f32 %v717, %v786
        %v796 = vadd.f32 %v717, %v787
        %v797 = vadd.f32 %v717, %v788
        %v798 = vadd.f32 %v717, %v789
        %v799 = vadd.f32 %v717, %v790
        %v800 = vadd.f32 %v717, %v791
        %v801 = vadd.f32 %v717, %v792
        %v802 = vadd.f32 %v717, %v793
        %v803 = vadd.f32 %v717, %v794
        %v804 = vlaneseq
        %v805 = vshrl.u32 %v804, 7
        %v806 = vsub.s32 1, %v805
        %v807 = vrot.slane %v706, %v806
        %v808 = vmul.f32 %v807, 0.0
        %v809 = vmul.f32 %v698, %v807
        %v810 = vmul.f32 %v699, %v807
        %v811 = vmul.f32 %v700, %v807
        %v812 = vmul.f32 %v701, %v807
        %v813 = vmul.f32 %v702, %v807
        %v814 = vmul.f32 %v703, %v807
        %815 = vset.pattern.permute.xlu0 1
        %816 = vperm.xlu0 %815, %v313
        %v817 = vpop.permute.xlu0 %816
        %818 = vset.pattern.permute.xlu0 1
        %819 = vperm.xlu0 %818, %v314
        %v820 = vpop.permute.xlu0 %819
        %821 = vset.pattern.permute.xlu0 1
        %822 = vperm.xlu0 %821, %v315
        %v823 = vpop.permute.xlu0 %822
        %824 = vset.pattern.permute.xlu0 1
        %825 = vperm.xlu0 %824, %v316
        %v826 = vpop.permute.xlu0 %825
        %827 = vset.pattern.permute.xlu0 1
        %828 = vperm.xlu0 %827, %v317
        %v829 = vpop.permute.xlu0 %828
        %830 = vset.pattern.permute.xlu0 1
        %831 = vperm.xlu0 %830, %v318
        %v832 = vpop.permute.xlu0 %831
        %833 = vset.pattern.permute.xlu0 1
        %834 = vperm.xlu0 %833, %v319
        %v835 = vpop.permute.xlu0 %834
        %836 = vset.pattern.permute.xlu0 1
        %837 = vperm.xlu0 %836, %v320
        %v838 = vpop.permute.xlu0 %837
        %v839 = vrot.slane %v817, 4
        %v840 = vrot.slane %v820, 4
        %v841 = vsel %vm346, %v839, %v840
        %v842 = vrot.slane %v823, 4
        %v843 = vsel %vm346, %v840, %v842
        %v844 = vrot.slane %v826, 4
        %v845 = vsel %vm346, %v842, %v844
        %v846 = vrot.slane %v829, 4
        %v847 = vsel %vm346, %v844, %v846
        %v848 = vrot.slane %v832, 4
        %v849 = vsel %vm346, %v846, %v848
        %v850 = vrot.slane %v835, 4
        %v851 = vsel %vm346, %v848, %v850
        %v852 = vrot.slane %v838, 4
        %v853 = vsel %vm346, %v850, %v852
        %v863 = vmul.f32 %v808, %v839
        %v864 = vmul.f32 %v808, %v841
        %v865 = vmul.f32 %v808, %v843
        %v866 = vmul.f32 %v809, %v845
        %v867 = vmul.f32 %v810, %v847
        %v868 = vmul.f32 %v811, %v849
        %v869 = vmul.f32 %v812, %v851
        %v870 = vmul.f32 %v813, %v853
        %v871 = vmul.f32 %v814, %v852
        %vm881 = vcmask 1046528
        %v882 = vrot.slane %v863, 1
        %v883 = vrot.slane %v864, 1
        %v884 = vsel %vm881, %v882, %v883
        %v885 = vrot.slane %v865, 1
        %v886 = vsel %vm881, %v883, %v885
        %v887 = vrot.slane %v866, 1
        %v888 = vsel %vm881, %v885, %v887
        %v889 = vrot.slane %v867, 1
        %v890 = vsel %vm881, %v887, %v889
        %v891 = vrot.slane %v868, 1
        %v892 = vsel %vm881, %v889, %v891
        %v893 = vrot.slane %v869, 1
        %v894 = vsel %vm881, %v891, %v893
        %v895 = vrot.slane %v870, 1
        %v896 = vsel %vm881, %v893, %v895
        %v897 = vrot.slane %v871, 1
        %v898 = vsel %vm881, %v895, %v897
        %v908 = vadd.f32 %v795, %v884
        %v909 = vadd.f32 %v796, %v886
        %v910 = vadd.f32 %v797, %v888
        %v911 = vadd.f32 %v798, %v890
        %v912 = vadd.f32 %v799, %v892
        %v913 = vadd.f32 %v800, %v894
        %v914 = vadd.f32 %v801, %v896
        %v915 = vadd.f32 %v802, %v898
        %v916 = vadd.f32 %v803, %v897
        %v917 = vlaneseq
        %v918 = vshrl.u32 %v917, 7
        %v919 = vsub.s32 2, %v918
        %v920 = vrot.slane %v706, %v919
        %v921 = vmul.f32 %v920, 0.0
        %v922 = vmul.f32 %v698, %v920
        %v923 = vmul.f32 %v699, %v920
        %v924 = vmul.f32 %v700, %v920
        %v925 = vmul.f32 %v701, %v920
        %v926 = vmul.f32 %v702, %v920
        %v927 = vmul.f32 %v703, %v920
        %928 = vset.pattern.permute.xlu0 2
        %929 = vperm.xlu0 %928, %v313
        %v930 = vpop.permute.xlu0 %929
        %931 = vset.pattern.permute.xlu0 2
        %932 = vperm.xlu0 %931, %v314
        %v933 = vpop.permute.xlu0 %932
        %934 = vset.pattern.permute.xlu0 2
        %935 = vperm.xlu0 %934, %v315
        %v936 = vpop.permute.xlu0 %935
        %937 = vset.pattern.permute.xlu0 2
        %938 = vperm.xlu0 %937, %v316
        %v939 = vpop.permute.xlu0 %938
        %940 = vset.pattern.permute.xlu0 2
        %941 = vperm.xlu0 %940, %v317
        %v942 = vpop.permute.xlu0 %941
        %943 = vset.pattern.permute.xlu0 2
        %944 = vperm.xlu0 %943, %v318
        %v945 = vpop.permute.xlu0 %944
        %946 = vset.pattern.permute.xlu0 2
        %947 = vperm.xlu0 %946, %v319
        %v948 = vpop.permute.xlu0 %947
        %949 = vset.pattern.permute.xlu0 2
        %950 = vperm.xlu0 %949, %v320
        %v951 = vpop.permute.xlu0 %950
        %vm952 = vcmask 1044480
        %v953 = vrot.slane %v930, 3
        %v954 = vrot.slane %v933, 3
        %v955 = vsel %vm952, %v953, %v954
        %v956 = vrot.slane %v936, 3
        %v957 = vsel %vm952, %v954, %v956
        %v958 = vrot.slane %v939, 3
        %v959 = vsel %vm952, %v956, %v958
        %v960 = vrot.slane %v942, 3
        %v961 = vsel %vm952, %v958, %v960
        %v962 = vrot.slane %v945, 3
        %v963 = vsel %vm952, %v960, %v962
        %v964 = vrot.slane %v948, 3
        %v965 = vsel %vm952, %v962, %v964
        %v966 = vrot.slane %v951, 3
        %v967 = vsel %vm952, %v964, %v966
        %v977 = vmul.f32 %v921, %v953
        %v978 = vmul.f32 %v921, %v955
        %v979 = vmul.f32 %v921, %v957
        %v980 = vmul.f32 %v922, %v959
        %v981 = vmul.f32 %v923, %v961
        %v982 = vmul.f32 %v924, %v963
        %v983 = vmul.f32 %v925, %v965
        %v984 = vmul.f32 %v926, %v967
        %v985 = vmul.f32 %v927, %v966
        %vm995 = vcmask 1045504
        %v996 = vrot.slane %v977, 2
        %v997 = vrot.slane %v978, 2
        %v998 = vsel %vm995, %v996, %v997
        %v999 = vrot.slane %v979, 2
        %v1000 = vsel %vm995, %v997, %v999
        %v1001 = vrot.slane %v980, 2
        %v1002 = vsel %vm995, %v999, %v1001
        %v1003 = vrot.slane %v981, 2
        %v1004 = vsel %vm995, %v1001, %v1003
        %v1005 = vrot.slane %v982, 2
        %v1006 = vsel %vm995, %v1003, %v1005
        %v1007 = vrot.slane %v983, 2
        %v1008 = vsel %vm995, %v1005, %v1007
        %v1009 = vrot.slane %v984, 2
        %v1010 = vsel %vm995, %v1007, %v1009
        %v1011 = vrot.slane %v985, 2
        %v1012 = vsel %vm995, %v1009, %v1011
        %v1022 = vadd.f32 %v908, %v998
        %v1023 = vadd.f32 %v909, %v1000
        %v1024 = vadd.f32 %v910, %v1002
        %v1025 = vadd.f32 %v911, %v1004
        %v1026 = vadd.f32 %v912, %v1006
        %v1027 = vadd.f32 %v913, %v1008
        %v1028 = vadd.f32 %v914, %v1010
        %v1029 = vadd.f32 %v915, %v1012
        %v1030 = vadd.f32 %v916, %v1011
        %v1031 = vlaneseq
        %v1032 = vshrl.u32 %v1031, 7
        %v1033 = vsub.s32 3, %v1032
        %v1034 = vrot.slane %v706, %v1033
        %v1035 = vmul.f32 %v1034, 0.0
        %v1036 = vmul.f32 %v698, %v1034
        %v1037 = vmul.f32 %v699, %v1034
        %v1038 = vmul.f32 %v700, %v1034
        %v1039 = vmul.f32 %v701, %v1034
        %v1040 = vmul.f32 %v702, %v1034
        %v1041 = vmul.f32 %v703, %v1034
        %1042 = vset.pattern.permute.xlu0 3
        %1043 = vperm.xlu0 %1042, %v313
        %v1044 = vpop.permute.xlu0 %1043
        %1045 = vset.pattern.permute.xlu0 3
        %1046 = vperm.xlu0 %1045, %v314
        %v1047 = vpop.permute.xlu0 %1046
        %1048 = vset.pattern.permute.xlu0 3
        %1049 = vperm.xlu0 %1048, %v315
        %v1050 = vpop.permute.xlu0 %1049
        %1051 = vset.pattern.permute.xlu0 3
        %1052 = vperm.xlu0 %1051, %v316
        %v1053 = vpop.permute.xlu0 %1052
        %1054 = vset.pattern.permute.xlu0 3
        %1055 = vperm.xlu0 %1054, %v317
        %v1056 = vpop.permute.xlu0 %1055
        %1057 = vset.pattern.permute.xlu0 3
        %1058 = vperm.xlu0 %1057, %v318
        %v1059 = vpop.permute.xlu0 %1058
        %1060 = vset.pattern.permute.xlu0 3
        %1061 = vperm.xlu0 %1060, %v319
        %v1062 = vpop.permute.xlu0 %1061
        %1063 = vset.pattern.permute.xlu0 3
        %1064 = vperm.xlu0 %1063, %v320
        %v1065 = vpop.permute.xlu0 %1064
        %v1066 = vrot.slane %v1044, 1
        %v1067 = vrot.slane %v1047, 1
        %v1068 = vsel %vm881, %v1066, %v1067
        %v1069 = vrot.slane %v1050, 1
        %v1070 = vsel %vm881, %v1067, %v1069
        %v1071 = vrot.slane %v1053, 1
        %v1072 = vsel %vm881, %v1069, %v1071
        %v1073 = vrot.slane %v1056, 1
        %v1074 = vsel %vm881, %v1071, %v1073
        %v1075 = vrot.slane %v1059, 1
        %v1076 = vsel %vm881, %v1073, %v1075
        %v1077 = vrot.slane %v1062, 1
        %v1078 = vsel %vm881, %v1075, %v1077
        %v1079 = vrot.slane %v1065, 1
        %v1080 = vsel %vm881, %v1077, %v1079
        %v1090 = vmul.f32 %v1035, %v1066
        %v1091 = vmul.f32 %v1035, %v1068
        %v1092 = vmul.f32 %v1035, %v1070
        %v1093 = vmul.f32 %v1036, %v1072
        %v1094 = vmul.f32 %v1037, %v1074
        %v1095 = vmul.f32 %v1038, %v1076
        %v1096 = vmul.f32 %v1039, %v1078
        %v1097 = vmul.f32 %v1040, %v1080
        %v1098 = vmul.f32 %v1041, %v1079
        %v1108 = vrot.slane %v1090, 4
        %v1109 = vrot.slane %v1091, 4
        %v1110 = vsel %vm346, %v1108, %v1109
        %v1111 = vrot.slane %v1092, 4
        %v1112 = vsel %vm346, %v1109, %v1111
        %v1113 = vrot.slane %v1093, 4
        %v1114 = vsel %vm346, %v1111, %v1113
        %v1115 = vrot.slane %v1094, 4
        %v1116 = vsel %vm346, %v1113, %v1115
        %v1117 = vrot.slane %v1095, 4
        %v1118 = vsel %vm346, %v1115, %v1117
        %v1119 = vrot.slane %v1096, 4
        %v1120 = vsel %vm346, %v1117, %v1119
        %v1121 = vrot.slane %v1097, 4
        %v1122 = vsel %vm346, %v1119, %v1121
        %v1123 = vrot.slane %v1098, 4
        %v1124 = vsel %vm346, %v1121, %v1123
        %v1134 = vadd.f32 %v1022, %v1110
        %v1135 = vadd.f32 %v1023, %v1112
        %v1136 = vadd.f32 %v1024, %v1114
        %v1137 = vadd.f32 %v1025, %v1116
        %v1138 = vadd.f32 %v1026, %v1118
        %v1139 = vadd.f32 %v1027, %v1120
        %v1140 = vadd.f32 %v1028, %v1122
        %v1141 = vadd.f32 %v1029, %v1124
        %v1142 = vadd.f32 %v1030, %v1123
        %v1143 = vlaneseq
        %v1144 = vshrl.u32 %v1143, 7
        %v1145 = vsub.s32 4, %v1144
        %v1146 = vrot.slane %v706, %v1145
        %v1147 = vmul.f32 %v1146, 0.0
        %v1148 = vmul.f32 %v698, %v1146
        %v1149 = vmul.f32 %v699, %v1146
        %v1150 = vmul.f32 %v700, %v1146
        %v1151 = vmul.f32 %v701, %v1146
        %v1152 = vmul.f32 %v702, %v1146
        %v1153 = vmul.f32 %v703, %v1146
        %1154 = vset.pattern.permute.xlu0 4
        %1155 = vperm.xlu0 %1154, %v313
        %v1156 = vpop.permute.xlu0 %1155
        %1158 = vset.pattern.permute.xlu0 4
        %1159 = vperm.xlu0 %1158, %v314
        %v1160 = vpop.permute.xlu0 %1159
        %1162 = vset.pattern.permute.xlu0 4
        %1163 = vperm.xlu0 %1162, %v315
        %v1164 = vpop.permute.xlu0 %1163
        %1166 = vset.pattern.permute.xlu0 4
        %1167 = vperm.xlu0 %1166, %v316
        %v1168 = vpop.permute.xlu0 %1167
        %1170 = vset.pattern.permute.xlu0 4
        %1171 = vperm.xlu0 %1170, %v317
        %v1172 = vpop.permute.xlu0 %1171
        %1174 = vset.pattern.permute.xlu0 4
        %1175 = vperm.xlu0 %1174, %v318
        %v1176 = vpop.permute.xlu0 %1175
        %1178 = vset.pattern.permute.xlu0 4
        %1179 = vperm.xlu0 %1178, %v319
        %v1180 = vpop.permute.xlu0 %1179
        %1182 = vset.pattern.permute.xlu0 4
        %1183 = vperm.xlu0 %1182, %v320
        %v1184 = vpop.permute.xlu0 %1183
        %v1186 = vmul.f32 %v1147, %v1156
        %v1187 = vmul.f32 %v1147, %v1160
        %v1188 = vmul.f32 %v1148, %v1164
        %v1189 = vmul.f32 %v1149, %v1168
        %v1190 = vmul.f32 %v1150, %v1172
        %v1191 = vmul.f32 %v1151, %v1176
        %v1192 = vmul.f32 %v1152, %v1180
        %v1193 = vmul.f32 %v1153, %v1184
        %v1202 = vrot.slane %v1186, 5
        %v1203 = vrot.slane %v1187, 5
        %v1204 = vsel %vm761, %v1202, %v1203
        %v1205 = vrot.slane %v1188, 5
        %v1206 = vsel %vm761, %v1203, %v1205
        %v1207 = vrot.slane %v1189, 5
        %v1208 = vsel %vm761, %v1205, %v1207
        %v1209 = vrot.slane %v1190, 5
        %v1210 = vsel %vm761, %v1207, %v1209
        %v1211 = vrot.slane %v1191, 5
        %v1212 = vsel %vm761, %v1209, %v1211
        %v1213 = vrot.slane %v1192, 5
        %v1214 = vsel %vm761, %v1211, %v1213
        %v1215 = vrot.slane %v1193, 5
        %v1216 = vsel %vm761, %v1213, %v1215
        %v1226 = vadd.f32 %v1134, %v1202
        %v1227 = vadd.f32 %v1135, %v1204
        %v1228 = vadd.f32 %v1136, %v1206
        %v1229 = vadd.f32 %v1137, %v1208
        %v1230 = vadd.f32 %v1138, %v1210
        %v1231 = vadd.f32 %v1139, %v1212
        %v1232 = vadd.f32 %v1140, %v1214
        %v1233 = vadd.f32 %v1141, %v1216
        %v1234 = vadd.f32 %v1142, %v1215
        %v1235 = vlaneseq
        %v1236 = vshrl.u32 %v1235, 7
        %v1237 = vsub.s32 5, %v1236
        %v1238 = vrot.slane %v706, %v1237
        %v1239 = vmul.f32 %v1238, 0.0
        %v1240 = vmul.f32 %v698, %v1238
        %v1241 = vmul.f32 %v699, %v1238
        %v1242 = vmul.f32 %v700, %v1238
        %v1243 = vmul.f32 %v701, %v1238
        %v1244 = vmul.f32 %v702, %v1238
        %v1245 = vmul.f32 %v703, %v1238
        %v1246 = vmul.f32 %v704, %v1238
        %1247 = vset.pattern.permute.xlu0 5
        %1248 = vperm.xlu0 %1247, %v313
        %v1249 = vpop.permute.xlu0 %1248
        %1250 = vset.pattern.permute.xlu0 5
        %1251 = vperm.xlu0 %1250, %v314
        %v1252 = vpop.permute.xlu0 %1251
        %1253 = vset.pattern.permute.xlu0 5
        %1254 = vperm.xlu0 %1253, %v315
        %v1255 = vpop.permute.xlu0 %1254
        %1256 = vset.pattern.permute.xlu0 5
        %1257 = vperm.xlu0 %1256, %v316
        %v1258 = vpop.permute.xlu0 %1257
        %1259 = vset.pattern.permute.xlu0 5
        %1260 = vperm.xlu0 %1259, %v317
        %v1261 = vpop.permute.xlu0 %1260
        %1262 = vset.pattern.permute.xlu0 5
        %1263 = vperm.xlu0 %1262, %v318
        %v1264 = vpop.permute.xlu0 %1263
        %1265 = vset.pattern.permute.xlu0 5
        %1266 = vperm.xlu0 %1265, %v319
        %v1267 = vpop.permute.xlu0 %1266
        %1268 = vset.pattern.permute.xlu0 5
        %1269 = vperm.xlu0 %1268, %v320
        %v1270 = vpop.permute.xlu0 %1269
        %vm1271 = vcmask 1040384
        %v1272 = vrot.slane %v1249, 7
        %v1273 = vrot.slane %v1252, 7
        %v1274 = vsel %vm1271, %v1272, %v1273
        %v1275 = vrot.slane %v1255, 7
        %v1276 = vsel %vm1271, %v1273, %v1275
        %v1277 = vrot.slane %v1258, 7
        %v1278 = vsel %vm1271, %v1275, %v1277
        %v1279 = vrot.slane %v1261, 7
        %v1280 = vsel %vm1271, %v1277, %v1279
        %v1281 = vrot.slane %v1264, 7
        %v1282 = vsel %vm1271, %v1279, %v1281
        %v1283 = vrot.slane %v1267, 7
        %v1284 = vsel %vm1271, %v1281, %v1283
        %v1285 = vrot.slane %v1270, 7
        %v1286 = vsel %vm1271, %v1283, %v1285
        %v1296 = vmul.f32 %v1239, %v1272
        %v1297 = vmul.f32 %v1239, %v1274
        %v1298 = vmul.f32 %v1240, %v1276
        %v1299 = vmul.f32 %v1241, %v1278
        %v1300 = vmul.f32 %v1242, %v1280
        %v1301 = vmul.f32 %v1243, %v1282
        %v1302 = vmul.f32 %v1244, %v1284
        %v1303 = vmul.f32 %v1245, %v1286
        %v1304 = vmul.f32 %v1246, %v1285
        %vm1314 = vcmask 1041408
        %v1315 = vrot.slane %v1296, 6
        %v1316 = vrot.slane %v1297, 6
        %v1317 = vsel %vm1314, %v1315, %v1316
        %v1318 = vrot.slane %v1298, 6
        %v1319 = vsel %vm1314, %v1316, %v1318
        %v1320 = vrot.slane %v1299, 6
        %v1321 = vsel %vm1314, %v1318, %v1320
        %v1322 = vrot.slane %v1300, 6
        %v1323 = vsel %vm1314, %v1320, %v1322
        %v1324 = vrot.slane %v1301, 6
        %v1325 = vsel %vm1314, %v1322, %v1324
        %v1326 = vrot.slane %v1302, 6
        %v1327 = vsel %vm1314, %v1324, %v1326
        %v1328 = vrot.slane %v1303, 6
        %v1329 = vsel %vm1314, %v1326, %v1328
        %v1330 = vrot.slane %v1304, 6
        %v1331 = vsel %vm1314, %v1328, %v1330
        %v1341 = vadd.f32 %v1226, %v1315
        %v1342 = vadd.f32 %v1227, %v1317
        %v1343 = vadd.f32 %v1228, %v1319
        %v1344 = vadd.f32 %v1229, %v1321
        %v1345 = vadd.f32 %v1230, %v1323
        %v1346 = vadd.f32 %v1231, %v1325
        %v1347 = vadd.f32 %v1232, %v1327
        %v1348 = vadd.f32 %v1233, %v1329
        %v1349 = vadd.f32 %v1234, %v1331
        %v1350 = vlaneseq
        %v1351 = vshrl.u32 %v1350, 7
        %v1352 = vsub.s32 6, %v1351
        %v1353 = vrot.slane %v706, %v1352
        %v1354 = vmul.f32 %v1353, 0.0
        %v1355 = vmul.f32 %v698, %v1353
        %v1356 = vmul.f32 %v699, %v1353
        %v1357 = vmul.f32 %v700, %v1353
        %v1358 = vmul.f32 %v701, %v1353
        %v1359 = vmul.f32 %v702, %v1353
        %v1360 = vmul.f32 %v703, %v1353
        %v1361 = vmul.f32 %v704, %v1353
        %1362 = vset.pattern.permute.xlu0 6
        %1363 = vperm.xlu0 %1362, %v313
        %v1364 = vpop.permute.xlu0 %1363
        %1365 = vset.pattern.permute.xlu0 6
        %1366 = vperm.xlu0 %1365, %v314
        %v1367 = vpop.permute.xlu0 %1366
        %1368 = vset.pattern.permute.xlu0 6
        %1369 = vperm.xlu0 %1368, %v315
        %v1370 = vpop.permute.xlu0 %1369
        %1371 = vset.pattern.permute.xlu0 6
        %1372 = vperm.xlu0 %1371, %v316
        %v1373 = vpop.permute.xlu0 %1372
        %1374 = vset.pattern.permute.xlu0 6
        %1375 = vperm.xlu0 %1374, %v317
        %v1376 = vpop.permute.xlu0 %1375
        %1377 = vset.pattern.permute.xlu0 6
        %1378 = vperm.xlu0 %1377, %v318
        %v1379 = vpop.permute.xlu0 %1378
        %1380 = vset.pattern.permute.xlu0 6
        %1381 = vperm.xlu0 %1380, %v319
        %v1382 = vpop.permute.xlu0 %1381
        %1383 = vset.pattern.permute.xlu0 6
        %1384 = vperm.xlu0 %1383, %v320
        %v1385 = vpop.permute.xlu0 %1384
        %v1386 = vrot.slane %v1364, 5
        %v1387 = vrot.slane %v1367, 5
        %v1388 = vsel %vm761, %v1386, %v1387
        %v1389 = vrot.slane %v1370, 5
        %v1390 = vsel %vm761, %v1387, %v1389
        %v1391 = vrot.slane %v1373, 5
        %v1392 = vsel %vm761, %v1389, %v1391
        %v1393 = vrot.slane %v1376, 5
        %v1394 = vsel %vm761, %v1391, %v1393
        %v1395 = vrot.slane %v1379, 5
        %v1396 = vsel %vm761, %v1393, %v1395
        %v1397 = vrot.slane %v1382, 5
        %v1398 = vsel %vm761, %v1395, %v1397
        %v1399 = vrot.slane %v1385, 5
        %v1400 = vsel %vm761, %v1397, %v1399
        %v1410 = vmul.f32 %v1354, %v1386
        %v1411 = vmul.f32 %v1354, %v1388
        %v1412 = vmul.f32 %v1355, %v1390
        %v1413 = vmul.f32 %v1356, %v1392
        %v1414 = vmul.f32 %v1357, %v1394
        %v1415 = vmul.f32 %v1358, %v1396
        %v1416 = vmul.f32 %v1359, %v1398
        %v1417 = vmul.f32 %v1360, %v1400
        %v1418 = vmul.f32 %v1361, %v1399
        %v1419 = vadd.f32 %v1341, %v1410
        %v1420 = vadd.f32 %v1342, %v1411
        %v1421 = vadd.f32 %v1343, %v1412
        %v1422 = vadd.f32 %v1344, %v1413
        %v1423 = vadd.f32 %v1345, %v1414
        %v1424 = vadd.f32 %v1346, %v1415
        %v1425 = vadd.f32 %v1347, %v1416
        %v1426 = vadd.f32 %v1348, %v1417
        %v1427 = vadd.f32 %v1349, %v1418
        %v1428 = vlaneseq
        %v1429 = vshrl.u32 %v1428, 7
        %v1430 = vsub.s32 7, %v1429
        %v1431 = vrot.slane %v706, %v1430
        %v1432 = vmul.f32 %v1431, 0.0
        %v1433 = vmul.f32 %v698, %v1431
        %v1434 = vmul.f32 %v699, %v1431
        %v1435 = vmul.f32 %v700, %v1431
        %v1436 = vmul.f32 %v701, %v1431
        %v1437 = vmul.f32 %v702, %v1431
        %v1438 = vmul.f32 %v703, %v1431
        %v1439 = vmul.f32 %v704, %v1431
        %1440 = vset.pattern.permute.xlu0 7
        %1441 = vperm.xlu0 %1440, %v313
        %v1442 = vpop.permute.xlu0 %1441
        %1443 = vset.pattern.permute.xlu0 7
        %1444 = vperm.xlu0 %1443, %v314
        %v1445 = vpop.permute.xlu0 %1444
        %1446 = vset.pattern.permute.xlu0 7
        %1447 = vperm.xlu0 %1446, %v315
        %v1448 = vpop.permute.xlu0 %1447
        %1449 = vset.pattern.permute.xlu0 7
        %1450 = vperm.xlu0 %1449, %v316
        %v1451 = vpop.permute.xlu0 %1450
        %1452 = vset.pattern.permute.xlu0 7
        %1453 = vperm.xlu0 %1452, %v317
        %v1454 = vpop.permute.xlu0 %1453
        %1455 = vset.pattern.permute.xlu0 7
        %1456 = vperm.xlu0 %1455, %v318
        %v1457 = vpop.permute.xlu0 %1456
        %1458 = vset.pattern.permute.xlu0 7
        %1459 = vperm.xlu0 %1458, %v319
        %v1460 = vpop.permute.xlu0 %1459
        %1461 = vset.pattern.permute.xlu0 7
        %1462 = vperm.xlu0 %1461, %v320
        %v1463 = vpop.permute.xlu0 %1462
        %v1464 = vrot.slane %v1442, 4
        %v1465 = vrot.slane %v1445, 4
        %v1466 = vsel %vm346, %v1464, %v1465
        %v1467 = vrot.slane %v1448, 4
        %v1468 = vsel %vm346, %v1465, %v1467
        %v1469 = vrot.slane %v1451, 4
        %v1470 = vsel %vm346, %v1467, %v1469
        %v1471 = vrot.slane %v1454, 4
        %v1472 = vsel %vm346, %v1469, %v1471
        %v1473 = vrot.slane %v1457, 4
        %v1474 = vsel %vm346, %v1471, %v1473
        %v1475 = vrot.slane %v1460, 4
        %v1476 = vsel %vm346, %v1473, %v1475
        %v1477 = vrot.slane %v1463, 4
        %v1478 = vsel %vm346, %v1475, %v1477
        %v1488 = vmul.f32 %v1432, %v1464
        %v1489 = vmul.f32 %v1432, %v1466
        %v1490 = vmul.f32 %v1433, %v1468
        %v1491 = vmul.f32 %v1434, %v1470
        %v1492 = vmul.f32 %v1435, %v1472
        %v1493 = vmul.f32 %v1436, %v1474
        %v1494 = vmul.f32 %v1437, %v1476
        %v1495 = vmul.f32 %v1438, %v1478
        %v1496 = vmul.f32 %v1439, %v1477
        %v1506 = vrot.slane %v1488, 1
        %v1507 = vrot.slane %v1489, 1
        %v1508 = vsel %vm881, %v1506, %v1507
        %v1509 = vrot.slane %v1490, 1
        %v1510 = vsel %vm881, %v1507, %v1509
        %v1511 = vrot.slane %v1491, 1
        %v1512 = vsel %vm881, %v1509, %v1511
        %v1513 = vrot.slane %v1492, 1
        %v1514 = vsel %vm881, %v1511, %v1513
        %v1515 = vrot.slane %v1493, 1
        %v1516 = vsel %vm881, %v1513, %v1515
        %v1517 = vrot.slane %v1494, 1
        %v1518 = vsel %vm881, %v1515, %v1517
        %v1519 = vrot.slane %v1495, 1
        %v1520 = vsel %vm881, %v1517, %v1519
        %v1521 = vrot.slane %v1496, 1
        %v1522 = vsel %vm881, %v1519, %v1521
        %v1532 = vadd.f32 %v1419, %v1508
        %v1533 = vadd.f32 %v1420, %v1510
        %v1534 = vadd.f32 %v1421, %v1512
        %v1535 = vadd.f32 %v1422, %v1514
        %v1536 = vadd.f32 %v1423, %v1516
        %v1537 = vadd.f32 %v1424, %v1518
        %v1538 = vadd.f32 %v1425, %v1520
        %v1539 = vadd.f32 %v1426, %v1522
        %v1540 = vadd.f32 %v1427, %v1521
        %v1541 = vlaneseq
        %v1542 = vshrl.u32 %v1541, 7
        %v1543 = vsub.s32 0, %v1542
        %v1544 = vrot.slane %v707, %v1543
        %v1545 = vmul.f32 %v1544, 0.0
        %v1546 = vmul.f32 %v698, %v1544
        %v1547 = vmul.f32 %v699, %v1544
        %v1548 = vmul.f32 %v700, %v1544
        %v1549 = vmul.f32 %v701, %v1544
        %v1550 = vmul.f32 %v702, %v1544
        %v1551 = vmul.f32 %v703, %v1544
        %v1552 = vmul.f32 %v704, %v1544
        %1553 = vset.pattern.permute.xlu0 8
        %1554 = vperm.xlu0 %1553, %v313
        %v1555 = vpop.permute.xlu0 %1554
        %1556 = vset.pattern.permute.xlu0 8
        %1557 = vperm.xlu0 %1556, %v314
        %v1558 = vpop.permute.xlu0 %1557
        %1559 = vset.pattern.permute.xlu0 8
        %1560 = vperm.xlu0 %1559, %v315
        %v1561 = vpop.permute.xlu0 %1560
        %1562 = vset.pattern.permute.xlu0 8
        %1563 = vperm.xlu0 %1562, %v316
        %v1564 = vpop.permute.xlu0 %1563
        %1565 = vset.pattern.permute.xlu0 8
        %1566 = vperm.xlu0 %1565, %v317
        %v1567 = vpop.permute.xlu0 %1566
        %1568 = vset.pattern.permute.xlu0 8
        %1569 = vperm.xlu0 %1568, %v318
        %v1570 = vpop.permute.xlu0 %1569
        %1571 = vset.pattern.permute.xlu0 8
        %1572 = vperm.xlu0 %1571, %v319
        %v1573 = vpop.permute.xlu0 %1572
        %1574 = vset.pattern.permute.xlu0 8
        %1575 = vperm.xlu0 %1574, %v320
        %v1576 = vpop.permute.xlu0 %1575
        %v1577 = vrot.slane %v1555, 3
        %v1578 = vrot.slane %v1558, 3
        %v1579 = vsel %vm952, %v1577, %v1578
        %v1580 = vrot.slane %v1561, 3
        %v1581 = vsel %vm952, %v1578, %v1580
        %v1582 = vrot.slane %v1564, 3
        %v1583 = vsel %vm952, %v1580, %v1582
        %v1584 = vrot.slane %v1567, 3
        %v1585 = vsel %vm952, %v1582, %v1584
        %v1586 = vrot.slane %v1570, 3
        %v1587 = vsel %vm952, %v1584, %v1586
        %v1588 = vrot.slane %v1573, 3
        %v1589 = vsel %vm952, %v1586, %v1588
        %v1590 = vrot.slane %v1576, 3
        %v1591 = vsel %vm952, %v1588, %v1590
        %v1601 = vmul.f32 %v1545, %v1577
        %v1602 = vmul.f32 %v1545, %v1579
        %v1603 = vmul.f32 %v1546, %v1581
        %v1604 = vmul.f32 %v1547, %v1583
        %v1605 = vmul.f32 %v1548, %v1585
        %v1606 = vmul.f32 %v1549, %v1587
        %v1607 = vmul.f32 %v1550, %v1589
        %v1608 = vmul.f32 %v1551, %v1591
        %v1609 = vmul.f32 %v1552, %v1590
        %v1619 = vrot.slane %v1601, 2
        %v1620 = vrot.slane %v1602, 2
        %v1621 = vsel %vm995, %v1619, %v1620
        %v1622 = vrot.slane %v1603, 2
        %v1623 = vsel %vm995, %v1620, %v1622
        %v1624 = vrot.slane %v1604, 2
        %v1625 = vsel %vm995, %v1622, %v1624
        %v1626 = vrot.slane %v1605, 2
        %v1627 = vsel %vm995, %v1624, %v1626
        %v1628 = vrot.slane %v1606, 2
        %v1629 = vsel %vm995, %v1626, %v1628
        %v1630 = vrot.slane %v1607, 2
        %v1631 = vsel %vm995, %v1628, %v1630
        %v1632 = vrot.slane %v1608, 2
        %v1633 = vsel %vm995, %v1630, %v1632
        %v1634 = vrot.slane %v1609, 2
        %v1635 = vsel %vm995, %v1632, %v1634
        %v1645 = vadd.f32 %v1532, %v1621
        %v1646 = vadd.f32 %v1533, %v1623
        %v1647 = vadd.f32 %v1534, %v1625
        %v1648 = vadd.f32 %v1535, %v1627
        %v1649 = vadd.f32 %v1536, %v1629
        %v1650 = vadd.f32 %v1537, %v1631
        %v1651 = vadd.f32 %v1538, %v1633
        %v1652 = vadd.f32 %v1539, %v1635
        %v1653 = vadd.f32 %v1540, %v1634
        %v1654 = vlaneseq
        %v1655 = vshrl.u32 %v1654, 7
        %v1656 = vsub.s32 1, %v1655
        %v1657 = vrot.slane %v707, %v1656
        %v1658 = vmul.f32 %v1657, 0.0
        %v1659 = vmul.f32 %v698, %v1657
        %v1660 = vmul.f32 %v699, %v1657
        %v1661 = vmul.f32 %v700, %v1657
        %v1662 = vmul.f32 %v701, %v1657
        %v1663 = vmul.f32 %v702, %v1657
        %v1664 = vmul.f32 %v703, %v1657
        %v1665 = vmul.f32 %v704, %v1657
        %v1666 = vmul.f32 %v705, %v1657
        %1667 = vset.pattern.permute.xlu0 9
        %1668 = vperm.xlu0 %1667, %v313
        %v1669 = vpop.permute.xlu0 %1668
        %1670 = vset.pattern.permute.xlu0 9
        %1671 = vperm.xlu0 %1670, %v314
        %v1672 = vpop.permute.xlu0 %1671
        %1673 = vset.pattern.permute.xlu0 9
        %1674 = vperm.xlu0 %1673, %v315
        %v1675 = vpop.permute.xlu0 %1674
        %1676 = vset.pattern.permute.xlu0 9
        %1677 = vperm.xlu0 %1676, %v316
        %v1678 = vpop.permute.xlu0 %1677
        %1679 = vset.pattern.permute.xlu0 9
        %1680 = vperm.xlu0 %1679, %v317
        %v1681 = vpop.permute.xlu0 %1680
        %1682 = vset.pattern.permute.xlu0 9
        %1683 = vperm.xlu0 %1682, %v318
        %v1684 = vpop.permute.xlu0 %1683
        %1685 = vset.pattern.permute.xlu0 9
        %1686 = vperm.xlu0 %1685, %v319
        %v1687 = vpop.permute.xlu0 %1686
        %1688 = vset.pattern.permute.xlu0 9
        %1689 = vperm.xlu0 %1688, %v320
        %v1690 = vpop.permute.xlu0 %1689
        %v1691 = vrot.slane %v1669, 5
        %v1692 = vrot.slane %v1672, 5
        %v1693 = vsel %vm761, %v1691, %v1692
        %v1694 = vrot.slane %v1675, 5
        %v1695 = vsel %vm761, %v1692, %v1694
        %v1696 = vrot.slane %v1678, 5
        %v1697 = vsel %vm761, %v1694, %v1696
        %v1698 = vrot.slane %v1681, 5
        %v1699 = vsel %vm761, %v1696, %v1698
        %v1700 = vrot.slane %v1684, 5
        %v1701 = vsel %vm761, %v1698, %v1700
        %v1702 = vrot.slane %v1687, 5
        %v1703 = vsel %vm761, %v1700, %v1702
        %v1704 = vrot.slane %v1690, 5
        %v1705 = vsel %vm761, %v1702, %v1704
        %v1715 = vmul.f32 %v1658, %v1691
        %v1716 = vmul.f32 %v1659, %v1693
        %v1717 = vmul.f32 %v1660, %v1695
        %v1718 = vmul.f32 %v1661, %v1697
        %v1719 = vmul.f32 %v1662, %v1699
        %v1720 = vmul.f32 %v1663, %v1701
        %v1721 = vmul.f32 %v1664, %v1703
        %v1722 = vmul.f32 %v1665, %v1705
        %v1723 = vmul.f32 %v1666, %v1704
        %v1724 = vadd.f32 %v1645, %v1715
        %v1725 = vadd.f32 %v1646, %v1716
        %v1726 = vadd.f32 %v1647, %v1717
        %v1727 = vadd.f32 %v1648, %v1718
        %v1728 = vadd.f32 %v1649, %v1719
        %v1729 = vadd.f32 %v1650, %v1720
        %v1730 = vadd.f32 %v1651, %v1721
        %v1731 = vadd.f32 %v1652, %v1722
        %v1732 = vadd.f32 %v1653, %v1723
        %v1733 = vlaneseq
        %v1734 = vshrl.u32 %v1733, 7
        %v1735 = vsub.s32 2, %v1734
        %v1736 = vrot.slane %v707, %v1735
        %v1737 = vmul.f32 %v1736, 0.0
        %v1738 = vmul.f32 %v698, %v1736
        %v1739 = vmul.f32 %v699, %v1736
        %v1740 = vmul.f32 %v700, %v1736
        %v1741 = vmul.f32 %v701, %v1736
        %v1742 = vmul.f32 %v702, %v1736
        %v1743 = vmul.f32 %v703, %v1736
        %v1744 = vmul.f32 %v704, %v1736
        %v1745 = vmul.f32 %v705, %v1736
        %1746 = vset.pattern.permute.xlu0 10
        %1747 = vperm.xlu0 %1746, %v313
        %v1748 = vpop.permute.xlu0 %1747
        %1749 = vset.pattern.permute.xlu0 10
        %1750 = vperm.xlu0 %1749, %v314
        %v1751 = vpop.permute.xlu0 %1750
        %1752 = vset.pattern.permute.xlu0 10
        %1753 = vperm.xlu0 %1752, %v315
        %v1754 = vpop.permute.xlu0 %1753
        %1755 = vset.pattern.permute.xlu0 10
        %1756 = vperm.xlu0 %1755, %v316
        %v1757 = vpop.permute.xlu0 %1756
        %1758 = vset.pattern.permute.xlu0 10
        %1759 = vperm.xlu0 %1758, %v317
        %v1760 = vpop.permute.xlu0 %1759
        %1761 = vset.pattern.permute.xlu0 10
        %1762 = vperm.xlu0 %1761, %v318
        %v1763 = vpop.permute.xlu0 %1762
        %1764 = vset.pattern.permute.xlu0 10
        %1765 = vperm.xlu0 %1764, %v319
        %v1766 = vpop.permute.xlu0 %1765
        %1767 = vset.pattern.permute.xlu0 10
        %1768 = vperm.xlu0 %1767, %v320
        %v1769 = vpop.permute.xlu0 %1768
        %v1770 = vrot.slane %v1748, 4
        %v1771 = vrot.slane %v1751, 4
        %v1772 = vsel %vm346, %v1770, %v1771
        %v1773 = vrot.slane %v1754, 4
        %v1774 = vsel %vm346, %v1771, %v1773
        %v1775 = vrot.slane %v1757, 4
        %v1776 = vsel %vm346, %v1773, %v1775
        %v1777 = vrot.slane %v1760, 4
        %v1778 = vsel %vm346, %v1775, %v1777
        %v1779 = vrot.slane %v1763, 4
        %v1780 = vsel %vm346, %v1777, %v1779
        %v1781 = vrot.slane %v1766, 4
        %v1782 = vsel %vm346, %v1779, %v1781
        %v1783 = vrot.slane %v1769, 4
        %v1784 = vsel %vm346, %v1781, %v1783
        %v1794 = vmul.f32 %v1737, %v1770
        %v1795 = vmul.f32 %v1738, %v1772
        %v1796 = vmul.f32 %v1739, %v1774
        %v1797 = vmul.f32 %v1740, %v1776
        %v1798 = vmul.f32 %v1741, %v1778
        %v1799 = vmul.f32 %v1742, %v1780
        %v1800 = vmul.f32 %v1743, %v1782
        %v1801 = vmul.f32 %v1744, %v1784
        %v1802 = vmul.f32 %v1745, %v1783
        %v1812 = vrot.slane %v1794, 1
        %v1813 = vrot.slane %v1795, 1
        %v1814 = vsel %vm881, %v1812, %v1813
        %v1815 = vrot.slane %v1796, 1
        %v1816 = vsel %vm881, %v1813, %v1815
        %v1817 = vrot.slane %v1797, 1
        %v1818 = vsel %vm881, %v1815, %v1817
        %v1819 = vrot.slane %v1798, 1
        %v1820 = vsel %vm881, %v1817, %v1819
        %v1821 = vrot.slane %v1799, 1
        %v1822 = vsel %vm881, %v1819, %v1821
        %v1823 = vrot.slane %v1800, 1
        %v1824 = vsel %vm881, %v1821, %v1823
        %v1825 = vrot.slane %v1801, 1
        %v1826 = vsel %vm881, %v1823, %v1825
        %v1827 = vrot.slane %v1802, 1
        %v1828 = vsel %vm881, %v1825, %v1827
        %v1838 = vadd.f32 %v1724, %v1814
        %v1839 = vadd.f32 %v1725, %v1816
        %v1840 = vadd.f32 %v1726, %v1818
        %v1841 = vadd.f32 %v1727, %v1820
        %v1842 = vadd.f32 %v1728, %v1822
        %v1843 = vadd.f32 %v1729, %v1824
        %v1844 = vadd.f32 %v1730, %v1826
        %v1845 = vadd.f32 %v1731, %v1828
        %v1846 = vadd.f32 %v1732, %v1827
        %v1847 = vlaneseq
        %v1848 = vshrl.u32 %v1847, 7
        %v1849 = vsub.s32 3, %v1848
        %v1850 = vrot.slane %v707, %v1849
        %v1851 = vmul.f32 %v1850, 0.0
        %v1852 = vmul.f32 %v698, %v1850
        %v1853 = vmul.f32 %v699, %v1850
        %v1854 = vmul.f32 %v700, %v1850
        %v1855 = vmul.f32 %v701, %v1850
        %v1856 = vmul.f32 %v702, %v1850
        %v1857 = vmul.f32 %v703, %v1850
        %v1858 = vmul.f32 %v704, %v1850
        %v1859 = vmul.f32 %v705, %v1850
        %1860 = vset.pattern.permute.xlu0 11
        %1861 = vperm.xlu0 %1860, %v313
        %v1862 = vpop.permute.xlu0 %1861
        %1863 = vset.pattern.permute.xlu0 11
        %1864 = vperm.xlu0 %1863, %v314
        %v1865 = vpop.permute.xlu0 %1864
        %1866 = vset.pattern.permute.xlu0 11
        %1867 = vperm.xlu0 %1866, %v315
        %v1868 = vpop.permute.xlu0 %1867
        %1869 = vset.pattern.permute.xlu0 11
        %1870 = vperm.xlu0 %1869, %v316
        %v1871 = vpop.permute.xlu0 %1870
        %1872 = vset.pattern.permute.xlu0 11
        %1873 = vperm.xlu0 %1872, %v317
        %v1874 = vpop.permute.xlu0 %1873
        %1875 = vset.pattern.permute.xlu0 11
        %1876 = vperm.xlu0 %1875, %v318
        %v1877 = vpop.permute.xlu0 %1876
        %1878 = vset.pattern.permute.xlu0 11
        %1879 = vperm.xlu0 %1878, %v319
        %v1880 = vpop.permute.xlu0 %1879
        %1881 = vset.pattern.permute.xlu0 11
        %1882 = vperm.xlu0 %1881, %v320
        %v1883 = vpop.permute.xlu0 %1882
        %v1884 = vrot.slane %v1862, 3
        %v1885 = vrot.slane %v1865, 3
        %v1886 = vsel %vm952, %v1884, %v1885
        %v1887 = vrot.slane %v1868, 3
        %v1888 = vsel %vm952, %v1885, %v1887
        %v1889 = vrot.slane %v1871, 3
        %v1890 = vsel %vm952, %v1887, %v1889
        %v1891 = vrot.slane %v1874, 3
        %v1892 = vsel %vm952, %v1889, %v1891
        %v1893 = vrot.slane %v1877, 3
        %v1894 = vsel %vm952, %v1891, %v1893
        %v1895 = vrot.slane %v1880, 3
        %v1896 = vsel %vm952, %v1893, %v1895
        %v1897 = vrot.slane %v1883, 3
        %v1898 = vsel %vm952, %v1895, %v1897
        %v1908 = vmul.f32 %v1851, %v1884
        %v1909 = vmul.f32 %v1852, %v1886
        %v1910 = vmul.f32 %v1853, %v1888
        %v1911 = vmul.f32 %v1854, %v1890
        %v1912 = vmul.f32 %v1855, %v1892
        %v1913 = vmul.f32 %v1856, %v1894
        %v1914 = vmul.f32 %v1857, %v1896
        %v1915 = vmul.f32 %v1858, %v1898
        %v1916 = vmul.f32 %v1859, %v1897
        %v1926 = vrot.slane %v1908, 2
        %v1927 = vrot.slane %v1909, 2
        %v1928 = vsel %vm995, %v1926, %v1927
        %v1929 = vrot.slane %v1910, 2
        %v1930 = vsel %vm995, %v1927, %v1929
        %v1931 = vrot.slane %v1911, 2
        %v1932 = vsel %vm995, %v1929, %v1931
        %v1933 = vrot.slane %v1912, 2
        %v1934 = vsel %vm995, %v1931, %v1933
        %v1935 = vrot.slane %v1913, 2
        %v1936 = vsel %vm995, %v1933, %v1935
        %v1937 = vrot.slane %v1914, 2
        %v1938 = vsel %vm995, %v1935, %v1937
        %v1939 = vrot.slane %v1915, 2
        %v1940 = vsel %vm995, %v1937, %v1939
        %v1941 = vrot.slane %v1916, 2
        %v1942 = vsel %vm995, %v1939, %v1941
        %v1952 = vadd.f32 %v1838, %v1928
        %v1953 = vadd.f32 %v1839, %v1930
        %v1954 = vadd.f32 %v1840, %v1932
        %v1955 = vadd.f32 %v1841, %v1934
        %v1956 = vadd.f32 %v1842, %v1936
        %v1957 = vadd.f32 %v1843, %v1938
        %v1958 = vadd.f32 %v1844, %v1940
        %v1959 = vadd.f32 %v1845, %v1942
        %v1960 = vadd.f32 %v1846, %v1941
        %v1961 = vlaneseq
        %v1962 = vshrl.u32 %v1961, 7
        %v1963 = vsub.s32 4, %v1962
        %v1964 = vrot.slane %v707, %v1963
        %v1965 = vmul.f32 %v1964, 0.0
        %v1966 = vmul.f32 %v698, %v1964
        %v1967 = vmul.f32 %v699, %v1964
        %v1968 = vmul.f32 %v700, %v1964
        %v1969 = vmul.f32 %v701, %v1964
        %v1970 = vmul.f32 %v702, %v1964
        %v1971 = vmul.f32 %v703, %v1964
        %v1972 = vmul.f32 %v704, %v1964
        %v1973 = vmul.f32 %v705, %v1964
        %1974 = vset.pattern.permute.xlu0 12
        %1975 = vperm.xlu0 %1974, %v313
        %v1976 = vpop.permute.xlu0 %1975
        %1977 = vset.pattern.permute.xlu0 12
        %1978 = vperm.xlu0 %1977, %v314
        %v1979 = vpop.permute.xlu0 %1978
        %1980 = vset.pattern.permute.xlu0 12
        %1981 = vperm.xlu0 %1980, %v315
        %v1982 = vpop.permute.xlu0 %1981
        %1983 = vset.pattern.permute.xlu0 12
        %1984 = vperm.xlu0 %1983, %v316
        %v1985 = vpop.permute.xlu0 %1984
        %1986 = vset.pattern.permute.xlu0 12
        %1987 = vperm.xlu0 %1986, %v317
        %v1988 = vpop.permute.xlu0 %1987
        %1989 = vset.pattern.permute.xlu0 12
        %1990 = vperm.xlu0 %1989, %v318
        %v1991 = vpop.permute.xlu0 %1990
        %1992 = vset.pattern.permute.xlu0 12
        %1993 = vperm.xlu0 %1992, %v319
        %v1994 = vpop.permute.xlu0 %1993
        %1995 = vset.pattern.permute.xlu0 12
        %1996 = vperm.xlu0 %1995, %v320
        %v1997 = vpop.permute.xlu0 %1996
        %v1998 = vrot.slane %v1976, 1
        %v1999 = vrot.slane %v1979, 1
        %v2000 = vsel %vm881, %v1998, %v1999
        %v2001 = vrot.slane %v1982, 1
        %v2002 = vsel %vm881, %v1999, %v2001
        %v2003 = vrot.slane %v1985, 1
        %v2004 = vsel %vm881, %v2001, %v2003
        %v2005 = vrot.slane %v1988, 1
        %v2006 = vsel %vm881, %v2003, %v2005
        %v2007 = vrot.slane %v1991, 1
        %v2008 = vsel %vm881, %v2005, %v2007
        %v2009 = vrot.slane %v1994, 1
        %v2010 = vsel %vm881, %v2007, %v2009
        %v2011 = vrot.slane %v1997, 1
        %v2012 = vsel %vm881, %v2009, %v2011
        %v2022 = vmul.f32 %v1965, %v1998
        %v2023 = vmul.f32 %v1966, %v2000
        %v2024 = vmul.f32 %v1967, %v2002
        %v2025 = vmul.f32 %v1968, %v2004
        %v2026 = vmul.f32 %v1969, %v2006
        %v2027 = vmul.f32 %v1970, %v2008
        %v2028 = vmul.f32 %v1971, %v2010
        %v2029 = vmul.f32 %v1972, %v2012
        %v2030 = vmul.f32 %v1973, %v2011
        %v2040 = vrot.slane %v2022, 4
        %v2041 = vrot.slane %v2023, 4
        %v2042 = vsel %vm346, %v2040, %v2041
        %v2043 = vrot.slane %v2024, 4
        %v2044 = vsel %vm346, %v2041, %v2043
        %v2045 = vrot.slane %v2025, 4
        %v2046 = vsel %vm346, %v2043, %v2045
        %v2047 = vrot.slane %v2026, 4
        %v2048 = vsel %vm346, %v2045, %v2047
        %v2049 = vrot.slane %v2027, 4
        %v2050 = vsel %vm346, %v2047, %v2049
        %v2051 = vrot.slane %v2028, 4
        %v2052 = vsel %vm346, %v2049, %v2051
        %v2053 = vrot.slane %v2029, 4
        %v2054 = vsel %vm346, %v2051, %v2053
        %v2055 = vrot.slane %v2030, 4
        %v2056 = vsel %vm346, %v2053, %v2055
        %v2066 = vadd.f32 %v1952, %v2042
        %v2067 = vadd.f32 %v1953, %v2044
        %v2068 = vadd.f32 %v1954, %v2046
        %v2069 = vadd.f32 %v1955, %v2048
        %v2070 = vadd.f32 %v1956, %v2050
        %v2071 = vadd.f32 %v1957, %v2052
        %v2072 = vadd.f32 %v1958, %v2054
        %v2073 = vadd.f32 %v1959, %v2056
        %v2074 = vadd.f32 %v1960, %v2055
        %v2075 = vlaneseq
        %v2076 = vshrl.u32 %v2075, 7
        %v2077 = vsub.s32 5, %v2076
        %v2078 = vrot.slane %v707, %v2077
        %v2079 = vmul.f32 %v698, %v2078
        %v2080 = vmul.f32 %v699, %v2078
        %v2081 = vmul.f32 %v700, %v2078
        %v2082 = vmul.f32 %v701, %v2078
        %v2083 = vmul.f32 %v702, %v2078
        %v2084 = vmul.f32 %v703, %v2078
        %v2085 = vmul.f32 %v704, %v2078
        %v2086 = vmul.f32 %v705, %v2078
        %v2095 = vrot.slane %v2079, 5
        %v2096 = vrot.slane %v2080, 5
        %v2097 = vsel %vm761, %v2095, %v2096
        %v2098 = vrot.slane %v2081, 5
        %v2099 = vsel %vm761, %v2096, %v2098
        %v2100 = vrot.slane %v2082, 5
        %v2101 = vsel %vm761, %v2098, %v2100
        %v2102 = vrot.slane %v2083, 5
        %v2103 = vsel %vm761, %v2100, %v2102
        %v2104 = vrot.slane %v2084, 5
        %v2105 = vsel %vm761, %v2102, %v2104
        %v2106 = vrot.slane %v2085, 5
        %v2107 = vsel %vm761, %v2104, %v2106
        %v2108 = vrot.slane %v2086, 5
        %v2109 = vsel %vm761, %v2106, %v2108
        %v2119 = vadd.f32 %v2066, %v2095
        %v2120 = vadd.f32 %v2067, %v2097
        %v2121 = vadd.f32 %v2068, %v2099
        %v2122 = vadd.f32 %v2069, %v2101
        %v2123 = vadd.f32 %v2070, %v2103
        %v2124 = vadd.f32 %v2071, %v2105
        %v2125 = vadd.f32 %v2072, %v2107
        %v2126 = vadd.f32 %v2073, %v2109
        %v2127 = vadd.f32 %v2074, %v2108
        %v2128 = vlaneseq
        %v2129 = vshrl.u32 %v2128, 7
        %v2130 = vsub.s32 6, %v2129
        %v2131 = vrot.slane %v707, %v2130
        %v2132 = vmul.f32 %v698, %v2131
        %v2133 = vmul.f32 %v699, %v2131
        %v2134 = vmul.f32 %v700, %v2131
        %v2135 = vmul.f32 %v701, %v2131
        %v2136 = vmul.f32 %v702, %v2131
        %v2137 = vmul.f32 %v703, %v2131
        %v2138 = vmul.f32 %v704, %v2131
        %v2139 = vmul.f32 %v705, %v2131
        %v2140 = vmul.f32 %v2131, 0.0
        %2141 = vset.pattern.permute.xlu0 14
        %2142 = vperm.xlu0 %2141, %v313
        %v2143 = vpop.permute.xlu0 %2142
        %2144 = vset.pattern.permute.xlu0 14
        %2145 = vperm.xlu0 %2144, %v314
        %v2146 = vpop.permute.xlu0 %2145
        %2147 = vset.pattern.permute.xlu0 14
        %2148 = vperm.xlu0 %2147, %v315
        %v2149 = vpop.permute.xlu0 %2148
        %2150 = vset.pattern.permute.xlu0 14
        %2151 = vperm.xlu0 %2150, %v316
        %v2152 = vpop.permute.xlu0 %2151
        %2153 = vset.pattern.permute.xlu0 14
        %2154 = vperm.xlu0 %2153, %v317
        %v2155 = vpop.permute.xlu0 %2154
        %2156 = vset.pattern.permute.xlu0 14
        %2157 = vperm.xlu0 %2156, %v318
        %v2158 = vpop.permute.xlu0 %2157
        %2159 = vset.pattern.permute.xlu0 14
        %2160 = vperm.xlu0 %2159, %v319
        %v2161 = vpop.permute.xlu0 %2160
        %2162 = vset.pattern.permute.xlu0 14
        %2163 = vperm.xlu0 %2162, %v320
        %v2164 = vpop.permute.xlu0 %2163
        %v2165 = vrot.slane %v2143, 7
        %v2166 = vrot.slane %v2146, 7
        %v2167 = vsel %vm1271, %v2165, %v2166
        %v2168 = vrot.slane %v2149, 7
        %v2169 = vsel %vm1271, %v2166, %v2168
        %v2170 = vrot.slane %v2152, 7
        %v2171 = vsel %vm1271, %v2168, %v2170
        %v2172 = vrot.slane %v2155, 7
        %v2173 = vsel %vm1271, %v2170, %v2172
        %v2174 = vrot.slane %v2158, 7
        %v2175 = vsel %vm1271, %v2172, %v2174
        %v2176 = vrot.slane %v2161, 7
        %v2177 = vsel %vm1271, %v2174, %v2176
        %v2178 = vrot.slane %v2164, 7
        %v2179 = vsel %vm1271, %v2176, %v2178
        %v2189 = vmul.f32 %v2132, %v2165
        %v2190 = vmul.f32 %v2133, %v2167
        %v2191 = vmul.f32 %v2134, %v2169
        %v2192 = vmul.f32 %v2135, %v2171
        %v2193 = vmul.f32 %v2136, %v2173
        %v2194 = vmul.f32 %v2137, %v2175
        %v2195 = vmul.f32 %v2138, %v2177
        %v2196 = vmul.f32 %v2139, %v2179
        %v2197 = vmul.f32 %v2140, %v2178
        %v2207 = vrot.slane %v2189, 6
        %v2208 = vrot.slane %v2190, 6
        %v2209 = vsel %vm1314, %v2207, %v2208
        %v2210 = vrot.slane %v2191, 6
        %v2211 = vsel %vm1314, %v2208, %v2210
        %v2212 = vrot.slane %v2192, 6
        %v2213 = vsel %vm1314, %v2210, %v2212
        %v2214 = vrot.slane %v2193, 6
        %v2215 = vsel %vm1314, %v2212, %v2214
        %v2216 = vrot.slane %v2194, 6
        %v2217 = vsel %vm1314, %v2214, %v2216
        %v2218 = vrot.slane %v2195, 6
        %v2219 = vsel %vm1314, %v2216, %v2218
        %v2220 = vrot.slane %v2196, 6
        %v2221 = vsel %vm1314, %v2218, %v2220
        %v2222 = vrot.slane %v2197, 6
        %v2223 = vsel %vm1314, %v2220, %v2222
        %v2233 = vadd.f32 %v2119, %v2207
        %v2234 = vadd.f32 %v2120, %v2209
        %v2235 = vadd.f32 %v2121, %v2211
        %v2236 = vadd.f32 %v2122, %v2213
        %v2237 = vadd.f32 %v2123, %v2215
        %v2238 = vadd.f32 %v2124, %v2217
        %v2239 = vadd.f32 %v2125, %v2219
        %v2240 = vadd.f32 %v2126, %v2221
        %v2241 = vadd.f32 %v2127, %v2223
        %v2242 = vlaneseq
        %v2243 = vshrl.u32 %v2242, 7
        %v2244 = vsub.s32 7, %v2243
        %v2245 = vrot.slane %v707, %v2244
        %v2246 = vmul.f32 %v698, %v2245
        %v2247 = vmul.f32 %v699, %v2245
        %v2248 = vmul.f32 %v700, %v2245
        %v2249 = vmul.f32 %v701, %v2245
        %v2250 = vmul.f32 %v702, %v2245
        %v2251 = vmul.f32 %v703, %v2245
        %v2252 = vmul.f32 %v704, %v2245
        %v2253 = vmul.f32 %v705, %v2245
        %v2254 = vmul.f32 %v2245, 0.0
        %2255 = vset.pattern.permute.xlu0 15
        %2256 = vperm.xlu0 %2255, %v313
        %v2257 = vpop.permute.xlu0 %2256
        %2258 = vset.pattern.permute.xlu0 15
        %2259 = vperm.xlu0 %2258, %v314
        %v2260 = vpop.permute.xlu0 %2259
        %2261 = vset.pattern.permute.xlu0 15
        %2262 = vperm.xlu0 %2261, %v315
        %v2263 = vpop.permute.xlu0 %2262
        %2264 = vset.pattern.permute.xlu0 15
        %2265 = vperm.xlu0 %2264, %v316
        %v2266 = vpop.permute.xlu0 %2265
        %2267 = vset.pattern.permute.xlu0 15
        %2268 = vperm.xlu0 %2267, %v317
        %v2269 = vpop.permute.xlu0 %2268
        %2270 = vset.pattern.permute.xlu0 15
        %2271 = vperm.xlu0 %2270, %v318
        %v2272 = vpop.permute.xlu0 %2271
        %2273 = vset.pattern.permute.xlu0 15
        %2274 = vperm.xlu0 %2273, %v319
        %v2275 = vpop.permute.xlu0 %2274
        %2276 = vset.pattern.permute.xlu0 15
        %2277 = vperm.xlu0 %2276, %v320
        %v2278 = vpop.permute.xlu0 %2277
        %v2279 = vrot.slane %v2257, 5
        %v2280 = vrot.slane %v2260, 5
        %v2281 = vsel %vm761, %v2279, %v2280
        %v2282 = vrot.slane %v2263, 5
        %v2283 = vsel %vm761, %v2280, %v2282
        %v2284 = vrot.slane %v2266, 5
        %v2285 = vsel %vm761, %v2282, %v2284
        %v2286 = vrot.slane %v2269, 5
        %v2287 = vsel %vm761, %v2284, %v2286
        %v2288 = vrot.slane %v2272, 5
        %v2289 = vsel %vm761, %v2286, %v2288
        %v2290 = vrot.slane %v2275, 5
        %v2291 = vsel %vm761, %v2288, %v2290
        %v2292 = vrot.slane %v2278, 5
        %v2293 = vsel %vm761, %v2290, %v2292
        %v2303 = vmul.f32 %v2246, %v2279
        %v2304 = vmul.f32 %v2247, %v2281
        %v2305 = vmul.f32 %v2248, %v2283
        %v2306 = vmul.f32 %v2249, %v2285
        %v2307 = vmul.f32 %v2250, %v2287
        %v2308 = vmul.f32 %v2251, %v2289
        %v2309 = vmul.f32 %v2252, %v2291
        %v2310 = vmul.f32 %v2253, %v2293
        %v2311 = vmul.f32 %v2254, %v2292
        %v2312 = vadd.f32 %v2233, %v2303
        %v2313 = vadd.f32 %v2234, %v2304
        %v2314 = vadd.f32 %v2235, %v2305
        %v2315 = vadd.f32 %v2236, %v2306
        %v2316 = vadd.f32 %v2237, %v2307
        %v2317 = vadd.f32 %v2238, %v2308
        %v2318 = vadd.f32 %v2239, %v2309
        %v2319 = vadd.f32 %v2240, %v2310
        %v2320 = vadd.f32 %v2241, %v2311
        %v2321 = vlaneseq
        %v2322 = vshrl.u32 %v2321, 7
        %v2323 = vsub.s32 0, %v2322
        %v2324 = vrot.slane %v708, %v2323
        %v2325 = vmul.f32 %v698, %v2324
        %v2326 = vmul.f32 %v699, %v2324
        %v2327 = vmul.f32 %v700, %v2324
        %v2328 = vmul.f32 %v701, %v2324
        %v2329 = vmul.f32 %v702, %v2324
        %v2330 = vmul.f32 %v703, %v2324
        %v2331 = vmul.f32 %v704, %v2324
        %v2332 = vmul.f32 %v705, %v2324
        %v2333 = vmul.f32 %v2324, 0.0
        %2334 = vset.pattern.permute.xlu0 16
        %2335 = vperm.xlu0 %2334, %v313
        %v2336 = vpop.permute.xlu0 %2335
        %2337 = vset.pattern.permute.xlu0 16
        %2338 = vperm.xlu0 %2337, %v314
        %v2339 = vpop.permute.xlu0 %2338
        %2340 = vset.pattern.permute.xlu0 16
        %2341 = vperm.xlu0 %2340, %v315
        %v2342 = vpop.permute.xlu0 %2341
        %2343 = vset.pattern.permute.xlu0 16
        %2344 = vperm.xlu0 %2343, %v316
        %v2345 = vpop.permute.xlu0 %2344
        %2346 = vset.pattern.permute.xlu0 16
        %2347 = vperm.xlu0 %2346, %v317
        %v2348 = vpop.permute.xlu0 %2347
        %2349 = vset.pattern.permute.xlu0 16
        %2350 = vperm.xlu0 %2349, %v318
        %v2351 = vpop.permute.xlu0 %2350
        %2352 = vset.pattern.permute.xlu0 16
        %2353 = vperm.xlu0 %2352, %v319
        %v2354 = vpop.permute.xlu0 %2353
        %2355 = vset.pattern.permute.xlu0 16
        %2356 = vperm.xlu0 %2355, %v320
        %v2357 = vpop.permute.xlu0 %2356
        %v2358 = vrot.slane %v2336, 4
        %v2359 = vrot.slane %v2339, 4
        %v2360 = vsel %vm346, %v2358, %v2359
        %v2361 = vrot.slane %v2342, 4
        %v2362 = vsel %vm346, %v2359, %v2361
        %v2363 = vrot.slane %v2345, 4
        %v2364 = vsel %vm346, %v2361, %v2363
        %v2365 = vrot.slane %v2348, 4
        %v2366 = vsel %vm346, %v2363, %v2365
        %v2367 = vrot.slane %v2351, 4
        %v2368 = vsel %vm346, %v2365, %v2367
        %v2369 = vrot.slane %v2354, 4
        %v2370 = vsel %vm346, %v2367, %v2369
        %v2371 = vrot.slane %v2357, 4
        %v2372 = vsel %vm346, %v2369, %v2371
        %v2382 = vmul.f32 %v2325, %v2358
        %v2383 = vmul.f32 %v2326, %v2360
        %v2384 = vmul.f32 %v2327, %v2362
        %v2385 = vmul.f32 %v2328, %v2364
        %v2386 = vmul.f32 %v2329, %v2366
        %v2387 = vmul.f32 %v2330, %v2368
        %v2388 = vmul.f32 %v2331, %v2370
        %v2389 = vmul.f32 %v2332, %v2372
        %v2390 = vmul.f32 %v2333, %v2371
        %v2400 = vrot.slane %v2382, 1
        %v2401 = vrot.slane %v2383, 1
        %v2402 = vsel %vm881, %v2400, %v2401
        %v2403 = vrot.slane %v2384, 1
        %v2404 = vsel %vm881, %v2401, %v2403
        %v2405 = vrot.slane %v2385, 1
        %v2406 = vsel %vm881, %v2403, %v2405
        %v2407 = vrot.slane %v2386, 1
        %v2408 = vsel %vm881, %v2405, %v2407
        %v2409 = vrot.slane %v2387, 1
        %v2410 = vsel %vm881, %v2407, %v2409
        %v2411 = vrot.slane %v2388, 1
        %v2412 = vsel %vm881, %v2409, %v2411
        %v2413 = vrot.slane %v2389, 1
        %v2414 = vsel %vm881, %v2411, %v2413
        %v2415 = vrot.slane %v2390, 1
        %v2416 = vsel %vm881, %v2413, %v2415
        %v2426 = vadd.f32 %v2312, %v2402
        %v2427 = vadd.f32 %v2313, %v2404
        %v2428 = vadd.f32 %v2314, %v2406
        %v2429 = vadd.f32 %v2315, %v2408
        %v2430 = vadd.f32 %v2316, %v2410
        %v2431 = vadd.f32 %v2317, %v2412
        %v2432 = vadd.f32 %v2318, %v2414
        %v2433 = vadd.f32 %v2319, %v2416
        %v2434 = vadd.f32 %v2320, %v2415
        %v2435 = vlaneseq
        %v2436 = vshrl.u32 %v2435, 7
        %v2437 = vsub.s32 1, %v2436
        %v2438 = vrot.slane %v708, %v2437
        %v2439 = vmul.f32 %v698, %v2438
        %v2440 = vmul.f32 %v699, %v2438
        %v2441 = vmul.f32 %v700, %v2438
        %v2442 = vmul.f32 %v701, %v2438
        %v2443 = vmul.f32 %v702, %v2438
        %v2444 = vmul.f32 %v703, %v2438
        %v2445 = vmul.f32 %v704, %v2438
        %v2446 = vmul.f32 %v705, %v2438
        %v2447 = vmul.f32 %v2438, 0.0
        %2448 = vset.pattern.permute.xlu0 17
        %2449 = vperm.xlu0 %2448, %v313
        %v2450 = vpop.permute.xlu0 %2449
        %2451 = vset.pattern.permute.xlu0 17
        %2452 = vperm.xlu0 %2451, %v314
        %v2453 = vpop.permute.xlu0 %2452
        %2454 = vset.pattern.permute.xlu0 17
        %2455 = vperm.xlu0 %2454, %v315
        %v2456 = vpop.permute.xlu0 %2455
        %2457 = vset.pattern.permute.xlu0 17
        %2458 = vperm.xlu0 %2457, %v316
        %v2459 = vpop.permute.xlu0 %2458
        %2460 = vset.pattern.permute.xlu0 17
        %2461 = vperm.xlu0 %2460, %v317
        %v2462 = vpop.permute.xlu0 %2461
        %2463 = vset.pattern.permute.xlu0 17
        %2464 = vperm.xlu0 %2463, %v318
        %v2465 = vpop.permute.xlu0 %2464
        %2466 = vset.pattern.permute.xlu0 17
        %2467 = vperm.xlu0 %2466, %v319
        %v2468 = vpop.permute.xlu0 %2467
        %2469 = vset.pattern.permute.xlu0 17
        %2470 = vperm.xlu0 %2469, %v320
        %v2471 = vpop.permute.xlu0 %2470
        %v2472 = vrot.slane %v2450, 3
        %v2473 = vrot.slane %v2453, 3
        %v2474 = vsel %vm952, %v2472, %v2473
        %v2475 = vrot.slane %v2456, 3
        %v2476 = vsel %vm952, %v2473, %v2475
        %v2477 = vrot.slane %v2459, 3
        %v2478 = vsel %vm952, %v2475, %v2477
        %v2479 = vrot.slane %v2462, 3
        %v2480 = vsel %vm952, %v2477, %v2479
        %v2481 = vrot.slane %v2465, 3
        %v2482 = vsel %vm952, %v2479, %v2481
        %v2483 = vrot.slane %v2468, 3
        %v2484 = vsel %vm952, %v2481, %v2483
        %v2485 = vrot.slane %v2471, 3
        %v2486 = vsel %vm952, %v2483, %v2485
        %v2496 = vmul.f32 %v2439, %v2472
        %v2497 = vmul.f32 %v2440, %v2474
        %v2498 = vmul.f32 %v2441, %v2476
        %v2499 = vmul.f32 %v2442, %v2478
        %v2500 = vmul.f32 %v2443, %v2480
        %v2501 = vmul.f32 %v2444, %v2482
        %v2502 = vmul.f32 %v2445, %v2484
        %v2503 = vmul.f32 %v2446, %v2486
        %v2504 = vmul.f32 %v2447, %v2485
        %v2514 = vrot.slane %v2496, 2
        %v2515 = vrot.slane %v2497, 2
        %v2516 = vsel %vm995, %v2514, %v2515
        %v2517 = vrot.slane %v2498, 2
        %v2518 = vsel %vm995, %v2515, %v2517
        %v2519 = vrot.slane %v2499, 2
        %v2520 = vsel %vm995, %v2517, %v2519
        %v2521 = vrot.slane %v2500, 2
        %v2522 = vsel %vm995, %v2519, %v2521
        %v2523 = vrot.slane %v2501, 2
        %v2524 = vsel %vm995, %v2521, %v2523
        %v2525 = vrot.slane %v2502, 2
        %v2526 = vsel %vm995, %v2523, %v2525
        %v2527 = vrot.slane %v2503, 2
        %v2528 = vsel %vm995, %v2525, %v2527
        %v2529 = vrot.slane %v2504, 2
        %v2530 = vsel %vm995, %v2527, %v2529
        %v2540 = vadd.f32 %v2426, %v2516
        %v2541 = vadd.f32 %v2427, %v2518
        %v2542 = vadd.f32 %v2428, %v2520
        %v2543 = vadd.f32 %v2429, %v2522
        %v2544 = vadd.f32 %v2430, %v2524
        %v2545 = vadd.f32 %v2431, %v2526
        %v2546 = vadd.f32 %v2432, %v2528
        %v2547 = vadd.f32 %v2433, %v2530
        %v2548 = vadd.f32 %v2434, %v2529
        %v2549 = vlaneseq
        %v2550 = vshrl.u32 %v2549, 7
        %v2551 = vsub.s32 2, %v2550
        %v2552 = vrot.slane %v708, %v2551
        %v2553 = vmul.f32 %v699, %v2552
        %v2554 = vmul.f32 %v700, %v2552
        %v2555 = vmul.f32 %v701, %v2552
        %v2556 = vmul.f32 %v702, %v2552
        %v2557 = vmul.f32 %v703, %v2552
        %v2558 = vmul.f32 %v704, %v2552
        %v2559 = vmul.f32 %v705, %v2552
        %v2560 = vmul.f32 %v2552, 0.0
        %2561 = vset.pattern.permute.xlu0 18
        %2562 = vperm.xlu0 %2561, %v313
        %v2563 = vpop.permute.xlu0 %2562
        %2564 = vset.pattern.permute.xlu0 18
        %2565 = vperm.xlu0 %2564, %v314
        %v2566 = vpop.permute.xlu0 %2565
        %2567 = vset.pattern.permute.xlu0 18
        %2568 = vperm.xlu0 %2567, %v315
        %v2569 = vpop.permute.xlu0 %2568
        %2570 = vset.pattern.permute.xlu0 18
        %2571 = vperm.xlu0 %2570, %v316
        %v2572 = vpop.permute.xlu0 %2571
        %2573 = vset.pattern.permute.xlu0 18
        %2574 = vperm.xlu0 %2573, %v317
        %v2575 = vpop.permute.xlu0 %2574
        %2576 = vset.pattern.permute.xlu0 18
        %2577 = vperm.xlu0 %2576, %v318
        %v2578 = vpop.permute.xlu0 %2577
        %2579 = vset.pattern.permute.xlu0 18
        %2580 = vperm.xlu0 %2579, %v319
        %v2581 = vpop.permute.xlu0 %2580
        %2582 = vset.pattern.permute.xlu0 18
        %2583 = vperm.xlu0 %2582, %v320
        %v2584 = vpop.permute.xlu0 %2583
        %v2585 = vrot.slane %v2563, 5
        %v2586 = vrot.slane %v2566, 5
        %v2587 = vsel %vm761, %v2585, %v2586
        %v2588 = vrot.slane %v2569, 5
        %v2589 = vsel %vm761, %v2586, %v2588
        %v2590 = vrot.slane %v2572, 5
        %v2591 = vsel %vm761, %v2588, %v2590
        %v2592 = vrot.slane %v2575, 5
        %v2593 = vsel %vm761, %v2590, %v2592
        %v2594 = vrot.slane %v2578, 5
        %v2595 = vsel %vm761, %v2592, %v2594
        %v2596 = vrot.slane %v2581, 5
        %v2597 = vsel %vm761, %v2594, %v2596
        %v2598 = vrot.slane %v2584, 5
        %v2599 = vsel %vm761, %v2596, %v2598
        %v2609 = vmul.f32 %v2553, %v2585
        %v2610 = vmul.f32 %v2554, %v2587
        %v2611 = vmul.f32 %v2555, %v2589
        %v2612 = vmul.f32 %v2556, %v2591
        %v2613 = vmul.f32 %v2557, %v2593
        %v2614 = vmul.f32 %v2558, %v2595
        %v2615 = vmul.f32 %v2559, %v2597
        %v2616 = vmul.f32 %v2560, %v2599
        %v2617 = vmul.f32 %v2560, %v2598
        %v2618 = vadd.f32 %v2540, %v2609
        %v2619 = vadd.f32 %v2541, %v2610
        %v2620 = vadd.f32 %v2542, %v2611
        %v2621 = vadd.f32 %v2543, %v2612
        %v2622 = vadd.f32 %v2544, %v2613
        %v2623 = vadd.f32 %v2545, %v2614
        %v2624 = vadd.f32 %v2546, %v2615
        %v2625 = vadd.f32 %v2547, %v2616
        %v2626 = vadd.f32 %v2548, %v2617
        %v2627 = vlaneseq
        %v2628 = vshrl.u32 %v2627, 7
        %v2629 = vsub.s32 3, %v2628
        %v2630 = vrot.slane %v708, %v2629
        %v2631 = vmul.f32 %v699, %v2630
        %v2632 = vmul.f32 %v700, %v2630
        %v2633 = vmul.f32 %v701, %v2630
        %v2634 = vmul.f32 %v702, %v2630
        %v2635 = vmul.f32 %v703, %v2630
        %v2636 = vmul.f32 %v704, %v2630
        %v2637 = vmul.f32 %v705, %v2630
        %v2638 = vmul.f32 %v2630, 0.0
        %2639 = vset.pattern.permute.xlu0 19
        %2640 = vperm.xlu0 %2639, %v313
        %v2641 = vpop.permute.xlu0 %2640
        %2642 = vset.pattern.permute.xlu0 19
        %2643 = vperm.xlu0 %2642, %v314
        %v2644 = vpop.permute.xlu0 %2643
        %2645 = vset.pattern.permute.xlu0 19
        %2646 = vperm.xlu0 %2645, %v315
        %v2647 = vpop.permute.xlu0 %2646
        %2648 = vset.pattern.permute.xlu0 19
        %2649 = vperm.xlu0 %2648, %v316
        %v2650 = vpop.permute.xlu0 %2649
        %2651 = vset.pattern.permute.xlu0 19
        %2652 = vperm.xlu0 %2651, %v317
        %v2653 = vpop.permute.xlu0 %2652
        %2654 = vset.pattern.permute.xlu0 19
        %2655 = vperm.xlu0 %2654, %v318
        %v2656 = vpop.permute.xlu0 %2655
        %2657 = vset.pattern.permute.xlu0 19
        %2658 = vperm.xlu0 %2657, %v319
        %v2659 = vpop.permute.xlu0 %2658
        %2660 = vset.pattern.permute.xlu0 19
        %2661 = vperm.xlu0 %2660, %v320
        %v2662 = vpop.permute.xlu0 %2661
        %v2663 = vrot.slane %v2641, 4
        %v2664 = vrot.slane %v2644, 4
        %v2665 = vsel %vm346, %v2663, %v2664
        %v2666 = vrot.slane %v2647, 4
        %v2667 = vsel %vm346, %v2664, %v2666
        %v2668 = vrot.slane %v2650, 4
        %v2669 = vsel %vm346, %v2666, %v2668
        %v2670 = vrot.slane %v2653, 4
        %v2671 = vsel %vm346, %v2668, %v2670
        %v2672 = vrot.slane %v2656, 4
        %v2673 = vsel %vm346, %v2670, %v2672
        %v2674 = vrot.slane %v2659, 4
        %v2675 = vsel %vm346, %v2672, %v2674
        %v2676 = vrot.slane %v2662, 4
        %v2677 = vsel %vm346, %v2674, %v2676
        %v2687 = vmul.f32 %v2631, %v2663
        %v2688 = vmul.f32 %v2632, %v2665
        %v2689 = vmul.f32 %v2633, %v2667
        %v2690 = vmul.f32 %v2634, %v2669
        %v2691 = vmul.f32 %v2635, %v2671
        %v2692 = vmul.f32 %v2636, %v2673
        %v2693 = vmul.f32 %v2637, %v2675
        %v2694 = vmul.f32 %v2638, %v2677
        %v2695 = vmul.f32 %v2638, %v2676
        %v2705 = vrot.slane %v2687, 1
        %v2706 = vrot.slane %v2688, 1
        %v2707 = vsel %vm881, %v2705, %v2706
        %v2708 = vrot.slane %v2689, 1
        %v2709 = vsel %vm881, %v2706, %v2708
        %v2710 = vrot.slane %v2690, 1
        %v2711 = vsel %vm881, %v2708, %v2710
        %v2712 = vrot.slane %v2691, 1
        %v2713 = vsel %vm881, %v2710, %v2712
        %v2714 = vrot.slane %v2692, 1
        %v2715 = vsel %vm881, %v2712, %v2714
        %v2716 = vrot.slane %v2693, 1
        %v2717 = vsel %vm881, %v2714, %v2716
        %v2718 = vrot.slane %v2694, 1
        %v2719 = vsel %vm881, %v2716, %v2718
        %v2720 = vrot.slane %v2695, 1
        %v2721 = vsel %vm881, %v2718, %v2720
        %v2731 = vadd.f32 %v2618, %v2707
        %v2732 = vadd.f32 %v2619, %v2709
        %v2733 = vadd.f32 %v2620, %v2711
        %v2734 = vadd.f32 %v2621, %v2713
        %v2735 = vadd.f32 %v2622, %v2715
        %v2736 = vadd.f32 %v2623, %v2717
        %v2737 = vadd.f32 %v2624, %v2719
        %v2738 = vadd.f32 %v2625, %v2721
        %v2739 = vadd.f32 %v2626, %v2720
        %v2740 = vlaneseq
        %v2741 = vshrl.u32 %v2740, 7
        %v2742 = vsub.s32 4, %v2741
        %v2743 = vrot.slane %v708, %v2742
        %v2744 = vmul.f32 %v699, %v2743
        %v2745 = vmul.f32 %v700, %v2743
        %v2746 = vmul.f32 %v701, %v2743
        %v2747 = vmul.f32 %v702, %v2743
        %v2748 = vmul.f32 %v703, %v2743
        %v2749 = vmul.f32 %v704, %v2743
        %v2750 = vmul.f32 %v705, %v2743
        %v2751 = vmul.f32 %v2743, 0.0
        %2752 = vset.pattern.permute.xlu0 20
        %2753 = vperm.xlu0 %2752, %v313
        %v2754 = vpop.permute.xlu0 %2753
        %2755 = vset.pattern.permute.xlu0 20
        %2756 = vperm.xlu0 %2755, %v314
        %v2757 = vpop.permute.xlu0 %2756
        %2758 = vset.pattern.permute.xlu0 20
        %2759 = vperm.xlu0 %2758, %v315
        %v2760 = vpop.permute.xlu0 %2759
        %2761 = vset.pattern.permute.xlu0 20
        %2762 = vperm.xlu0 %2761, %v316
        %v2763 = vpop.permute.xlu0 %2762
        %2764 = vset.pattern.permute.xlu0 20
        %2765 = vperm.xlu0 %2764, %v317
        %v2766 = vpop.permute.xlu0 %2765
        %2767 = vset.pattern.permute.xlu0 20
        %2768 = vperm.xlu0 %2767, %v318
        %v2769 = vpop.permute.xlu0 %2768
        %2770 = vset.pattern.permute.xlu0 20
        %2771 = vperm.xlu0 %2770, %v319
        %v2772 = vpop.permute.xlu0 %2771
        %2773 = vset.pattern.permute.xlu0 20
        %2774 = vperm.xlu0 %2773, %v320
        %v2775 = vpop.permute.xlu0 %2774
        %v2776 = vrot.slane %v2754, 3
        %v2777 = vrot.slane %v2757, 3
        %v2778 = vsel %vm952, %v2776, %v2777
        %v2779 = vrot.slane %v2760, 3
        %v2780 = vsel %vm952, %v2777, %v2779
        %v2781 = vrot.slane %v2763, 3
        %v2782 = vsel %vm952, %v2779, %v2781
        %v2783 = vrot.slane %v2766, 3
        %v2784 = vsel %vm952, %v2781, %v2783
        %v2785 = vrot.slane %v2769, 3
        %v2786 = vsel %vm952, %v2783, %v2785
        %v2787 = vrot.slane %v2772, 3
        %v2788 = vsel %vm952, %v2785, %v2787
        %v2789 = vrot.slane %v2775, 3
        %v2790 = vsel %vm952, %v2787, %v2789
        %v2800 = vmul.f32 %v2744, %v2776
        %v2801 = vmul.f32 %v2745, %v2778
        %v2802 = vmul.f32 %v2746, %v2780
        %v2803 = vmul.f32 %v2747, %v2782
        %v2804 = vmul.f32 %v2748, %v2784
        %v2805 = vmul.f32 %v2749, %v2786
        %v2806 = vmul.f32 %v2750, %v2788
        %v2807 = vmul.f32 %v2751, %v2790
        %v2808 = vmul.f32 %v2751, %v2789
        %v2818 = vrot.slane %v2800, 2
        %v2819 = vrot.slane %v2801, 2
        %v2820 = vsel %vm995, %v2818, %v2819
        %v2821 = vrot.slane %v2802, 2
        %v2822 = vsel %vm995, %v2819, %v2821
        %v2823 = vrot.slane %v2803, 2
        %v2824 = vsel %vm995, %v2821, %v2823
        %v2825 = vrot.slane %v2804, 2
        %v2826 = vsel %vm995, %v2823, %v2825
        %v2827 = vrot.slane %v2805, 2
        %v2828 = vsel %vm995, %v2825, %v2827
        %v2829 = vrot.slane %v2806, 2
        %v2830 = vsel %vm995, %v2827, %v2829
        %v2831 = vrot.slane %v2807, 2
        %v2832 = vsel %vm995, %v2829, %v2831
        %v2833 = vrot.slane %v2808, 2
        %v2834 = vsel %vm995, %v2831, %v2833
        %v2844 = vadd.f32 %v2731, %v2820
        %v2845 = vadd.f32 %v2732, %v2822
        %v2846 = vadd.f32 %v2733, %v2824
        %v2847 = vadd.f32 %v2734, %v2826
        %v2848 = vadd.f32 %v2735, %v2828
        %v2849 = vadd.f32 %v2736, %v2830
        %v2850 = vadd.f32 %v2737, %v2832
        %v2851 = vadd.f32 %v2738, %v2834
        %v2852 = vadd.f32 %v2739, %v2833
        %v2853 = vlaneseq
        %v2854 = vshrl.u32 %v2853, 7
        %v2855 = vsub.s32 5, %v2854
        %v2856 = vrot.slane %v708, %v2855
        %v2857 = vmul.f32 %v699, %v2856
        %v2858 = vmul.f32 %v700, %v2856
        %v2859 = vmul.f32 %v701, %v2856
        %v2860 = vmul.f32 %v702, %v2856
        %v2861 = vmul.f32 %v703, %v2856
        %v2862 = vmul.f32 %v704, %v2856
        %v2863 = vmul.f32 %v705, %v2856
        %v2864 = vmul.f32 %v2856, 0.0
        %2865 = vset.pattern.permute.xlu0 21
        %2866 = vperm.xlu0 %2865, %v313
        %v2867 = vpop.permute.xlu0 %2866
        %2868 = vset.pattern.permute.xlu0 21
        %2869 = vperm.xlu0 %2868, %v314
        %v2870 = vpop.permute.xlu0 %2869
        %2871 = vset.pattern.permute.xlu0 21
        %2872 = vperm.xlu0 %2871, %v315
        %v2873 = vpop.permute.xlu0 %2872
        %2874 = vset.pattern.permute.xlu0 21
        %2875 = vperm.xlu0 %2874, %v316
        %v2876 = vpop.permute.xlu0 %2875
        %2877 = vset.pattern.permute.xlu0 21
        %2878 = vperm.xlu0 %2877, %v317
        %v2879 = vpop.permute.xlu0 %2878
        %2880 = vset.pattern.permute.xlu0 21
        %2881 = vperm.xlu0 %2880, %v318
        %v2882 = vpop.permute.xlu0 %2881
        %2883 = vset.pattern.permute.xlu0 21
        %2884 = vperm.xlu0 %2883, %v319
        %v2885 = vpop.permute.xlu0 %2884
        %2886 = vset.pattern.permute.xlu0 21
        %2887 = vperm.xlu0 %2886, %v320
        %v2888 = vpop.permute.xlu0 %2887
        %v2889 = vrot.slane %v2867, 1
        %v2890 = vrot.slane %v2870, 1
        %v2891 = vsel %vm881, %v2889, %v2890
        %v2892 = vrot.slane %v2873, 1
        %v2893 = vsel %vm881, %v2890, %v2892
        %v2894 = vrot.slane %v2876, 1
        %v2895 = vsel %vm881, %v2892, %v2894
        %v2896 = vrot.slane %v2879, 1
        %v2897 = vsel %vm881, %v2894, %v2896
        %v2898 = vrot.slane %v2882, 1
        %v2899 = vsel %vm881, %v2896, %v2898
        %v2900 = vrot.slane %v2885, 1
        %v2901 = vsel %vm881, %v2898, %v2900
        %v2902 = vrot.slane %v2888, 1
        %v2903 = vsel %vm881, %v2900, %v2902
        %v2913 = vmul.f32 %v2857, %v2889
        %v2914 = vmul.f32 %v2858, %v2891
        %v2915 = vmul.f32 %v2859, %v2893
        %v2916 = vmul.f32 %v2860, %v2895
        %v2917 = vmul.f32 %v2861, %v2897
        %v2918 = vmul.f32 %v2862, %v2899
        %v2919 = vmul.f32 %v2863, %v2901
        %v2920 = vmul.f32 %v2864, %v2903
        %v2921 = vmul.f32 %v2864, %v2902
        %v2931 = vrot.slane %v2913, 4
        %v2932 = vrot.slane %v2914, 4
        %v2933 = vsel %vm346, %v2931, %v2932
        %v2934 = vrot.slane %v2915, 4
        %v2935 = vsel %vm346, %v2932, %v2934
        %v2936 = vrot.slane %v2916, 4
        %v2937 = vsel %vm346, %v2934, %v2936
        %v2938 = vrot.slane %v2917, 4
        %v2939 = vsel %vm346, %v2936, %v2938
        %v2940 = vrot.slane %v2918, 4
        %v2941 = vsel %vm346, %v2938, %v2940
        %v2942 = vrot.slane %v2919, 4
        %v2943 = vsel %vm346, %v2940, %v2942
        %v2944 = vrot.slane %v2920, 4
        %v2945 = vsel %vm346, %v2942, %v2944
        %v2946 = vrot.slane %v2921, 4
        %v2947 = vsel %vm346, %v2944, %v2946
        %v2957 = vadd.f32 %v2844, %v2933
        %v2958 = vadd.f32 %v2845, %v2935
        %v2959 = vadd.f32 %v2846, %v2937
        %v2960 = vadd.f32 %v2847, %v2939
        %v2961 = vadd.f32 %v2848, %v2941
        %v2962 = vadd.f32 %v2849, %v2943
        %v2963 = vadd.f32 %v2850, %v2945
        %v2964 = vadd.f32 %v2851, %v2947
        %v2965 = vadd.f32 %v2852, %v2946
        %v2966 = vlaneseq
        %v2967 = vshrl.u32 %v2966, 7
        %v2968 = vsub.s32 6, %v2967
        %v2969 = vrot.slane %v708, %v2968
        %v2970 = vmul.f32 %v700, %v2969
        %v2971 = vmul.f32 %v701, %v2969
        %v2972 = vmul.f32 %v702, %v2969
        %v2973 = vmul.f32 %v703, %v2969
        %v2974 = vmul.f32 %v704, %v2969
        %v2975 = vmul.f32 %v705, %v2969
        %v2976 = vmul.f32 %v2969, 0.0
        %2977 = vset.pattern.permute.xlu0 22
        %2978 = vperm.xlu0 %2977, %v313
        %v2979 = vpop.permute.xlu0 %2978
        %2981 = vset.pattern.permute.xlu0 22
        %2982 = vperm.xlu0 %2981, %v314
        %v2983 = vpop.permute.xlu0 %2982
        %2985 = vset.pattern.permute.xlu0 22
        %2986 = vperm.xlu0 %2985, %v315
        %v2987 = vpop.permute.xlu0 %2986
        %2989 = vset.pattern.permute.xlu0 22
        %2990 = vperm.xlu0 %2989, %v316
        %v2991 = vpop.permute.xlu0 %2990
        %2993 = vset.pattern.permute.xlu0 22
        %2994 = vperm.xlu0 %2993, %v317
        %v2995 = vpop.permute.xlu0 %2994
        %2997 = vset.pattern.permute.xlu0 22
        %2998 = vperm.xlu0 %2997, %v318
        %v2999 = vpop.permute.xlu0 %2998
        %3001 = vset.pattern.permute.xlu0 22
        %3002 = vperm.xlu0 %3001, %v319
        %v3003 = vpop.permute.xlu0 %3002
        %3005 = vset.pattern.permute.xlu0 22
        %3006 = vperm.xlu0 %3005, %v320
        %v3007 = vpop.permute.xlu0 %3006
        %v3009 = vmul.f32 %v2970, %v2979
        %v3010 = vmul.f32 %v2971, %v2983
        %v3011 = vmul.f32 %v2972, %v2987
        %v3012 = vmul.f32 %v2973, %v2991
        %v3013 = vmul.f32 %v2974, %v2995
        %v3014 = vmul.f32 %v2975, %v2999
        %v3015 = vmul.f32 %v2976, %v3003
        %v3016 = vmul.f32 %v2976, %v3007
        %v3025 = vrot.slane %v3009, 5
        %v3026 = vrot.slane %v3010, 5
        %v3027 = vsel %vm761, %v3025, %v3026
        %v3028 = vrot.slane %v3011, 5
        %v3029 = vsel %vm761, %v3026, %v3028
        %v3030 = vrot.slane %v3012, 5
        %v3031 = vsel %vm761, %v3028, %v3030
        %v3032 = vrot.slane %v3013, 5
        %v3033 = vsel %vm761, %v3030, %v3032
        %v3034 = vrot.slane %v3014, 5
        %v3035 = vsel %vm761, %v3032, %v3034
        %v3036 = vrot.slane %v3015, 5
        %v3037 = vsel %vm761, %v3034, %v3036
        %v3038 = vrot.slane %v3016, 5
        %v3039 = vsel %vm761, %v3036, %v3038
        %v3049 = vadd.f32 %v2957, %v3025
        %v3050 = vadd.f32 %v2958, %v3027
        %v3051 = vadd.f32 %v2959, %v3029
        %v3052 = vadd.f32 %v2960, %v3031
        %v3053 = vadd.f32 %v2961, %v3033
        %v3054 = vadd.f32 %v2962, %v3035
        %v3055 = vadd.f32 %v2963, %v3037
        %v3056 = vadd.f32 %v2964, %v3039
        %v3057 = vadd.f32 %v2965, %v3038
        %v3058 = vlaneseq
        %v3059 = vshrl.u32 %v3058, 7
        %v3060 = vsub.s32 7, %v3059
        %v3061 = vrot.slane %v708, %v3060
        %v3062 = vmul.f32 %v700, %v3061
        %v3063 = vmul.f32 %v701, %v3061
        %v3064 = vmul.f32 %v702, %v3061
        %v3065 = vmul.f32 %v703, %v3061
        %v3066 = vmul.f32 %v704, %v3061
        %v3067 = vmul.f32 %v705, %v3061
        %v3068 = vmul.f32 %v3061, 0.0
        %3069 = vset.pattern.permute.xlu0 23
        %3070 = vperm.xlu0 %3069, %v313
        %v3071 = vpop.permute.xlu0 %3070
        %3072 = vset.pattern.permute.xlu0 23
        %3073 = vperm.xlu0 %3072, %v314
        %v3074 = vpop.permute.xlu0 %3073
        %3075 = vset.pattern.permute.xlu0 23
        %3076 = vperm.xlu0 %3075, %v315
        %v3077 = vpop.permute.xlu0 %3076
        %3078 = vset.pattern.permute.xlu0 23
        %3079 = vperm.xlu0 %3078, %v316
        %v3080 = vpop.permute.xlu0 %3079
        %3081 = vset.pattern.permute.xlu0 23
        %3082 = vperm.xlu0 %3081, %v317
        %v3083 = vpop.permute.xlu0 %3082
        %3084 = vset.pattern.permute.xlu0 23
        %3085 = vperm.xlu0 %3084, %v318
        %v3086 = vpop.permute.xlu0 %3085
        %3087 = vset.pattern.permute.xlu0 23
        %3088 = vperm.xlu0 %3087, %v319
        %v3089 = vpop.permute.xlu0 %3088
        %3090 = vset.pattern.permute.xlu0 23
        %3091 = vperm.xlu0 %3090, %v320
        %v3092 = vpop.permute.xlu0 %3091
        %v3093 = vrot.slane %v3071, 7
        %v3094 = vrot.slane %v3074, 7
        %v3095 = vsel %vm1271, %v3093, %v3094
        %v3096 = vrot.slane %v3077, 7
        %v3097 = vsel %vm1271, %v3094, %v3096
        %v3098 = vrot.slane %v3080, 7
        %v3099 = vsel %vm1271, %v3096, %v3098
        %v3100 = vrot.slane %v3083, 7
        %v3101 = vsel %vm1271, %v3098, %v3100
        %v3102 = vrot.slane %v3086, 7
        %v3103 = vsel %vm1271, %v3100, %v3102
        %v3104 = vrot.slane %v3089, 7
        %v3105 = vsel %vm1271, %v3102, %v3104
        %v3106 = vrot.slane %v3092, 7
        %v3107 = vsel %vm1271, %v3104, %v3106
        %v3117 = vmul.f32 %v3062, %v3093
        %v3118 = vmul.f32 %v3063, %v3095
        %v3119 = vmul.f32 %v3064, %v3097
        %v3120 = vmul.f32 %v3065, %v3099
        %v3121 = vmul.f32 %v3066, %v3101
        %v3122 = vmul.f32 %v3067, %v3103
        %v3123 = vmul.f32 %v3068, %v3105
        %v3124 = vmul.f32 %v3068, %v3107
        %v3125 = vmul.f32 %v3068, %v3106
        %v3135 = vrot.slane %v3117, 6
        %v3136 = vrot.slane %v3118, 6
        %v3137 = vsel %vm1314, %v3135, %v3136
        %v3138 = vrot.slane %v3119, 6
        %v3139 = vsel %vm1314, %v3136, %v3138
        %v3140 = vrot.slane %v3120, 6
        %v3141 = vsel %vm1314, %v3138, %v3140
        %v3142 = vrot.slane %v3121, 6
        %v3143 = vsel %vm1314, %v3140, %v3142
        %v3144 = vrot.slane %v3122, 6
        %v3145 = vsel %vm1314, %v3142, %v3144
        %v3146 = vrot.slane %v3123, 6
        %v3147 = vsel %vm1314, %v3144, %v3146
        %v3148 = vrot.slane %v3124, 6
        %v3149 = vsel %vm1314, %v3146, %v3148
        %v3150 = vrot.slane %v3125, 6
        %v3151 = vsel %vm1314, %v3148, %v3150
        %v3161 = vadd.f32 %v3049, %v3135
        %v3162 = vadd.f32 %v3050, %v3137
        %v3163 = vadd.f32 %v3051, %v3139
        %v3164 = vadd.f32 %v3052, %v3141
        %v3165 = vadd.f32 %v3053, %v3143
        %v3166 = vadd.f32 %v3054, %v3145
        %v3167 = vadd.f32 %v3055, %v3147
        %v3168 = vadd.f32 %v3056, %v3149
        %v3169 = vadd.f32 %v3057, %v3151
        %v3170 = vlaneseq
        %v3171 = vshrl.u32 %v3170, 7
        %v3172 = vsub.s32 0, %v3171
        %v3173 = vrot.slane %v709, %v3172
        %v3174 = vmul.f32 %v700, %v3173
        %v3175 = vmul.f32 %v701, %v3173
        %v3176 = vmul.f32 %v702, %v3173
        %v3177 = vmul.f32 %v703, %v3173
        %v3178 = vmul.f32 %v704, %v3173
        %v3179 = vmul.f32 %v705, %v3173
        %v3180 = vmul.f32 %v3173, 0.0
        %3181 = vset.pattern.permute.xlu0 24
        %3182 = vperm.xlu0 %3181, %v313
        %v3183 = vpop.permute.xlu0 %3182
        %3184 = vset.pattern.permute.xlu0 24
        %3185 = vperm.xlu0 %3184, %v314
        %v3186 = vpop.permute.xlu0 %3185
        %3187 = vset.pattern.permute.xlu0 24
        %3188 = vperm.xlu0 %3187, %v315
        %v3189 = vpop.permute.xlu0 %3188
        %3190 = vset.pattern.permute.xlu0 24
        %3191 = vperm.xlu0 %3190, %v316
        %v3192 = vpop.permute.xlu0 %3191
        %3193 = vset.pattern.permute.xlu0 24
        %3194 = vperm.xlu0 %3193, %v317
        %v3195 = vpop.permute.xlu0 %3194
        %3196 = vset.pattern.permute.xlu0 24
        %3197 = vperm.xlu0 %3196, %v318
        %v3198 = vpop.permute.xlu0 %3197
        %3199 = vset.pattern.permute.xlu0 24
        %3200 = vperm.xlu0 %3199, %v319
        %v3201 = vpop.permute.xlu0 %3200
        %3202 = vset.pattern.permute.xlu0 24
        %3203 = vperm.xlu0 %3202, %v320
        %v3204 = vpop.permute.xlu0 %3203
        %v3205 = vrot.slane %v3183, 5
        %v3206 = vrot.slane %v3186, 5
        %v3207 = vsel %vm761, %v3205, %v3206
        %v3208 = vrot.slane %v3189, 5
        %v3209 = vsel %vm761, %v3206, %v3208
        %v3210 = vrot.slane %v3192, 5
        %v3211 = vsel %vm761, %v3208, %v3210
        %v3212 = vrot.slane %v3195, 5
        %v3213 = vsel %vm761, %v3210, %v3212
        %v3214 = vrot.slane %v3198, 5
        %v3215 = vsel %vm761, %v3212, %v3214
        %v3216 = vrot.slane %v3201, 5
        %v3217 = vsel %vm761, %v3214, %v3216
        %v3218 = vrot.slane %v3204, 5
        %v3219 = vsel %vm761, %v3216, %v3218
        %v3229 = vmul.f32 %v3174, %v3205
        %v3230 = vmul.f32 %v3175, %v3207
        %v3231 = vmul.f32 %v3176, %v3209
        %v3232 = vmul.f32 %v3177, %v3211
        %v3233 = vmul.f32 %v3178, %v3213
        %v3234 = vmul.f32 %v3179, %v3215
        %v3235 = vmul.f32 %v3180, %v3217
        %v3236 = vmul.f32 %v3180, %v3219
        %v3237 = vmul.f32 %v3180, %v3218
        %v3238 = vadd.f32 %v3161, %v3229
        %v3239 = vadd.f32 %v3162, %v3230
        %v3240 = vadd.f32 %v3163, %v3231
        %v3241 = vadd.f32 %v3164, %v3232
        %v3242 = vadd.f32 %v3165, %v3233
        %v3243 = vadd.f32 %v3166, %v3234
        %v3244 = vadd.f32 %v3167, %v3235
        %v3245 = vadd.f32 %v3168, %v3236
        %v3246 = vadd.f32 %v3169, %v3237
        %v3247 = vlaneseq
        %v3248 = vshrl.u32 %v3247, 7
        %v3249 = vsub.s32 1, %v3248
        %v3250 = vrot.slane %v709, %v3249
        %v3251 = vmul.f32 %v700, %v3250
        %v3252 = vmul.f32 %v701, %v3250
        %v3253 = vmul.f32 %v702, %v3250
        %v3254 = vmul.f32 %v703, %v3250
        %v3255 = vmul.f32 %v704, %v3250
        %v3256 = vmul.f32 %v705, %v3250
        %v3257 = vmul.f32 %v3250, 0.0
        %3258 = vset.pattern.permute.xlu0 25
        %3259 = vperm.xlu0 %3258, %v313
        %v3260 = vpop.permute.xlu0 %3259
        %3261 = vset.pattern.permute.xlu0 25
        %3262 = vperm.xlu0 %3261, %v314
        %v3263 = vpop.permute.xlu0 %3262
        %3264 = vset.pattern.permute.xlu0 25
        %3265 = vperm.xlu0 %3264, %v315
        %v3266 = vpop.permute.xlu0 %3265
        %3267 = vset.pattern.permute.xlu0 25
        %3268 = vperm.xlu0 %3267, %v316
        %v3269 = vpop.permute.xlu0 %3268
        %3270 = vset.pattern.permute.xlu0 25
        %3271 = vperm.xlu0 %3270, %v317
        %v3272 = vpop.permute.xlu0 %3271
        %3273 = vset.pattern.permute.xlu0 25
        %3274 = vperm.xlu0 %3273, %v318
        %v3275 = vpop.permute.xlu0 %3274
        %3276 = vset.pattern.permute.xlu0 25
        %3277 = vperm.xlu0 %3276, %v319
        %v3278 = vpop.permute.xlu0 %3277
        %3279 = vset.pattern.permute.xlu0 25
        %3280 = vperm.xlu0 %3279, %v320
        %v3281 = vpop.permute.xlu0 %3280
        %v3282 = vrot.slane %v3260, 4
        %v3283 = vrot.slane %v3263, 4
        %v3284 = vsel %vm346, %v3282, %v3283
        %v3285 = vrot.slane %v3266, 4
        %v3286 = vsel %vm346, %v3283, %v3285
        %v3287 = vrot.slane %v3269, 4
        %v3288 = vsel %vm346, %v3285, %v3287
        %v3289 = vrot.slane %v3272, 4
        %v3290 = vsel %vm346, %v3287, %v3289
        %v3291 = vrot.slane %v3275, 4
        %v3292 = vsel %vm346, %v3289, %v3291
        %v3293 = vrot.slane %v3278, 4
        %v3294 = vsel %vm346, %v3291, %v3293
        %v3295 = vrot.slane %v3281, 4
        %v3296 = vsel %vm346, %v3293, %v3295
        %v3306 = vmul.f32 %v3251, %v3282
        %v3307 = vmul.f32 %v3252, %v3284
        %v3308 = vmul.f32 %v3253, %v3286
        %v3309 = vmul.f32 %v3254, %v3288
        %v3310 = vmul.f32 %v3255, %v3290
        %v3311 = vmul.f32 %v3256, %v3292
        %v3312 = vmul.f32 %v3257, %v3294
        %v3313 = vmul.f32 %v3257, %v3296
        %v3314 = vmul.f32 %v3257, %v3295
        %v3324 = vrot.slane %v3306, 1
        %v3325 = vrot.slane %v3307, 1
        %v3326 = vsel %vm881, %v3324, %v3325
        %v3327 = vrot.slane %v3308, 1
        %v3328 = vsel %vm881, %v3325, %v3327
        %v3329 = vrot.slane %v3309, 1
        %v3330 = vsel %vm881, %v3327, %v3329
        %v3331 = vrot.slane %v3310, 1
        %v3332 = vsel %vm881, %v3329, %v3331
        %v3333 = vrot.slane %v3311, 1
        %v3334 = vsel %vm881, %v3331, %v3333
        %v3335 = vrot.slane %v3312, 1
        %v3336 = vsel %vm881, %v3333, %v3335
        %v3337 = vrot.slane %v3313, 1
        %v3338 = vsel %vm881, %v3335, %v3337
        %v3339 = vrot.slane %v3314, 1
        %v3340 = vsel %vm881, %v3337, %v3339
        %v3350 = vadd.f32 %v3238, %v3326
        %v3351 = vadd.f32 %v3239, %v3328
        %v3352 = vadd.f32 %v3240, %v3330
        %v3353 = vadd.f32 %v3241, %v3332
        %v3354 = vadd.f32 %v3242, %v3334
        %v3355 = vadd.f32 %v3243, %v3336
        %v3356 = vadd.f32 %v3244, %v3338
        %v3357 = vadd.f32 %v3245, %v3340
        %v3358 = vadd.f32 %v3246, %v3339
        %v3359 = vlaneseq
        %v3360 = vshrl.u32 %v3359, 7
        %v3361 = vsub.s32 2, %v3360
        %v3362 = vrot.slane %v709, %v3361
        %v3363 = vmul.f32 %v700, %v3362
        %v3364 = vmul.f32 %v701, %v3362
        %v3365 = vmul.f32 %v702, %v3362
        %v3366 = vmul.f32 %v703, %v3362
        %v3367 = vmul.f32 %v704, %v3362
        %v3368 = vmul.f32 %v705, %v3362
        %v3369 = vmul.f32 %v3362, 0.0
        %3370 = vset.pattern.permute.xlu0 26
        %3371 = vperm.xlu0 %3370, %v313
        %v3372 = vpop.permute.xlu0 %3371
        %3373 = vset.pattern.permute.xlu0 26
        %3374 = vperm.xlu0 %3373, %v314
        %v3375 = vpop.permute.xlu0 %3374
        %3376 = vset.pattern.permute.xlu0 26
        %3377 = vperm.xlu0 %3376, %v315
        %v3378 = vpop.permute.xlu0 %3377
        %3379 = vset.pattern.permute.xlu0 26
        %3380 = vperm.xlu0 %3379, %v316
        %v3381 = vpop.permute.xlu0 %3380
        %3382 = vset.pattern.permute.xlu0 26
        %3383 = vperm.xlu0 %3382, %v317
        %v3384 = vpop.permute.xlu0 %3383
        %3385 = vset.pattern.permute.xlu0 26
        %3386 = vperm.xlu0 %3385, %v318
        %v3387 = vpop.permute.xlu0 %3386
        %3388 = vset.pattern.permute.xlu0 26
        %3389 = vperm.xlu0 %3388, %v319
        %v3390 = vpop.permute.xlu0 %3389
        %3391 = vset.pattern.permute.xlu0 26
        %3392 = vperm.xlu0 %3391, %v320
        %v3393 = vpop.permute.xlu0 %3392
        %v3394 = vrot.slane %v3372, 3
        %v3395 = vrot.slane %v3375, 3
        %v3396 = vsel %vm952, %v3394, %v3395
        %v3397 = vrot.slane %v3378, 3
        %v3398 = vsel %vm952, %v3395, %v3397
        %v3399 = vrot.slane %v3381, 3
        %v3400 = vsel %vm952, %v3397, %v3399
        %v3401 = vrot.slane %v3384, 3
        %v3402 = vsel %vm952, %v3399, %v3401
        %v3403 = vrot.slane %v3387, 3
        %v3404 = vsel %vm952, %v3401, %v3403
        %v3405 = vrot.slane %v3390, 3
        %v3406 = vsel %vm952, %v3403, %v3405
        %v3407 = vrot.slane %v3393, 3
        %v3408 = vsel %vm952, %v3405, %v3407
        %v3418 = vmul.f32 %v3363, %v3394
        %v3419 = vmul.f32 %v3364, %v3396
        %v3420 = vmul.f32 %v3365, %v3398
        %v3421 = vmul.f32 %v3366, %v3400
        %v3422 = vmul.f32 %v3367, %v3402
        %v3423 = vmul.f32 %v3368, %v3404
        %v3424 = vmul.f32 %v3369, %v3406
        %v3425 = vmul.f32 %v3369, %v3408
        %v3426 = vmul.f32 %v3369, %v3407
        %v3436 = vrot.slane %v3418, 2
        %v3437 = vrot.slane %v3419, 2
        %v3438 = vsel %vm995, %v3436, %v3437
        %v3439 = vrot.slane %v3420, 2
        %v3440 = vsel %vm995, %v3437, %v3439
        %v3441 = vrot.slane %v3421, 2
        %v3442 = vsel %vm995, %v3439, %v3441
        %v3443 = vrot.slane %v3422, 2
        %v3444 = vsel %vm995, %v3441, %v3443
        %v3445 = vrot.slane %v3423, 2
        %v3446 = vsel %vm995, %v3443, %v3445
        %v3447 = vrot.slane %v3424, 2
        %v3448 = vsel %vm995, %v3445, %v3447
        %v3449 = vrot.slane %v3425, 2
        %v3450 = vsel %vm995, %v3447, %v3449
        %v3451 = vrot.slane %v3426, 2
        %v3452 = vsel %vm995, %v3449, %v3451
        %v3462 = vadd.f32 %v3350, %v3438
        %v3463 = vadd.f32 %v3351, %v3440
        %v3464 = vadd.f32 %v3352, %v3442
        %v3465 = vadd.f32 %v3353, %v3444
        %v3466 = vadd.f32 %v3354, %v3446
        %v3467 = vadd.f32 %v3355, %v3448
        %v3468 = vadd.f32 %v3356, %v3450
        %v3469 = vadd.f32 %v3357, %v3452
        %v3470 = vadd.f32 %v3358, %v3451
        %v3480 = vrot.slane %v3462, 3
        %v3481 = vrot.slane %v3463, 3
        %v3482 = vsel %vm952, %v3480, %v3481
        %v3483 = vrot.slane %v3464, 3
        %v3484 = vsel %vm952, %v3481, %v3483
        %v3485 = vrot.slane %v3465, 3
        %v3486 = vsel %vm952, %v3483, %v3485
        %v3487 = vrot.slane %v3466, 3
        %v3488 = vsel %vm952, %v3485, %v3487
        %v3489 = vrot.slane %v3467, 3
        %v3490 = vsel %vm952, %v3487, %v3489
        %v3491 = vrot.slane %v3468, 3
        %v3492 = vsel %vm952, %v3489, %v3491
        %v3493 = vrot.slane %v3469, 3
        %v3494 = vsel %vm952, %v3491, %v3493
        %v3495 = vrot.slane %v3470, 3
        %v3496 = vsel %vm952, %v3493, %v3495
        %v3505 = vsel %vm415, %v3482, 0.0
        %v3506 = vsel %vm415, %v3484, 0.0
        %v3507 = vadd.f32 %v3505, %v3506
        %v3508 = vsel %vm415, %v3486, 0.0
        %v3509 = vadd.f32 %v3507, %v3508
        %v3510 = vsel %vm415, %v3488, 0.0
        %v3511 = vadd.f32 %v3509, %v3510
        %v3512 = vsel %vm415, %v3490, 0.0
        %v3513 = vadd.f32 %v3511, %v3512
        %v3514 = vsel %vm415, %v3492, 0.0
        %v3515 = vadd.f32 %v3513, %v3514
        %v3516 = vsel %vm415, %v3494, 0.0
        %v3517 = vadd.f32 %v3515, %v3516
        %v3518 = vsel %vm415, %v3496, 0.0
        %v3519 = vadd.f32 %v3517, %v3518
        %v3520 = vrot.slane %v3519, 4
        %v3521 = vadd.f32 %v3519, %v3520
        %v3522 = vrot.slane %v3521, 2
        %v3523 = vadd.f32 %v3521, %v3522
        %v3524 = vrot.slane %v3523, 1
        %v3525 = vadd.f32 %v3523, %v3524
        %v3526 = vmul.f32 %v3525, %v437
        %v3527 = vmul.f32 %v3462, %v3462
        %v3528 = vmul.f32 %v3463, %v3463
        %v3529 = vmul.f32 %v3464, %v3464
        %v3530 = vmul.f32 %v3465, %v3465
        %v3531 = vmul.f32 %v3466, %v3466
        %v3532 = vmul.f32 %v3467, %v3467
        %v3533 = vmul.f32 %v3468, %v3468
        %v3534 = vmul.f32 %v3469, %v3469
        %v3535 = vmul.f32 %v3470, %v3470
        %v3545 = vrot.slane %v3527, 3
        %v3546 = vrot.slane %v3528, 3
        %v3547 = vsel %vm952, %v3545, %v3546
        %v3548 = vrot.slane %v3529, 3
        %v3549 = vsel %vm952, %v3546, %v3548
        %v3550 = vrot.slane %v3530, 3
        %v3551 = vsel %vm952, %v3548, %v3550
        %v3552 = vrot.slane %v3531, 3
        %v3553 = vsel %vm952, %v3550, %v3552
        %v3554 = vrot.slane %v3532, 3
        %v3555 = vsel %vm952, %v3552, %v3554
        %v3556 = vrot.slane %v3533, 3
        %v3557 = vsel %vm952, %v3554, %v3556
        %v3558 = vrot.slane %v3534, 3
        %v3559 = vsel %vm952, %v3556, %v3558
        %v3560 = vrot.slane %v3535, 3
        %v3561 = vsel %vm952, %v3558, %v3560
        %v3570 = vsel %vm415, %v3547, 0.0
        %v3571 = vsel %vm415, %v3549, 0.0
        %v3572 = vadd.f32 %v3570, %v3571
        %v3573 = vsel %vm415, %v3551, 0.0
        %v3574 = vadd.f32 %v3572, %v3573
        %v3575 = vsel %vm415, %v3553, 0.0
        %v3576 = vadd.f32 %v3574, %v3575
        %v3577 = vsel %vm415, %v3555, 0.0
        %v3578 = vadd.f32 %v3576, %v3577
        %v3579 = vsel %vm415, %v3557, 0.0
        %v3580 = vadd.f32 %v3578, %v3579
        %v3581 = vsel %vm415, %v3559, 0.0
        %v3582 = vadd.f32 %v3580, %v3581
        %v3583 = vsel %vm415, %v3561, 0.0
        %v3584 = vadd.f32 %v3582, %v3583
        %v3585 = vrot.slane %v3584, 4
        %v3586 = vadd.f32 %v3584, %v3585
        %v3587 = vrot.slane %v3586, 2
        %v3588 = vadd.f32 %v3586, %v3587
        %v3589 = vrot.slane %v3588, 1
        %v3590 = vadd.f32 %v3588, %v3589
        %v3591 = vmul.f32 %v3590, %v437
        %v3592 = vmul.f32 %v3526, %v3526
        %v3593 = vsub.f32 %v3591, %v3592
        %v3594 = vmax.f32 %v3593, 0.0
        %v3595 = vsub.f32 %v3462, %v3526
        %v3596 = vsub.f32 %v3463, %v3526
        %v3597 = vsub.f32 %v3464, %v3526
        %v3598 = vsub.f32 %v3465, %v3526
        %v3599 = vsub.f32 %v3466, %v3526
        %v3600 = vsub.f32 %v3467, %v3526
        %v3601 = vsub.f32 %v3468, %v3526
        %v3602 = vsub.f32 %v3469, %v3526
        %v3603 = vsub.f32 %v3470, %v3526
        %v3604 = vadd.f32 %v3594, 1e-05
        %v3605 = vrsqrt.pop %v3604
        %v3606 = vmul.f32 %v3595, %v3605
        %v3607 = vmul.f32 %v3596, %v3605
        %v3608 = vmul.f32 %v3597, %v3605
        %v3609 = vmul.f32 %v3598, %v3605
        %v3610 = vmul.f32 %v3599, %v3605
        %v3611 = vmul.f32 %v3600, %v3605
        %v3612 = vmul.f32 %v3601, %v3605
        %v3613 = vmul.f32 %v3602, %v3605
        %v3614 = vmul.f32 %v3603, %v3605
        %v3615 = vmul.f32 %v3606, 0.5
        %v3616 = vmul.f32 %v3607, 0.5
        %v3617 = vmul.f32 %v3608, 0.5
        %v3618 = vmul.f32 %v3609, 0.5
        %v3619 = vmul.f32 %v3610, 0.5
        %v3620 = vmul.f32 %v3611, 0.5
        %v3621 = vmul.f32 %v3612, 0.5
        %v3622 = vmul.f32 %v3613, 0.5
        %v3623 = vmul.f32 %v3614, 0.5
        %v3624 = vmul.f32 %v3606, 0.70710677
        %v3625 = vmul.f32 %v3607, 0.70710677
        %v3626 = vmul.f32 %v3608, 0.70710677
        %v3627 = vmul.f32 %v3609, 0.70710677
        %v3628 = vmul.f32 %v3610, 0.70710677
        %v3629 = vmul.f32 %v3611, 0.70710677
        %v3630 = vmul.f32 %v3612, 0.70710677
        %v3631 = vmul.f32 %v3613, 0.70710677
        %v3632 = vmul.f32 %v3614, 0.70710677
        %v3633 = vand.u32 2147483647, %v3624
        %v3634 = vand.u32 2147483647, %v3625
        %v3635 = vand.u32 2147483647, %v3626
        %v3636 = vand.u32 2147483647, %v3627
        %v3637 = vand.u32 2147483647, %v3628
        %v3638 = vand.u32 2147483647, %v3629
        %v3639 = vand.u32 2147483647, %v3630
        %v3640 = vand.u32 2147483647, %v3631
        %v3641 = vand.u32 2147483647, %v3632
        %v3642 = vmul.f32 %v3633, 0.3275911
        %v3643 = vmul.f32 %v3634, 0.3275911
        %v3644 = vmul.f32 %v3635, 0.3275911
        %v3645 = vmul.f32 %v3636, 0.3275911
        %v3646 = vmul.f32 %v3637, 0.3275911
        %v3647 = vmul.f32 %v3638, 0.3275911
        %v3648 = vmul.f32 %v3639, 0.3275911
        %v3649 = vmul.f32 %v3640, 0.3275911
        %v3650 = vmul.f32 %v3641, 0.3275911
        %v3651 = vadd.f32 %v3642, 1.0
        %v3652 = vadd.f32 %v3643, 1.0
        %v3653 = vadd.f32 %v3644, 1.0
        %v3654 = vadd.f32 %v3645, 1.0
        %v3655 = vadd.f32 %v3646, 1.0
        %v3656 = vadd.f32 %v3647, 1.0
        %v3657 = vadd.f32 %v3648, 1.0
        %v3658 = vadd.f32 %v3649, 1.0
        %v3659 = vadd.f32 %v3650, 1.0
        %v3660 = vrcp.pop %v3651
        %v3661 = vmul.f32 1.0, %v3660
        %v3662 = vrcp.pop %v3652
        %v3663 = vmul.f32 1.0, %v3662
        %v3664 = vrcp.pop %v3653
        %v3665 = vmul.f32 1.0, %v3664
        %v3666 = vrcp.pop %v3654
        %v3667 = vmul.f32 1.0, %v3666
        %v3668 = vrcp.pop %v3655
        %v3669 = vmul.f32 1.0, %v3668
        %v3670 = vrcp.pop %v3656
        %v3671 = vmul.f32 1.0, %v3670
        %v3672 = vrcp.pop %v3657
        %v3673 = vmul.f32 1.0, %v3672
        %v3674 = vrcp.pop %v3658
        %v3675 = vmul.f32 1.0, %v3674
        %v3676 = vrcp.pop %v3659
        %v3677 = vmul.f32 1.0, %v3676
        %v3678 = vmul.f32 %v3661, 1.0614054
        %v3679 = vmul.f32 %v3663, 1.0614054
        %v3680 = vmul.f32 %v3665, 1.0614054
        %v3681 = vmul.f32 %v3667, 1.0614054
        %v3682 = vmul.f32 %v3669, 1.0614054
        %v3683 = vmul.f32 %v3671, 1.0614054
        %v3684 = vmul.f32 %v3673, 1.0614054
        %v3685 = vmul.f32 %v3675, 1.0614054
        %v3686 = vmul.f32 %v3677, 1.0614054
        %v3687 = vadd.f32 %v3678, -1.4531521
        %v3688 = vadd.f32 %v3679, -1.4531521
        %v3689 = vadd.f32 %v3680, -1.4531521
        %v3690 = vadd.f32 %v3681, -1.4531521
        %v3691 = vadd.f32 %v3682, -1.4531521
        %v3692 = vadd.f32 %v3683, -1.4531521
        %v3693 = vadd.f32 %v3684, -1.4531521
        %v3694 = vadd.f32 %v3685, -1.4531521
        %v3695 = vadd.f32 %v3686, -1.4531521
        %v3696 = vmul.f32 %v3687, %v3661
        %v3697 = vmul.f32 %v3688, %v3663
        %v3698 = vmul.f32 %v3689, %v3665
        %v3699 = vmul.f32 %v3690, %v3667
        %v3700 = vmul.f32 %v3691, %v3669
        %v3701 = vmul.f32 %v3692, %v3671
        %v3702 = vmul.f32 %v3693, %v3673
        %v3703 = vmul.f32 %v3694, %v3675
        %v3704 = vmul.f32 %v3695, %v3677
        %v3705 = vadd.f32 %v3696, 1.4214138
        %v3706 = vadd.f32 %v3697, 1.4214138
        %v3707 = vadd.f32 %v3698, 1.4214138
        %v3708 = vadd.f32 %v3699, 1.4214138
        %v3709 = vadd.f32 %v3700, 1.4214138
        %v3710 = vadd.f32 %v3701, 1.4214138
        %v3711 = vadd.f32 %v3702, 1.4214138
        %v3712 = vadd.f32 %v3703, 1.4214138
        %v3713 = vadd.f32 %v3704, 1.4214138
        %v3714 = vmul.f32 %v3705, %v3661
        %v3715 = vmul.f32 %v3706, %v3663
        %v3716 = vmul.f32 %v3707, %v3665
        %v3717 = vmul.f32 %v3708, %v3667
        %v3718 = vmul.f32 %v3709, %v3669
        %v3719 = vmul.f32 %v3710, %v3671
        %v3720 = vmul.f32 %v3711, %v3673
        %v3721 = vmul.f32 %v3712, %v3675
        %v3722 = vmul.f32 %v3713, %v3677
        %v3723 = vadd.f32 %v3714, -0.28449672
        %v3724 = vadd.f32 %v3715, -0.28449672
        %v3725 = vadd.f32 %v3716, -0.28449672
        %v3726 = vadd.f32 %v3717, -0.28449672
        %v3727 = vadd.f32 %v3718, -0.28449672
        %v3728 = vadd.f32 %v3719, -0.28449672
        %v3729 = vadd.f32 %v3720, -0.28449672
        %v3730 = vadd.f32 %v3721, -0.28449672
        %v3731 = vadd.f32 %v3722, -0.28449672
        %v3732 = vmul.f32 %v3723, %v3661
        %v3733 = vmul.f32 %v3724, %v3663
        %v3734 = vmul.f32 %v3725, %v3665
        %v3735 = vmul.f32 %v3726, %v3667
        %v3736 = vmul.f32 %v3727, %v3669
        %v3737 = vmul.f32 %v3728, %v3671
        %v3738 = vmul.f32 %v3729, %v3673
        %v3739 = vmul.f32 %v3730, %v3675
        %v3740 = vmul.f32 %v3731, %v3677
        %v3741 = vadd.f32 %v3732, 0.2548296
        %v3742 = vadd.f32 %v3733, 0.2548296
        %v3743 = vadd.f32 %v3734, 0.2548296
        %v3744 = vadd.f32 %v3735, 0.2548296
        %v3745 = vadd.f32 %v3736, 0.2548296
        %v3746 = vadd.f32 %v3737, 0.2548296
        %v3747 = vadd.f32 %v3738, 0.2548296
        %v3748 = vadd.f32 %v3739, 0.2548296
        %v3749 = vadd.f32 %v3740, 0.2548296
        %v3750 = vmul.f32 %v3741, %v3661
        %v3751 = vmul.f32 %v3742, %v3663
        %v3752 = vmul.f32 %v3743, %v3665
        %v3753 = vmul.f32 %v3744, %v3667
        %v3754 = vmul.f32 %v3745, %v3669
        %v3755 = vmul.f32 %v3746, %v3671
        %v3756 = vmul.f32 %v3747, %v3673
        %v3757 = vmul.f32 %v3748, %v3675
        %v3758 = vmul.f32 %v3749, %v3677
        %v3759 = vsub.f32 0.0, %v3633
        %v3760 = vsub.f32 0.0, %v3634
        %v3761 = vsub.f32 0.0, %v3635
        %v3762 = vsub.f32 0.0, %v3636
        %v3763 = vsub.f32 0.0, %v3637
        %v3764 = vsub.f32 0.0, %v3638
        %v3765 = vsub.f32 0.0, %v3639
        %v3766 = vsub.f32 0.0, %v3640
        %v3767 = vsub.f32 0.0, %v3641
        %v3768 = vmul.f32 %v3759, %v3633
        %v3769 = vmul.f32 %v3760, %v3634
        %v3770 = vmul.f32 %v3761, %v3635
        %v3771 = vmul.f32 %v3762, %v3636
        %v3772 = vmul.f32 %v3763, %v3637
        %v3773 = vmul.f32 %v3764, %v3638
        %v3774 = vmul.f32 %v3765, %v3639
        %v3775 = vmul.f32 %v3766, %v3640
        %v3776 = vmul.f32 %v3767, %v3641
        %v3777 = vmul.f32 %v3768, 1.442695
        %v3778 = vpow.pop %v3777
        %v3779 = vmul.f32 %v3769, 1.442695
        %v3780 = vpow.pop %v3779
        %v3781 = vmul.f32 %v3770, 1.442695
        %v3782 = vpow.pop %v3781
        %v3783 = vmul.f32 %v3771, 1.442695
        %v3784 = vpow.pop %v3783
        %v3785 = vmul.f32 %v3772, 1.442695
        %v3786 = vpow.pop %v3785
        %v3787 = vmul.f32 %v3773, 1.442695
        %v3788 = vpow.pop %v3787
        %v3789 = vmul.f32 %v3774, 1.442695
        %v3790 = vpow.pop %v3789
        %v3791 = vmul.f32 %v3775, 1.442695
        %v3792 = vpow.pop %v3791
        %v3793 = vmul.f32 %v3776, 1.442695
        %v3794 = vpow.pop %v3793
        %v3795 = vmul.f32 %v3750, %v3778
        %v3796 = vmul.f32 %v3751, %v3780
        %v3797 = vmul.f32 %v3752, %v3782
        %v3798 = vmul.f32 %v3753, %v3784
        %v3799 = vmul.f32 %v3754, %v3786
        %v3800 = vmul.f32 %v3755, %v3788
        %v3801 = vmul.f32 %v3756, %v3790
        %v3802 = vmul.f32 %v3757, %v3792
        %v3803 = vmul.f32 %v3758, %v3794
        %v3804 = vsub.f32 1.0, %v3795
        %v3805 = vsub.f32 1.0, %v3796
        %v3806 = vsub.f32 1.0, %v3797
        %v3807 = vsub.f32 1.0, %v3798
        %v3808 = vsub.f32 1.0, %v3799
        %v3809 = vsub.f32 1.0, %v3800
        %v3810 = vsub.f32 1.0, %v3801
        %v3811 = vsub.f32 1.0, %v3802
        %v3812 = vsub.f32 1.0, %v3803
        %vm3813 = vcmp.ge.f32.partialorder %v3624, 0.0
        %vm3814 = vcmp.ge.f32.partialorder %v3625, 0.0
        %vm3815 = vcmp.ge.f32.partialorder %v3626, 0.0
        %vm3816 = vcmp.ge.f32.partialorder %v3627, 0.0
        %vm3817 = vcmp.ge.f32.partialorder %v3628, 0.0
        %vm3818 = vcmp.ge.f32.partialorder %v3629, 0.0
        %vm3819 = vcmp.ge.f32.partialorder %v3630, 0.0
        %vm3820 = vcmp.ge.f32.partialorder %v3631, 0.0
        %vm3821 = vcmp.ge.f32.partialorder %v3632, 0.0
        %v3822 = vsub.f32 0.0, %v3804
        %v3823 = vsub.f32 0.0, %v3805
        %v3824 = vsub.f32 0.0, %v3806
        %v3825 = vsub.f32 0.0, %v3807
        %v3826 = vsub.f32 0.0, %v3808
        %v3827 = vsub.f32 0.0, %v3809
        %v3828 = vsub.f32 0.0, %v3810
        %v3829 = vsub.f32 0.0, %v3811
        %v3830 = vsub.f32 0.0, %v3812
        %v3831 = vsel %vm3813, %v3804, %v3822
        %v3832 = vsel %vm3814, %v3805, %v3823
        %v3833 = vsel %vm3815, %v3806, %v3824
        %v3834 = vsel %vm3816, %v3807, %v3825
        %v3835 = vsel %vm3817, %v3808, %v3826
        %v3836 = vsel %vm3818, %v3809, %v3827
        %v3837 = vsel %vm3819, %v3810, %v3828
        %v3838 = vsel %vm3820, %v3811, %v3829
        %v3839 = vsel %vm3821, %v3812, %v3830
        %v3840 = vadd.f32 %v3831, 1.0
        %v3841 = vadd.f32 %v3832, 1.0
        %v3842 = vadd.f32 %v3833, 1.0
        %v3843 = vadd.f32 %v3834, 1.0
        %v3844 = vadd.f32 %v3835, 1.0
        %v3845 = vadd.f32 %v3836, 1.0
        %v3846 = vadd.f32 %v3837, 1.0
        %v3847 = vadd.f32 %v3838, 1.0
        %v3848 = vadd.f32 %v3839, 1.0
        %v3849 = vmul.f32 %v3615, %v3840
        %v3850 = vmul.f32 %v3616, %v3841
        %v3851 = vmul.f32 %v3617, %v3842
        %v3852 = vmul.f32 %v3618, %v3843
        %v3853 = vmul.f32 %v3619, %v3844
        %v3854 = vmul.f32 %v3620, %v3845
        %v3855 = vmul.f32 %v3621, %v3846
        %v3856 = vmul.f32 %v3622, %v3847
        %v3857 = vmul.f32 %v3623, %v3848
        %v3866 = vrot.slane %v698, 5
        %v3867 = vrot.slane %v699, 5
        %v3868 = vsel %vm761, %v3866, %v3867
        %v3869 = vrot.slane %v700, 5
        %v3870 = vsel %vm761, %v3867, %v3869
        %v3871 = vrot.slane %v701, 5
        %v3872 = vsel %vm761, %v3869, %v3871
        %v3873 = vrot.slane %v702, 5
        %v3874 = vsel %vm761, %v3871, %v3873
        %v3875 = vrot.slane %v703, 5
        %v3876 = vsel %vm761, %v3873, %v3875
        %v3877 = vrot.slane %v704, 5
        %v3878 = vsel %vm761, %v3875, %v3877
        %v3879 = vrot.slane %v705, 5
        %v3880 = vsel %vm761, %v3877, %v3879
        %v3890 = vadd.f32 %v3849, %v3866
        %v3891 = vadd.f32 %v3850, %v3868
        %v3892 = vadd.f32 %v3851, %v3870
        %v3893 = vadd.f32 %v3852, %v3872
        %v3894 = vadd.f32 %v3853, %v3874
        %v3895 = vadd.f32 %v3854, %v3876
        %v3896 = vadd.f32 %v3855, %v3878
        %v3897 = vadd.f32 %v3856, %v3880
        %v3898 = vadd.f32 %v3857, %v3879
        %v3899 = vpack.c.bf16 %v3891, %v3890
        %v3900 = vpack.c.bf16 %v3893, %v3892
        %v3901 = vpack.c.bf16 %v3895, %v3894
        %v3902 = vpack.c.bf16 %v3897, %v3896
        %v3903 = vpack.c.bf16 %v3898, %v3898
        %v3904 = vld [vmem:[%s6] sm:$0xf]
        %v3905 = vld [vmem:[%s6 + $0x4] sm:$0xf]
        %v3906 = vld [vmem:[%s7] sm:$0x1]
        %v3908 = vlaneseq
        %v3909 = vshrl.u32 %v3908, 7
        %v3910 = vsub.s32 0, %v3909
        %v3911 = vrot.slane %v3906, %v3910
        %vm3913 = vsmask.f32 6400
        %v3915 = vshrl.u32 %v3899, 16
        %v3917 = vrot.slane %v3915, 1
        %v3918 = vshll.u32 %v3899, 16
        %v3920 = vrot.slane %v3918, 2
        %v3921 = vor.u32 %v3917, %v3920
        %v3923 = vshrl.u32 %v3900, 16
        %v3925 = vrot.slane %v3923, 1
        %v3926 = vshll.u32 %v3900, 16
        %v3928 = vrot.slane %v3926, 2
        %v3929 = vor.u32 %v3925, %v3928
        %v3930 = vsel %vm3913, %v3921, %v3929
        %v3932 = vshrl.u32 %v3901, 16
        %v3934 = vrot.slane %v3932, 1
        %v3935 = vshll.u32 %v3901, 16
        %v3937 = vrot.slane %v3935, 2
        %v3938 = vor.u32 %v3934, %v3937
        %v3939 = vsel %vm3913, %v3929, %v3938
        %v3941 = vshrl.u32 %v3902, 16
        %v3943 = vrot.slane %v3941, 1
        %v3944 = vshll.u32 %v3902, 16
        %v3946 = vrot.slane %v3944, 2
        %v3947 = vor.u32 %v3943, %v3946
        %v3948 = vsel %vm3913, %v3938, %v3947
        %v3950 = vshrl.u32 %v3903, 16
        %v3952 = vrot.slane %v3950, 1
        %v3953 = vshll.u32 %v3903, 16
        %v3955 = vrot.slane %v3953, 2
        %v3956 = vor.u32 %v3952, %v3955
        %v3957 = vsel %vm3913, %v3947, %v3956
        %v3960 = vunpack.c.l.b16 %v3904
        %v3961 = vunpack.c.l.b16 %v3905
        %v3962 = vpack.c.b16 %v3961, %v3960
        %v3965 = vsel %vm415, %v3930, 0
        %v3968 = vsel %vm415, %v3939, 0
        %v3971 = vsel %vm415, %v3948, 0
        %v3974 = vsel %vm415, %v3957, 0
        %3976 = vmatprep.subr.bf16.mxu0 0
        %3977 = vmatpush1.bf16.msra.mxu0 0
        %3978 = vmatprep.subr.bf16.mxu0 0
        %3979 = vmatpush1.bf16.msra.mxu0 0
        %3980 = vmatprep.subr.bf16.mxu0 0
        %3981 = vmatpush1.bf16.msra.mxu0 0
        %3982 = vmatprep.subr.bf16.mxu0 0
        %3983 = vmatpush1.bf16.msra.mxu0 0
        %3984 = vmatprep.subr.bf16.mxu0 0
        %3985 = vmatpush1.bf16.msra.mxu0 0
        %3986 = vmatprep.subr.bf16.mxu0 0
        %3987 = vmatpush1.bf16.msra.mxu0 0
        %3988 = vmatprep.subr.bf16.mxu0 0
        %3989 = vmatpush1.bf16.msra.mxu0 0
        %3990 = vmatprep.subr.bf16.mxu0 0
        %3991 = vmatpush1.bf16.msra.mxu0 %v3962
        %3992 = vmatprep.subr.bf16.mxu0 0
        %3993 = vmatpush2.bf16.msra.mxu0 0
        %3994 = vmatprep.subr.bf16.mxu0 0
        %3995 = vmatpush2.bf16.msra.mxu0 0
        %3996 = vmatprep.subr.bf16.mxu0 0
        %3997 = vmatpush2.bf16.msra.mxu0 0
        %3998 = vmatprep.subr.bf16.mxu0 0
        %3999 = vmatpush2.bf16.msra.mxu0 0
        %4000 = vmatprep.subr.bf16.mxu0 0
        %4001 = vmatpush2.bf16.msra.mxu0 0
        %4002 = vmatprep.subr.bf16.mxu0 0
        %4003 = vmatpush2.bf16.msra.mxu0 0
        %4004 = vmatprep.subr.bf16.mxu0 0
        %4005 = vmatpush2.bf16.msra.mxu0 0
        %4006 = vmatprep.subr.bf16.mxu0 0
        %4007 = vmatpush2.bf16.msra.mxu0 0
        %4008 = vmatprep.mubr.bf16.mxu0 0
        %4009 = vmatmul.mubr.bf16.gmra.mxu0 %v3965
        %v4010 = vpop.f32.mrf.mxu0
        %v4011 = vadd.f32 %v3911, %v4010
        %v4012 = vpop.f32.mrf.mxu0
        %v4013 = vpop.f32.mrf.mxu0
        %v4014 = vadd.f32 %v3911, %v4013
        %v4015 = vpop.f32.mrf.mxu0
        %4016 = vmatprep.mubr.bf16.mxu0 0
        %4017 = vmatmul.mubr.bf16.gmra.mxu0 %v3968
        %v4018 = vpop.f32.mrf.mxu0
        %v4019 = vadd.f32 %v3911, %v4018
        %v4020 = vpop.f32.mrf.mxu0
        %v4021 = vpop.f32.mrf.mxu0
        %v4022 = vadd.f32 %v3911, %v4021
        %v4023 = vpop.f32.mrf.mxu0
        %4024 = vmatprep.mubr.bf16.mxu0 0
        %4025 = vmatmul.mubr.bf16.gmra.mxu0 %v3971
        %v4026 = vpop.f32.mrf.mxu0
        %v4027 = vadd.f32 %v3911, %v4026
        %v4028 = vpop.f32.mrf.mxu0
        %v4029 = vpop.f32.mrf.mxu0
        %v4030 = vadd.f32 %v3911, %v4029
        %v4031 = vpop.f32.mrf.mxu0
        %4032 = vmatprep.mubr.bf16.mxu0 0
        %4033 = vmatmul.mubr.bf16.gmra.mxu0 %v3974
        %v4034 = vpop.f32.mrf.mxu0
        %v4035 = vadd.f32 %v3911, %v4034
        %v4036 = vpop.f32.mrf.mxu0
        %v4037 = vpop.f32.mrf.mxu0
        %v4038 = vadd.f32 %v3911, %v4037
        %v4039 = vpop.f32.mrf.mxu0
        %4040 = vdwg.mxu0
        %v4041 = vsel %vm333, %v4011, 0.0
        %v4042 = vsel %vm333, %v4014, 0.0
        %v4043 = vadd.f32 %v4041, %v4042
        %v4044 = vsel %vm333, %v4019, 0.0
        %v4045 = vadd.f32 %v4043, %v4044
        %v4046 = vsel %vm333, %v4022, 0.0
        %v4047 = vadd.f32 %v4045, %v4046
        %v4048 = vsel %vm333, %v4027, 0.0
        %v4049 = vadd.f32 %v4047, %v4048
        %v4050 = vsel %vm333, %v4030, 0.0
        %v4051 = vadd.f32 %v4049, %v4050
        %v4052 = vsel %vm333, %v4035, 0.0
        %v4053 = vadd.f32 %v4051, %v4052
        %v4054 = vsel %vm333, %v4038, 0.0
        %v4055 = vadd.f32 %v4053, %v4054
        %v4056 = vrot.slane %v4055, 4
        %v4057 = vadd.f32 %v4055, %v4056
        %v4058 = vrot.slane %v4057, 2
        %v4059 = vadd.f32 %v4057, %v4058
        %v4060 = vrot.slane %v4059, 1
        %v4061 = vadd.f32 %v4059, %v4060
        %v4062 = vmul.f32 %v4061, %v437
        %v4063 = vmul.f32 %v4011, %v4011
        %v4064 = vmul.f32 %v4014, %v4014
        %v4065 = vmul.f32 %v4019, %v4019
        %v4066 = vmul.f32 %v4022, %v4022
        %v4067 = vmul.f32 %v4027, %v4027
        %v4068 = vmul.f32 %v4030, %v4030
        %v4069 = vmul.f32 %v4035, %v4035
        %v4070 = vmul.f32 %v4038, %v4038
        %v4071 = vsel %vm333, %v4063, 0.0
        %v4072 = vsel %vm333, %v4064, 0.0
        %v4073 = vadd.f32 %v4071, %v4072
        %v4074 = vsel %vm333, %v4065, 0.0
        %v4075 = vadd.f32 %v4073, %v4074
        %v4076 = vsel %vm333, %v4066, 0.0
        %v4077 = vadd.f32 %v4075, %v4076
        %v4078 = vsel %vm333, %v4067, 0.0
        %v4079 = vadd.f32 %v4077, %v4078
        %v4080 = vsel %vm333, %v4068, 0.0
        %v4081 = vadd.f32 %v4079, %v4080
        %v4082 = vsel %vm333, %v4069, 0.0
        %v4083 = vadd.f32 %v4081, %v4082
        %v4084 = vsel %vm333, %v4070, 0.0
        %v4085 = vadd.f32 %v4083, %v4084
        %v4086 = vrot.slane %v4085, 4
        %v4087 = vadd.f32 %v4085, %v4086
        %v4088 = vrot.slane %v4087, 2
        %v4089 = vadd.f32 %v4087, %v4088
        %v4090 = vrot.slane %v4089, 1
        %v4091 = vadd.f32 %v4089, %v4090
        %v4092 = vmul.f32 %v4091, %v437
        %v4093 = vmul.f32 %v4062, %v4062
        %v4094 = vsub.f32 %v4092, %v4093
        %v4095 = vmax.f32 %v4094, 0.0
        %v4096 = vsub.f32 %v4011, %v4062
        %v4097 = vsub.f32 %v4014, %v4062
        %v4098 = vsub.f32 %v4019, %v4062
        %v4099 = vsub.f32 %v4022, %v4062
        %v4100 = vsub.f32 %v4027, %v4062
        %v4101 = vsub.f32 %v4030, %v4062
        %v4102 = vsub.f32 %v4035, %v4062
        %v4103 = vsub.f32 %v4038, %v4062
        %v4104 = vadd.f32 %v4095, 1e-05
        %v4105 = vrsqrt.pop %v4104
        %v4106 = vmul.f32 %v4096, %v4105
        %v4107 = vmul.f32 %v4097, %v4105
        %v4108 = vmul.f32 %v4098, %v4105
        %v4109 = vmul.f32 %v4099, %v4105
        %v4110 = vmul.f32 %v4100, %v4105
        %v4111 = vmul.f32 %v4101, %v4105
        %v4112 = vmul.f32 %v4102, %v4105
        %v4113 = vmul.f32 %v4103, %v4105
        %4114 = vst.msk [vmem:[%s298] sm:$0xff] %vm333, %v4106
        %4115 = vst.msk [vmem:[%s298 + $0x8] sm:$0xff] %vm333, %v4107
        %4116 = vst.msk [vmem:[%s298 + $0x10] sm:$0xff] %vm333, %v4108
        %4117 = vst.msk [vmem:[%s298 + $0x18] sm:$0xff] %vm333, %v4109
        %4118 = vst.msk [vmem:[%s298 + $0x20] sm:$0xff] %vm333, %v4110
        %4119 = vst.msk [vmem:[%s298 + $0x28] sm:$0xff] %vm333, %v4111
        %4120 = vst.msk [vmem:[%s298 + $0x30] sm:$0xff] %vm333, %v4112
        %4121 = vst.msk [vmem:[%s298 + $0x38] sm:$0xff] %vm333, %v4113
        %s4122 = sand.u32 %s203, 1
        %s4123 = scalar_lea.sflag [#allocation3], %s4122
        %s4124 = sand.u32 %s203, 1
        %s4125 = smul.addr %s4124, 64
        %s4126 = scalar_lea.vmem [#allocation2], %s4125
        // Predicated region
        $region53: #{hpb3d_forward.7} parent=51 // pred_check
          %p4127 = pneg %p213
        $region54: #{hpb3d_forward.7} parent=51 // pred_check_branch
          %4129 = sbr.rel (%p4127) target = $region56
        $region55: #{hpb3d_forward.7} parent=51 // pred_region
          %s4131 = ssub.s32 1024, 1024
          %4132 = vsyncadd %s4123, %s4131
          %s4133 = smul.addr %s22, 8
          %s4134 = smul.addr %s4133, 128
          %s4135 = scalar_lea.hbm %s8, %s4134
          %s4136 = sshll.u32 %s4126, 4
          %s4137 = int_to_ptr.vmem [resolvable:$true] %s4136
          %4142 = dma.vmem_to_hbm [thread:$0]  %s4137, 1024, %s4135, %s4123, 128, 128, 8
        $region56: #{hpb3d_forward.7} parent=51 // pred_fallthru
          _
      $region52: #{hpb3d_forward.7} parent=5 // pred_fallthru
        _
      %p4143 = scmp.le.s32.totalorder 2, %s17
      // Predicated region
      $region57: #{hpb3d_forward.7} parent=5 // pred_check
        %p4144 = pneg %p4143
      $region58: #{hpb3d_forward.7} parent=5 // pred_check_branch
        %4146 = sbr.rel (%p4144) target = $region60
      $region59: #{hpb3d_forward.7} parent=5 // pred_region
        %s4147 = ssub.s32 %s17, 2
        // Predicated region
        $region61: #{hpb3d_forward.7} parent=59 // pred_check
          %p4148 = pneg %p219
        $region62: #{hpb3d_forward.7} parent=59 // pred_check_branch
          %4150 = sbr.rel (%p4148) target = $region64
        $region63: #{hpb3d_forward.7} parent=59 // pred_region
          %s4151 = sand.u32 %s204, 1
          %s4152 = scalar_lea.sflag [#allocation3], %s4151
          %s4153 = sand.u32 %s204, 1
          %s4154 = smul.addr %s4153, 64
          %s4155 = scalar_lea.vmem [#allocation2], %s4154
          %4156 = dma.done %s4152, 1024
        $region64: #{hpb3d_forward.7} parent=59 // pred_fallthru
          _
      $region60: #{hpb3d_forward.7} parent=5 // pred_fallthru
        _
    $region6: #{hpb3d_forward.7} parent=1 // loop_footer
      %s21 = sadd.s32 1, %s17
    $region7: #{hpb3d_forward.7} parent=1 // loop_footer_branch
      %16 = sbr.rel target = $region3
    $region8: #{hpb3d_forward.7} parent=1 // loop_exit
      _
    %4157 = vsyncpa [#allocation3], 1
    %s4158 = scalar_lea.sflag [#allocation3], 1
    %4159 = vsyncpa %s4158, 1

// kernel: hpb3d_forward.6
$region0: #{hpb3d_forward.6}
  #allocation0 [shape = 'u32[]', space=smem, size = 0x4, offset = 0x4, fixed_abs, tag = 'smem constant byte address 0x4 - core index']
  #allocation1 [shape = 'u32[144,128]{1,0:T(1,128)}', space=vmem, size = 0x12000, scoped, tag = 'internal scratch']
  %s0 = inlined_call_operand.vmem [shape: f32[2,64,16], index: 0, kind: input, shape index: {}]
  %s1 = inlined_call_operand.vmem [shape: f32[2,64,8], index: 1, kind: input, shape index: {}]
  %s2 = inlined_call_operand.vmem [shape: f32[64,27], index: 2, kind: input, shape index: {}]
  %s3 = inlined_call_operand.vmem [shape: bf16[16,8], index: 3, kind: input, shape index: {}]
  %s4 = inlined_call_operand.vmem [shape: f32[1,8], index: 4, kind: input, shape index: {}]
  %s5 = inlined_call_operand.vmem [shape: f32[27,8], index: 5, kind: input, shape index: {}]
  %s6 = inlined_call_operand.vmem [shape: f32[1,8], index: 6, kind: input, shape index: {}]
  %s7 = inlined_call_operand.vmem [shape: bf16[8,8], index: 7, kind: input, shape index: {}]
  %s8 = inlined_call_operand.vmem [shape: bf16[8,8], index: 8, kind: input, shape index: {}]
  %s9 = inlined_call_operand.vmem [shape: f32[1,8], index: 9, kind: input, shape index: {}]
  %s10 = inlined_call_operand.vmem [shape: f32[2,64,8], index: 10, kind: output, shape index: {}]
  %s11 = sld [smem:[#allocation0]]
  $region73: #{hpb3d_forward.6} parent=0
    _
  %s13 = ssub.s32 1, %s11
  %s14 = scalar_select 0, %s13, %s11
  loop: start=0, step=1, limit=4
  $region2: #{hpb3d_forward.6} parent=0 // loop_pre_header
    _
  $region3: #{hpb3d_forward.6} parent=0 // loop_header
    %s16 = sphi 0, %s20
    %p17 = scmp.ge.s32.totalorder %s16, 4
    %s26 = sphi 0, %s28
    %s29 = sphi 0, %s26
    %s30 = sphi 0, %s29
    %s46 = sphi 0, %s30
    %s52 = sphi 0, %s54
    %s55 = sphi 0, %s52
    %s56 = sphi 0, %s55
    %s72 = sphi 0, %s56
    %s76 = sphi 0, %s76
    %s78 = sphi 0, %s76
    %s79 = sphi 0, %s78
    %s93 = sphi 0, %s79
    %s97 = sphi 0, %s97
    %s99 = sphi 0, %s97
    %s100 = sphi 0, %s99
    %s114 = sphi 0, %s100
    %s118 = sphi 0, %s118
    %s120 = sphi 0, %s118
    %s121 = sphi 0, %s120
    %s135 = sphi 0, %s121
    %s139 = sphi 0, %s139
    %s141 = sphi 0, %s139
    %s142 = sphi 0, %s141
    %s156 = sphi 0, %s142
    %s160 = sphi 0, %s160
    %s162 = sphi 0, %s160
    %s163 = sphi 0, %s162
    %s177 = sphi 0, %s163
    %s181 = sphi 0, %s181
    %s183 = sphi 0, %s181
    %s184 = sphi 0, %s183
    %s198 = sphi 0, %s184
    %s202 = sphi 0, %s202
    %s204 = sphi 0, %s202
    %s205 = sphi 0, %s204
    %s219 = sphi 0, %s205
    %s223 = sphi 0, %s223
    %s225 = sphi 0, %s223
    %s226 = sphi 0, %s225
    %s240 = sphi 0, %s226
    %s246 = sphi 0, %s248
    %s249 = sphi 0, %s246
    %s250 = sphi 0, %s249
    %s266 = sphi 0, %s250
  $region4: #{hpb3d_forward.6} parent=0 // loop_header_branch
    %19 = sbr.rel (%p17) target = $region8
  $region5: #{hpb3d_forward.6} parent=0 // loop_body
    %s21 = ssub.s32 %s16, 1
    %s22 = ssub.s32 %s16, 2
    %s23 = sadd.s32 %s16, 1
    %s24 = ssub.s32 %s16, %s23
    %p25 = scmp.eq.s32.totalorder %s24, 0
    %s27 = sadd.s32 %s26, 1
    %s28 = scalar_select %p25, %s26, %s27
    %p31 = pneg %p25
    %p32 = scmp.eq.s32.totalorder %s16, 1
    %p33 = por %p31, %p32
    %p34 = scmp.ne.s32.totalorder %s26, %s29
    %p35 = scmp.eq.s32.totalorder %s16, 0
    %p36 = por %p34, %p35
    %p37 = scmp.ne.s32.totalorder %s26, %s29
    %p38 = scmp.eq.s32.totalorder %s21, 1
    %p39 = por %p37, %p38
    %p40 = scmp.ne.s32.totalorder %s29, %s30
    %p41 = scmp.eq.s32.totalorder %s21, 0
    %p42 = por %p40, %p41
    %p43 = scmp.ne.s32.totalorder %s29, %s30
    %p44 = scmp.eq.s32.totalorder %s22, 1
    %p45 = por %p43, %p44
    %p47 = scmp.ne.s32.totalorder %s30, %s46
    %p48 = scmp.eq.s32.totalorder %s22, 0
    %p49 = por %p47, %p48
    %s50 = ssub.s32 %s16, %s23
    %p51 = scmp.eq.s32.totalorder %s50, 0
    %s53 = sadd.s32 %s52, 1
    %s54 = scalar_select %p51, %s52, %s53
    %p57 = pneg %p51
    %p58 = scmp.eq.s32.totalorder %s16, 1
    %p59 = por %p57, %p58
    %p60 = scmp.ne.s32.totalorder %s52, %s55
    %p61 = scmp.eq.s32.totalorder %s16, 0
    %p62 = por %p60, %p61
    %p63 = scmp.ne.s32.totalorder %s52, %s55
    %p64 = scmp.eq.s32.totalorder %s21, 1
    %p65 = por %p63, %p64
    %p66 = scmp.ne.s32.totalorder %s55, %s56
    %p67 = scmp.eq.s32.totalorder %s21, 0
    %p68 = por %p66, %p67
    %p69 = scmp.ne.s32.totalorder %s55, %s56
    %p70 = scmp.eq.s32.totalorder %s22, 1
    %p71 = por %p69, %p70
    %p73 = scmp.ne.s32.totalorder %s56, %s72
    %p74 = scmp.eq.s32.totalorder %s22, 0
    %p75 = por %p73, %p74
    %s77 = sadd.s32 %s76, 1
    %p80 = scmp.eq.s32.totalorder %s16, 1
    %p81 = scmp.ne.s32.totalorder %s76, %s78
    %p82 = scmp.eq.s32.totalorder %s16, 0
    %p83 = por %p81, %p82
    %p84 = scmp.ne.s32.totalorder %s76, %s78
    %p85 = scmp.eq.s32.totalorder %s21, 1
    %p86 = por %p84, %p85
    %p87 = scmp.ne.s32.totalorder %s78, %s79
    %p88 = scmp.eq.s32.totalorder %s21, 0
    %p89 = por %p87, %p88
    %p90 = scmp.ne.s32.totalorder %s78, %s79
    %p91 = scmp.eq.s32.totalorder %s22, 1
    %p92 = por %p90, %p91
    %p94 = scmp.ne.s32.totalorder %s79, %s93
    %p95 = scmp.eq.s32.totalorder %s22, 0
    %p96 = por %p94, %p95
    %s98 = sadd.s32 %s97, 1
    %p101 = scmp.eq.s32.totalorder %s16, 1
    %p102 = scmp.ne.s32.totalorder %s97, %s99
    %p103 = scmp.eq.s32.totalorder %s16, 0
    %p104 = por %p102, %p103
    %p105 = scmp.ne.s32.totalorder %s97, %s99
    %p106 = scmp.eq.s32.totalorder %s21, 1
    %p107 = por %p105, %p106
    %p108 = scmp.ne.s32.totalorder %s99, %s100
    %p109 = scmp.eq.s32.totalorder %s21, 0
    %p110 = por %p108, %p109
    %p111 = scmp.ne.s32.totalorder %s99, %s100
    %p112 = scmp.eq.s32.totalorder %s22, 1
    %p113 = por %p111, %p112
    %p115 = scmp.ne.s32.totalorder %s100, %s114
    %p116 = scmp.eq.s32.totalorder %s22, 0
    %p117 = por %p115, %p116
    %s119 = sadd.s32 %s118, 1
    %p122 = scmp.eq.s32.totalorder %s16, 1
    %p123 = scmp.ne.s32.totalorder %s118, %s120
    %p124 = scmp.eq.s32.totalorder %s16, 0
    %p125 = por %p123, %p124
    %p126 = scmp.ne.s32.totalorder %s118, %s120
    %p127 = scmp.eq.s32.totalorder %s21, 1
    %p128 = por %p126, %p127
    %p129 = scmp.ne.s32.totalorder %s120, %s121
    %p130 = scmp.eq.s32.totalorder %s21, 0
    %p131 = por %p129, %p130
    %p132 = scmp.ne.s32.totalorder %s120, %s121
    %p133 = scmp.eq.s32.totalorder %s22, 1
    %p134 = por %p132, %p133
    %p136 = scmp.ne.s32.totalorder %s121, %s135
    %p137 = scmp.eq.s32.totalorder %s22, 0
    %p138 = por %p136, %p137
    %s140 = sadd.s32 %s139, 1
    %p143 = scmp.eq.s32.totalorder %s16, 1
    %p144 = scmp.ne.s32.totalorder %s139, %s141
    %p145 = scmp.eq.s32.totalorder %s16, 0
    %p146 = por %p144, %p145
    %p147 = scmp.ne.s32.totalorder %s139, %s141
    %p148 = scmp.eq.s32.totalorder %s21, 1
    %p149 = por %p147, %p148
    %p150 = scmp.ne.s32.totalorder %s141, %s142
    %p151 = scmp.eq.s32.totalorder %s21, 0
    %p152 = por %p150, %p151
    %p153 = scmp.ne.s32.totalorder %s141, %s142
    %p154 = scmp.eq.s32.totalorder %s22, 1
    %p155 = por %p153, %p154
    %p157 = scmp.ne.s32.totalorder %s142, %s156
    %p158 = scmp.eq.s32.totalorder %s22, 0
    %p159 = por %p157, %p158
    %s161 = sadd.s32 %s160, 1
    %p164 = scmp.eq.s32.totalorder %s16, 1
    %p165 = scmp.ne.s32.totalorder %s160, %s162
    %p166 = scmp.eq.s32.totalorder %s16, 0
    %p167 = por %p165, %p166
    %p168 = scmp.ne.s32.totalorder %s160, %s162
    %p169 = scmp.eq.s32.totalorder %s21, 1
    %p170 = por %p168, %p169
    %p171 = scmp.ne.s32.totalorder %s162, %s163
    %p172 = scmp.eq.s32.totalorder %s21, 0
    %p173 = por %p171, %p172
    %p174 = scmp.ne.s32.totalorder %s162, %s163
    %p175 = scmp.eq.s32.totalorder %s22, 1
    %p176 = por %p174, %p175
    %p178 = scmp.ne.s32.totalorder %s163, %s177
    %p179 = scmp.eq.s32.totalorder %s22, 0
    %p180 = por %p178, %p179
    %s182 = sadd.s32 %s181, 1
    %p185 = scmp.eq.s32.totalorder %s16, 1
    %p186 = scmp.ne.s32.totalorder %s181, %s183
    %p187 = scmp.eq.s32.totalorder %s16, 0
    %p188 = por %p186, %p187
    %p189 = scmp.ne.s32.totalorder %s181, %s183
    %p190 = scmp.eq.s32.totalorder %s21, 1
    %p191 = por %p189, %p190
    %p192 = scmp.ne.s32.totalorder %s183, %s184
    %p193 = scmp.eq.s32.totalorder %s21, 0
    %p194 = por %p192, %p193
    %p195 = scmp.ne.s32.totalorder %s183, %s184
    %p196 = scmp.eq.s32.totalorder %s22, 1
    %p197 = por %p195, %p196
    %p199 = scmp.ne.s32.totalorder %s184, %s198
    %p200 = scmp.eq.s32.totalorder %s22, 0
    %p201 = por %p199, %p200
    %s203 = sadd.s32 %s202, 1
    %p206 = scmp.eq.s32.totalorder %s16, 1
    %p207 = scmp.ne.s32.totalorder %s202, %s204
    %p208 = scmp.eq.s32.totalorder %s16, 0
    %p209 = por %p207, %p208
    %p210 = scmp.ne.s32.totalorder %s202, %s204
    %p211 = scmp.eq.s32.totalorder %s21, 1
    %p212 = por %p210, %p211
    %p213 = scmp.ne.s32.totalorder %s204, %s205
    %p214 = scmp.eq.s32.totalorder %s21, 0
    %p215 = por %p213, %p214
    %p216 = scmp.ne.s32.totalorder %s204, %s205
    %p217 = scmp.eq.s32.totalorder %s22, 1
    %p218 = por %p216, %p217
    %p220 = scmp.ne.s32.totalorder %s205, %s219
    %p221 = scmp.eq.s32.totalorder %s22, 0
    %p222 = por %p220, %p221
    %s224 = sadd.s32 %s223, 1
    %p227 = scmp.eq.s32.totalorder %s16, 1
    %p228 = scmp.ne.s32.totalorder %s223, %s225
    %p229 = scmp.eq.s32.totalorder %s16, 0
    %p230 = por %p228, %p229
    %p231 = scmp.ne.s32.totalorder %s223, %s225
    %p232 = scmp.eq.s32.totalorder %s21, 1
    %p233 = por %p231, %p232
    %p234 = scmp.ne.s32.totalorder %s225, %s226
    %p235 = scmp.eq.s32.totalorder %s21, 0
    %p236 = por %p234, %p235
    %p237 = scmp.ne.s32.totalorder %s225, %s226
    %p238 = scmp.eq.s32.totalorder %s22, 1
    %p239 = por %p237, %p238
    %p241 = scmp.ne.s32.totalorder %s226, %s240
    %p242 = scmp.eq.s32.totalorder %s22, 0
    %p243 = por %p241, %p242
    %s244 = ssub.s32 %s16, %s23
    %p245 = scmp.eq.s32.totalorder %s244, 0
    %s247 = sadd.s32 %s246, 1
    %s248 = scalar_select %p245, %s246, %s247
    %p251 = pneg %p245
    %p252 = scmp.eq.s32.totalorder %s16, 1
    %p253 = por %p251, %p252
    %p254 = scmp.ne.s32.totalorder %s246, %s249
    %p255 = scmp.eq.s32.totalorder %s16, 0
    %p256 = por %p254, %p255
    %p257 = scmp.ne.s32.totalorder %s246, %s249
    %p258 = scmp.eq.s32.totalorder %s21, 1
    %p259 = por %p257, %p258
    %p260 = scmp.ne.s32.totalorder %s249, %s250
    %p261 = scmp.eq.s32.totalorder %s21, 0
    %p262 = por %p260, %p261
    %p263 = scmp.ne.s32.totalorder %s249, %s250
    %p264 = scmp.eq.s32.totalorder %s22, 1
    %p265 = por %p263, %p264
    %p267 = scmp.ne.s32.totalorder %s250, %s266
    %p268 = scmp.eq.s32.totalorder %s22, 0
    %p269 = por %p267, %p268
    %p270 = scmp.le.s32.totalorder 1, %s16
    %p271 = scmp.lt.s32.totalorder %s16, 3
    %p272 = pnand %p270, %p271
    %p273 = pneg %p272
    // Predicated region
    $region9: #{hpb3d_forward.6} parent=5 // pred_check
      _
    $region10: #{hpb3d_forward.6} parent=5 // pred_check_branch
      %275 = sbr.rel (%p272) target = $region12
    $region11: #{hpb3d_forward.6} parent=5 // pred_region
      %s276 = ssub.s32 %s16, 1
      // Predicated region
      $region13: #{hpb3d_forward.6} parent=11 // pred_check
        %p277 = pneg %p89
      $region14: #{hpb3d_forward.6} parent=11 // pred_check_branch
        %279 = sbr.rel (%p277) target = $region16
      $region15: #{hpb3d_forward.6} parent=11 // pred_region
        _
      $region16: #{hpb3d_forward.6} parent=11 // pred_fallthru
        _
      // Predicated region
      $region17: #{hpb3d_forward.6} parent=11 // pred_check
        %p280 = pneg %p110
      $region18: #{hpb3d_forward.6} parent=11 // pred_check_branch
        %282 = sbr.rel (%p280) target = $region20
      $region19: #{hpb3d_forward.6} parent=11 // pred_region
        _
      $region20: #{hpb3d_forward.6} parent=11 // pred_fallthru
        _
      // Predicated region
      $region21: #{hpb3d_forward.6} parent=11 // pred_check
        %p283 = pneg %p131
      $region22: #{hpb3d_forward.6} parent=11 // pred_check_branch
        %285 = sbr.rel (%p283) target = $region24
      $region23: #{hpb3d_forward.6} parent=11 // pred_region
        _
      $region24: #{hpb3d_forward.6} parent=11 // pred_fallthru
        _
      // Predicated region
      $region25: #{hpb3d_forward.6} parent=11 // pred_check
        %p286 = pneg %p152
      $region26: #{hpb3d_forward.6} parent=11 // pred_check_branch
        %288 = sbr.rel (%p286) target = $region28
      $region27: #{hpb3d_forward.6} parent=11 // pred_region
        _
      $region28: #{hpb3d_forward.6} parent=11 // pred_fallthru
        _
      // Predicated region
      $region29: #{hpb3d_forward.6} parent=11 // pred_check
        %p289 = pneg %p173
      $region30: #{hpb3d_forward.6} parent=11 // pred_check_branch
        %291 = sbr.rel (%p289) target = $region32
      $region31: #{hpb3d_forward.6} parent=11 // pred_region
        _
      $region32: #{hpb3d_forward.6} parent=11 // pred_fallthru
        _
      // Predicated region
      $region33: #{hpb3d_forward.6} parent=11 // pred_check
        %p292 = pneg %p194
      $region34: #{hpb3d_forward.6} parent=11 // pred_check_branch
        %294 = sbr.rel (%p292) target = $region36
      $region35: #{hpb3d_forward.6} parent=11 // pred_region
        _
      $region36: #{hpb3d_forward.6} parent=11 // pred_fallthru
        _
      // Predicated region
      $region37: #{hpb3d_forward.6} parent=11 // pred_check
        %p295 = pneg %p215
      $region38: #{hpb3d_forward.6} parent=11 // pred_check_branch
        %297 = sbr.rel (%p295) target = $region40
      $region39: #{hpb3d_forward.6} parent=11 // pred_region
        _
      $region40: #{hpb3d_forward.6} parent=11 // pred_fallthru
        _
      // Predicated region
      $region41: #{hpb3d_forward.6} parent=11 // pred_check
        %p298 = pneg %p236
      $region42: #{hpb3d_forward.6} parent=11 // pred_check_branch
        %300 = sbr.rel (%p298) target = $region44
      $region43: #{hpb3d_forward.6} parent=11 // pred_region
        _
      $region44: #{hpb3d_forward.6} parent=11 // pred_fallthru
        _
    $region12: #{hpb3d_forward.6} parent=5 // pred_fallthru
      _
    %p301 = scmp.lt.s32.totalorder %s16, 2
    // Predicated region
    $region45: #{hpb3d_forward.6} parent=5 // pred_check
      %p302 = pneg %p301
    $region46: #{hpb3d_forward.6} parent=5 // pred_check_branch
      %304 = sbr.rel (%p302) target = $region48
    $region47: #{hpb3d_forward.6} parent=5 // pred_region
      // Predicated region
      $region49: #{hpb3d_forward.6} parent=47 // pred_check
        %p305 = pneg %p36
      $region50: #{hpb3d_forward.6} parent=47 // pred_check_branch
        %307 = sbr.rel (%p305) target = $region52
      $region51: #{hpb3d_forward.6} parent=47 // pred_region
        %p308 = scmp.lt.s32.totalorder %s16, 1
        %s309 = scalar_select %p308, %s16, 1
        %s310 = smul.addr %s309, 8
        %s311 = smul.addr %s310, 8
        %s312 = scalar_lea.vmem %s0, %s311
      $region52: #{hpb3d_forward.6} parent=47 // pred_fallthru
        _
      // Predicated region
      $region53: #{hpb3d_forward.6} parent=47 // pred_check
        %p313 = pneg %p62
      $region54: #{hpb3d_forward.6} parent=47 // pred_check_branch
        %315 = sbr.rel (%p313) target = $region56
      $region55: #{hpb3d_forward.6} parent=47 // pred_region
        %p316 = scmp.lt.s32.totalorder %s16, 1
        %s317 = scalar_select %p316, %s16, 1
        %s318 = smul.addr %s317, 8
        %s319 = smul.addr %s318, 8
        %s320 = scalar_lea.vmem %s1, %s319
      $region56: #{hpb3d_forward.6} parent=47 // pred_fallthru
        _
    $region48: #{hpb3d_forward.6} parent=5 // pred_fallthru
      _
    %p321 = scmp.le.s32.totalorder 1, %s16
    %p322 = scmp.lt.s32.totalorder %s16, 3
    %p323 = pnand %p321, %p322
    %p324 = pneg %p323
    // Predicated region
    $region57: #{hpb3d_forward.6} parent=5 // pred_check
      _
    $region58: #{hpb3d_forward.6} parent=5 // pred_check_branch
      %326 = sbr.rel (%p323) target = $region60
    $region59: #{hpb3d_forward.6} parent=5 // pred_region
      %s327 = ssub.s32 %s16, 1
      %p328 = scmp.lt.s32.totalorder %s21, 1
      %s329 = scalar_select %p328, %s21, 1
      %s330 = smul.addr %s329, 8
      %s331 = smul.addr %s330, 8
      %s332 = scalar_lea.vmem %s0, %s331
      %p333 = pneg %p42
      %p334 = pneg %p39
      %p335 = scmp.lt.s32.totalorder %s21, 1
      %s336 = scalar_select %p335, %s21, 1
      %s337 = smul.addr %s336, 8
      %s338 = smul.addr %s337, 8
      %s339 = scalar_lea.vmem %s1, %s338
      %p340 = pneg %p68
      %p341 = pneg %p65
      %p342 = pneg %p89
      %p343 = pneg %p86
      %p344 = pneg %p110
      %p345 = pneg %p107
      %p346 = pneg %p131
      %p347 = pneg %p128
      %p348 = pneg %p152
      %p349 = pneg %p149
      %p350 = pneg %p173
      %p351 = pneg %p170
      %p352 = pneg %p194
      %p353 = pneg %p191
      %p354 = pneg %p215
      %p355 = pneg %p212
      %p356 = pneg %p236
      %p357 = pneg %p233
      %p358 = pneg %p262
      %p359 = pneg %p259
      %p360 = scmp.lt.s32.totalorder %s21, 1
      %s361 = scalar_select %p360, %s21, 1
      %s362 = smul.addr %s361, 8
      %s363 = smul.addr %s362, 8
      %s364 = scalar_lea.vmem %s10, %s363
      %p365 = scmp.lt.s32.totalorder %s21, 1
      %s366 = scalar_select %p365, %s21, 1
      %s367 = smul.addr %s366, 8
      %s368 = smul.addr %s367, 8
      %s369 = scalar_lea.vmem %s0, %s368
      %p370 = scmp.lt.s32.totalorder %s21, 1
      %s371 = scalar_select %p370, %s21, 1
      %s372 = smul.addr %s371, 8
      %s373 = smul.addr %s372, 8
      %s374 = scalar_lea.vmem %s1, %s373
      %p375 = scmp.lt.s32.totalorder %s21, 1
      %s376 = scalar_select %p375, %s21, 1
      %s377 = smul.addr %s376, 8
      %s378 = smul.addr %s377, 8
      %s379 = scalar_lea.vmem %s10, %s378
      %v381 = vld [vmem:[%s374] sm:$0xff]
      %v382 = vld [vmem:[%s374 + $0x8] sm:$0xff]
      %v383 = vld [vmem:[%s374 + $0x10] sm:$0xff]
      %v384 = vld [vmem:[%s374 + $0x18] sm:$0xff]
      %v385 = vld [vmem:[%s374 + $0x20] sm:$0xff]
      %v386 = vld [vmem:[%s374 + $0x28] sm:$0xff]
      %v387 = vld [vmem:[%s374 + $0x30] sm:$0xff]
      %v388 = vld [vmem:[%s374 + $0x38] sm:$0xff]
      %v389 = vld [vmem:[%s2] sm:$0xff]
      %v390 = vld [vmem:[%s2 + $0x8] sm:$0xff]
      %v391 = vld [vmem:[%s2 + $0x10] sm:$0xff]
      %v392 = vld [vmem:[%s2 + $0x18] sm:$0xff]
      %v393 = vld [vmem:[%s2 + $0x20] sm:$0xff]
      %v394 = vld [vmem:[%s2 + $0x28] sm:$0xff]
      %v395 = vld [vmem:[%s2 + $0x30] sm:$0xff]
      %v396 = vld [vmem:[%s2 + $0x38] sm:$0xff]
      %v397 = vld [vmem:[%s369] sm:$0xff]
      %v398 = vld [vmem:[%s369 + $0x8] sm:$0xff]
      %v399 = vld [vmem:[%s369 + $0x10] sm:$0xff]
      %v400 = vld [vmem:[%s369 + $0x18] sm:$0xff]
      %v401 = vld [vmem:[%s369 + $0x20] sm:$0xff]
      %v402 = vld [vmem:[%s369 + $0x28] sm:$0xff]
      %v403 = vld [vmem:[%s369 + $0x30] sm:$0xff]
      %v404 = vld [vmem:[%s369 + $0x38] sm:$0xff]
      %v405 = vpack.c.bf16 %v398, %v397
      %v406 = vpack.c.bf16 %v400, %v399
      %v407 = vpack.c.bf16 %v402, %v401
      %v408 = vpack.c.bf16 %v404, %v403
      %v409 = vld [vmem:[%s3] sm:$0xf]
      %v410 = vld [vmem:[%s3 + $0x4] sm:$0xf]
      %v411 = vld [vmem:[%s4] sm:$0x1]
      %v413 = vlaneseq
      %v414 = vshrl.u32 %v413, 7
      %v415 = vsub.s32 0, %v414
      %v416 = vrot.slane %v411, %v415
      %v420 = vunpack.c.l.b16 %v409
      %v421 = vunpack.c.l.b16 %v410
      %v422 = vpack.c.b16 %v421, %v420
      %vm424 = vcmask 130048
      %v426 = vsel %vm424, %v405, 0
      %v429 = vsel %vm424, %v406, 0
      %v432 = vsel %vm424, %v407, 0
      %v435 = vsel %vm424, %v408, 0
      %437 = vmatprep.subr.bf16.mxu0 0
      %438 = vmatpush1.bf16.msra.mxu0 0
      %439 = vmatprep.subr.bf16.mxu0 0
      %440 = vmatpush1.bf16.msra.mxu0 0
      %441 = vmatprep.subr.bf16.mxu0 0
      %442 = vmatpush1.bf16.msra.mxu0 0
      %443 = vmatprep.subr.bf16.mxu0 0
      %444 = vmatpush1.bf16.msra.mxu0 0
      %445 = vmatprep.subr.bf16.mxu0 0
      %446 = vmatpush1.bf16.msra.mxu0 0
      %447 = vmatprep.subr.bf16.mxu0 0
      %448 = vmatpush1.bf16.msra.mxu0 0
      %449 = vmatprep.subr.bf16.mxu0 0
      %450 = vmatpush1.bf16.msra.mxu0 0
      %451 = vmatprep.subr.bf16.mxu0 0
      %452 = vmatpush1.bf16.msra.mxu0 %v422
      %453 = vmatprep.subr.bf16.mxu0 0
      %454 = vmatpush2.bf16.msra.mxu0 0
      %455 = vmatprep.subr.bf16.mxu0 0
      %456 = vmatpush2.bf16.msra.mxu0 0
      %457 = vmatprep.subr.bf16.mxu0 0
      %458 = vmatpush2.bf16.msra.mxu0 0
      %459 = vmatprep.subr.bf16.mxu0 0
      %460 = vmatpush2.bf16.msra.mxu0 0
      %461 = vmatprep.subr.bf16.mxu0 0
      %462 = vmatpush2.bf16.msra.mxu0 0
      %463 = vmatprep.subr.bf16.mxu0 0
      %464 = vmatpush2.bf16.msra.mxu0 0
      %465 = vmatprep.subr.bf16.mxu0 0
      %466 = vmatpush2.bf16.msra.mxu0 0
      %467 = vmatprep.subr.bf16.mxu0 0
      %468 = vmatpush2.bf16.msra.mxu0 0
      %469 = vmatprep.mubr.bf16.mxu0 0
      %470 = vmatmul.mubr.bf16.gmra.mxu0 %v426
      %v471 = vpop.f32.mrf.mxu0
      %v472 = vadd.f32 %v416, %v471
      %v473 = vpop.f32.mrf.mxu0
      %v474 = vpop.f32.mrf.mxu0
      %v475 = vadd.f32 %v416, %v474
      %v476 = vpop.f32.mrf.mxu0
      %477 = vmatprep.mubr.bf16.mxu0 0
      %478 = vmatmul.mubr.bf16.gmra.mxu0 %v429
      %v479 = vpop.f32.mrf.mxu0
      %v480 = vadd.f32 %v416, %v479
      %v481 = vpop.f32.mrf.mxu0
      %v482 = vpop.f32.mrf.mxu0
      %v483 = vadd.f32 %v416, %v482
      %v484 = vpop.f32.mrf.mxu0
      %485 = vmatprep.mubr.bf16.mxu0 0
      %486 = vmatmul.mubr.bf16.gmra.mxu0 %v432
      %v487 = vpop.f32.mrf.mxu0
      %v488 = vadd.f32 %v416, %v487
      %v489 = vpop.f32.mrf.mxu0
      %v490 = vpop.f32.mrf.mxu0
      %v491 = vadd.f32 %v416, %v490
      %v492 = vpop.f32.mrf.mxu0
      %493 = vmatprep.mubr.bf16.mxu0 0
      %494 = vmatmul.mubr.bf16.gmra.mxu0 %v435
      %v495 = vpop.f32.mrf.mxu0
      %v496 = vadd.f32 %v416, %v495
      %v497 = vpop.f32.mrf.mxu0
      %v498 = vpop.f32.mrf.mxu0
      %v499 = vadd.f32 %v416, %v498
      %v500 = vpop.f32.mrf.mxu0
      %501 = vdwg.mxu0
      %v502 = vld [vmem:[%s5] sm:$0xff]
      %v503 = vld [vmem:[%s5 + $0x8] sm:$0xff]
      %v504 = vld [vmem:[%s5 + $0x10] sm:$0xff]
      %v505 = vld [vmem:[%s5 + $0x18] sm:$0x7]
      %v506 = vld [vmem:[%s6] sm:$0x1]
      %v508 = vlaneseq
      %v509 = vshrl.u32 %v508, 7
      %v510 = vsub.s32 0, %v509
      %v511 = vrot.slane %v506, %v510
      %v513 = vadd.f32 %v511, 0.0
      %v514 = vlaneseq
      %v515 = vshrl.u32 %v514, 7
      %v516 = vsub.s32 0, %v515
      %v517 = vrot.slane %v502, %v516
      %v518 = vmul.f32 %v517, 0.0
      %v519 = vmul.f32 %v381, %v517
      %v520 = vmul.f32 %v382, %v517
      %v521 = vmul.f32 %v383, %v517
      %v522 = vmul.f32 %v384, %v517
      %v523 = vmul.f32 %v385, %v517
      %v524 = vmul.f32 %v386, %v517
      %526 = vset.pattern.permute.xlu0 0
      %527 = vperm.xlu0 %526, %v389
      %v528 = vpop.permute.xlu0 %527
      %530 = vset.pattern.permute.xlu0 0
      %531 = vperm.xlu0 %530, %v390
      %v532 = vpop.permute.xlu0 %531
      %534 = vset.pattern.permute.xlu0 0
      %535 = vperm.xlu0 %534, %v391
      %v536 = vpop.permute.xlu0 %535
      %538 = vset.pattern.permute.xlu0 0
      %539 = vperm.xlu0 %538, %v392
      %v540 = vpop.permute.xlu0 %539
      %542 = vset.pattern.permute.xlu0 0
      %543 = vperm.xlu0 %542, %v393
      %v544 = vpop.permute.xlu0 %543
      %546 = vset.pattern.permute.xlu0 0
      %547 = vperm.xlu0 %546, %v394
      %v548 = vpop.permute.xlu0 %547
      %550 = vset.pattern.permute.xlu0 0
      %551 = vperm.xlu0 %550, %v395
      %v552 = vpop.permute.xlu0 %551
      %554 = vset.pattern.permute.xlu0 0
      %555 = vperm.xlu0 %554, %v396
      %v556 = vpop.permute.xlu0 %555
      %vm557 = vcmask 1042432
      %v558 = vrot.slane %v528, 5
      %v559 = vrot.slane %v532, 5
      %v560 = vsel %vm557, %v558, %v559
      %v561 = vrot.slane %v536, 5
      %v562 = vsel %vm557, %v559, %v561
      %v563 = vrot.slane %v540, 5
      %v564 = vsel %vm557, %v561, %v563
      %v565 = vrot.slane %v544, 5
      %v566 = vsel %vm557, %v563, %v565
      %v567 = vrot.slane %v548, 5
      %v568 = vsel %vm557, %v565, %v567
      %v569 = vrot.slane %v552, 5
      %v570 = vsel %vm557, %v567, %v569
      %v571 = vrot.slane %v556, 5
      %v572 = vsel %vm557, %v569, %v571
      %v582 = vmul.f32 %v518, %v558
      %v583 = vmul.f32 %v518, %v560
      %v584 = vmul.f32 %v518, %v562
      %v585 = vmul.f32 %v519, %v564
      %v586 = vmul.f32 %v520, %v566
      %v587 = vmul.f32 %v521, %v568
      %v588 = vmul.f32 %v522, %v570
      %v589 = vmul.f32 %v523, %v572
      %v590 = vmul.f32 %v524, %v571
      %v591 = vadd.f32 %v513, %v582
      %v592 = vadd.f32 %v513, %v583
      %v593 = vadd.f32 %v513, %v584
      %v594 = vadd.f32 %v513, %v585
      %v595 = vadd.f32 %v513, %v586
      %v596 = vadd.f32 %v513, %v587
      %v597 = vadd.f32 %v513, %v588
      %v598 = vadd.f32 %v513, %v589
      %v599 = vadd.f32 %v513, %v590
      %v600 = vlaneseq
      %v601 = vshrl.u32 %v600, 7
      %v602 = vsub.s32 1, %v601
      %v603 = vrot.slane %v502, %v602
      %v604 = vmul.f32 %v603, 0.0
      %v605 = vmul.f32 %v381, %v603
      %v606 = vmul.f32 %v382, %v603
      %v607 = vmul.f32 %v383, %v603
      %v608 = vmul.f32 %v384, %v603
      %v609 = vmul.f32 %v385, %v603
      %v610 = vmul.f32 %v386, %v603
      %611 = vset.pattern.permute.xlu0 1
      %612 = vperm.xlu0 %611, %v389
      %v613 = vpop.permute.xlu0 %612
      %614 = vset.pattern.permute.xlu0 1
      %615 = vperm.xlu0 %614, %v390
      %v616 = vpop.permute.xlu0 %615
      %617 = vset.pattern.permute.xlu0 1
      %618 = vperm.xlu0 %617, %v391
      %v619 = vpop.permute.xlu0 %618
      %620 = vset.pattern.permute.xlu0 1
      %621 = vperm.xlu0 %620, %v392
      %v622 = vpop.permute.xlu0 %621
      %623 = vset.pattern.permute.xlu0 1
      %624 = vperm.xlu0 %623, %v393
      %v625 = vpop.permute.xlu0 %624
      %626 = vset.pattern.permute.xlu0 1
      %627 = vperm.xlu0 %626, %v394
      %v628 = vpop.permute.xlu0 %627
      %629 = vset.pattern.permute.xlu0 1
      %630 = vperm.xlu0 %629, %v395
      %v631 = vpop.permute.xlu0 %630
      %632 = vset.pattern.permute.xlu0 1
      %633 = vperm.xlu0 %632, %v396
      %v634 = vpop.permute.xlu0 %633
      %vm635 = vcmask 1043456
      %v636 = vrot.slane %v613, 4
      %v637 = vrot.slane %v616, 4
      %v638 = vsel %vm635, %v636, %v637
      %v639 = vrot.slane %v619, 4
      %v640 = vsel %vm635, %v637, %v639
      %v641 = vrot.slane %v622, 4
      %v642 = vsel %vm635, %v639, %v641
      %v643 = vrot.slane %v625, 4
      %v644 = vsel %vm635, %v641, %v643
      %v645 = vrot.slane %v628, 4
      %v646 = vsel %vm635, %v643, %v645
      %v647 = vrot.slane %v631, 4
      %v648 = vsel %vm635, %v645, %v647
      %v649 = vrot.slane %v634, 4
      %v650 = vsel %vm635, %v647, %v649
      %v660 = vmul.f32 %v604, %v636
      %v661 = vmul.f32 %v604, %v638
      %v662 = vmul.f32 %v604, %v640
      %v663 = vmul.f32 %v605, %v642
      %v664 = vmul.f32 %v606, %v644
      %v665 = vmul.f32 %v607, %v646
      %v666 = vmul.f32 %v608, %v648
      %v667 = vmul.f32 %v609, %v650
      %v668 = vmul.f32 %v610, %v649
      %vm678 = vcmask 1046528
      %v679 = vrot.slane %v660, 1
      %v680 = vrot.slane %v661, 1
      %v681 = vsel %vm678, %v679, %v680
      %v682 = vrot.slane %v662, 1
      %v683 = vsel %vm678, %v680, %v682
      %v684 = vrot.slane %v663, 1
      %v685 = vsel %vm678, %v682, %v684
      %v686 = vrot.slane %v664, 1
      %v687 = vsel %vm678, %v684, %v686
      %v688 = vrot.slane %v665, 1
      %v689 = vsel %vm678, %v686, %v688
      %v690 = vrot.slane %v666, 1
      %v691 = vsel %vm678, %v688, %v690
      %v692 = vrot.slane %v667, 1
      %v693 = vsel %vm678, %v690, %v692
      %v694 = vrot.slane %v668, 1
      %v695 = vsel %vm678, %v692, %v694
      %v705 = vadd.f32 %v591, %v681
      %v706 = vadd.f32 %v592, %v683
      %v707 = vadd.f32 %v593, %v685
      %v708 = vadd.f32 %v594, %v687
      %v709 = vadd.f32 %v595, %v689
      %v710 = vadd.f32 %v596, %v691
      %v711 = vadd.f32 %v597, %v693
      %v712 = vadd.f32 %v598, %v695
      %v713 = vadd.f32 %v599, %v694
      %v714 = vlaneseq
      %v715 = vshrl.u32 %v714, 7
      %v716 = vsub.s32 2, %v715
      %v717 = vrot.slane %v502, %v716
      %v718 = vmul.f32 %v717, 0.0
      %v719 = vmul.f32 %v381, %v717
      %v720 = vmul.f32 %v382, %v717
      %v721 = vmul.f32 %v383, %v717
      %v722 = vmul.f32 %v384, %v717
      %v723 = vmul.f32 %v385, %v717
      %v724 = vmul.f32 %v386, %v717
      %725 = vset.pattern.permute.xlu0 2
      %726 = vperm.xlu0 %725, %v389
      %v727 = vpop.permute.xlu0 %726
      %728 = vset.pattern.permute.xlu0 2
      %729 = vperm.xlu0 %728, %v390
      %v730 = vpop.permute.xlu0 %729
      %731 = vset.pattern.permute.xlu0 2
      %732 = vperm.xlu0 %731, %v391
      %v733 = vpop.permute.xlu0 %732
      %734 = vset.pattern.permute.xlu0 2
      %735 = vperm.xlu0 %734, %v392
      %v736 = vpop.permute.xlu0 %735
      %737 = vset.pattern.permute.xlu0 2
      %738 = vperm.xlu0 %737, %v393
      %v739 = vpop.permute.xlu0 %738
      %740 = vset.pattern.permute.xlu0 2
      %741 = vperm.xlu0 %740, %v394
      %v742 = vpop.permute.xlu0 %741
      %743 = vset.pattern.permute.xlu0 2
      %744 = vperm.xlu0 %743, %v395
      %v745 = vpop.permute.xlu0 %744
      %746 = vset.pattern.permute.xlu0 2
      %747 = vperm.xlu0 %746, %v396
      %v748 = vpop.permute.xlu0 %747
      %vm749 = vcmask 1044480
      %v750 = vrot.slane %v727, 3
      %v751 = vrot.slane %v730, 3
      %v752 = vsel %vm749, %v750, %v751
      %v753 = vrot.slane %v733, 3
      %v754 = vsel %vm749, %v751, %v753
      %v755 = vrot.slane %v736, 3
      %v756 = vsel %vm749, %v753, %v755
      %v757 = vrot.slane %v739, 3
      %v758 = vsel %vm749, %v755, %v757
      %v759 = vrot.slane %v742, 3
      %v760 = vsel %vm749, %v757, %v759
      %v761 = vrot.slane %v745, 3
      %v762 = vsel %vm749, %v759, %v761
      %v763 = vrot.slane %v748, 3
      %v764 = vsel %vm749, %v761, %v763
      %v774 = vmul.f32 %v718, %v750
      %v775 = vmul.f32 %v718, %v752
      %v776 = vmul.f32 %v718, %v754
      %v777 = vmul.f32 %v719, %v756
      %v778 = vmul.f32 %v720, %v758
      %v779 = vmul.f32 %v721, %v760
      %v780 = vmul.f32 %v722, %v762
      %v781 = vmul.f32 %v723, %v764
      %v782 = vmul.f32 %v724, %v763
      %vm792 = vcmask 1045504
      %v793 = vrot.slane %v774, 2
      %v794 = vrot.slane %v775, 2
      %v795 = vsel %vm792, %v793, %v794
      %v796 = vrot.slane %v776, 2
      %v797 = vsel %vm792, %v794, %v796
      %v798 = vrot.slane %v777, 2
      %v799 = vsel %vm792, %v796, %v798
      %v800 = vrot.slane %v778, 2
      %v801 = vsel %vm792, %v798, %v800
      %v802 = vrot.slane %v779, 2
      %v803 = vsel %vm792, %v800, %v802
      %v804 = vrot.slane %v780, 2
      %v805 = vsel %vm792, %v802, %v804
      %v806 = vrot.slane %v781, 2
      %v807 = vsel %vm792, %v804, %v806
      %v808 = vrot.slane %v782, 2
      %v809 = vsel %vm792, %v806, %v808
      %v819 = vadd.f32 %v705, %v795
      %v820 = vadd.f32 %v706, %v797
      %v821 = vadd.f32 %v707, %v799
      %v822 = vadd.f32 %v708, %v801
      %v823 = vadd.f32 %v709, %v803
      %v824 = vadd.f32 %v710, %v805
      %v825 = vadd.f32 %v711, %v807
      %v826 = vadd.f32 %v712, %v809
      %v827 = vadd.f32 %v713, %v808
      %v828 = vlaneseq
      %v829 = vshrl.u32 %v828, 7
      %v830 = vsub.s32 3, %v829
      %v831 = vrot.slane %v502, %v830
      %v832 = vmul.f32 %v831, 0.0
      %v833 = vmul.f32 %v381, %v831
      %v834 = vmul.f32 %v382, %v831
      %v835 = vmul.f32 %v383, %v831
      %v836 = vmul.f32 %v384, %v831
      %v837 = vmul.f32 %v385, %v831
      %v838 = vmul.f32 %v386, %v831
      %839 = vset.pattern.permute.xlu0 3
      %840 = vperm.xlu0 %839, %v389
      %v841 = vpop.permute.xlu0 %840
      %842 = vset.pattern.permute.xlu0 3
      %843 = vperm.xlu0 %842, %v390
      %v844 = vpop.permute.xlu0 %843
      %845 = vset.pattern.permute.xlu0 3
      %846 = vperm.xlu0 %845, %v391
      %v847 = vpop.permute.xlu0 %846
      %848 = vset.pattern.permute.xlu0 3
      %849 = vperm.xlu0 %848, %v392
      %v850 = vpop.permute.xlu0 %849
      %851 = vset.pattern.permute.xlu0 3
      %852 = vperm.xlu0 %851, %v393
      %v853 = vpop.permute.xlu0 %852
      %854 = vset.pattern.permute.xlu0 3
      %855 = vperm.xlu0 %854, %v394
      %v856 = vpop.permute.xlu0 %855
      %857 = vset.pattern.permute.xlu0 3
      %858 = vperm.xlu0 %857, %v395
      %v859 = vpop.permute.xlu0 %858
      %860 = vset.pattern.permute.xlu0 3
      %861 = vperm.xlu0 %860, %v396
      %v862 = vpop.permute.xlu0 %861
      %v863 = vrot.slane %v841, 1
      %v864 = vrot.slane %v844, 1
      %v865 = vsel %vm678, %v863, %v864
      %v866 = vrot.slane %v847, 1
      %v867 = vsel %vm678, %v864, %v866
      %v868 = vrot.slane %v850, 1
      %v869 = vsel %vm678, %v866, %v868
      %v870 = vrot.slane %v853, 1
      %v871 = vsel %vm678, %v868, %v870
      %v872 = vrot.slane %v856, 1
      %v873 = vsel %vm678, %v870, %v872
      %v874 = vrot.slane %v859, 1
      %v875 = vsel %vm678, %v872, %v874
      %v876 = vrot.slane %v862, 1
      %v877 = vsel %vm678, %v874, %v876
      %v887 = vmul.f32 %v832, %v863
      %v888 = vmul.f32 %v832, %v865
      %v889 = vmul.f32 %v832, %v867
      %v890 = vmul.f32 %v833, %v869
      %v891 = vmul.f32 %v834, %v871
      %v892 = vmul.f32 %v835, %v873
      %v893 = vmul.f32 %v836, %v875
      %v894 = vmul.f32 %v837, %v877
      %v895 = vmul.f32 %v838, %v876
      %v905 = vrot.slane %v887, 4
      %v906 = vrot.slane %v888, 4
      %v907 = vsel %vm635, %v905, %v906
      %v908 = vrot.slane %v889, 4
      %v909 = vsel %vm635, %v906, %v908
      %v910 = vrot.slane %v890, 4
      %v911 = vsel %vm635, %v908, %v910
      %v912 = vrot.slane %v891, 4
      %v913 = vsel %vm635, %v910, %v912
      %v914 = vrot.slane %v892, 4
      %v915 = vsel %vm635, %v912, %v914
      %v916 = vrot.slane %v893, 4
      %v917 = vsel %vm635, %v914, %v916
      %v918 = vrot.slane %v894, 4
      %v919 = vsel %vm635, %v916, %v918
      %v920 = vrot.slane %v895, 4
      %v921 = vsel %vm635, %v918, %v920
      %v931 = vadd.f32 %v819, %v907
      %v932 = vadd.f32 %v820, %v909
      %v933 = vadd.f32 %v821, %v911
      %v934 = vadd.f32 %v822, %v913
      %v935 = vadd.f32 %v823, %v915
      %v936 = vadd.f32 %v824, %v917
      %v937 = vadd.f32 %v825, %v919
      %v938 = vadd.f32 %v826, %v921
      %v939 = vadd.f32 %v827, %v920
      %v940 = vlaneseq
      %v941 = vshrl.u32 %v940, 7
      %v942 = vsub.s32 4, %v941
      %v943 = vrot.slane %v502, %v942
      %v944 = vmul.f32 %v943, 0.0
      %v945 = vmul.f32 %v381, %v943
      %v946 = vmul.f32 %v382, %v943
      %v947 = vmul.f32 %v383, %v943
      %v948 = vmul.f32 %v384, %v943
      %v949 = vmul.f32 %v385, %v943
      %v950 = vmul.f32 %v386, %v943
      %951 = vset.pattern.permute.xlu0 4
      %952 = vperm.xlu0 %951, %v389
      %v953 = vpop.permute.xlu0 %952
      %955 = vset.pattern.permute.xlu0 4
      %956 = vperm.xlu0 %955, %v390
      %v957 = vpop.permute.xlu0 %956
      %959 = vset.pattern.permute.xlu0 4
      %960 = vperm.xlu0 %959, %v391
      %v961 = vpop.permute.xlu0 %960
      %963 = vset.pattern.permute.xlu0 4
      %964 = vperm.xlu0 %963, %v392
      %v965 = vpop.permute.xlu0 %964
      %967 = vset.pattern.permute.xlu0 4
      %968 = vperm.xlu0 %967, %v393
      %v969 = vpop.permute.xlu0 %968
      %971 = vset.pattern.permute.xlu0 4
      %972 = vperm.xlu0 %971, %v394
      %v973 = vpop.permute.xlu0 %972
      %975 = vset.pattern.permute.xlu0 4
      %976 = vperm.xlu0 %975, %v395
      %v977 = vpop.permute.xlu0 %976
      %979 = vset.pattern.permute.xlu0 4
      %980 = vperm.xlu0 %979, %v396
      %v981 = vpop.permute.xlu0 %980
      %v983 = vmul.f32 %v944, %v953
      %v984 = vmul.f32 %v944, %v957
      %v985 = vmul.f32 %v945, %v961
      %v986 = vmul.f32 %v946, %v965
      %v987 = vmul.f32 %v947, %v969
      %v988 = vmul.f32 %v948, %v973
      %v989 = vmul.f32 %v949, %v977
      %v990 = vmul.f32 %v950, %v981
      %v999 = vrot.slane %v983, 5
      %v1000 = vrot.slane %v984, 5
      %v1001 = vsel %vm557, %v999, %v1000
      %v1002 = vrot.slane %v985, 5
      %v1003 = vsel %vm557, %v1000, %v1002
      %v1004 = vrot.slane %v986, 5
      %v1005 = vsel %vm557, %v1002, %v1004
      %v1006 = vrot.slane %v987, 5
      %v1007 = vsel %vm557, %v1004, %v1006
      %v1008 = vrot.slane %v988, 5
      %v1009 = vsel %vm557, %v1006, %v1008
      %v1010 = vrot.slane %v989, 5
      %v1011 = vsel %vm557, %v1008, %v1010
      %v1012 = vrot.slane %v990, 5
      %v1013 = vsel %vm557, %v1010, %v1012
      %v1023 = vadd.f32 %v931, %v999
      %v1024 = vadd.f32 %v932, %v1001
      %v1025 = vadd.f32 %v933, %v1003
      %v1026 = vadd.f32 %v934, %v1005
      %v1027 = vadd.f32 %v935, %v1007
      %v1028 = vadd.f32 %v936, %v1009
      %v1029 = vadd.f32 %v937, %v1011
      %v1030 = vadd.f32 %v938, %v1013
      %v1031 = vadd.f32 %v939, %v1012
      %v1032 = vlaneseq
      %v1033 = vshrl.u32 %v1032, 7
      %v1034 = vsub.s32 5, %v1033
      %v1035 = vrot.slane %v502, %v1034
      %v1036 = vmul.f32 %v1035, 0.0
      %v1037 = vmul.f32 %v381, %v1035
      %v1038 = vmul.f32 %v382, %v1035
      %v1039 = vmul.f32 %v383, %v1035
      %v1040 = vmul.f32 %v384, %v1035
      %v1041 = vmul.f32 %v385, %v1035
      %v1042 = vmul.f32 %v386, %v1035
      %v1043 = vmul.f32 %v387, %v1035
      %1044 = vset.pattern.permute.xlu0 5
      %1045 = vperm.xlu0 %1044, %v389
      %v1046 = vpop.permute.xlu0 %1045
      %1047 = vset.pattern.permute.xlu0 5
      %1048 = vperm.xlu0 %1047, %v390
      %v1049 = vpop.permute.xlu0 %1048
      %1050 = vset.pattern.permute.xlu0 5
      %1051 = vperm.xlu0 %1050, %v391
      %v1052 = vpop.permute.xlu0 %1051
      %1053 = vset.pattern.permute.xlu0 5
      %1054 = vperm.xlu0 %1053, %v392
      %v1055 = vpop.permute.xlu0 %1054
      %1056 = vset.pattern.permute.xlu0 5
      %1057 = vperm.xlu0 %1056, %v393
      %v1058 = vpop.permute.xlu0 %1057
      %1059 = vset.pattern.permute.xlu0 5
      %1060 = vperm.xlu0 %1059, %v394
      %v1061 = vpop.permute.xlu0 %1060
      %1062 = vset.pattern.permute.xlu0 5
      %1063 = vperm.xlu0 %1062, %v395
      %v1064 = vpop.permute.xlu0 %1063
      %1065 = vset.pattern.permute.xlu0 5
      %1066 = vperm.xlu0 %1065, %v396
      %v1067 = vpop.permute.xlu0 %1066
      %vm1068 = vcmask 1040384
      %v1069 = vrot.slane %v1046, 7
      %v1070 = vrot.slane %v1049, 7
      %v1071 = vsel %vm1068, %v1069, %v1070
      %v1072 = vrot.slane %v1052, 7
      %v1073 = vsel %vm1068, %v1070, %v1072
      %v1074 = vrot.slane %v1055, 7
      %v1075 = vsel %vm1068, %v1072, %v1074
      %v1076 = vrot.slane %v1058, 7
      %v1077 = vsel %vm1068, %v1074, %v1076
      %v1078 = vrot.slane %v1061, 7
      %v1079 = vsel %vm1068, %v1076, %v1078
      %v1080 = vrot.slane %v1064, 7
      %v1081 = vsel %vm1068, %v1078, %v1080
      %v1082 = vrot.slane %v1067, 7
      %v1083 = vsel %vm1068, %v1080, %v1082
      %v1093 = vmul.f32 %v1036, %v1069
      %v1094 = vmul.f32 %v1036, %v1071
      %v1095 = vmul.f32 %v1037, %v1073
      %v1096 = vmul.f32 %v1038, %v1075
      %v1097 = vmul.f32 %v1039, %v1077
      %v1098 = vmul.f32 %v1040, %v1079
      %v1099 = vmul.f32 %v1041, %v1081
      %v1100 = vmul.f32 %v1042, %v1083
      %v1101 = vmul.f32 %v1043, %v1082
      %vm1111 = vcmask 1041408
      %v1112 = vrot.slane %v1093, 6
      %v1113 = vrot.slane %v1094, 6
      %v1114 = vsel %vm1111, %v1112, %v1113
      %v1115 = vrot.slane %v1095, 6
      %v1116 = vsel %vm1111, %v1113, %v1115
      %v1117 = vrot.slane %v1096, 6
      %v1118 = vsel %vm1111, %v1115, %v1117
      %v1119 = vrot.slane %v1097, 6
      %v1120 = vsel %vm1111, %v1117, %v1119
      %v1121 = vrot.slane %v1098, 6
      %v1122 = vsel %vm1111, %v1119, %v1121
      %v1123 = vrot.slane %v1099, 6
      %v1124 = vsel %vm1111, %v1121, %v1123
      %v1125 = vrot.slane %v1100, 6
      %v1126 = vsel %vm1111, %v1123, %v1125
      %v1127 = vrot.slane %v1101, 6
      %v1128 = vsel %vm1111, %v1125, %v1127
      %v1138 = vadd.f32 %v1023, %v1112
      %v1139 = vadd.f32 %v1024, %v1114
      %v1140 = vadd.f32 %v1025, %v1116
      %v1141 = vadd.f32 %v1026, %v1118
      %v1142 = vadd.f32 %v1027, %v1120
      %v1143 = vadd.f32 %v1028, %v1122
      %v1144 = vadd.f32 %v1029, %v1124
      %v1145 = vadd.f32 %v1030, %v1126
      %v1146 = vadd.f32 %v1031, %v1128
      %v1147 = vlaneseq
      %v1148 = vshrl.u32 %v1147, 7
      %v1149 = vsub.s32 6, %v1148
      %v1150 = vrot.slane %v502, %v1149
      %v1151 = vmul.f32 %v1150, 0.0
      %v1152 = vmul.f32 %v381, %v1150
      %v1153 = vmul.f32 %v382, %v1150
      %v1154 = vmul.f32 %v383, %v1150
      %v1155 = vmul.f32 %v384, %v1150
      %v1156 = vmul.f32 %v385, %v1150
      %v1157 = vmul.f32 %v386, %v1150
      %v1158 = vmul.f32 %v387, %v1150
      %1159 = vset.pattern.permute.xlu0 6
      %1160 = vperm.xlu0 %1159, %v389
      %v1161 = vpop.permute.xlu0 %1160
      %1162 = vset.pattern.permute.xlu0 6
      %1163 = vperm.xlu0 %1162, %v390
      %v1164 = vpop.permute.xlu0 %1163
      %1165 = vset.pattern.permute.xlu0 6
      %1166 = vperm.xlu0 %1165, %v391
      %v1167 = vpop.permute.xlu0 %1166
      %1168 = vset.pattern.permute.xlu0 6
      %1169 = vperm.xlu0 %1168, %v392
      %v1170 = vpop.permute.xlu0 %1169
      %1171 = vset.pattern.permute.xlu0 6
      %1172 = vperm.xlu0 %1171, %v393
      %v1173 = vpop.permute.xlu0 %1172
      %1174 = vset.pattern.permute.xlu0 6
      %1175 = vperm.xlu0 %1174, %v394
      %v1176 = vpop.permute.xlu0 %1175
      %1177 = vset.pattern.permute.xlu0 6
      %1178 = vperm.xlu0 %1177, %v395
      %v1179 = vpop.permute.xlu0 %1178
      %1180 = vset.pattern.permute.xlu0 6
      %1181 = vperm.xlu0 %1180, %v396
      %v1182 = vpop.permute.xlu0 %1181
      %v1183 = vrot.slane %v1161, 5
      %v1184 = vrot.slane %v1164, 5
      %v1185 = vsel %vm557, %v1183, %v1184
      %v1186 = vrot.slane %v1167, 5
      %v1187 = vsel %vm557, %v1184, %v1186
      %v1188 = vrot.slane %v1170, 5
      %v1189 = vsel %vm557, %v1186, %v1188
      %v1190 = vrot.slane %v1173, 5
      %v1191 = vsel %vm557, %v1188, %v1190
      %v1192 = vrot.slane %v1176, 5
      %v1193 = vsel %vm557, %v1190, %v1192
      %v1194 = vrot.slane %v1179, 5
      %v1195 = vsel %vm557, %v1192, %v1194
      %v1196 = vrot.slane %v1182, 5
      %v1197 = vsel %vm557, %v1194, %v1196
      %v1207 = vmul.f32 %v1151, %v1183
      %v1208 = vmul.f32 %v1151, %v1185
      %v1209 = vmul.f32 %v1152, %v1187
      %v1210 = vmul.f32 %v1153, %v1189
      %v1211 = vmul.f32 %v1154, %v1191
      %v1212 = vmul.f32 %v1155, %v1193
      %v1213 = vmul.f32 %v1156, %v1195
      %v1214 = vmul.f32 %v1157, %v1197
      %v1215 = vmul.f32 %v1158, %v1196
      %v1216 = vadd.f32 %v1138, %v1207
      %v1217 = vadd.f32 %v1139, %v1208
      %v1218 = vadd.f32 %v1140, %v1209
      %v1219 = vadd.f32 %v1141, %v1210
      %v1220 = vadd.f32 %v1142, %v1211
      %v1221 = vadd.f32 %v1143, %v1212
      %v1222 = vadd.f32 %v1144, %v1213
      %v1223 = vadd.f32 %v1145, %v1214
      %v1224 = vadd.f32 %v1146, %v1215
      %v1225 = vlaneseq
      %v1226 = vshrl.u32 %v1225, 7
      %v1227 = vsub.s32 7, %v1226
      %v1228 = vrot.slane %v502, %v1227
      %v1229 = vmul.f32 %v1228, 0.0
      %v1230 = vmul.f32 %v381, %v1228
      %v1231 = vmul.f32 %v382, %v1228
      %v1232 = vmul.f32 %v383, %v1228
      %v1233 = vmul.f32 %v384, %v1228
      %v1234 = vmul.f32 %v385, %v1228
      %v1235 = vmul.f32 %v386, %v1228
      %v1236 = vmul.f32 %v387, %v1228
      %1237 = vset.pattern.permute.xlu0 7
      %1238 = vperm.xlu0 %1237, %v389
      %v1239 = vpop.permute.xlu0 %1238
      %1240 = vset.pattern.permute.xlu0 7
      %1241 = vperm.xlu0 %1240, %v390
      %v1242 = vpop.permute.xlu0 %1241
      %1243 = vset.pattern.permute.xlu0 7
      %1244 = vperm.xlu0 %1243, %v391
      %v1245 = vpop.permute.xlu0 %1244
      %1246 = vset.pattern.permute.xlu0 7
      %1247 = vperm.xlu0 %1246, %v392
      %v1248 = vpop.permute.xlu0 %1247
      %1249 = vset.pattern.permute.xlu0 7
      %1250 = vperm.xlu0 %1249, %v393
      %v1251 = vpop.permute.xlu0 %1250
      %1252 = vset.pattern.permute.xlu0 7
      %1253 = vperm.xlu0 %1252, %v394
      %v1254 = vpop.permute.xlu0 %1253
      %1255 = vset.pattern.permute.xlu0 7
      %1256 = vperm.xlu0 %1255, %v395
      %v1257 = vpop.permute.xlu0 %1256
      %1258 = vset.pattern.permute.xlu0 7
      %1259 = vperm.xlu0 %1258, %v396
      %v1260 = vpop.permute.xlu0 %1259
      %v1261 = vrot.slane %v1239, 4
      %v1262 = vrot.slane %v1242, 4
      %v1263 = vsel %vm635, %v1261, %v1262
      %v1264 = vrot.slane %v1245, 4
      %v1265 = vsel %vm635, %v1262, %v1264
      %v1266 = vrot.slane %v1248, 4
      %v1267 = vsel %vm635, %v1264, %v1266
      %v1268 = vrot.slane %v1251, 4
      %v1269 = vsel %vm635, %v1266, %v1268
      %v1270 = vrot.slane %v1254, 4
      %v1271 = vsel %vm635, %v1268, %v1270
      %v1272 = vrot.slane %v1257, 4
      %v1273 = vsel %vm635, %v1270, %v1272
      %v1274 = vrot.slane %v1260, 4
      %v1275 = vsel %vm635, %v1272, %v1274
      %v1285 = vmul.f32 %v1229, %v1261
      %v1286 = vmul.f32 %v1229, %v1263
      %v1287 = vmul.f32 %v1230, %v1265
      %v1288 = vmul.f32 %v1231, %v1267
      %v1289 = vmul.f32 %v1232, %v1269
      %v1290 = vmul.f32 %v1233, %v1271
      %v1291 = vmul.f32 %v1234, %v1273
      %v1292 = vmul.f32 %v1235, %v1275
      %v1293 = vmul.f32 %v1236, %v1274
      %v1303 = vrot.slane %v1285, 1
      %v1304 = vrot.slane %v1286, 1
      %v1305 = vsel %vm678, %v1303, %v1304
      %v1306 = vrot.slane %v1287, 1
      %v1307 = vsel %vm678, %v1304, %v1306
      %v1308 = vrot.slane %v1288, 1
      %v1309 = vsel %vm678, %v1306, %v1308
      %v1310 = vrot.slane %v1289, 1
      %v1311 = vsel %vm678, %v1308, %v1310
      %v1312 = vrot.slane %v1290, 1
      %v1313 = vsel %vm678, %v1310, %v1312
      %v1314 = vrot.slane %v1291, 1
      %v1315 = vsel %vm678, %v1312, %v1314
      %v1316 = vrot.slane %v1292, 1
      %v1317 = vsel %vm678, %v1314, %v1316
      %v1318 = vrot.slane %v1293, 1
      %v1319 = vsel %vm678, %v1316, %v1318
      %v1329 = vadd.f32 %v1216, %v1305
      %v1330 = vadd.f32 %v1217, %v1307
      %v1331 = vadd.f32 %v1218, %v1309
      %v1332 = vadd.f32 %v1219, %v1311
      %v1333 = vadd.f32 %v1220, %v1313
      %v1334 = vadd.f32 %v1221, %v1315
      %v1335 = vadd.f32 %v1222, %v1317
      %v1336 = vadd.f32 %v1223, %v1319
      %v1337 = vadd.f32 %v1224, %v1318
      %v1338 = vlaneseq
      %v1339 = vshrl.u32 %v1338, 7
      %v1340 = vsub.s32 0, %v1339
      %v1341 = vrot.slane %v503, %v1340
      %v1342 = vmul.f32 %v1341, 0.0
      %v1343 = vmul.f32 %v381, %v1341
      %v1344 = vmul.f32 %v382, %v1341
      %v1345 = vmul.f32 %v383, %v1341
      %v1346 = vmul.f32 %v384, %v1341
      %v1347 = vmul.f32 %v385, %v1341
      %v1348 = vmul.f32 %v386, %v1341
      %v1349 = vmul.f32 %v387, %v1341
      %1350 = vset.pattern.permute.xlu0 8
      %1351 = vperm.xlu0 %1350, %v389
      %v1352 = vpop.permute.xlu0 %1351
      %1353 = vset.pattern.permute.xlu0 8
      %1354 = vperm.xlu0 %1353, %v390
      %v1355 = vpop.permute.xlu0 %1354
      %1356 = vset.pattern.permute.xlu0 8
      %1357 = vperm.xlu0 %1356, %v391
      %v1358 = vpop.permute.xlu0 %1357
      %1359 = vset.pattern.permute.xlu0 8
      %1360 = vperm.xlu0 %1359, %v392
      %v1361 = vpop.permute.xlu0 %1360
      %1362 = vset.pattern.permute.xlu0 8
      %1363 = vperm.xlu0 %1362, %v393
      %v1364 = vpop.permute.xlu0 %1363
      %1365 = vset.pattern.permute.xlu0 8
      %1366 = vperm.xlu0 %1365, %v394
      %v1367 = vpop.permute.xlu0 %1366
      %1368 = vset.pattern.permute.xlu0 8
      %1369 = vperm.xlu0 %1368, %v395
      %v1370 = vpop.permute.xlu0 %1369
      %1371 = vset.pattern.permute.xlu0 8
      %1372 = vperm.xlu0 %1371, %v396
      %v1373 = vpop.permute.xlu0 %1372
      %v1374 = vrot.slane %v1352, 3
      %v1375 = vrot.slane %v1355, 3
      %v1376 = vsel %vm749, %v1374, %v1375
      %v1377 = vrot.slane %v1358, 3
      %v1378 = vsel %vm749, %v1375, %v1377
      %v1379 = vrot.slane %v1361, 3
      %v1380 = vsel %vm749, %v1377, %v1379
      %v1381 = vrot.slane %v1364, 3
      %v1382 = vsel %vm749, %v1379, %v1381
      %v1383 = vrot.slane %v1367, 3
      %v1384 = vsel %vm749, %v1381, %v1383
      %v1385 = vrot.slane %v1370, 3
      %v1386 = vsel %vm749, %v1383, %v1385
      %v1387 = vrot.slane %v1373, 3
      %v1388 = vsel %vm749, %v1385, %v1387
      %v1398 = vmul.f32 %v1342, %v1374
      %v1399 = vmul.f32 %v1342, %v1376
      %v1400 = vmul.f32 %v1343, %v1378
      %v1401 = vmul.f32 %v1344, %v1380
      %v1402 = vmul.f32 %v1345, %v1382
      %v1403 = vmul.f32 %v1346, %v1384
      %v1404 = vmul.f32 %v1347, %v1386
      %v1405 = vmul.f32 %v1348, %v1388
      %v1406 = vmul.f32 %v1349, %v1387
      %v1416 = vrot.slane %v1398, 2
      %v1417 = vrot.slane %v1399, 2
      %v1418 = vsel %vm792, %v1416, %v1417
      %v1419 = vrot.slane %v1400, 2
      %v1420 = vsel %vm792, %v1417, %v1419
      %v1421 = vrot.slane %v1401, 2
      %v1422 = vsel %vm792, %v1419, %v1421
      %v1423 = vrot.slane %v1402, 2
      %v1424 = vsel %vm792, %v1421, %v1423
      %v1425 = vrot.slane %v1403, 2
      %v1426 = vsel %vm792, %v1423, %v1425
      %v1427 = vrot.slane %v1404, 2
      %v1428 = vsel %vm792, %v1425, %v1427
      %v1429 = vrot.slane %v1405, 2
      %v1430 = vsel %vm792, %v1427, %v1429
      %v1431 = vrot.slane %v1406, 2
      %v1432 = vsel %vm792, %v1429, %v1431
      %v1442 = vadd.f32 %v1329, %v1418
      %v1443 = vadd.f32 %v1330, %v1420
      %v1444 = vadd.f32 %v1331, %v1422
      %v1445 = vadd.f32 %v1332, %v1424
      %v1446 = vadd.f32 %v1333, %v1426
      %v1447 = vadd.f32 %v1334, %v1428
      %v1448 = vadd.f32 %v1335, %v1430
      %v1449 = vadd.f32 %v1336, %v1432
      %v1450 = vadd.f32 %v1337, %v1431
      %v1451 = vlaneseq
      %v1452 = vshrl.u32 %v1451, 7
      %v1453 = vsub.s32 1, %v1452
      %v1454 = vrot.slane %v503, %v1453
      %v1455 = vmul.f32 %v1454, 0.0
      %v1456 = vmul.f32 %v381, %v1454
      %v1457 = vmul.f32 %v382, %v1454
      %v1458 = vmul.f32 %v383, %v1454
      %v1459 = vmul.f32 %v384, %v1454
      %v1460 = vmul.f32 %v385, %v1454
      %v1461 = vmul.f32 %v386, %v1454
      %v1462 = vmul.f32 %v387, %v1454
      %v1463 = vmul.f32 %v388, %v1454
      %1464 = vset.pattern.permute.xlu0 9
      %1465 = vperm.xlu0 %1464, %v389
      %v1466 = vpop.permute.xlu0 %1465
      %1467 = vset.pattern.permute.xlu0 9
      %1468 = vperm.xlu0 %1467, %v390
      %v1469 = vpop.permute.xlu0 %1468
      %1470 = vset.pattern.permute.xlu0 9
      %1471 = vperm.xlu0 %1470, %v391
      %v1472 = vpop.permute.xlu0 %1471
      %1473 = vset.pattern.permute.xlu0 9
      %1474 = vperm.xlu0 %1473, %v392
      %v1475 = vpop.permute.xlu0 %1474
      %1476 = vset.pattern.permute.xlu0 9
      %1477 = vperm.xlu0 %1476, %v393
      %v1478 = vpop.permute.xlu0 %1477
      %1479 = vset.pattern.permute.xlu0 9
      %1480 = vperm.xlu0 %1479, %v394
      %v1481 = vpop.permute.xlu0 %1480
      %1482 = vset.pattern.permute.xlu0 9
      %1483 = vperm.xlu0 %1482, %v395
      %v1484 = vpop.permute.xlu0 %1483
      %1485 = vset.pattern.permute.xlu0 9
      %1486 = vperm.xlu0 %1485, %v396
      %v1487 = vpop.permute.xlu0 %1486
      %v1488 = vrot.slane %v1466, 5
      %v1489 = vrot.slane %v1469, 5
      %v1490 = vsel %vm557, %v1488, %v1489
      %v1491 = vrot.slane %v1472, 5
      %v1492 = vsel %vm557, %v1489, %v1491
      %v1493 = vrot.slane %v1475, 5
      %v1494 = vsel %vm557, %v1491, %v1493
      %v1495 = vrot.slane %v1478, 5
      %v1496 = vsel %vm557, %v1493, %v1495
      %v1497 = vrot.slane %v1481, 5
      %v1498 = vsel %vm557, %v1495, %v1497
      %v1499 = vrot.slane %v1484, 5
      %v1500 = vsel %vm557, %v1497, %v1499
      %v1501 = vrot.slane %v1487, 5
      %v1502 = vsel %vm557, %v1499, %v1501
      %v1512 = vmul.f32 %v1455, %v1488
      %v1513 = vmul.f32 %v1456, %v1490
      %v1514 = vmul.f32 %v1457, %v1492
      %v1515 = vmul.f32 %v1458, %v1494
      %v1516 = vmul.f32 %v1459, %v1496
      %v1517 = vmul.f32 %v1460, %v1498
      %v1518 = vmul.f32 %v1461, %v1500
      %v1519 = vmul.f32 %v1462, %v1502
      %v1520 = vmul.f32 %v1463, %v1501
      %v1521 = vadd.f32 %v1442, %v1512
      %v1522 = vadd.f32 %v1443, %v1513
      %v1523 = vadd.f32 %v1444, %v1514
      %v1524 = vadd.f32 %v1445, %v1515
      %v1525 = vadd.f32 %v1446, %v1516
      %v1526 = vadd.f32 %v1447, %v1517
      %v1527 = vadd.f32 %v1448, %v1518
      %v1528 = vadd.f32 %v1449, %v1519
      %v1529 = vadd.f32 %v1450, %v1520
      %v1530 = vlaneseq
      %v1531 = vshrl.u32 %v1530, 7
      %v1532 = vsub.s32 2, %v1531
      %v1533 = vrot.slane %v503, %v1532
      %v1534 = vmul.f32 %v1533, 0.0
      %v1535 = vmul.f32 %v381, %v1533
      %v1536 = vmul.f32 %v382, %v1533
      %v1537 = vmul.f32 %v383, %v1533
      %v1538 = vmul.f32 %v384, %v1533
      %v1539 = vmul.f32 %v385, %v1533
      %v1540 = vmul.f32 %v386, %v1533
      %v1541 = vmul.f32 %v387, %v1533
      %v1542 = vmul.f32 %v388, %v1533
      %1543 = vset.pattern.permute.xlu0 10
      %1544 = vperm.xlu0 %1543, %v389
      %v1545 = vpop.permute.xlu0 %1544
      %1546 = vset.pattern.permute.xlu0 10
      %1547 = vperm.xlu0 %1546, %v390
      %v1548 = vpop.permute.xlu0 %1547
      %1549 = vset.pattern.permute.xlu0 10
      %1550 = vperm.xlu0 %1549, %v391
      %v1551 = vpop.permute.xlu0 %1550
      %1552 = vset.pattern.permute.xlu0 10
      %1553 = vperm.xlu0 %1552, %v392
      %v1554 = vpop.permute.xlu0 %1553
      %1555 = vset.pattern.permute.xlu0 10
      %1556 = vperm.xlu0 %1555, %v393
      %v1557 = vpop.permute.xlu0 %1556
      %1558 = vset.pattern.permute.xlu0 10
      %1559 = vperm.xlu0 %1558, %v394
      %v1560 = vpop.permute.xlu0 %1559
      %1561 = vset.pattern.permute.xlu0 10
      %1562 = vperm.xlu0 %1561, %v395
      %v1563 = vpop.permute.xlu0 %1562
      %1564 = vset.pattern.permute.xlu0 10
      %1565 = vperm.xlu0 %1564, %v396
      %v1566 = vpop.permute.xlu0 %1565
      %v1567 = vrot.slane %v1545, 4
      %v1568 = vrot.slane %v1548, 4
      %v1569 = vsel %vm635, %v1567, %v1568
      %v1570 = vrot.slane %v1551, 4
      %v1571 = vsel %vm635, %v1568, %v1570
      %v1572 = vrot.slane %v1554, 4
      %v1573 = vsel %vm635, %v1570, %v1572
      %v1574 = vrot.slane %v1557, 4
      %v1575 = vsel %vm635, %v1572, %v1574
      %v1576 = vrot.slane %v1560, 4
      %v1577 = vsel %vm635, %v1574, %v1576
      %v1578 = vrot.slane %v1563, 4
      %v1579 = vsel %vm635, %v1576, %v1578
      %v1580 = vrot.slane %v1566, 4
      %v1581 = vsel %vm635, %v1578, %v1580
      %v1591 = vmul.f32 %v1534, %v1567
      %v1592 = vmul.f32 %v1535, %v1569
      %v1593 = vmul.f32 %v1536, %v1571
      %v1594 = vmul.f32 %v1537, %v1573
      %v1595 = vmul.f32 %v1538, %v1575
      %v1596 = vmul.f32 %v1539, %v1577
      %v1597 = vmul.f32 %v1540, %v1579
      %v1598 = vmul.f32 %v1541, %v1581
      %v1599 = vmul.f32 %v1542, %v1580
      %v1609 = vrot.slane %v1591, 1
      %v1610 = vrot.slane %v1592, 1
      %v1611 = vsel %vm678, %v1609, %v1610
      %v1612 = vrot.slane %v1593, 1
      %v1613 = vsel %vm678, %v1610, %v1612
      %v1614 = vrot.slane %v1594, 1
      %v1615 = vsel %vm678, %v1612, %v1614
      %v1616 = vrot.slane %v1595, 1
      %v1617 = vsel %vm678, %v1614, %v1616
      %v1618 = vrot.slane %v1596, 1
      %v1619 = vsel %vm678, %v1616, %v1618
      %v1620 = vrot.slane %v1597, 1
      %v1621 = vsel %vm678, %v1618, %v1620
      %v1622 = vrot.slane %v1598, 1
      %v1623 = vsel %vm678, %v1620, %v1622
      %v1624 = vrot.slane %v1599, 1
      %v1625 = vsel %vm678, %v1622, %v1624
      %v1635 = vadd.f32 %v1521, %v1611
      %v1636 = vadd.f32 %v1522, %v1613
      %v1637 = vadd.f32 %v1523, %v1615
      %v1638 = vadd.f32 %v1524, %v1617
      %v1639 = vadd.f32 %v1525, %v1619
      %v1640 = vadd.f32 %v1526, %v1621
      %v1641 = vadd.f32 %v1527, %v1623
      %v1642 = vadd.f32 %v1528, %v1625
      %v1643 = vadd.f32 %v1529, %v1624
      %v1644 = vlaneseq
      %v1645 = vshrl.u32 %v1644, 7
      %v1646 = vsub.s32 3, %v1645
      %v1647 = vrot.slane %v503, %v1646
      %v1648 = vmul.f32 %v1647, 0.0
      %v1649 = vmul.f32 %v381, %v1647
      %v1650 = vmul.f32 %v382, %v1647
      %v1651 = vmul.f32 %v383, %v1647
      %v1652 = vmul.f32 %v384, %v1647
      %v1653 = vmul.f32 %v385, %v1647
      %v1654 = vmul.f32 %v386, %v1647
      %v1655 = vmul.f32 %v387, %v1647
      %v1656 = vmul.f32 %v388, %v1647
      %1657 = vset.pattern.permute.xlu0 11
      %1658 = vperm.xlu0 %1657, %v389
      %v1659 = vpop.permute.xlu0 %1658
      %1660 = vset.pattern.permute.xlu0 11
      %1661 = vperm.xlu0 %1660, %v390
      %v1662 = vpop.permute.xlu0 %1661
      %1663 = vset.pattern.permute.xlu0 11
      %1664 = vperm.xlu0 %1663, %v391
      %v1665 = vpop.permute.xlu0 %1664
      %1666 = vset.pattern.permute.xlu0 11
      %1667 = vperm.xlu0 %1666, %v392
      %v1668 = vpop.permute.xlu0 %1667
      %1669 = vset.pattern.permute.xlu0 11
      %1670 = vperm.xlu0 %1669, %v393
      %v1671 = vpop.permute.xlu0 %1670
      %1672 = vset.pattern.permute.xlu0 11
      %1673 = vperm.xlu0 %1672, %v394
      %v1674 = vpop.permute.xlu0 %1673
      %1675 = vset.pattern.permute.xlu0 11
      %1676 = vperm.xlu0 %1675, %v395
      %v1677 = vpop.permute.xlu0 %1676
      %1678 = vset.pattern.permute.xlu0 11
      %1679 = vperm.xlu0 %1678, %v396
      %v1680 = vpop.permute.xlu0 %1679
      %v1681 = vrot.slane %v1659, 3
      %v1682 = vrot.slane %v1662, 3
      %v1683 = vsel %vm749, %v1681, %v1682
      %v1684 = vrot.slane %v1665, 3
      %v1685 = vsel %vm749, %v1682, %v1684
      %v1686 = vrot.slane %v1668, 3
      %v1687 = vsel %vm749, %v1684, %v1686
      %v1688 = vrot.slane %v1671, 3
      %v1689 = vsel %vm749, %v1686, %v1688
      %v1690 = vrot.slane %v1674, 3
      %v1691 = vsel %vm749, %v1688, %v1690
      %v1692 = vrot.slane %v1677, 3
      %v1693 = vsel %vm749, %v1690, %v1692
      %v1694 = vrot.slane %v1680, 3
      %v1695 = vsel %vm749, %v1692, %v1694
      %v1705 = vmul.f32 %v1648, %v1681
      %v1706 = vmul.f32 %v1649, %v1683
      %v1707 = vmul.f32 %v1650, %v1685
      %v1708 = vmul.f32 %v1651, %v1687
      %v1709 = vmul.f32 %v1652, %v1689
      %v1710 = vmul.f32 %v1653, %v1691
      %v1711 = vmul.f32 %v1654, %v1693
      %v1712 = vmul.f32 %v1655, %v1695
      %v1713 = vmul.f32 %v1656, %v1694
      %v1723 = vrot.slane %v1705, 2
      %v1724 = vrot.slane %v1706, 2
      %v1725 = vsel %vm792, %v1723, %v1724
      %v1726 = vrot.slane %v1707, 2
      %v1727 = vsel %vm792, %v1724, %v1726
      %v1728 = vrot.slane %v1708, 2
      %v1729 = vsel %vm792, %v1726, %v1728
      %v1730 = vrot.slane %v1709, 2
      %v1731 = vsel %vm792, %v1728, %v1730
      %v1732 = vrot.slane %v1710, 2
      %v1733 = vsel %vm792, %v1730, %v1732
      %v1734 = vrot.slane %v1711, 2
      %v1735 = vsel %vm792, %v1732, %v1734
      %v1736 = vrot.slane %v1712, 2
      %v1737 = vsel %vm792, %v1734, %v1736
      %v1738 = vrot.slane %v1713, 2
      %v1739 = vsel %vm792, %v1736, %v1738
      %v1749 = vadd.f32 %v1635, %v1725
      %v1750 = vadd.f32 %v1636, %v1727
      %v1751 = vadd.f32 %v1637, %v1729
      %v1752 = vadd.f32 %v1638, %v1731
      %v1753 = vadd.f32 %v1639, %v1733
      %v1754 = vadd.f32 %v1640, %v1735
      %v1755 = vadd.f32 %v1641, %v1737
      %v1756 = vadd.f32 %v1642, %v1739
      %v1757 = vadd.f32 %v1643, %v1738
      %v1758 = vlaneseq
      %v1759 = vshrl.u32 %v1758, 7
      %v1760 = vsub.s32 4, %v1759
      %v1761 = vrot.slane %v503, %v1760
      %v1762 = vmul.f32 %v1761, 0.0
      %v1763 = vmul.f32 %v381, %v1761
      %v1764 = vmul.f32 %v382, %v1761
      %v1765 = vmul.f32 %v383, %v1761
      %v1766 = vmul.f32 %v384, %v1761
      %v1767 = vmul.f32 %v385, %v1761
      %v1768 = vmul.f32 %v386, %v1761
      %v1769 = vmul.f32 %v387, %v1761
      %v1770 = vmul.f32 %v388, %v1761
      %1771 = vset.pattern.permute.xlu0 12
      %1772 = vperm.xlu0 %1771, %v389
      %v1773 = vpop.permute.xlu0 %1772
      %1774 = vset.pattern.permute.xlu0 12
      %1775 = vperm.xlu0 %1774, %v390
      %v1776 = vpop.permute.xlu0 %1775
      %1777 = vset.pattern.permute.xlu0 12
      %1778 = vperm.xlu0 %1777, %v391
      %v1779 = vpop.permute.xlu0 %1778
      %1780 = vset.pattern.permute.xlu0 12
      %1781 = vperm.xlu0 %1780, %v392
      %v1782 = vpop.permute.xlu0 %1781
      %1783 = vset.pattern.permute.xlu0 12
      %1784 = vperm.xlu0 %1783, %v393
      %v1785 = vpop.permute.xlu0 %1784
      %1786 = vset.pattern.permute.xlu0 12
      %1787 = vperm.xlu0 %1786, %v394
      %v1788 = vpop.permute.xlu0 %1787
      %1789 = vset.pattern.permute.xlu0 12
      %1790 = vperm.xlu0 %1789, %v395
      %v1791 = vpop.permute.xlu0 %1790
      %1792 = vset.pattern.permute.xlu0 12
      %1793 = vperm.xlu0 %1792, %v396
      %v1794 = vpop.permute.xlu0 %1793
      %v1795 = vrot.slane %v1773, 1
      %v1796 = vrot.slane %v1776, 1
      %v1797 = vsel %vm678, %v1795, %v1796
      %v1798 = vrot.slane %v1779, 1
      %v1799 = vsel %vm678, %v1796, %v1798
      %v1800 = vrot.slane %v1782, 1
      %v1801 = vsel %vm678, %v1798, %v1800
      %v1802 = vrot.slane %v1785, 1
      %v1803 = vsel %vm678, %v1800, %v1802
      %v1804 = vrot.slane %v1788, 1
      %v1805 = vsel %vm678, %v1802, %v1804
      %v1806 = vrot.slane %v1791, 1
      %v1807 = vsel %vm678, %v1804, %v1806
      %v1808 = vrot.slane %v1794, 1
      %v1809 = vsel %vm678, %v1806, %v1808
      %v1819 = vmul.f32 %v1762, %v1795
      %v1820 = vmul.f32 %v1763, %v1797
      %v1821 = vmul.f32 %v1764, %v1799
      %v1822 = vmul.f32 %v1765, %v1801
      %v1823 = vmul.f32 %v1766, %v1803
      %v1824 = vmul.f32 %v1767, %v1805
      %v1825 = vmul.f32 %v1768, %v1807
      %v1826 = vmul.f32 %v1769, %v1809
      %v1827 = vmul.f32 %v1770, %v1808
      %v1837 = vrot.slane %v1819, 4
      %v1838 = vrot.slane %v1820, 4
      %v1839 = vsel %vm635, %v1837, %v1838
      %v1840 = vrot.slane %v1821, 4
      %v1841 = vsel %vm635, %v1838, %v1840
      %v1842 = vrot.slane %v1822, 4
      %v1843 = vsel %vm635, %v1840, %v1842
      %v1844 = vrot.slane %v1823, 4
      %v1845 = vsel %vm635, %v1842, %v1844
      %v1846 = vrot.slane %v1824, 4
      %v1847 = vsel %vm635, %v1844, %v1846
      %v1848 = vrot.slane %v1825, 4
      %v1849 = vsel %vm635, %v1846, %v1848
      %v1850 = vrot.slane %v1826, 4
      %v1851 = vsel %vm635, %v1848, %v1850
      %v1852 = vrot.slane %v1827, 4
      %v1853 = vsel %vm635, %v1850, %v1852
      %v1863 = vadd.f32 %v1749, %v1839
      %v1864 = vadd.f32 %v1750, %v1841
      %v1865 = vadd.f32 %v1751, %v1843
      %v1866 = vadd.f32 %v1752, %v1845
      %v1867 = vadd.f32 %v1753, %v1847
      %v1868 = vadd.f32 %v1754, %v1849
      %v1869 = vadd.f32 %v1755, %v1851
      %v1870 = vadd.f32 %v1756, %v1853
      %v1871 = vadd.f32 %v1757, %v1852
      %v1872 = vlaneseq
      %v1873 = vshrl.u32 %v1872, 7
      %v1874 = vsub.s32 5, %v1873
      %v1875 = vrot.slane %v503, %v1874
      %v1876 = vmul.f32 %v381, %v1875
      %v1877 = vmul.f32 %v382, %v1875
      %v1878 = vmul.f32 %v383, %v1875
      %v1879 = vmul.f32 %v384, %v1875
      %v1880 = vmul.f32 %v385, %v1875
      %v1881 = vmul.f32 %v386, %v1875
      %v1882 = vmul.f32 %v387, %v1875
      %v1883 = vmul.f32 %v388, %v1875
      %v1892 = vrot.slane %v1876, 5
      %v1893 = vrot.slane %v1877, 5
      %v1894 = vsel %vm557, %v1892, %v1893
      %v1895 = vrot.slane %v1878, 5
      %v1896 = vsel %vm557, %v1893, %v1895
      %v1897 = vrot.slane %v1879, 5
      %v1898 = vsel %vm557, %v1895, %v1897
      %v1899 = vrot.slane %v1880, 5
      %v1900 = vsel %vm557, %v1897, %v1899
      %v1901 = vrot.slane %v1881, 5
      %v1902 = vsel %vm557, %v1899, %v1901
      %v1903 = vrot.slane %v1882, 5
      %v1904 = vsel %vm557, %v1901, %v1903
      %v1905 = vrot.slane %v1883, 5
      %v1906 = vsel %vm557, %v1903, %v1905
      %v1916 = vadd.f32 %v1863, %v1892
      %v1917 = vadd.f32 %v1864, %v1894
      %v1918 = vadd.f32 %v1865, %v1896
      %v1919 = vadd.f32 %v1866, %v1898
      %v1920 = vadd.f32 %v1867, %v1900
      %v1921 = vadd.f32 %v1868, %v1902
      %v1922 = vadd.f32 %v1869, %v1904
      %v1923 = vadd.f32 %v1870, %v1906
      %v1924 = vadd.f32 %v1871, %v1905
      %v1925 = vlaneseq
      %v1926 = vshrl.u32 %v1925, 7
      %v1927 = vsub.s32 6, %v1926
      %v1928 = vrot.slane %v503, %v1927
      %v1929 = vmul.f32 %v381, %v1928
      %v1930 = vmul.f32 %v382, %v1928
      %v1931 = vmul.f32 %v383, %v1928
      %v1932 = vmul.f32 %v384, %v1928
      %v1933 = vmul.f32 %v385, %v1928
      %v1934 = vmul.f32 %v386, %v1928
      %v1935 = vmul.f32 %v387, %v1928
      %v1936 = vmul.f32 %v388, %v1928
      %v1937 = vmul.f32 %v1928, 0.0
      %1938 = vset.pattern.permute.xlu0 14
      %1939 = vperm.xlu0 %1938, %v389
      %v1940 = vpop.permute.xlu0 %1939
      %1941 = vset.pattern.permute.xlu0 14
      %1942 = vperm.xlu0 %1941, %v390
      %v1943 = vpop.permute.xlu0 %1942
      %1944 = vset.pattern.permute.xlu0 14
      %1945 = vperm.xlu0 %1944, %v391
      %v1946 = vpop.permute.xlu0 %1945
      %1947 = vset.pattern.permute.xlu0 14
      %1948 = vperm.xlu0 %1947, %v392
      %v1949 = vpop.permute.xlu0 %1948
      %1950 = vset.pattern.permute.xlu0 14
      %1951 = vperm.xlu0 %1950, %v393
      %v1952 = vpop.permute.xlu0 %1951
      %1953 = vset.pattern.permute.xlu0 14
      %1954 = vperm.xlu0 %1953, %v394
      %v1955 = vpop.permute.xlu0 %1954
      %1956 = vset.pattern.permute.xlu0 14
      %1957 = vperm.xlu0 %1956, %v395
      %v1958 = vpop.permute.xlu0 %1957
      %1959 = vset.pattern.permute.xlu0 14
      %1960 = vperm.xlu0 %1959, %v396
      %v1961 = vpop.permute.xlu0 %1960
      %v1962 = vrot.slane %v1940, 7
      %v1963 = vrot.slane %v1943, 7
      %v1964 = vsel %vm1068, %v1962, %v1963
      %v1965 = vrot.slane %v1946, 7
      %v1966 = vsel %vm1068, %v1963, %v1965
      %v1967 = vrot.slane %v1949, 7
      %v1968 = vsel %vm1068, %v1965, %v1967
      %v1969 = vrot.slane %v1952, 7
      %v1970 = vsel %vm1068, %v1967, %v1969
      %v1971 = vrot.slane %v1955, 7
      %v1972 = vsel %vm1068, %v1969, %v1971
      %v1973 = vrot.slane %v1958, 7
      %v1974 = vsel %vm1068, %v1971, %v1973
      %v1975 = vrot.slane %v1961, 7
      %v1976 = vsel %vm1068, %v1973, %v1975
      %v1986 = vmul.f32 %v1929, %v1962
      %v1987 = vmul.f32 %v1930, %v1964
      %v1988 = vmul.f32 %v1931, %v1966
      %v1989 = vmul.f32 %v1932, %v1968
      %v1990 = vmul.f32 %v1933, %v1970
      %v1991 = vmul.f32 %v1934, %v1972
      %v1992 = vmul.f32 %v1935, %v1974
      %v1993 = vmul.f32 %v1936, %v1976
      %v1994 = vmul.f32 %v1937, %v1975
      %v2004 = vrot.slane %v1986, 6
      %v2005 = vrot.slane %v1987, 6
      %v2006 = vsel %vm1111, %v2004, %v2005
      %v2007 = vrot.slane %v1988, 6
      %v2008 = vsel %vm1111, %v2005, %v2007
      %v2009 = vrot.slane %v1989, 6
      %v2010 = vsel %vm1111, %v2007, %v2009
      %v2011 = vrot.slane %v1990, 6
      %v2012 = vsel %vm1111, %v2009, %v2011
      %v2013 = vrot.slane %v1991, 6
      %v2014 = vsel %vm1111, %v2011, %v2013
      %v2015 = vrot.slane %v1992, 6
      %v2016 = vsel %vm1111, %v2013, %v2015
      %v2017 = vrot.slane %v1993, 6
      %v2018 = vsel %vm1111, %v2015, %v2017
      %v2019 = vrot.slane %v1994, 6
      %v2020 = vsel %vm1111, %v2017, %v2019
      %v2030 = vadd.f32 %v1916, %v2004
      %v2031 = vadd.f32 %v1917, %v2006
      %v2032 = vadd.f32 %v1918, %v2008
      %v2033 = vadd.f32 %v1919, %v2010
      %v2034 = vadd.f32 %v1920, %v2012
      %v2035 = vadd.f32 %v1921, %v2014
      %v2036 = vadd.f32 %v1922, %v2016
      %v2037 = vadd.f32 %v1923, %v2018
      %v2038 = vadd.f32 %v1924, %v2020
      %v2039 = vlaneseq
      %v2040 = vshrl.u32 %v2039, 7
      %v2041 = vsub.s32 7, %v2040
      %v2042 = vrot.slane %v503, %v2041
      %v2043 = vmul.f32 %v381, %v2042
      %v2044 = vmul.f32 %v382, %v2042
      %v2045 = vmul.f32 %v383, %v2042
      %v2046 = vmul.f32 %v384, %v2042
      %v2047 = vmul.f32 %v385, %v2042
      %v2048 = vmul.f32 %v386, %v2042
      %v2049 = vmul.f32 %v387, %v2042
      %v2050 = vmul.f32 %v388, %v2042
      %v2051 = vmul.f32 %v2042, 0.0
      %2052 = vset.pattern.permute.xlu0 15
      %2053 = vperm.xlu0 %2052, %v389
      %v2054 = vpop.permute.xlu0 %2053
      %2055 = vset.pattern.permute.xlu0 15
      %2056 = vperm.xlu0 %2055, %v390
      %v2057 = vpop.permute.xlu0 %2056
      %2058 = vset.pattern.permute.xlu0 15
      %2059 = vperm.xlu0 %2058, %v391
      %v2060 = vpop.permute.xlu0 %2059
      %2061 = vset.pattern.permute.xlu0 15
      %2062 = vperm.xlu0 %2061, %v392
      %v2063 = vpop.permute.xlu0 %2062
      %2064 = vset.pattern.permute.xlu0 15
      %2065 = vperm.xlu0 %2064, %v393
      %v2066 = vpop.permute.xlu0 %2065
      %2067 = vset.pattern.permute.xlu0 15
      %2068 = vperm.xlu0 %2067, %v394
      %v2069 = vpop.permute.xlu0 %2068
      %2070 = vset.pattern.permute.xlu0 15
      %2071 = vperm.xlu0 %2070, %v395
      %v2072 = vpop.permute.xlu0 %2071
      %2073 = vset.pattern.permute.xlu0 15
      %2074 = vperm.xlu0 %2073, %v396
      %v2075 = vpop.permute.xlu0 %2074
      %v2076 = vrot.slane %v2054, 5
      %v2077 = vrot.slane %v2057, 5
      %v2078 = vsel %vm557, %v2076, %v2077
      %v2079 = vrot.slane %v2060, 5
      %v2080 = vsel %vm557, %v2077, %v2079
      %v2081 = vrot.slane %v2063, 5
      %v2082 = vsel %vm557, %v2079, %v2081
      %v2083 = vrot.slane %v2066, 5
      %v2084 = vsel %vm557, %v2081, %v2083
      %v2085 = vrot.slane %v2069, 5
      %v2086 = vsel %vm557, %v2083, %v2085
      %v2087 = vrot.slane %v2072, 5
      %v2088 = vsel %vm557, %v2085, %v2087
      %v2089 = vrot.slane %v2075, 5
      %v2090 = vsel %vm557, %v2087, %v2089
      %v2100 = vmul.f32 %v2043, %v2076
      %v2101 = vmul.f32 %v2044, %v2078
      %v2102 = vmul.f32 %v2045, %v2080
      %v2103 = vmul.f32 %v2046, %v2082
      %v2104 = vmul.f32 %v2047, %v2084
      %v2105 = vmul.f32 %v2048, %v2086
      %v2106 = vmul.f32 %v2049, %v2088
      %v2107 = vmul.f32 %v2050, %v2090
      %v2108 = vmul.f32 %v2051, %v2089
      %v2109 = vadd.f32 %v2030, %v2100
      %v2110 = vadd.f32 %v2031, %v2101
      %v2111 = vadd.f32 %v2032, %v2102
      %v2112 = vadd.f32 %v2033, %v2103
      %v2113 = vadd.f32 %v2034, %v2104
      %v2114 = vadd.f32 %v2035, %v2105
      %v2115 = vadd.f32 %v2036, %v2106
      %v2116 = vadd.f32 %v2037, %v2107
      %v2117 = vadd.f32 %v2038, %v2108
      %v2118 = vlaneseq
      %v2119 = vshrl.u32 %v2118, 7
      %v2120 = vsub.s32 0, %v2119
      %v2121 = vrot.slane %v504, %v2120
      %v2122 = vmul.f32 %v381, %v2121
      %v2123 = vmul.f32 %v382, %v2121
      %v2124 = vmul.f32 %v383, %v2121
      %v2125 = vmul.f32 %v384, %v2121
      %v2126 = vmul.f32 %v385, %v2121
      %v2127 = vmul.f32 %v386, %v2121
      %v2128 = vmul.f32 %v387, %v2121
      %v2129 = vmul.f32 %v388, %v2121
      %v2130 = vmul.f32 %v2121, 0.0
      %2131 = vset.pattern.permute.xlu0 16
      %2132 = vperm.xlu0 %2131, %v389
      %v2133 = vpop.permute.xlu0 %2132
      %2134 = vset.pattern.permute.xlu0 16
      %2135 = vperm.xlu0 %2134, %v390
      %v2136 = vpop.permute.xlu0 %2135
      %2137 = vset.pattern.permute.xlu0 16
      %2138 = vperm.xlu0 %2137, %v391
      %v2139 = vpop.permute.xlu0 %2138
      %2140 = vset.pattern.permute.xlu0 16
      %2141 = vperm.xlu0 %2140, %v392
      %v2142 = vpop.permute.xlu0 %2141
      %2143 = vset.pattern.permute.xlu0 16
      %2144 = vperm.xlu0 %2143, %v393
      %v2145 = vpop.permute.xlu0 %2144
      %2146 = vset.pattern.permute.xlu0 16
      %2147 = vperm.xlu0 %2146, %v394
      %v2148 = vpop.permute.xlu0 %2147
      %2149 = vset.pattern.permute.xlu0 16
      %2150 = vperm.xlu0 %2149, %v395
      %v2151 = vpop.permute.xlu0 %2150
      %2152 = vset.pattern.permute.xlu0 16
      %2153 = vperm.xlu0 %2152, %v396
      %v2154 = vpop.permute.xlu0 %2153
      %v2155 = vrot.slane %v2133, 4
      %v2156 = vrot.slane %v2136, 4
      %v2157 = vsel %vm635, %v2155, %v2156
      %v2158 = vrot.slane %v2139, 4
      %v2159 = vsel %vm635, %v2156, %v2158
      %v2160 = vrot.slane %v2142, 4
      %v2161 = vsel %vm635, %v2158, %v2160
      %v2162 = vrot.slane %v2145, 4
      %v2163 = vsel %vm635, %v2160, %v2162
      %v2164 = vrot.slane %v2148, 4
      %v2165 = vsel %vm635, %v2162, %v2164
      %v2166 = vrot.slane %v2151, 4
      %v2167 = vsel %vm635, %v2164, %v2166
      %v2168 = vrot.slane %v2154, 4
      %v2169 = vsel %vm635, %v2166, %v2168
      %v2179 = vmul.f32 %v2122, %v2155
      %v2180 = vmul.f32 %v2123, %v2157
      %v2181 = vmul.f32 %v2124, %v2159
      %v2182 = vmul.f32 %v2125, %v2161
      %v2183 = vmul.f32 %v2126, %v2163
      %v2184 = vmul.f32 %v2127, %v2165
      %v2185 = vmul.f32 %v2128, %v2167
      %v2186 = vmul.f32 %v2129, %v2169
      %v2187 = vmul.f32 %v2130, %v2168
      %v2197 = vrot.slane %v2179, 1
      %v2198 = vrot.slane %v2180, 1
      %v2199 = vsel %vm678, %v2197, %v2198
      %v2200 = vrot.slane %v2181, 1
      %v2201 = vsel %vm678, %v2198, %v2200
      %v2202 = vrot.slane %v2182, 1
      %v2203 = vsel %vm678, %v2200, %v2202
      %v2204 = vrot.slane %v2183, 1
      %v2205 = vsel %vm678, %v2202, %v2204
      %v2206 = vrot.slane %v2184, 1
      %v2207 = vsel %vm678, %v2204, %v2206
      %v2208 = vrot.slane %v2185, 1
      %v2209 = vsel %vm678, %v2206, %v2208
      %v2210 = vrot.slane %v2186, 1
      %v2211 = vsel %vm678, %v2208, %v2210
      %v2212 = vrot.slane %v2187, 1
      %v2213 = vsel %vm678, %v2210, %v2212
      %v2223 = vadd.f32 %v2109, %v2199
      %v2224 = vadd.f32 %v2110, %v2201
      %v2225 = vadd.f32 %v2111, %v2203
      %v2226 = vadd.f32 %v2112, %v2205
      %v2227 = vadd.f32 %v2113, %v2207
      %v2228 = vadd.f32 %v2114, %v2209
      %v2229 = vadd.f32 %v2115, %v2211
      %v2230 = vadd.f32 %v2116, %v2213
      %v2231 = vadd.f32 %v2117, %v2212
      %v2232 = vlaneseq
      %v2233 = vshrl.u32 %v2232, 7
      %v2234 = vsub.s32 1, %v2233
      %v2235 = vrot.slane %v504, %v2234
      %v2236 = vmul.f32 %v381, %v2235
      %v2237 = vmul.f32 %v382, %v2235
      %v2238 = vmul.f32 %v383, %v2235
      %v2239 = vmul.f32 %v384, %v2235
      %v2240 = vmul.f32 %v385, %v2235
      %v2241 = vmul.f32 %v386, %v2235
      %v2242 = vmul.f32 %v387, %v2235
      %v2243 = vmul.f32 %v388, %v2235
      %v2244 = vmul.f32 %v2235, 0.0
      %2245 = vset.pattern.permute.xlu0 17
      %2246 = vperm.xlu0 %2245, %v389
      %v2247 = vpop.permute.xlu0 %2246
      %2248 = vset.pattern.permute.xlu0 17
      %2249 = vperm.xlu0 %2248, %v390
      %v2250 = vpop.permute.xlu0 %2249
      %2251 = vset.pattern.permute.xlu0 17
      %2252 = vperm.xlu0 %2251, %v391
      %v2253 = vpop.permute.xlu0 %2252
      %2254 = vset.pattern.permute.xlu0 17
      %2255 = vperm.xlu0 %2254, %v392
      %v2256 = vpop.permute.xlu0 %2255
      %2257 = vset.pattern.permute.xlu0 17
      %2258 = vperm.xlu0 %2257, %v393
      %v2259 = vpop.permute.xlu0 %2258
      %2260 = vset.pattern.permute.xlu0 17
      %2261 = vperm.xlu0 %2260, %v394
      %v2262 = vpop.permute.xlu0 %2261
      %2263 = vset.pattern.permute.xlu0 17
      %2264 = vperm.xlu0 %2263, %v395
      %v2265 = vpop.permute.xlu0 %2264
      %2266 = vset.pattern.permute.xlu0 17
      %2267 = vperm.xlu0 %2266, %v396
      %v2268 = vpop.permute.xlu0 %2267
      %v2269 = vrot.slane %v2247, 3
      %v2270 = vrot.slane %v2250, 3
      %v2271 = vsel %vm749, %v2269, %v2270
      %v2272 = vrot.slane %v2253, 3
      %v2273 = vsel %vm749, %v2270, %v2272
      %v2274 = vrot.slane %v2256, 3
      %v2275 = vsel %vm749, %v2272, %v2274
      %v2276 = vrot.slane %v2259, 3
      %v2277 = vsel %vm749, %v2274, %v2276
      %v2278 = vrot.slane %v2262, 3
      %v2279 = vsel %vm749, %v2276, %v2278
      %v2280 = vrot.slane %v2265, 3
      %v2281 = vsel %vm749, %v2278, %v2280
      %v2282 = vrot.slane %v2268, 3
      %v2283 = vsel %vm749, %v2280, %v2282
      %v2293 = vmul.f32 %v2236, %v2269
      %v2294 = vmul.f32 %v2237, %v2271
      %v2295 = vmul.f32 %v2238, %v2273
      %v2296 = vmul.f32 %v2239, %v2275
      %v2297 = vmul.f32 %v2240, %v2277
      %v2298 = vmul.f32 %v2241, %v2279
      %v2299 = vmul.f32 %v2242, %v2281
      %v2300 = vmul.f32 %v2243, %v2283
      %v2301 = vmul.f32 %v2244, %v2282
      %v2311 = vrot.slane %v2293, 2
      %v2312 = vrot.slane %v2294, 2
      %v2313 = vsel %vm792, %v2311, %v2312
      %v2314 = vrot.slane %v2295, 2
      %v2315 = vsel %vm792, %v2312, %v2314
      %v2316 = vrot.slane %v2296, 2
      %v2317 = vsel %vm792, %v2314, %v2316
      %v2318 = vrot.slane %v2297, 2
      %v2319 = vsel %vm792, %v2316, %v2318
      %v2320 = vrot.slane %v2298, 2
      %v2321 = vsel %vm792, %v2318, %v2320
      %v2322 = vrot.slane %v2299, 2
      %v2323 = vsel %vm792, %v2320, %v2322
      %v2324 = vrot.slane %v2300, 2
      %v2325 = vsel %vm792, %v2322, %v2324
      %v2326 = vrot.slane %v2301, 2
      %v2327 = vsel %vm792, %v2324, %v2326
      %v2337 = vadd.f32 %v2223, %v2313
      %v2338 = vadd.f32 %v2224, %v2315
      %v2339 = vadd.f32 %v2225, %v2317
      %v2340 = vadd.f32 %v2226, %v2319
      %v2341 = vadd.f32 %v2227, %v2321
      %v2342 = vadd.f32 %v2228, %v2323
      %v2343 = vadd.f32 %v2229, %v2325
      %v2344 = vadd.f32 %v2230, %v2327
      %v2345 = vadd.f32 %v2231, %v2326
      %v2346 = vlaneseq
      %v2347 = vshrl.u32 %v2346, 7
      %v2348 = vsub.s32 2, %v2347
      %v2349 = vrot.slane %v504, %v2348
      %v2350 = vmul.f32 %v382, %v2349
      %v2351 = vmul.f32 %v383, %v2349
      %v2352 = vmul.f32 %v384, %v2349
      %v2353 = vmul.f32 %v385, %v2349
      %v2354 = vmul.f32 %v386, %v2349
      %v2355 = vmul.f32 %v387, %v2349
      %v2356 = vmul.f32 %v388, %v2349
      %v2357 = vmul.f32 %v2349, 0.0
      %2358 = vset.pattern.permute.xlu0 18
      %2359 = vperm.xlu0 %2358, %v389
      %v2360 = vpop.permute.xlu0 %2359
      %2361 = vset.pattern.permute.xlu0 18
      %2362 = vperm.xlu0 %2361, %v390
      %v2363 = vpop.permute.xlu0 %2362
      %2364 = vset.pattern.permute.xlu0 18
      %2365 = vperm.xlu0 %2364, %v391
      %v2366 = vpop.permute.xlu0 %2365
      %2367 = vset.pattern.permute.xlu0 18
      %2368 = vperm.xlu0 %2367, %v392
      %v2369 = vpop.permute.xlu0 %2368
      %2370 = vset.pattern.permute.xlu0 18
      %2371 = vperm.xlu0 %2370, %v393
      %v2372 = vpop.permute.xlu0 %2371
      %2373 = vset.pattern.permute.xlu0 18
      %2374 = vperm.xlu0 %2373, %v394
      %v2375 = vpop.permute.xlu0 %2374
      %2376 = vset.pattern.permute.xlu0 18
      %2377 = vperm.xlu0 %2376, %v395
      %v2378 = vpop.permute.xlu0 %2377
      %2379 = vset.pattern.permute.xlu0 18
      %2380 = vperm.xlu0 %2379, %v396
      %v2381 = vpop.permute.xlu0 %2380
      %v2382 = vrot.slane %v2360, 5
      %v2383 = vrot.slane %v2363, 5
      %v2384 = vsel %vm557, %v2382, %v2383
      %v2385 = vrot.slane %v2366, 5
      %v2386 = vsel %vm557, %v2383, %v2385
      %v2387 = vrot.slane %v2369, 5
      %v2388 = vsel %vm557, %v2385, %v2387
      %v2389 = vrot.slane %v2372, 5
      %v2390 = vsel %vm557, %v2387, %v2389
      %v2391 = vrot.slane %v2375, 5
      %v2392 = vsel %vm557, %v2389, %v2391
      %v2393 = vrot.slane %v2378, 5
      %v2394 = vsel %vm557, %v2391, %v2393
      %v2395 = vrot.slane %v2381, 5
      %v2396 = vsel %vm557, %v2393, %v2395
      %v2406 = vmul.f32 %v2350, %v2382
      %v2407 = vmul.f32 %v2351, %v2384
      %v2408 = vmul.f32 %v2352, %v2386
      %v2409 = vmul.f32 %v2353, %v2388
      %v2410 = vmul.f32 %v2354, %v2390
      %v2411 = vmul.f32 %v2355, %v2392
      %v2412 = vmul.f32 %v2356, %v2394
      %v2413 = vmul.f32 %v2357, %v2396
      %v2414 = vmul.f32 %v2357, %v2395
      %v2415 = vadd.f32 %v2337, %v2406
      %v2416 = vadd.f32 %v2338, %v2407
      %v2417 = vadd.f32 %v2339, %v2408
      %v2418 = vadd.f32 %v2340, %v2409
      %v2419 = vadd.f32 %v2341, %v2410
      %v2420 = vadd.f32 %v2342, %v2411
      %v2421 = vadd.f32 %v2343, %v2412
      %v2422 = vadd.f32 %v2344, %v2413
      %v2423 = vadd.f32 %v2345, %v2414
      %v2424 = vlaneseq
      %v2425 = vshrl.u32 %v2424, 7
      %v2426 = vsub.s32 3, %v2425
      %v2427 = vrot.slane %v504, %v2426
      %v2428 = vmul.f32 %v382, %v2427
      %v2429 = vmul.f32 %v383, %v2427
      %v2430 = vmul.f32 %v384, %v2427
      %v2431 = vmul.f32 %v385, %v2427
      %v2432 = vmul.f32 %v386, %v2427
      %v2433 = vmul.f32 %v387, %v2427
      %v2434 = vmul.f32 %v388, %v2427
      %v2435 = vmul.f32 %v2427, 0.0
      %2436 = vset.pattern.permute.xlu0 19
      %2437 = vperm.xlu0 %2436, %v389
      %v2438 = vpop.permute.xlu0 %2437
      %2439 = vset.pattern.permute.xlu0 19
      %2440 = vperm.xlu0 %2439, %v390
      %v2441 = vpop.permute.xlu0 %2440
      %2442 = vset.pattern.permute.xlu0 19
      %2443 = vperm.xlu0 %2442, %v391
      %v2444 = vpop.permute.xlu0 %2443
      %2445 = vset.pattern.permute.xlu0 19
      %2446 = vperm.xlu0 %2445, %v392
      %v2447 = vpop.permute.xlu0 %2446
      %2448 = vset.pattern.permute.xlu0 19
      %2449 = vperm.xlu0 %2448, %v393
      %v2450 = vpop.permute.xlu0 %2449
      %2451 = vset.pattern.permute.xlu0 19
      %2452 = vperm.xlu0 %2451, %v394
      %v2453 = vpop.permute.xlu0 %2452
      %2454 = vset.pattern.permute.xlu0 19
      %2455 = vperm.xlu0 %2454, %v395
      %v2456 = vpop.permute.xlu0 %2455
      %2457 = vset.pattern.permute.xlu0 19
      %2458 = vperm.xlu0 %2457, %v396
      %v2459 = vpop.permute.xlu0 %2458
      %v2460 = vrot.slane %v2438, 4
      %v2461 = vrot.slane %v2441, 4
      %v2462 = vsel %vm635, %v2460, %v2461
      %v2463 = vrot.slane %v2444, 4
      %v2464 = vsel %vm635, %v2461, %v2463
      %v2465 = vrot.slane %v2447, 4
      %v2466 = vsel %vm635, %v2463, %v2465
      %v2467 = vrot.slane %v2450, 4
      %v2468 = vsel %vm635, %v2465, %v2467
      %v2469 = vrot.slane %v2453, 4
      %v2470 = vsel %vm635, %v2467, %v2469
      %v2471 = vrot.slane %v2456, 4
      %v2472 = vsel %vm635, %v2469, %v2471
      %v2473 = vrot.slane %v2459, 4
      %v2474 = vsel %vm635, %v2471, %v2473
      %v2484 = vmul.f32 %v2428, %v2460
      %v2485 = vmul.f32 %v2429, %v2462
      %v2486 = vmul.f32 %v2430, %v2464
      %v2487 = vmul.f32 %v2431, %v2466
      %v2488 = vmul.f32 %v2432, %v2468
      %v2489 = vmul.f32 %v2433, %v2470
      %v2490 = vmul.f32 %v2434, %v2472
      %v2491 = vmul.f32 %v2435, %v2474
      %v2492 = vmul.f32 %v2435, %v2473
      %v2502 = vrot.slane %v2484, 1
      %v2503 = vrot.slane %v2485, 1
      %v2504 = vsel %vm678, %v2502, %v2503
      %v2505 = vrot.slane %v2486, 1
      %v2506 = vsel %vm678, %v2503, %v2505
      %v2507 = vrot.slane %v2487, 1
      %v2508 = vsel %vm678, %v2505, %v2507
      %v2509 = vrot.slane %v2488, 1
      %v2510 = vsel %vm678, %v2507, %v2509
      %v2511 = vrot.slane %v2489, 1
      %v2512 = vsel %vm678, %v2509, %v2511
      %v2513 = vrot.slane %v2490, 1
      %v2514 = vsel %vm678, %v2511, %v2513
      %v2515 = vrot.slane %v2491, 1
      %v2516 = vsel %vm678, %v2513, %v2515
      %v2517 = vrot.slane %v2492, 1
      %v2518 = vsel %vm678, %v2515, %v2517
      %v2528 = vadd.f32 %v2415, %v2504
      %v2529 = vadd.f32 %v2416, %v2506
      %v2530 = vadd.f32 %v2417, %v2508
      %v2531 = vadd.f32 %v2418, %v2510
      %v2532 = vadd.f32 %v2419, %v2512
      %v2533 = vadd.f32 %v2420, %v2514
      %v2534 = vadd.f32 %v2421, %v2516
      %v2535 = vadd.f32 %v2422, %v2518
      %v2536 = vadd.f32 %v2423, %v2517
      %v2537 = vlaneseq
      %v2538 = vshrl.u32 %v2537, 7
      %v2539 = vsub.s32 4, %v2538
      %v2540 = vrot.slane %v504, %v2539
      %v2541 = vmul.f32 %v382, %v2540
      %v2542 = vmul.f32 %v383, %v2540
      %v2543 = vmul.f32 %v384, %v2540
      %v2544 = vmul.f32 %v385, %v2540
      %v2545 = vmul.f32 %v386, %v2540
      %v2546 = vmul.f32 %v387, %v2540
      %v2547 = vmul.f32 %v388, %v2540
      %v2548 = vmul.f32 %v2540, 0.0
      %2549 = vset.pattern.permute.xlu0 20
      %2550 = vperm.xlu0 %2549, %v389
      %v2551 = vpop.permute.xlu0 %2550
      %2552 = vset.pattern.permute.xlu0 20
      %2553 = vperm.xlu0 %2552, %v390
      %v2554 = vpop.permute.xlu0 %2553
      %2555 = vset.pattern.permute.xlu0 20
      %2556 = vperm.xlu0 %2555, %v391
      %v2557 = vpop.permute.xlu0 %2556
      %2558 = vset.pattern.permute.xlu0 20
      %2559 = vperm.xlu0 %2558, %v392
      %v2560 = vpop.permute.xlu0 %2559
      %2561 = vset.pattern.permute.xlu0 20
      %2562 = vperm.xlu0 %2561, %v393
      %v2563 = vpop.permute.xlu0 %2562
      %2564 = vset.pattern.permute.xlu0 20
      %2565 = vperm.xlu0 %2564, %v394
      %v2566 = vpop.permute.xlu0 %2565
      %2567 = vset.pattern.permute.xlu0 20
      %2568 = vperm.xlu0 %2567, %v395
      %v2569 = vpop.permute.xlu0 %2568
      %2570 = vset.pattern.permute.xlu0 20
      %2571 = vperm.xlu0 %2570, %v396
      %v2572 = vpop.permute.xlu0 %2571
      %v2573 = vrot.slane %v2551, 3
      %v2574 = vrot.slane %v2554, 3
      %v2575 = vsel %vm749, %v2573, %v2574
      %v2576 = vrot.slane %v2557, 3
      %v2577 = vsel %vm749, %v2574, %v2576
      %v2578 = vrot.slane %v2560, 3
      %v2579 = vsel %vm749, %v2576, %v2578
      %v2580 = vrot.slane %v2563, 3
      %v2581 = vsel %vm749, %v2578, %v2580
      %v2582 = vrot.slane %v2566, 3
      %v2583 = vsel %vm749, %v2580, %v2582
      %v2584 = vrot.slane %v2569, 3
      %v2585 = vsel %vm749, %v2582, %v2584
      %v2586 = vrot.slane %v2572, 3
      %v2587 = vsel %vm749, %v2584, %v2586
      %v2597 = vmul.f32 %v2541, %v2573
      %v2598 = vmul.f32 %v2542, %v2575
      %v2599 = vmul.f32 %v2543, %v2577
      %v2600 = vmul.f32 %v2544, %v2579
      %v2601 = vmul.f32 %v2545, %v2581
      %v2602 = vmul.f32 %v2546, %v2583
      %v2603 = vmul.f32 %v2547, %v2585
      %v2604 = vmul.f32 %v2548, %v2587
      %v2605 = vmul.f32 %v2548, %v2586
      %v2615 = vrot.slane %v2597, 2
      %v2616 = vrot.slane %v2598, 2
      %v2617 = vsel %vm792, %v2615, %v2616
      %v2618 = vrot.slane %v2599, 2
      %v2619 = vsel %vm792, %v2616, %v2618
      %v2620 = vrot.slane %v2600, 2
      %v2621 = vsel %vm792, %v2618, %v2620
      %v2622 = vrot.slane %v2601, 2
      %v2623 = vsel %vm792, %v2620, %v2622
      %v2624 = vrot.slane %v2602, 2
      %v2625 = vsel %vm792, %v2622, %v2624
      %v2626 = vrot.slane %v2603, 2
      %v2627 = vsel %vm792, %v2624, %v2626
      %v2628 = vrot.slane %v2604, 2
      %v2629 = vsel %vm792, %v2626, %v2628
      %v2630 = vrot.slane %v2605, 2
      %v2631 = vsel %vm792, %v2628, %v2630
      %v2641 = vadd.f32 %v2528, %v2617
      %v2642 = vadd.f32 %v2529, %v2619
      %v2643 = vadd.f32 %v2530, %v2621
      %v2644 = vadd.f32 %v2531, %v2623
      %v2645 = vadd.f32 %v2532, %v2625
      %v2646 = vadd.f32 %v2533, %v2627
      %v2647 = vadd.f32 %v2534, %v2629
      %v2648 = vadd.f32 %v2535, %v2631
      %v2649 = vadd.f32 %v2536, %v2630
      %v2650 = vlaneseq
      %v2651 = vshrl.u32 %v2650, 7
      %v2652 = vsub.s32 5, %v2651
      %v2653 = vrot.slane %v504, %v2652
      %v2654 = vmul.f32 %v382, %v2653
      %v2655 = vmul.f32 %v383, %v2653
      %v2656 = vmul.f32 %v384, %v2653
      %v2657 = vmul.f32 %v385, %v2653
      %v2658 = vmul.f32 %v386, %v2653
      %v2659 = vmul.f32 %v387, %v2653
      %v2660 = vmul.f32 %v388, %v2653
      %v2661 = vmul.f32 %v2653, 0.0
      %2662 = vset.pattern.permute.xlu0 21
      %2663 = vperm.xlu0 %2662, %v389
      %v2664 = vpop.permute.xlu0 %2663
      %2665 = vset.pattern.permute.xlu0 21
      %2666 = vperm.xlu0 %2665, %v390
      %v2667 = vpop.permute.xlu0 %2666
      %2668 = vset.pattern.permute.xlu0 21
      %2669 = vperm.xlu0 %2668, %v391
      %v2670 = vpop.permute.xlu0 %2669
      %2671 = vset.pattern.permute.xlu0 21
      %2672 = vperm.xlu0 %2671, %v392
      %v2673 = vpop.permute.xlu0 %2672
      %2674 = vset.pattern.permute.xlu0 21
      %2675 = vperm.xlu0 %2674, %v393
      %v2676 = vpop.permute.xlu0 %2675
      %2677 = vset.pattern.permute.xlu0 21
      %2678 = vperm.xlu0 %2677, %v394
      %v2679 = vpop.permute.xlu0 %2678
      %2680 = vset.pattern.permute.xlu0 21
      %2681 = vperm.xlu0 %2680, %v395
      %v2682 = vpop.permute.xlu0 %2681
      %2683 = vset.pattern.permute.xlu0 21
      %2684 = vperm.xlu0 %2683, %v396
      %v2685 = vpop.permute.xlu0 %2684
      %v2686 = vrot.slane %v2664, 1
      %v2687 = vrot.slane %v2667, 1
      %v2688 = vsel %vm678, %v2686, %v2687
      %v2689 = vrot.slane %v2670, 1
      %v2690 = vsel %vm678, %v2687, %v2689
      %v2691 = vrot.slane %v2673, 1
      %v2692 = vsel %vm678, %v2689, %v2691
      %v2693 = vrot.slane %v2676, 1
      %v2694 = vsel %vm678, %v2691, %v2693
      %v2695 = vrot.slane %v2679, 1
      %v2696 = vsel %vm678, %v2693, %v2695
      %v2697 = vrot.slane %v2682, 1
      %v2698 = vsel %vm678, %v2695, %v2697
      %v2699 = vrot.slane %v2685, 1
      %v2700 = vsel %vm678, %v2697, %v2699
      %v2710 = vmul.f32 %v2654, %v2686
      %v2711 = vmul.f32 %v2655, %v2688
      %v2712 = vmul.f32 %v2656, %v2690
      %v2713 = vmul.f32 %v2657, %v2692
      %v2714 = vmul.f32 %v2658, %v2694
      %v2715 = vmul.f32 %v2659, %v2696
      %v2716 = vmul.f32 %v2660, %v2698
      %v2717 = vmul.f32 %v2661, %v2700
      %v2718 = vmul.f32 %v2661, %v2699
      %v2728 = vrot.slane %v2710, 4
      %v2729 = vrot.slane %v2711, 4
      %v2730 = vsel %vm635, %v2728, %v2729
      %v2731 = vrot.slane %v2712, 4
      %v2732 = vsel %vm635, %v2729, %v2731
      %v2733 = vrot.slane %v2713, 4
      %v2734 = vsel %vm635, %v2731, %v2733
      %v2735 = vrot.slane %v2714, 4
      %v2736 = vsel %vm635, %v2733, %v2735
      %v2737 = vrot.slane %v2715, 4
      %v2738 = vsel %vm635, %v2735, %v2737
      %v2739 = vrot.slane %v2716, 4
      %v2740 = vsel %vm635, %v2737, %v2739
      %v2741 = vrot.slane %v2717, 4
      %v2742 = vsel %vm635, %v2739, %v2741
      %v2743 = vrot.slane %v2718, 4
      %v2744 = vsel %vm635, %v2741, %v2743
      %v2754 = vadd.f32 %v2641, %v2730
      %v2755 = vadd.f32 %v2642, %v2732
      %v2756 = vadd.f32 %v2643, %v2734
      %v2757 = vadd.f32 %v2644, %v2736
      %v2758 = vadd.f32 %v2645, %v2738
      %v2759 = vadd.f32 %v2646, %v2740
      %v2760 = vadd.f32 %v2647, %v2742
      %v2761 = vadd.f32 %v2648, %v2744
      %v2762 = vadd.f32 %v2649, %v2743
      %v2763 = vlaneseq
      %v2764 = vshrl.u32 %v2763, 7
      %v2765 = vsub.s32 6, %v2764
      %v2766 = vrot.slane %v504, %v2765
      %v2767 = vmul.f32 %v383, %v2766
      %v2768 = vmul.f32 %v384, %v2766
      %v2769 = vmul.f32 %v385, %v2766
      %v2770 = vmul.f32 %v386, %v2766
      %v2771 = vmul.f32 %v387, %v2766
      %v2772 = vmul.f32 %v388, %v2766
      %v2773 = vmul.f32 %v2766, 0.0
      %2774 = vset.pattern.permute.xlu0 22
      %2775 = vperm.xlu0 %2774, %v389
      %v2776 = vpop.permute.xlu0 %2775
      %2778 = vset.pattern.permute.xlu0 22
      %2779 = vperm.xlu0 %2778, %v390
      %v2780 = vpop.permute.xlu0 %2779
      %2782 = vset.pattern.permute.xlu0 22
      %2783 = vperm.xlu0 %2782, %v391
      %v2784 = vpop.permute.xlu0 %2783
      %2786 = vset.pattern.permute.xlu0 22
      %2787 = vperm.xlu0 %2786, %v392
      %v2788 = vpop.permute.xlu0 %2787
      %2790 = vset.pattern.permute.xlu0 22
      %2791 = vperm.xlu0 %2790, %v393
      %v2792 = vpop.permute.xlu0 %2791
      %2794 = vset.pattern.permute.xlu0 22
      %2795 = vperm.xlu0 %2794, %v394
      %v2796 = vpop.permute.xlu0 %2795
      %2798 = vset.pattern.permute.xlu0 22
      %2799 = vperm.xlu0 %2798, %v395
      %v2800 = vpop.permute.xlu0 %2799
      %2802 = vset.pattern.permute.xlu0 22
      %2803 = vperm.xlu0 %2802, %v396
      %v2804 = vpop.permute.xlu0 %2803
      %v2806 = vmul.f32 %v2767, %v2776
      %v2807 = vmul.f32 %v2768, %v2780
      %v2808 = vmul.f32 %v2769, %v2784
      %v2809 = vmul.f32 %v2770, %v2788
      %v2810 = vmul.f32 %v2771, %v2792
      %v2811 = vmul.f32 %v2772, %v2796
      %v2812 = vmul.f32 %v2773, %v2800
      %v2813 = vmul.f32 %v2773, %v2804
      %v2822 = vrot.slane %v2806, 5
      %v2823 = vrot.slane %v2807, 5
      %v2824 = vsel %vm557, %v2822, %v2823
      %v2825 = vrot.slane %v2808, 5
      %v2826 = vsel %vm557, %v2823, %v2825
      %v2827 = vrot.slane %v2809, 5
      %v2828 = vsel %vm557, %v2825, %v2827
      %v2829 = vrot.slane %v2810, 5
      %v2830 = vsel %vm557, %v2827, %v2829
      %v2831 = vrot.slane %v2811, 5
      %v2832 = vsel %vm557, %v2829, %v2831
      %v2833 = vrot.slane %v2812, 5
      %v2834 = vsel %vm557, %v2831, %v2833
      %v2835 = vrot.slane %v2813, 5
      %v2836 = vsel %vm557, %v2833, %v2835
      %v2846 = vadd.f32 %v2754, %v2822
      %v2847 = vadd.f32 %v2755, %v2824
      %v2848 = vadd.f32 %v2756, %v2826
      %v2849 = vadd.f32 %v2757, %v2828
      %v2850 = vadd.f32 %v2758, %v2830
      %v2851 = vadd.f32 %v2759, %v2832
      %v2852 = vadd.f32 %v2760, %v2834
      %v2853 = vadd.f32 %v2761, %v2836
      %v2854 = vadd.f32 %v2762, %v2835
      %v2855 = vlaneseq
      %v2856 = vshrl.u32 %v2855, 7
      %v2857 = vsub.s32 7, %v2856
      %v2858 = vrot.slane %v504, %v2857
      %v2859 = vmul.f32 %v383, %v2858
      %v2860 = vmul.f32 %v384, %v2858
      %v2861 = vmul.f32 %v385, %v2858
      %v2862 = vmul.f32 %v386, %v2858
      %v2863 = vmul.f32 %v387, %v2858
      %v2864 = vmul.f32 %v388, %v2858
      %v2865 = vmul.f32 %v2858, 0.0
      %2866 = vset.pattern.permute.xlu0 23
      %2867 = vperm.xlu0 %2866, %v389
      %v2868 = vpop.permute.xlu0 %2867
      %2869 = vset.pattern.permute.xlu0 23
      %2870 = vperm.xlu0 %2869, %v390
      %v2871 = vpop.permute.xlu0 %2870
      %2872 = vset.pattern.permute.xlu0 23
      %2873 = vperm.xlu0 %2872, %v391
      %v2874 = vpop.permute.xlu0 %2873
      %2875 = vset.pattern.permute.xlu0 23
      %2876 = vperm.xlu0 %2875, %v392
      %v2877 = vpop.permute.xlu0 %2876
      %2878 = vset.pattern.permute.xlu0 23
      %2879 = vperm.xlu0 %2878, %v393
      %v2880 = vpop.permute.xlu0 %2879
      %2881 = vset.pattern.permute.xlu0 23
      %2882 = vperm.xlu0 %2881, %v394
      %v2883 = vpop.permute.xlu0 %2882
      %2884 = vset.pattern.permute.xlu0 23
      %2885 = vperm.xlu0 %2884, %v395
      %v2886 = vpop.permute.xlu0 %2885
      %2887 = vset.pattern.permute.xlu0 23
      %2888 = vperm.xlu0 %2887, %v396
      %v2889 = vpop.permute.xlu0 %2888
      %v2890 = vrot.slane %v2868, 7
      %v2891 = vrot.slane %v2871, 7
      %v2892 = vsel %vm1068, %v2890, %v2891
      %v2893 = vrot.slane %v2874, 7
      %v2894 = vsel %vm1068, %v2891, %v2893
      %v2895 = vrot.slane %v2877, 7
      %v2896 = vsel %vm1068, %v2893, %v2895
      %v2897 = vrot.slane %v2880, 7
      %v2898 = vsel %vm1068, %v2895, %v2897
      %v2899 = vrot.slane %v2883, 7
      %v2900 = vsel %vm1068, %v2897, %v2899
      %v2901 = vrot.slane %v2886, 7
      %v2902 = vsel %vm1068, %v2899, %v2901
      %v2903 = vrot.slane %v2889, 7
      %v2904 = vsel %vm1068, %v2901, %v2903
      %v2914 = vmul.f32 %v2859, %v2890
      %v2915 = vmul.f32 %v2860, %v2892
      %v2916 = vmul.f32 %v2861, %v2894
      %v2917 = vmul.f32 %v2862, %v2896
      %v2918 = vmul.f32 %v2863, %v2898
      %v2919 = vmul.f32 %v2864, %v2900
      %v2920 = vmul.f32 %v2865, %v2902
      %v2921 = vmul.f32 %v2865, %v2904
      %v2922 = vmul.f32 %v2865, %v2903
      %v2932 = vrot.slane %v2914, 6
      %v2933 = vrot.slane %v2915, 6
      %v2934 = vsel %vm1111, %v2932, %v2933
      %v2935 = vrot.slane %v2916, 6
      %v2936 = vsel %vm1111, %v2933, %v2935
      %v2937 = vrot.slane %v2917, 6
      %v2938 = vsel %vm1111, %v2935, %v2937
      %v2939 = vrot.slane %v2918, 6
      %v2940 = vsel %vm1111, %v2937, %v2939
      %v2941 = vrot.slane %v2919, 6
      %v2942 = vsel %vm1111, %v2939, %v2941
      %v2943 = vrot.slane %v2920, 6
      %v2944 = vsel %vm1111, %v2941, %v2943
      %v2945 = vrot.slane %v2921, 6
      %v2946 = vsel %vm1111, %v2943, %v2945
      %v2947 = vrot.slane %v2922, 6
      %v2948 = vsel %vm1111, %v2945, %v2947
      %v2958 = vadd.f32 %v2846, %v2932
      %v2959 = vadd.f32 %v2847, %v2934
      %v2960 = vadd.f32 %v2848, %v2936
      %v2961 = vadd.f32 %v2849, %v2938
      %v2962 = vadd.f32 %v2850, %v2940
      %v2963 = vadd.f32 %v2851, %v2942
      %v2964 = vadd.f32 %v2852, %v2944
      %v2965 = vadd.f32 %v2853, %v2946
      %v2966 = vadd.f32 %v2854, %v2948
      %v2967 = vlaneseq
      %v2968 = vshrl.u32 %v2967, 7
      %v2969 = vsub.s32 0, %v2968
      %v2970 = vrot.slane %v505, %v2969
      %v2971 = vmul.f32 %v383, %v2970
      %v2972 = vmul.f32 %v384, %v2970
      %v2973 = vmul.f32 %v385, %v2970
      %v2974 = vmul.f32 %v386, %v2970
      %v2975 = vmul.f32 %v387, %v2970
      %v2976 = vmul.f32 %v388, %v2970
      %v2977 = vmul.f32 %v2970, 0.0
      %2978 = vset.pattern.permute.xlu0 24
      %2979 = vperm.xlu0 %2978, %v389
      %v2980 = vpop.permute.xlu0 %2979
      %2981 = vset.pattern.permute.xlu0 24
      %2982 = vperm.xlu0 %2981, %v390
      %v2983 = vpop.permute.xlu0 %2982
      %2984 = vset.pattern.permute.xlu0 24
      %2985 = vperm.xlu0 %2984, %v391
      %v2986 = vpop.permute.xlu0 %2985
      %2987 = vset.pattern.permute.xlu0 24
      %2988 = vperm.xlu0 %2987, %v392
      %v2989 = vpop.permute.xlu0 %2988
      %2990 = vset.pattern.permute.xlu0 24
      %2991 = vperm.xlu0 %2990, %v393
      %v2992 = vpop.permute.xlu0 %2991
      %2993 = vset.pattern.permute.xlu0 24
      %2994 = vperm.xlu0 %2993, %v394
      %v2995 = vpop.permute.xlu0 %2994
      %2996 = vset.pattern.permute.xlu0 24
      %2997 = vperm.xlu0 %2996, %v395
      %v2998 = vpop.permute.xlu0 %2997
      %2999 = vset.pattern.permute.xlu0 24
      %3000 = vperm.xlu0 %2999, %v396
      %v3001 = vpop.permute.xlu0 %3000
      %v3002 = vrot.slane %v2980, 5
      %v3003 = vrot.slane %v2983, 5
      %v3004 = vsel %vm557, %v3002, %v3003
      %v3005 = vrot.slane %v2986, 5
      %v3006 = vsel %vm557, %v3003, %v3005
      %v3007 = vrot.slane %v2989, 5
      %v3008 = vsel %vm557, %v3005, %v3007
      %v3009 = vrot.slane %v2992, 5
      %v3010 = vsel %vm557, %v3007, %v3009
      %v3011 = vrot.slane %v2995, 5
      %v3012 = vsel %vm557, %v3009, %v3011
      %v3013 = vrot.slane %v2998, 5
      %v3014 = vsel %vm557, %v3011, %v3013
      %v3015 = vrot.slane %v3001, 5
      %v3016 = vsel %vm557, %v3013, %v3015
      %v3026 = vmul.f32 %v2971, %v3002
      %v3027 = vmul.f32 %v2972, %v3004
      %v3028 = vmul.f32 %v2973, %v3006
      %v3029 = vmul.f32 %v2974, %v3008
      %v3030 = vmul.f32 %v2975, %v3010
      %v3031 = vmul.f32 %v2976, %v3012
      %v3032 = vmul.f32 %v2977, %v3014
      %v3033 = vmul.f32 %v2977, %v3016
      %v3034 = vmul.f32 %v2977, %v3015
      %v3035 = vadd.f32 %v2958, %v3026
      %v3036 = vadd.f32 %v2959, %v3027
      %v3037 = vadd.f32 %v2960, %v3028
      %v3038 = vadd.f32 %v2961, %v3029
      %v3039 = vadd.f32 %v2962, %v3030
      %v3040 = vadd.f32 %v2963, %v3031
      %v3041 = vadd.f32 %v2964, %v3032
      %v3042 = vadd.f32 %v2965, %v3033
      %v3043 = vadd.f32 %v2966, %v3034
      %v3044 = vlaneseq
      %v3045 = vshrl.u32 %v3044, 7
      %v3046 = vsub.s32 1, %v3045
      %v3047 = vrot.slane %v505, %v3046
      %v3048 = vmul.f32 %v383, %v3047
      %v3049 = vmul.f32 %v384, %v3047
      %v3050 = vmul.f32 %v385, %v3047
      %v3051 = vmul.f32 %v386, %v3047
      %v3052 = vmul.f32 %v387, %v3047
      %v3053 = vmul.f32 %v388, %v3047
      %v3054 = vmul.f32 %v3047, 0.0
      %3055 = vset.pattern.permute.xlu0 25
      %3056 = vperm.xlu0 %3055, %v389
      %v3057 = vpop.permute.xlu0 %3056
      %3058 = vset.pattern.permute.xlu0 25
      %3059 = vperm.xlu0 %3058, %v390
      %v3060 = vpop.permute.xlu0 %3059
      %3061 = vset.pattern.permute.xlu0 25
      %3062 = vperm.xlu0 %3061, %v391
      %v3063 = vpop.permute.xlu0 %3062
      %3064 = vset.pattern.permute.xlu0 25
      %3065 = vperm.xlu0 %3064, %v392
      %v3066 = vpop.permute.xlu0 %3065
      %3067 = vset.pattern.permute.xlu0 25
      %3068 = vperm.xlu0 %3067, %v393
      %v3069 = vpop.permute.xlu0 %3068
      %3070 = vset.pattern.permute.xlu0 25
      %3071 = vperm.xlu0 %3070, %v394
      %v3072 = vpop.permute.xlu0 %3071
      %3073 = vset.pattern.permute.xlu0 25
      %3074 = vperm.xlu0 %3073, %v395
      %v3075 = vpop.permute.xlu0 %3074
      %3076 = vset.pattern.permute.xlu0 25
      %3077 = vperm.xlu0 %3076, %v396
      %v3078 = vpop.permute.xlu0 %3077
      %v3079 = vrot.slane %v3057, 4
      %v3080 = vrot.slane %v3060, 4
      %v3081 = vsel %vm635, %v3079, %v3080
      %v3082 = vrot.slane %v3063, 4
      %v3083 = vsel %vm635, %v3080, %v3082
      %v3084 = vrot.slane %v3066, 4
      %v3085 = vsel %vm635, %v3082, %v3084
      %v3086 = vrot.slane %v3069, 4
      %v3087 = vsel %vm635, %v3084, %v3086
      %v3088 = vrot.slane %v3072, 4
      %v3089 = vsel %vm635, %v3086, %v3088
      %v3090 = vrot.slane %v3075, 4
      %v3091 = vsel %vm635, %v3088, %v3090
      %v3092 = vrot.slane %v3078, 4
      %v3093 = vsel %vm635, %v3090, %v3092
      %v3103 = vmul.f32 %v3048, %v3079
      %v3104 = vmul.f32 %v3049, %v3081
      %v3105 = vmul.f32 %v3050, %v3083
      %v3106 = vmul.f32 %v3051, %v3085
      %v3107 = vmul.f32 %v3052, %v3087
      %v3108 = vmul.f32 %v3053, %v3089
      %v3109 = vmul.f32 %v3054, %v3091
      %v3110 = vmul.f32 %v3054, %v3093
      %v3111 = vmul.f32 %v3054, %v3092
      %v3121 = vrot.slane %v3103, 1
      %v3122 = vrot.slane %v3104, 1
      %v3123 = vsel %vm678, %v3121, %v3122
      %v3124 = vrot.slane %v3105, 1
      %v3125 = vsel %vm678, %v3122, %v3124
      %v3126 = vrot.slane %v3106, 1
      %v3127 = vsel %vm678, %v3124, %v3126
      %v3128 = vrot.slane %v3107, 1
      %v3129 = vsel %vm678, %v3126, %v3128
      %v3130 = vrot.slane %v3108, 1
      %v3131 = vsel %vm678, %v3128, %v3130
      %v3132 = vrot.slane %v3109, 1
      %v3133 = vsel %vm678, %v3130, %v3132
      %v3134 = vrot.slane %v3110, 1
      %v3135 = vsel %vm678, %v3132, %v3134
      %v3136 = vrot.slane %v3111, 1
      %v3137 = vsel %vm678, %v3134, %v3136
      %v3147 = vadd.f32 %v3035, %v3123
      %v3148 = vadd.f32 %v3036, %v3125
      %v3149 = vadd.f32 %v3037, %v3127
      %v3150 = vadd.f32 %v3038, %v3129
      %v3151 = vadd.f32 %v3039, %v3131
      %v3152 = vadd.f32 %v3040, %v3133
      %v3153 = vadd.f32 %v3041, %v3135
      %v3154 = vadd.f32 %v3042, %v3137
      %v3155 = vadd.f32 %v3043, %v3136
      %v3156 = vlaneseq
      %v3157 = vshrl.u32 %v3156, 7
      %v3158 = vsub.s32 2, %v3157
      %v3159 = vrot.slane %v505, %v3158
      %v3160 = vmul.f32 %v383, %v3159
      %v3161 = vmul.f32 %v384, %v3159
      %v3162 = vmul.f32 %v385, %v3159
      %v3163 = vmul.f32 %v386, %v3159
      %v3164 = vmul.f32 %v387, %v3159
      %v3165 = vmul.f32 %v388, %v3159
      %v3166 = vmul.f32 %v3159, 0.0
      %3167 = vset.pattern.permute.xlu0 26
      %3168 = vperm.xlu0 %3167, %v389
      %v3169 = vpop.permute.xlu0 %3168
      %3170 = vset.pattern.permute.xlu0 26
      %3171 = vperm.xlu0 %3170, %v390
      %v3172 = vpop.permute.xlu0 %3171
      %3173 = vset.pattern.permute.xlu0 26
      %3174 = vperm.xlu0 %3173, %v391
      %v3175 = vpop.permute.xlu0 %3174
      %3176 = vset.pattern.permute.xlu0 26
      %3177 = vperm.xlu0 %3176, %v392
      %v3178 = vpop.permute.xlu0 %3177
      %3179 = vset.pattern.permute.xlu0 26
      %3180 = vperm.xlu0 %3179, %v393
      %v3181 = vpop.permute.xlu0 %3180
      %3182 = vset.pattern.permute.xlu0 26
      %3183 = vperm.xlu0 %3182, %v394
      %v3184 = vpop.permute.xlu0 %3183
      %3185 = vset.pattern.permute.xlu0 26
      %3186 = vperm.xlu0 %3185, %v395
      %v3187 = vpop.permute.xlu0 %3186
      %3188 = vset.pattern.permute.xlu0 26
      %3189 = vperm.xlu0 %3188, %v396
      %v3190 = vpop.permute.xlu0 %3189
      %v3191 = vrot.slane %v3169, 3
      %v3192 = vrot.slane %v3172, 3
      %v3193 = vsel %vm749, %v3191, %v3192
      %v3194 = vrot.slane %v3175, 3
      %v3195 = vsel %vm749, %v3192, %v3194
      %v3196 = vrot.slane %v3178, 3
      %v3197 = vsel %vm749, %v3194, %v3196
      %v3198 = vrot.slane %v3181, 3
      %v3199 = vsel %vm749, %v3196, %v3198
      %v3200 = vrot.slane %v3184, 3
      %v3201 = vsel %vm749, %v3198, %v3200
      %v3202 = vrot.slane %v3187, 3
      %v3203 = vsel %vm749, %v3200, %v3202
      %v3204 = vrot.slane %v3190, 3
      %v3205 = vsel %vm749, %v3202, %v3204
      %v3215 = vmul.f32 %v3160, %v3191
      %v3216 = vmul.f32 %v3161, %v3193
      %v3217 = vmul.f32 %v3162, %v3195
      %v3218 = vmul.f32 %v3163, %v3197
      %v3219 = vmul.f32 %v3164, %v3199
      %v3220 = vmul.f32 %v3165, %v3201
      %v3221 = vmul.f32 %v3166, %v3203
      %v3222 = vmul.f32 %v3166, %v3205
      %v3223 = vmul.f32 %v3166, %v3204
      %v3233 = vrot.slane %v3215, 2
      %v3234 = vrot.slane %v3216, 2
      %v3235 = vsel %vm792, %v3233, %v3234
      %v3236 = vrot.slane %v3217, 2
      %v3237 = vsel %vm792, %v3234, %v3236
      %v3238 = vrot.slane %v3218, 2
      %v3239 = vsel %vm792, %v3236, %v3238
      %v3240 = vrot.slane %v3219, 2
      %v3241 = vsel %vm792, %v3238, %v3240
      %v3242 = vrot.slane %v3220, 2
      %v3243 = vsel %vm792, %v3240, %v3242
      %v3244 = vrot.slane %v3221, 2
      %v3245 = vsel %vm792, %v3242, %v3244
      %v3246 = vrot.slane %v3222, 2
      %v3247 = vsel %vm792, %v3244, %v3246
      %v3248 = vrot.slane %v3223, 2
      %v3249 = vsel %vm792, %v3246, %v3248
      %v3259 = vadd.f32 %v3147, %v3235
      %v3260 = vadd.f32 %v3148, %v3237
      %v3261 = vadd.f32 %v3149, %v3239
      %v3262 = vadd.f32 %v3150, %v3241
      %v3263 = vadd.f32 %v3151, %v3243
      %v3264 = vadd.f32 %v3152, %v3245
      %v3265 = vadd.f32 %v3153, %v3247
      %v3266 = vadd.f32 %v3154, %v3249
      %v3267 = vadd.f32 %v3155, %v3248
      %v3268 = vpack.c.bf16 %v475, %v472
      %v3269 = vpack.c.bf16 %v483, %v480
      %v3270 = vpack.c.bf16 %v491, %v488
      %v3271 = vpack.c.bf16 %v499, %v496
      %v3272 = vld [vmem:[%s7] sm:$0xf]
      %v3273 = vpack.c.bf16 %v3260, %v3259
      %v3274 = vpack.c.bf16 %v3262, %v3261
      %v3275 = vpack.c.bf16 %v3264, %v3263
      %v3276 = vpack.c.bf16 %v3266, %v3265
      %v3277 = vpack.c.bf16 %v3267, %v3267
      %v3278 = vld [vmem:[%s8] sm:$0xf]
      %vm3279 = vsmask.f32 6400
      %v3281 = vshrl.u32 %v3273, 16
      %v3283 = vrot.slane %v3281, 1
      %v3284 = vshll.u32 %v3273, 16
      %v3286 = vrot.slane %v3284, 2
      %v3287 = vor.u32 %v3283, %v3286
      %v3289 = vshrl.u32 %v3274, 16
      %v3291 = vrot.slane %v3289, 1
      %v3292 = vshll.u32 %v3274, 16
      %v3294 = vrot.slane %v3292, 2
      %v3295 = vor.u32 %v3291, %v3294
      %v3296 = vsel %vm3279, %v3287, %v3295
      %v3298 = vshrl.u32 %v3275, 16
      %v3300 = vrot.slane %v3298, 1
      %v3301 = vshll.u32 %v3275, 16
      %v3303 = vrot.slane %v3301, 2
      %v3304 = vor.u32 %v3300, %v3303
      %v3305 = vsel %vm3279, %v3295, %v3304
      %v3307 = vshrl.u32 %v3276, 16
      %v3309 = vrot.slane %v3307, 1
      %v3310 = vshll.u32 %v3276, 16
      %v3312 = vrot.slane %v3310, 2
      %v3313 = vor.u32 %v3309, %v3312
      %v3314 = vsel %vm3279, %v3304, %v3313
      %v3316 = vshrl.u32 %v3277, 16
      %v3318 = vrot.slane %v3316, 1
      %v3319 = vshll.u32 %v3277, 16
      %v3321 = vrot.slane %v3319, 2
      %v3322 = vor.u32 %v3318, %v3321
      %v3323 = vsel %vm3279, %v3313, %v3322
      %vm3324 = vcmask 64512
      %v3326 = vsel %vm3324, %v3296, 0
      %v3329 = vsel %vm3324, %v3305, 0
      %v3332 = vsel %vm3324, %v3314, 0
      %v3335 = vsel %vm3324, %v3323, 0
      %v3338 = vsel %vm635, %v3278, 0
      %3340 = vmatprep.subr.bf16.mxu0 0
      %3341 = vmatpush1.bf16.msra.mxu0 0
      %3342 = vmatprep.subr.bf16.mxu0 0
      %3343 = vmatpush1.bf16.msra.mxu0 0
      %3344 = vmatprep.subr.bf16.mxu0 0
      %3345 = vmatpush1.bf16.msra.mxu0 0
      %3346 = vmatprep.subr.bf16.mxu0 0
      %3347 = vmatpush1.bf16.msra.mxu0 0
      %3348 = vmatprep.subr.bf16.mxu0 0
      %3349 = vmatpush1.bf16.msra.mxu0 0
      %3350 = vmatprep.subr.bf16.mxu0 0
      %3351 = vmatpush1.bf16.msra.mxu0 0
      %3352 = vmatprep.subr.bf16.mxu0 0
      %3353 = vmatpush1.bf16.msra.mxu0 0
      %3354 = vmatprep.subr.bf16.mxu0 0
      %3355 = vmatpush1.bf16.msra.mxu0 %v3338
      %3356 = vmatprep.subr.bf16.mxu0 0
      %3357 = vmatpush2.bf16.msra.mxu0 0
      %3358 = vmatprep.subr.bf16.mxu0 0
      %3359 = vmatpush2.bf16.msra.mxu0 0
      %3360 = vmatprep.subr.bf16.mxu0 0
      %3361 = vmatpush2.bf16.msra.mxu0 0
      %3362 = vmatprep.subr.bf16.mxu0 0
      %3363 = vmatpush2.bf16.msra.mxu0 0
      %3364 = vmatprep.subr.bf16.mxu0 0
      %3365 = vmatpush2.bf16.msra.mxu0 0
      %3366 = vmatprep.subr.bf16.mxu0 0
      %3367 = vmatpush2.bf16.msra.mxu0 0
      %3368 = vmatprep.subr.bf16.mxu0 0
      %3369 = vmatpush2.bf16.msra.mxu0 0
      %3370 = vmatprep.subr.bf16.mxu0 0
      %3371 = vmatpush2.bf16.msra.mxu0 0
      %3372 = vmatprep.mubr.bf16.mxu0 0
      %3373 = vmatmul.mubr.bf16.gmra.mxu0 %v3326
      %v3374 = vpop.f32.mrf.mxu0
      %v3375 = vadd.f32 0.0, %v3374
      %v3376 = vpop.f32.mrf.mxu0
      %v3377 = vpop.f32.mrf.mxu0
      %v3378 = vadd.f32 0.0, %v3377
      %v3379 = vpop.f32.mrf.mxu0
      %3380 = vmatprep.mubr.bf16.mxu0 0
      %3381 = vmatmul.mubr.bf16.gmra.mxu0 %v3329
      %v3382 = vpop.f32.mrf.mxu0
      %v3383 = vadd.f32 0.0, %v3382
      %v3384 = vpop.f32.mrf.mxu0
      %v3385 = vpop.f32.mrf.mxu0
      %v3386 = vadd.f32 0.0, %v3385
      %v3387 = vpop.f32.mrf.mxu0
      %3388 = vmatprep.mubr.bf16.mxu0 0
      %3389 = vmatmul.mubr.bf16.gmra.mxu0 %v3332
      %v3390 = vpop.f32.mrf.mxu0
      %v3391 = vadd.f32 0.0, %v3390
      %v3392 = vpop.f32.mrf.mxu0
      %v3393 = vpop.f32.mrf.mxu0
      %v3394 = vadd.f32 0.0, %v3393
      %v3395 = vpop.f32.mrf.mxu0
      %3396 = vmatprep.mubr.bf16.mxu0 0
      %3397 = vmatmul.mubr.bf16.gmra.mxu0 %v3335
      %v3398 = vpop.f32.mrf.mxu0
      %v3399 = vadd.f32 0.0, %v3398
      %v3400 = vpop.f32.mrf.mxu0
      %v3401 = vpop.f32.mrf.mxu0
      %v3402 = vadd.f32 0.0, %v3401
      %v3403 = vpop.f32.mrf.mxu0
      %3404 = vdwg.mxu0
      %v3406 = vsel %vm3324, %v3268, 0
      %v3409 = vsel %vm3324, %v3269, 0
      %v3412 = vsel %vm3324, %v3270, 0
      %v3415 = vsel %vm3324, %v3271, 0
      %v3418 = vsel %vm635, %v3272, 0
      %3420 = vmatprep.subr.bf16.mxu0 0
      %3421 = vmatpush1.bf16.msra.mxu0 0
      %3422 = vmatprep.subr.bf16.mxu0 0
      %3423 = vmatpush1.bf16.msra.mxu0 0
      %3424 = vmatprep.subr.bf16.mxu0 0
      %3425 = vmatpush1.bf16.msra.mxu0 0
      %3426 = vmatprep.subr.bf16.mxu0 0
      %3427 = vmatpush1.bf16.msra.mxu0 0
      %3428 = vmatprep.subr.bf16.mxu0 0
      %3429 = vmatpush1.bf16.msra.mxu0 0
      %3430 = vmatprep.subr.bf16.mxu0 0
      %3431 = vmatpush1.bf16.msra.mxu0 0
      %3432 = vmatprep.subr.bf16.mxu0 0
      %3433 = vmatpush1.bf16.msra.mxu0 0
      %3434 = vmatprep.subr.bf16.mxu0 0
      %3435 = vmatpush1.bf16.msra.mxu0 %v3418
      %3436 = vmatprep.subr.bf16.mxu0 0
      %3437 = vmatpush2.bf16.msra.mxu0 0
      %3438 = vmatprep.subr.bf16.mxu0 0
      %3439 = vmatpush2.bf16.msra.mxu0 0
      %3440 = vmatprep.subr.bf16.mxu0 0
      %3441 = vmatpush2.bf16.msra.mxu0 0
      %3442 = vmatprep.subr.bf16.mxu0 0
      %3443 = vmatpush2.bf16.msra.mxu0 0
      %3444 = vmatprep.subr.bf16.mxu0 0
      %3445 = vmatpush2.bf16.msra.mxu0 0
      %3446 = vmatprep.subr.bf16.mxu0 0
      %3447 = vmatpush2.bf16.msra.mxu0 0
      %3448 = vmatprep.subr.bf16.mxu0 0
      %3449 = vmatpush2.bf16.msra.mxu0 0
      %3450 = vmatprep.subr.bf16.mxu0 0
      %3451 = vmatpush2.bf16.msra.mxu0 0
      %3452 = vmatprep.mubr.bf16.mxu0 0
      %3453 = vmatmul.mubr.bf16.gmra.mxu0 %v3406
      %v3454 = vpop.f32.mrf.mxu0
      %v3455 = vadd.f32 %v3375, %v3454
      %v3456 = vpop.f32.mrf.mxu0
      %v3457 = vpop.f32.mrf.mxu0
      %v3458 = vadd.f32 %v3378, %v3457
      %v3459 = vpop.f32.mrf.mxu0
      %3460 = vmatprep.mubr.bf16.mxu0 0
      %3461 = vmatmul.mubr.bf16.gmra.mxu0 %v3409
      %v3462 = vpop.f32.mrf.mxu0
      %v3463 = vadd.f32 %v3383, %v3462
      %v3464 = vpop.f32.mrf.mxu0
      %v3465 = vpop.f32.mrf.mxu0
      %v3466 = vadd.f32 %v3386, %v3465
      %v3467 = vpop.f32.mrf.mxu0
      %3468 = vmatprep.mubr.bf16.mxu0 0
      %3469 = vmatmul.mubr.bf16.gmra.mxu0 %v3412
      %v3470 = vpop.f32.mrf.mxu0
      %v3471 = vadd.f32 %v3391, %v3470
      %v3472 = vpop.f32.mrf.mxu0
      %v3473 = vpop.f32.mrf.mxu0
      %v3474 = vadd.f32 %v3394, %v3473
      %v3475 = vpop.f32.mrf.mxu0
      %3476 = vmatprep.mubr.bf16.mxu0 0
      %3477 = vmatmul.mubr.bf16.gmra.mxu0 %v3415
      %v3478 = vpop.f32.mrf.mxu0
      %v3479 = vadd.f32 %v3399, %v3478
      %v3480 = vpop.f32.mrf.mxu0
      %v3481 = vpop.f32.mrf.mxu0
      %v3482 = vadd.f32 %v3402, %v3481
      %v3483 = vpop.f32.mrf.mxu0
      %3484 = vdwg.mxu0
      %v3485 = vld [vmem:[%s9] sm:$0x1]
      %v3487 = vlaneseq
      %v3488 = vshrl.u32 %v3487, 7
      %v3489 = vsub.s32 0, %v3488
      %v3490 = vrot.slane %v3485, %v3489
      %v3492 = vadd.f32 %v3455, %v3490
      %v3493 = vadd.f32 %v3458, %v3490
      %v3494 = vadd.f32 %v3463, %v3490
      %v3495 = vadd.f32 %v3466, %v3490
      %v3496 = vadd.f32 %v3471, %v3490
      %v3497 = vadd.f32 %v3474, %v3490
      %v3498 = vadd.f32 %v3479, %v3490
      %v3499 = vadd.f32 %v3482, %v3490
      %v3500 = vadd.f32 %v3492, %v381
      %v3501 = vadd.f32 %v3493, %v382
      %v3502 = vadd.f32 %v3494, %v383
      %v3503 = vadd.f32 %v3495, %v384
      %v3504 = vadd.f32 %v3496, %v385
      %v3505 = vadd.f32 %v3497, %v386
      %v3506 = vadd.f32 %v3498, %v387
      %v3507 = vadd.f32 %v3499, %v388
      %3508 = vst.msk [vmem:[%s379] sm:$0xff] %vm3324, %v3500
      %3509 = vst.msk [vmem:[%s379 + $0x8] sm:$0xff] %vm3324, %v3501
      %3510 = vst.msk [vmem:[%s379 + $0x10] sm:$0xff] %vm3324, %v3502
      %3511 = vst.msk [vmem:[%s379 + $0x18] sm:$0xff] %vm3324, %v3503
      %3512 = vst.msk [vmem:[%s379 + $0x20] sm:$0xff] %vm3324, %v3504
      %3513 = vst.msk [vmem:[%s379 + $0x28] sm:$0xff] %vm3324, %v3505
      %3514 = vst.msk [vmem:[%s379 + $0x30] sm:$0xff] %vm3324, %v3506
      %3515 = vst.msk [vmem:[%s379 + $0x38] sm:$0xff] %vm3324, %v3507
      %p3516 = scmp.lt.s32.totalorder %s21, 1
      %s3517 = scalar_select %p3516, %s21, 1
      %s3518 = smul.addr %s3517, 8
      %s3519 = smul.addr %s3518, 8
      %s3520 = scalar_lea.vmem %s10, %s3519
      // Predicated region
      $region61: #{hpb3d_forward.6} parent=59 // pred_check
        %p3521 = pneg %p259
      $region62: #{hpb3d_forward.6} parent=59 // pred_check_branch
        %3523 = sbr.rel (%p3521) target = $region64
      $region63: #{hpb3d_forward.6} parent=59 // pred_region
        _
      $region64: #{hpb3d_forward.6} parent=59 // pred_fallthru
        _
    $region60: #{hpb3d_forward.6} parent=5 // pred_fallthru
      _
    %p3524 = scmp.le.s32.totalorder 2, %s16
    // Predicated region
    $region65: #{hpb3d_forward.6} parent=5 // pred_check
      %p3525 = pneg %p3524
    $region66: #{hpb3d_forward.6} parent=5 // pred_check_branch
      %3527 = sbr.rel (%p3525) target = $region68
    $region67: #{hpb3d_forward.6} parent=5 // pred_region
      %s3528 = ssub.s32 %s16, 2
      // Predicated region
      $region69: #{hpb3d_forward.6} parent=67 // pred_check
        %p3529 = pneg %p265
      $region70: #{hpb3d_forward.6} parent=67 // pred_check_branch
        %3531 = sbr.rel (%p3529) target = $region72
      $region71: #{hpb3d_forward.6} parent=67 // pred_region
        %p3532 = scmp.lt.s32.totalorder %s22, 1
        %s3533 = scalar_select %p3532, %s22, 1
        %s3534 = smul.addr %s3533, 8
        %s3535 = smul.addr %s3534, 8
        %s3536 = scalar_lea.vmem %s10, %s3535
      $region72: #{hpb3d_forward.6} parent=67 // pred_fallthru
        _
    $region68: #{hpb3d_forward.6} parent=5 // pred_fallthru
      _
  $region6: #{hpb3d_forward.6} parent=0 // loop_footer
    %s20 = sadd.s32 1, %s16
  $region7: #{hpb3d_forward.6} parent=0 // loop_footer_branch
    %15 = sbr.rel target = $region3
  $region8: #{hpb3d_forward.6} parent=0 // loop_exit
    _

</llo_original>
